<compile_context>
chip_gen: v5e
topology: v5e:2x2
jax: 0.10.0
libtpu: 0.0.40
codegen_flags: <defaults>
</compile_context>

<pallas_src>
import jax
import jax.numpy as jnp
from jax import lax
from jax.experimental import pallas as pl
from jax.experimental.pallas import tpu as pltpu

# ---------------------------------------------------------------------------
# Deterministic graph configuration (stands in for RandomGraph and the
# in_channel_dict / out_channel_dict / resolution_dict globals).
# node 0 = input node (identity), node NODE_NUM + 1 = output node.
NODE_NUM = 4
IN_EDGES = {1: [0], 2: [1], 3: [1, 2], 4: [2, 3], 5: [3, 4]}
IN_CH = {1: 8, 2: 8, 3: 16, 4: 16, 5: 8}          # in_channel_dict
OUT_CH = {0: 4, 1: 16, 2: 8, 3: 8, 4: 16, 5: 8}   # out_channel_dict
RES = {1: 16, 2: 16, 3: 8, 4: 8, 5: 16}           # resolution_dict
BN_EPS = 1e-5
SLAB_W = 144                                       # widest packed matrix (9*16)


def _node_kind(n):
    # same rule as Node.__init__
    if n % 2 == 0 and n <= NODE_NUM / 2:
        return "sampling"      # MaxPool2d(3, stride=2, padding=1)
    if n % 2 == 0 and n > NODE_NUM / 2:
        return "upsampling"    # Upsample(scale_factor=2), nearest
    return "conv"              # Unit_conv


# ---------------------------------------------------------------------------
# Operand coalescing: one matrix slab, one bias/BN column slab, one SMEM
# scalar bundle.  Index dicts hold static Python offsets used for in-kernel
# static ref slices.
# ---------------------------------------------------------------------------
class _MatPacker:
    def __init__(self, width):
        self.width = width
        self.chunks = []
        self.index = {}
        self.rows = 0

    def add(self, name, mat):
        mat = jnp.asarray(mat, jnp.float32)
        r, c = mat.shape
        assert c <= self.width, (name, mat.shape)
        self.index[name] = (self.rows, r, c)
        if c < self.width:
            mat = jnp.concatenate(
                [mat, jnp.zeros((r, self.width - c), jnp.float32)], axis=1)
        pad_r = (-r) % 8                    # keep every matrix sublane-aligned
        if pad_r:
            mat = jnp.concatenate(
                [mat, jnp.zeros((pad_r, self.width), jnp.float32)], axis=0)
        self.chunks.append(mat)
        self.rows += r + pad_r

    def finalize(self):
        return jnp.concatenate(self.chunks, axis=0)


class _ColPacker:
    """Each column holds one per-channel vector (bias / BN scale / BN shift)."""

    def __init__(self, height=16):
        self.height = height
        self.cols = []
        self.index = {}

    def add(self, name, vec):
        vec = jnp.asarray(vec, jnp.float32).reshape(-1)
        r = vec.shape[0]
        assert r <= self.height, (name, r)
        self.index[name] = (len(self.cols), r)
        self.cols.append(jnp.pad(vec, (0, self.height - r)))

    def finalize(self):
        pad = (-len(self.cols)) % 8
        cols = self.cols + [jnp.zeros((self.height,), jnp.float32)] * pad
        return jnp.stack(cols, axis=1)          # (height, n_cols)


def _fold_bn_conv1x1(q):
    # fold eval-mode BatchNorm into a 1x1 conv with weight in (out, in) layout
    s = q["gamma"] * lax.rsqrt(q["var"] + BN_EPS)
    w = q["w"] * s[:, None]
    b = (q["b"] - q["mean"]) * s + q["beta"]
    return w, b


def _pack_params(params):
    mats = _MatPacker(SLAB_W)
    cols = _ColPacker(16)
    scal_vals, scal_idx = [], {}

    def add_scal(name, v):
        scal_idx[name] = len(scal_vals)
        scal_vals.append(jnp.asarray(v, jnp.float32).reshape(()))

    for node in range(1, NODE_NUM + 2):
        p = params[node]
        ins = IN_EDGES[node]
        cin = IN_CH[node]
        tag = f"n{node}"
        for j in range(len(ins)):
            mats.add(f"{tag}_nw{j}", p["normalize"][j]["w"])
            cols.add(f"{tag}_nb{j}", p["normalize"][j]["b"])
        mats.add(f"{tag}_nwl", p["normalize"][-1]["w"])
        cols.add(f"{tag}_nbl", p["normalize"][-1]["b"])
        if len(ins) > 1:                                  # attention gate
            wg, bg = _fold_bn_conv1x1(p["W_g"])
            wx, bx = _fold_bn_conv1x1(p["W_x"])
            wp, bp = _fold_bn_conv1x1(p["psi"])
            mats.add(f"{tag}_wg", wg)
            cols.add(f"{tag}_bg", bg)
            mats.add(f"{tag}_wx", wx)
            cols.add(f"{tag}_bx", bx)
            mats.add(f"{tag}_wp", wp.reshape(1, cin))
            add_scal(f"{tag}_bp", bp[0])
        if _node_kind(node) == "conv":                    # Unit_conv
            u = p["unit"]
            cout = OUT_CH[node]
            # storage (3,3,cin,cout) -> packed (cout, 9*cin), tap-major.
            w1 = jnp.transpose(u["w1"], (3, 0, 1, 2)).reshape(cin, 9 * cin)
            w2 = jnp.transpose(u["w2"], (3, 0, 1, 2)).reshape(cout, 9 * cin)
            mats.add(f"{tag}_w1", w1)
            cols.add(f"{tag}_b1", u["b1"])
            mats.add(f"{tag}_w2", w2)
            cols.add(f"{tag}_b2", u["b2"])
            s2 = u["gamma"] * lax.rsqrt(u["var"] + BN_EPS)
            t2 = u["beta"] - u["mean"] * s2
            cols.add(f"{tag}_s2", s2)
            cols.add(f"{tag}_t2", t2)
            add_scal(f"{tag}_a1", u["a1"])
            add_scal(f"{tag}_a2", u["a2"])

    return (mats.finalize(), cols.finalize(), jnp.stack(scal_vals),
            mats.index, cols.index, scal_idx)


def _resample_mats(B, Hi, Wi):
    """0/1 selection matrices for nearest resize / maxpool decimation / 2x up.

    sd: (B*Hi*Wi, B*Ho*Wo)   out = x @ sd   -> even-index decimation by 2
    su: (B*Ho*Wo, B*Hi*Wi)   out = x @ su   -> nearest 2x upsample
    """
    Ho, Wo = Hi // 2, Wi // 2
    Ni, No = B * Hi * Wi, B * Ho * Wo
    q = jnp.arange(No, dtype=jnp.int32)
    b = q // (Ho * Wo)
    r = q % (Ho * Wo)
    src_d = b * (Hi * Wi) + (r // Wo) * 2 * Wi + (r % Wo) * 2
    sd = (jnp.arange(Ni, dtype=jnp.int32)[:, None] == src_d[None, :]
          ).astype(jnp.float32)
    p = jnp.arange(Ni, dtype=jnp.int32)
    b2 = p // (Hi * Wi)
    r2 = p % (Hi * Wi)
    src_u = b2 * (Ho * Wo) + ((r2 // Wi) // 2) * Wo + (r2 % Wi) // 2
    su = (jnp.arange(No, dtype=jnp.int32)[:, None] == src_u[None, :]
          ).astype(jnp.float32)
    return sd, su


# ---------------------------------------------------------------------------
# Fully fused whole-graph kernel
# ---------------------------------------------------------------------------
def _build_graph_kernel(B, mat_idx, col_idx, scal_idx):
    N16 = B * 16 * 16
    N8 = B * 8 * 8

    def kernel(scal_ref, x_ref, slab_ref, col_ref, sd_ref, su_ref, o_ref):
        f32 = jnp.float32

        def M(name):                                 # packed matrix slice
            r0, r, c = mat_idx[name]
            return slab_ref[r0:r0 + r, 0:c]

        def V(name):                                 # (r, 1) column vector
            c0, r = col_idx[name]
            return col_ref[0:r, c0:c0 + 1]

        def S(name):                                 # SMEM scalar
            return scal_ref[scal_idx[name]]

        def mm(a, b):
            return jnp.dot(a, b, preferred_element_type=f32)

        def spatial_idx(Hi, Wi, N):
            # per-lane (h, w) coordinates of the flattened (b, h, w) pixel axis
            p = lax.broadcasted_iota(jnp.int32, (1, N), 1)
            hw = jnp.bitwise_and(p, Hi * Wi - 1)
            hh = jnp.right_shift(hw, (Wi - 1).bit_length())
            ww = jnp.bitwise_and(hw, Wi - 1)
            return hh, ww

        h16, w16 = spatial_idx(16, 16, N16)
        h8, w8 = spatial_idx(8, 8, N8)

        def shifted_taps(x, hh, ww, Hi, Wi, N, pad_val):
            # 3x3 neighbourhood taps via lane rolls + zero/-inf boundary masks.
            taps = []
            for kh in (-1, 0, 1):
                for kw in (-1, 0, 1):
                    s = kh * Wi + kw
                    t = x if s == 0 else pltpu.roll(x, (-s) % N, axis=1)
                    ok = ((hh + kh >= 0) & (hh + kh < Hi) &
                          (ww + kw >= 0) & (ww + kw < Wi))
                    taps.append(jnp.where(ok, t, pad_val))
            return taps

        def conv3x3(x, w, b, hh, ww, Hi, Wi, N):
            # one packed (Cout, 9*Cin) x (9*Cin, N) matmul for all 9 taps
            patch = jnp.concatenate(
                shifted_taps(x, hh, ww, Hi, Wi, N, f32(0.0)), axis=0)
            return mm(w, patch) + b

        def maxpool3x3(x, hh, ww, Hi, Wi, N):
            taps = shifted_taps(x, hh, ww, Hi, Wi, N, f32(-3.0e38))
            out = taps[0]
            for t in taps[1:]:
                out = jnp.maximum(out, t)
            return out        # stride-1 pooled; stride-2 decimation via sd

        def prelu(z, a):
            return jnp.where(z >= 0.0, z, a * z)

        def sigmoid(z):
            # numerically stable, exact reciprocal
            ez = jnp.exp(-jnp.abs(z))
            return jnp.where(z >= 0.0, 1.0, ez) / (1.0 + ez)

        def node_mix(tag, ins):
            # normalize[j] 1x1 -> attention gate -> concat -> normalize[-1]
            x = mm(M(f"{tag}_nw0"), ins[0]) + V(f"{tag}_nb0")
            parts = [x]
            for j in range(1, len(ins)):
                y = mm(M(f"{tag}_nw{j}"), ins[j]) + V(f"{tag}_nb{j}")
                g1 = mm(M(f"{tag}_wg"), x) + V(f"{tag}_bg")
                x1 = mm(M(f"{tag}_wx"), y) + V(f"{tag}_bx")
                pr = jnp.maximum(g1 + x1, 0.0)                    # ReLU
                z = mm(M(f"{tag}_wp"), pr) + S(f"{tag}_bp")       # psi (MXU)
                parts.append(y * sigmoid(z))
            cat = parts[0] if len(parts) == 1 else jnp.concatenate(parts, axis=0)
            return mm(M(f"{tag}_nwl"), cat) + V(f"{tag}_nbl")

        def unit_conv(tag, x, hh, ww, Hi, Wi, N):
            # conv3x3 -> PReLU -> conv3x3 -> PReLU -> BN(eval); dropout = id
            z1 = conv3x3(x, M(f"{tag}_w1"), V(f"{tag}_b1"), hh, ww, Hi, Wi, N)
            h = prelu(z1, S(f"{tag}_a1"))
            z2 = conv3x3(h, M(f"{tag}_w2"), V(f"{tag}_b2"), hh, ww, Hi, Wi, N)
            p = prelu(z2, S(f"{tag}_a2"))
            return p * V(f"{tag}_s2") + V(f"{tag}_t2")

        sd = sd_ref[...]                    # (N16, N8)  even-index decimation
        su = su_ref[...]                    # (N8, N16)  nearest 2x upsample

        x0 = x_ref[...]                     # (4, N16) network input, 16x16

        # node 1: conv node @ 16x16, input = image
        m1 = unit_conv("n1", node_mix("n1", [x0]), h16, w16, 16, 16, N16)

        # node 2: sampling node @ 16x16 -> MaxPool3x3/s2/p1 -> 8x8
        x2 = node_mix("n2", [m1])
        m2 = mm(maxpool3x3(x2, h16, w16, 16, 16, N16), sd)

        # node 3: conv node @ 8x8, inputs (node1 resized 16->8, node2)
        i30 = mm(m1, sd)                    # nearest resize 16x16 -> 8x8
        m3 = unit_conv("n3", node_mix("n3", [i30, m2]), h8, w8, 8, 8, N8)

        # node 4: upsampling node @ 8x8, inputs (node2, node3) -> 2x nearest
        x4 = node_mix("n4", [m2, m3])
        m4 = mm(x4, su)                     # 8x8 -> 16x16

        # node 5: conv node @ 16x16, inputs (node3 resized 8->16, node4)
        i50 = mm(m3, su)                    # nearest resize 8x8 -> 16x16
        m5 = unit_conv("n5", node_mix("n5", [i50, m4]), h16, w16, 16, 16, N16)

        o_ref[...] = m5                     # (8, N16) lane-dense store

    return kernel


# ---------------------------------------------------------------------------
# RandWire forward (NCHW in, NCHW out -- matches the PyTorch module)
# ---------------------------------------------------------------------------
def randwire_forward(params, x_nchw):
    x = x_nchw.astype(jnp.float32)
    B, C0, H, W = x.shape
    assert (H, W) == (16, 16) and C0 == OUT_CH[0]

    # channels on sublanes, flattened (b, h, w) pixels on lanes (lane-dense)
    x_cn = jnp.transpose(x, (1, 0, 2, 3)).reshape(C0, B * H * W)

    slab, colv, scal, mat_idx, col_idx, scal_idx = _pack_params(params)
    sd, su = _resample_mats(B, H, W)

    c_out = OUT_CH[NODE_NUM + 1]
    n16 = B * H * W

    def fullspec(a):
        return pl.BlockSpec(a.shape, lambda i, nd=a.ndim: (0,) * nd)

    args = (scal, x_cn, slab, colv, sd, su)
    in_specs = [pl.BlockSpec(memory_space=pltpu.MemorySpace.SMEM)]
    in_specs += [fullspec(a) for a in args[1:]]

    out = pl.pallas_call(
        _build_graph_kernel(B, mat_idx, col_idx, scal_idx),
        out_shape=jax.ShapeDtypeStruct((c_out, n16), jnp.float32),
        grid=(1,),
        in_specs=in_specs,
        out_specs=pl.BlockSpec((c_out, n16), lambda i: (0, 0)),
        compiler_params=pltpu.CompilerParams(
            dimension_semantics=("arbitrary",)),
    )(*args)

    return jnp.transpose(out.reshape(c_out, B, H, W), (1, 0, 2, 3))


# ---------------------------------------------------------------------------
# Parameter initialization (deterministic, synthetic). 1x1 conv weights use the
# PyTorch (out, in) orientation; 3x3 weights are stored as (3, 3, cin, cout).
# ---------------------------------------------------------------------------
def _nrm(key, shape, scale=0.1):
    return scale * jax.random.normal(key, shape, dtype=jnp.float32)


def init_params(key):
    params = {}
    for node in range(1, NODE_NUM + 2):
        ins = IN_EDGES[node]
        cin = IN_CH[node]
        cout = OUT_CH[node]
        keys = jax.random.split(key, 65)
        key = keys[-1]
        ki = iter(keys[:-1])

        normalize = []
        for v in ins:
            normalize.append({"w": _nrm(next(ki), (cin, OUT_CH[v])),
                              "b": _nrm(next(ki), (cin,))})
        normalize.append({"w": _nrm(next(ki), (cin, cin * len(ins))),
                          "b": _nrm(next(ki), (cin,))})

        def conv_bn(co, ci):
            return {"w": _nrm(next(ki), (co, ci)),
                    "b": _nrm(next(ki), (co,)),
                    "gamma": 1.0 + _nrm(next(ki), (co,)),
                    "beta": _nrm(next(ki), (co,)),
                    "mean": jnp.zeros((co,), jnp.float32),
                    "var": jnp.ones((co,), jnp.float32)}

        p = {"normalize": normalize,
             "W_g": conv_bn(cin, cin),
             "W_x": conv_bn(cin, cin),
             "psi": conv_bn(1, cin)}

        if _node_kind(node) == "conv":
            p["unit"] = {"w1": _nrm(next(ki), (3, 3, cin, cin)),
                         "b1": _nrm(next(ki), (cin,)),
                         "a1": jnp.float32(0.25),
                         "w2": _nrm(next(ki), (3, 3, cin, cout)),
                         "b2": _nrm(next(ki), (cout,)),
                         "a2": jnp.float32(0.25),
                         "gamma": 1.0 + _nrm(next(ki), (cout,)),
                         "beta": _nrm(next(ki), (cout,)),
                         "mean": jnp.zeros((cout,), jnp.float32),
                         "var": jnp.ones((cout,), jnp.float32)}
        params[node] = p
    return params


# ---------------------------------------------------------------------------
if __name__ == "__main__":
    key = jax.random.PRNGKey(0)
    pkey, xkey = jax.random.split(key)
    params = init_params(pkey)
    x = jax.random.normal(xkey, (2, OUT_CH[0], 16, 16), dtype=jnp.float32)  # NCHW

    fwd = jax.jit(randwire_forward)
    out = fwd(params, x)
    jax.block_until_ready(out)
    assert out.shape == (2, OUT_CH[NODE_NUM + 1], 16, 16), out.shape
    assert bool(jnp.all(jnp.isfinite(out)))
    print("KERNEL_OK")
</pallas_src>

<mosaic_0001>
module attributes {stable_mosaic.version = 11 : i64} {
  func.func @kernel(%arg0: i32, %arg1: memref<9xf32, #tpu.memory_space<smem>>, %arg2: memref<4x512xf32, #tpu.memory_space<vmem>>, %arg3: memref<320x144xf32, #tpu.memory_space<vmem>>, %arg4: memref<16x32xf32, #tpu.memory_space<vmem>>, %arg5: memref<512x128xf32, #tpu.memory_space<vmem>>, %arg6: memref<128x512xf32, #tpu.memory_space<vmem>>, %arg7: memref<8x512xf32, #tpu.memory_space<vmem>>) attributes {dimension_semantics = [#tpu.dimension_semantics<arbitrary>], iteration_bounds = array<i64: 1>, scalar_prefetch = 0 : i64, scratch_operands = 0 : i64, tpu.core_type = #tpu.core_type<tc>, window_params = [{transform_indices = @transform_0, window_bounds = array<i64: 9>}, {pipeline_mode = #tpu.pipeline_mode<synchronous>, transform_indices = @transform_1, window_bounds = array<i64: 4, 512>}, {pipeline_mode = #tpu.pipeline_mode<synchronous>, transform_indices = @transform_2, window_bounds = array<i64: 320, 144>}, {pipeline_mode = #tpu.pipeline_mode<synchronous>, transform_indices = @transform_3, window_bounds = array<i64: 16, 32>}, {pipeline_mode = #tpu.pipeline_mode<synchronous>, transform_indices = @transform_4, window_bounds = array<i64: 512, 128>}, {pipeline_mode = #tpu.pipeline_mode<synchronous>, transform_indices = @transform_5, window_bounds = array<i64: 128, 512>}, {pipeline_mode = #tpu.pipeline_mode<synchronous>, transform_indices = @transform_6, window_bounds = array<i64: 8, 512>}]} {
    %0 = tpu.iota {dimensions = array<i32: 1>} : vector<1x512xi32>
    %c255_i32 = arith.constant 255 : i32
    %1 = vector.broadcast %c255_i32 : i32 to vector<1x512xi32>
    %2 = arith.andi %0, %1 : vector<1x512xi32>
    %c4_i32 = arith.constant 4 : i32
    %3 = vector.broadcast %c4_i32 : i32 to vector<1x512xi32>
    %4 = arith.shrsi %2, %3 : vector<1x512xi32>
    %c15_i32 = arith.constant 15 : i32
    %5 = vector.broadcast %c15_i32 : i32 to vector<1x512xi32>
    %6 = arith.andi %2, %5 : vector<1x512xi32>
    %7 = tpu.iota {dimensions = array<i32: 1>} : vector<1x128xi32>
    %c63_i32 = arith.constant 63 : i32
    %8 = vector.broadcast %c63_i32 : i32 to vector<1x128xi32>
    %9 = arith.andi %7, %8 : vector<1x128xi32>
    %c3_i32 = arith.constant 3 : i32
    %10 = vector.broadcast %c3_i32 : i32 to vector<1x128xi32>
    %11 = arith.shrsi %9, %10 : vector<1x128xi32>
    %c7_i32 = arith.constant 7 : i32
    %12 = vector.broadcast %c7_i32 : i32 to vector<1x128xi32>
    %13 = arith.andi %9, %12 : vector<1x128xi32>
    %c0 = arith.constant 0 : index
    %c0_0 = arith.constant 0 : index
    %14 = vector.load %arg5[%c0, %c0_0] : memref<512x128xf32, #tpu.memory_space<vmem>>, vector<512x128xf32>
    %c0_1 = arith.constant 0 : index
    %c0_2 = arith.constant 0 : index
    %15 = vector.load %arg6[%c0_1, %c0_2] : memref<128x512xf32, #tpu.memory_space<vmem>>, vector<128x512xf32>
    %c0_3 = arith.constant 0 : index
    %c0_4 = arith.constant 0 : index
    %16 = vector.load %arg2[%c0_3, %c0_4] : memref<4x512xf32, #tpu.memory_space<vmem>>, vector<4x512xf32>
    %c0_5 = arith.constant 0 : index
    %c0_6 = arith.constant 0 : index
    %17 = vector.load %arg3[%c0_5, %c0_6] : memref<320x144xf32, #tpu.memory_space<vmem>>, vector<8x4xf32>
    %cst = arith.constant dense<0.000000e+00> : vector<8x512xf32>
    %18 = tpu.matmul %17, %16, %cst {dimension_numbers = #tpu.dot_dimension_numbers<[1], [0], [0], [1], [0, 0, 1, 1], [], []>} : vector<8x4xf32>, vector<4x512xf32>, vector<8x512xf32> -> vector<8x512xf32>
    %c0_7 = arith.constant 0 : index
    %c0_8 = arith.constant 0 : index
    %19 = vector.load %arg4[%c0_7, %c0_8] : memref<16x32xf32, #tpu.memory_space<vmem>>, vector<8x1xf32>
    %20 = vector.broadcast %19 : vector<8x1xf32> to vector<8x512xf32>
    %21 = arith.addf %18, %20 : vector<8x512xf32>
    %c8 = arith.constant 8 : index
    %c0_9 = arith.constant 0 : index
    %22 = vector.load %arg3[%c8, %c0_9] : memref<320x144xf32, #tpu.memory_space<vmem>>, vector<8x8xf32>
    %cst_10 = arith.constant dense<0.000000e+00> : vector<8x512xf32>
    %23 = tpu.matmul %22, %21, %cst_10 {dimension_numbers = #tpu.dot_dimension_numbers<[1], [0], [0], [1], [0, 0, 1, 1], [], []>} : vector<8x8xf32>, vector<8x512xf32>, vector<8x512xf32> -> vector<8x512xf32>
    %c0_11 = arith.constant 0 : index
    %c1 = arith.constant 1 : index
    %24 = vector.load %arg4[%c0_11, %c1] : memref<16x32xf32, #tpu.memory_space<vmem>>, vector<8x1xf32>
    %25 = vector.broadcast %24 : vector<8x1xf32> to vector<8x512xf32>
    %26 = arith.addf %23, %25 : vector<8x512xf32>
    %c16 = arith.constant 16 : index
    %c0_12 = arith.constant 0 : index
    %27 = vector.load %arg3[%c16, %c0_12] : memref<320x144xf32, #tpu.memory_space<vmem>>, vector<8x72xf32>
    %c0_13 = arith.constant 0 : index
    %c2 = arith.constant 2 : index
    %28 = vector.load %arg4[%c0_13, %c2] : memref<16x32xf32, #tpu.memory_space<vmem>>, vector<8x1xf32>
    %c17_i32 = arith.constant 17 : i32
    %29 = tpu.dynamic_rotate %26 by %c17_i32 dim 1 : vector<8x512xf32>, i32 -> vector<8x512xf32>
    %c-1_i32 = arith.constant -1 : i32
    %30 = vector.broadcast %c-1_i32 : i32 to vector<1x512xi32>
    %31 = arith.addi %4, %30 : vector<1x512xi32>
    %c0_i32 = arith.constant 0 : i32
    %32 = vector.broadcast %c0_i32 : i32 to vector<1x512xi32>
    %33 = arith.cmpi sge, %31, %32 : vector<1x512xi32>
    %c-1_i32_14 = arith.constant -1 : i32
    %34 = vector.broadcast %c-1_i32_14 : i32 to vector<1x512xi32>
    %35 = arith.addi %4, %34 : vector<1x512xi32>
    %c16_i32 = arith.constant 16 : i32
    %36 = vector.broadcast %c16_i32 : i32 to vector<1x512xi32>
    %37 = arith.cmpi slt, %35, %36 : vector<1x512xi32>
    %38 = arith.andi %33, %37 : vector<1x512xi1>
    %c-1_i32_15 = arith.constant -1 : i32
    %39 = vector.broadcast %c-1_i32_15 : i32 to vector<1x512xi32>
    %40 = arith.addi %6, %39 : vector<1x512xi32>
    %c0_i32_16 = arith.constant 0 : i32
    %41 = vector.broadcast %c0_i32_16 : i32 to vector<1x512xi32>
    %42 = arith.cmpi sge, %40, %41 : vector<1x512xi32>
    %43 = arith.andi %38, %42 : vector<1x512xi1>
    %c-1_i32_17 = arith.constant -1 : i32
    %44 = vector.broadcast %c-1_i32_17 : i32 to vector<1x512xi32>
    %45 = arith.addi %6, %44 : vector<1x512xi32>
    %c16_i32_18 = arith.constant 16 : i32
    %46 = vector.broadcast %c16_i32_18 : i32 to vector<1x512xi32>
    %47 = arith.cmpi slt, %45, %46 : vector<1x512xi32>
    %48 = arith.andi %43, %47 : vector<1x512xi1>
    %cst_19 = arith.constant 0.000000e+00 : f32
    %49 = vector.shape_cast %48 : vector<1x512xi1> to vector<1x512xi1>
    %50 = vector.broadcast %49 : vector<1x512xi1> to vector<8x512xi1>
    %51 = vector.broadcast %cst_19 : f32 to vector<8x512xf32>
    %52 = arith.select %50, %29, %51 : vector<8x512xi1>, vector<8x512xf32>
    %c16_i32_20 = arith.constant 16 : i32
    %53 = tpu.dynamic_rotate %26 by %c16_i32_20 dim 1 : vector<8x512xf32>, i32 -> vector<8x512xf32>
    %c-1_i32_21 = arith.constant -1 : i32
    %54 = vector.broadcast %c-1_i32_21 : i32 to vector<1x512xi32>
    %55 = arith.addi %4, %54 : vector<1x512xi32>
    %c0_i32_22 = arith.constant 0 : i32
    %56 = vector.broadcast %c0_i32_22 : i32 to vector<1x512xi32>
    %57 = arith.cmpi sge, %55, %56 : vector<1x512xi32>
    %c-1_i32_23 = arith.constant -1 : i32
    %58 = vector.broadcast %c-1_i32_23 : i32 to vector<1x512xi32>
    %59 = arith.addi %4, %58 : vector<1x512xi32>
    %c16_i32_24 = arith.constant 16 : i32
    %60 = vector.broadcast %c16_i32_24 : i32 to vector<1x512xi32>
    %61 = arith.cmpi slt, %59, %60 : vector<1x512xi32>
    %62 = arith.andi %57, %61 : vector<1x512xi1>
    %c0_i32_25 = arith.constant 0 : i32
    %63 = vector.broadcast %c0_i32_25 : i32 to vector<1x512xi32>
    %64 = arith.addi %6, %63 : vector<1x512xi32>
    %c0_i32_26 = arith.constant 0 : i32
    %65 = vector.broadcast %c0_i32_26 : i32 to vector<1x512xi32>
    %66 = arith.cmpi sge, %64, %65 : vector<1x512xi32>
    %67 = arith.andi %62, %66 : vector<1x512xi1>
    %c0_i32_27 = arith.constant 0 : i32
    %68 = vector.broadcast %c0_i32_27 : i32 to vector<1x512xi32>
    %69 = arith.addi %6, %68 : vector<1x512xi32>
    %c16_i32_28 = arith.constant 16 : i32
    %70 = vector.broadcast %c16_i32_28 : i32 to vector<1x512xi32>
    %71 = arith.cmpi slt, %69, %70 : vector<1x512xi32>
    %72 = arith.andi %67, %71 : vector<1x512xi1>
    %cst_29 = arith.constant 0.000000e+00 : f32
    %73 = vector.shape_cast %72 : vector<1x512xi1> to vector<1x512xi1>
    %74 = vector.broadcast %73 : vector<1x512xi1> to vector<8x512xi1>
    %75 = vector.broadcast %cst_29 : f32 to vector<8x512xf32>
    %76 = arith.select %74, %53, %75 : vector<8x512xi1>, vector<8x512xf32>
    %c15_i32_30 = arith.constant 15 : i32
    %77 = tpu.dynamic_rotate %26 by %c15_i32_30 dim 1 : vector<8x512xf32>, i32 -> vector<8x512xf32>
    %c-1_i32_31 = arith.constant -1 : i32
    %78 = vector.broadcast %c-1_i32_31 : i32 to vector<1x512xi32>
    %79 = arith.addi %4, %78 : vector<1x512xi32>
    %c0_i32_32 = arith.constant 0 : i32
    %80 = vector.broadcast %c0_i32_32 : i32 to vector<1x512xi32>
    %81 = arith.cmpi sge, %79, %80 : vector<1x512xi32>
    %c-1_i32_33 = arith.constant -1 : i32
    %82 = vector.broadcast %c-1_i32_33 : i32 to vector<1x512xi32>
    %83 = arith.addi %4, %82 : vector<1x512xi32>
    %c16_i32_34 = arith.constant 16 : i32
    %84 = vector.broadcast %c16_i32_34 : i32 to vector<1x512xi32>
    %85 = arith.cmpi slt, %83, %84 : vector<1x512xi32>
    %86 = arith.andi %81, %85 : vector<1x512xi1>
    %c1_i32 = arith.constant 1 : i32
    %87 = vector.broadcast %c1_i32 : i32 to vector<1x512xi32>
    %88 = arith.addi %6, %87 : vector<1x512xi32>
    %c0_i32_35 = arith.constant 0 : i32
    %89 = vector.broadcast %c0_i32_35 : i32 to vector<1x512xi32>
    %90 = arith.cmpi sge, %88, %89 : vector<1x512xi32>
    %91 = arith.andi %86, %90 : vector<1x512xi1>
    %c1_i32_36 = arith.constant 1 : i32
    %92 = vector.broadcast %c1_i32_36 : i32 to vector<1x512xi32>
    %93 = arith.addi %6, %92 : vector<1x512xi32>
    %c16_i32_37 = arith.constant 16 : i32
    %94 = vector.broadcast %c16_i32_37 : i32 to vector<1x512xi32>
    %95 = arith.cmpi slt, %93, %94 : vector<1x512xi32>
    %96 = arith.andi %91, %95 : vector<1x512xi1>
    %cst_38 = arith.constant 0.000000e+00 : f32
    %97 = vector.shape_cast %96 : vector<1x512xi1> to vector<1x512xi1>
    %98 = vector.broadcast %97 : vector<1x512xi1> to vector<8x512xi1>
    %99 = vector.broadcast %cst_38 : f32 to vector<8x512xf32>
    %100 = arith.select %98, %77, %99 : vector<8x512xi1>, vector<8x512xf32>
    %c1_i32_39 = arith.constant 1 : i32
    %101 = tpu.dynamic_rotate %26 by %c1_i32_39 dim 1 : vector<8x512xf32>, i32 -> vector<8x512xf32>
    %c0_i32_40 = arith.constant 0 : i32
    %102 = vector.broadcast %c0_i32_40 : i32 to vector<1x512xi32>
    %103 = arith.addi %4, %102 : vector<1x512xi32>
    %c0_i32_41 = arith.constant 0 : i32
    %104 = vector.broadcast %c0_i32_41 : i32 to vector<1x512xi32>
    %105 = arith.cmpi sge, %103, %104 : vector<1x512xi32>
    %c0_i32_42 = arith.constant 0 : i32
    %106 = vector.broadcast %c0_i32_42 : i32 to vector<1x512xi32>
    %107 = arith.addi %4, %106 : vector<1x512xi32>
    %c16_i32_43 = arith.constant 16 : i32
    %108 = vector.broadcast %c16_i32_43 : i32 to vector<1x512xi32>
    %109 = arith.cmpi slt, %107, %108 : vector<1x512xi32>
    %110 = arith.andi %105, %109 : vector<1x512xi1>
    %c-1_i32_44 = arith.constant -1 : i32
    %111 = vector.broadcast %c-1_i32_44 : i32 to vector<1x512xi32>
    %112 = arith.addi %6, %111 : vector<1x512xi32>
    %c0_i32_45 = arith.constant 0 : i32
    %113 = vector.broadcast %c0_i32_45 : i32 to vector<1x512xi32>
    %114 = arith.cmpi sge, %112, %113 : vector<1x512xi32>
    %115 = arith.andi %110, %114 : vector<1x512xi1>
    %c-1_i32_46 = arith.constant -1 : i32
    %116 = vector.broadcast %c-1_i32_46 : i32 to vector<1x512xi32>
    %117 = arith.addi %6, %116 : vector<1x512xi32>
    %c16_i32_47 = arith.constant 16 : i32
    %118 = vector.broadcast %c16_i32_47 : i32 to vector<1x512xi32>
    %119 = arith.cmpi slt, %117, %118 : vector<1x512xi32>
    %120 = arith.andi %115, %119 : vector<1x512xi1>
    %cst_48 = arith.constant 0.000000e+00 : f32
    %121 = vector.shape_cast %120 : vector<1x512xi1> to vector<1x512xi1>
    %122 = vector.broadcast %121 : vector<1x512xi1> to vector<8x512xi1>
    %123 = vector.broadcast %cst_48 : f32 to vector<8x512xf32>
    %124 = arith.select %122, %101, %123 : vector<8x512xi1>, vector<8x512xf32>
    %c0_i32_49 = arith.constant 0 : i32
    %125 = vector.broadcast %c0_i32_49 : i32 to vector<1x512xi32>
    %126 = arith.addi %4, %125 : vector<1x512xi32>
    %c0_i32_50 = arith.constant 0 : i32
    %127 = vector.broadcast %c0_i32_50 : i32 to vector<1x512xi32>
    %128 = arith.cmpi sge, %126, %127 : vector<1x512xi32>
    %c0_i32_51 = arith.constant 0 : i32
    %129 = vector.broadcast %c0_i32_51 : i32 to vector<1x512xi32>
    %130 = arith.addi %4, %129 : vector<1x512xi32>
    %c16_i32_52 = arith.constant 16 : i32
    %131 = vector.broadcast %c16_i32_52 : i32 to vector<1x512xi32>
    %132 = arith.cmpi slt, %130, %131 : vector<1x512xi32>
    %133 = arith.andi %128, %132 : vector<1x512xi1>
    %c0_i32_53 = arith.constant 0 : i32
    %134 = vector.broadcast %c0_i32_53 : i32 to vector<1x512xi32>
    %135 = arith.addi %6, %134 : vector<1x512xi32>
    %c0_i32_54 = arith.constant 0 : i32
    %136 = vector.broadcast %c0_i32_54 : i32 to vector<1x512xi32>
    %137 = arith.cmpi sge, %135, %136 : vector<1x512xi32>
    %138 = arith.andi %133, %137 : vector<1x512xi1>
    %c0_i32_55 = arith.constant 0 : i32
    %139 = vector.broadcast %c0_i32_55 : i32 to vector<1x512xi32>
    %140 = arith.addi %6, %139 : vector<1x512xi32>
    %c16_i32_56 = arith.constant 16 : i32
    %141 = vector.broadcast %c16_i32_56 : i32 to vector<1x512xi32>
    %142 = arith.cmpi slt, %140, %141 : vector<1x512xi32>
    %143 = arith.andi %138, %142 : vector<1x512xi1>
    %cst_57 = arith.constant 0.000000e+00 : f32
    %144 = vector.shape_cast %143 : vector<1x512xi1> to vector<1x512xi1>
    %145 = vector.broadcast %144 : vector<1x512xi1> to vector<8x512xi1>
    %146 = vector.broadcast %cst_57 : f32 to vector<8x512xf32>
    %147 = arith.select %145, %26, %146 : vector<8x512xi1>, vector<8x512xf32>
    %c511_i32 = arith.constant 511 : i32
    %148 = tpu.dynamic_rotate %26 by %c511_i32 dim 1 : vector<8x512xf32>, i32 -> vector<8x512xf32>
    %c0_i32_58 = arith.constant 0 : i32
    %149 = vector.broadcast %c0_i32_58 : i32 to vector<1x512xi32>
    %150 = arith.addi %4, %149 : vector<1x512xi32>
    %c0_i32_59 = arith.constant 0 : i32
    %151 = vector.broadcast %c0_i32_59 : i32 to vector<1x512xi32>
    %152 = arith.cmpi sge, %150, %151 : vector<1x512xi32>
    %c0_i32_60 = arith.constant 0 : i32
    %153 = vector.broadcast %c0_i32_60 : i32 to vector<1x512xi32>
    %154 = arith.addi %4, %153 : vector<1x512xi32>
    %c16_i32_61 = arith.constant 16 : i32
    %155 = vector.broadcast %c16_i32_61 : i32 to vector<1x512xi32>
    %156 = arith.cmpi slt, %154, %155 : vector<1x512xi32>
    %157 = arith.andi %152, %156 : vector<1x512xi1>
    %c1_i32_62 = arith.constant 1 : i32
    %158 = vector.broadcast %c1_i32_62 : i32 to vector<1x512xi32>
    %159 = arith.addi %6, %158 : vector<1x512xi32>
    %c0_i32_63 = arith.constant 0 : i32
    %160 = vector.broadcast %c0_i32_63 : i32 to vector<1x512xi32>
    %161 = arith.cmpi sge, %159, %160 : vector<1x512xi32>
    %162 = arith.andi %157, %161 : vector<1x512xi1>
    %c1_i32_64 = arith.constant 1 : i32
    %163 = vector.broadcast %c1_i32_64 : i32 to vector<1x512xi32>
    %164 = arith.addi %6, %163 : vector<1x512xi32>
    %c16_i32_65 = arith.constant 16 : i32
    %165 = vector.broadcast %c16_i32_65 : i32 to vector<1x512xi32>
    %166 = arith.cmpi slt, %164, %165 : vector<1x512xi32>
    %167 = arith.andi %162, %166 : vector<1x512xi1>
    %cst_66 = arith.constant 0.000000e+00 : f32
    %168 = vector.shape_cast %167 : vector<1x512xi1> to vector<1x512xi1>
    %169 = vector.broadcast %168 : vector<1x512xi1> to vector<8x512xi1>
    %170 = vector.broadcast %cst_66 : f32 to vector<8x512xf32>
    %171 = arith.select %169, %148, %170 : vector<8x512xi1>, vector<8x512xf32>
    %c497_i32 = arith.constant 497 : i32
    %172 = tpu.dynamic_rotate %26 by %c497_i32 dim 1 : vector<8x512xf32>, i32 -> vector<8x512xf32>
    %c1_i32_67 = arith.constant 1 : i32
    %173 = vector.broadcast %c1_i32_67 : i32 to vector<1x512xi32>
    %174 = arith.addi %4, %173 : vector<1x512xi32>
    %c0_i32_68 = arith.constant 0 : i32
    %175 = vector.broadcast %c0_i32_68 : i32 to vector<1x512xi32>
    %176 = arith.cmpi sge, %174, %175 : vector<1x512xi32>
    %c1_i32_69 = arith.constant 1 : i32
    %177 = vector.broadcast %c1_i32_69 : i32 to vector<1x512xi32>
    %178 = arith.addi %4, %177 : vector<1x512xi32>
    %c16_i32_70 = arith.constant 16 : i32
    %179 = vector.broadcast %c16_i32_70 : i32 to vector<1x512xi32>
    %180 = arith.cmpi slt, %178, %179 : vector<1x512xi32>
    %181 = arith.andi %176, %180 : vector<1x512xi1>
    %c-1_i32_71 = arith.constant -1 : i32
    %182 = vector.broadcast %c-1_i32_71 : i32 to vector<1x512xi32>
    %183 = arith.addi %6, %182 : vector<1x512xi32>
    %c0_i32_72 = arith.constant 0 : i32
    %184 = vector.broadcast %c0_i32_72 : i32 to vector<1x512xi32>
    %185 = arith.cmpi sge, %183, %184 : vector<1x512xi32>
    %186 = arith.andi %181, %185 : vector<1x512xi1>
    %c-1_i32_73 = arith.constant -1 : i32
    %187 = vector.broadcast %c-1_i32_73 : i32 to vector<1x512xi32>
    %188 = arith.addi %6, %187 : vector<1x512xi32>
    %c16_i32_74 = arith.constant 16 : i32
    %189 = vector.broadcast %c16_i32_74 : i32 to vector<1x512xi32>
    %190 = arith.cmpi slt, %188, %189 : vector<1x512xi32>
    %191 = arith.andi %186, %190 : vector<1x512xi1>
    %cst_75 = arith.constant 0.000000e+00 : f32
    %192 = vector.shape_cast %191 : vector<1x512xi1> to vector<1x512xi1>
    %193 = vector.broadcast %192 : vector<1x512xi1> to vector<8x512xi1>
    %194 = vector.broadcast %cst_75 : f32 to vector<8x512xf32>
    %195 = arith.select %193, %172, %194 : vector<8x512xi1>, vector<8x512xf32>
    %c496_i32 = arith.constant 496 : i32
    %196 = tpu.dynamic_rotate %26 by %c496_i32 dim 1 : vector<8x512xf32>, i32 -> vector<8x512xf32>
    %c1_i32_76 = arith.constant 1 : i32
    %197 = vector.broadcast %c1_i32_76 : i32 to vector<1x512xi32>
    %198 = arith.addi %4, %197 : vector<1x512xi32>
    %c0_i32_77 = arith.constant 0 : i32
    %199 = vector.broadcast %c0_i32_77 : i32 to vector<1x512xi32>
    %200 = arith.cmpi sge, %198, %199 : vector<1x512xi32>
    %c1_i32_78 = arith.constant 1 : i32
    %201 = vector.broadcast %c1_i32_78 : i32 to vector<1x512xi32>
    %202 = arith.addi %4, %201 : vector<1x512xi32>
    %c16_i32_79 = arith.constant 16 : i32
    %203 = vector.broadcast %c16_i32_79 : i32 to vector<1x512xi32>
    %204 = arith.cmpi slt, %202, %203 : vector<1x512xi32>
    %205 = arith.andi %200, %204 : vector<1x512xi1>
    %c0_i32_80 = arith.constant 0 : i32
    %206 = vector.broadcast %c0_i32_80 : i32 to vector<1x512xi32>
    %207 = arith.addi %6, %206 : vector<1x512xi32>
    %c0_i32_81 = arith.constant 0 : i32
    %208 = vector.broadcast %c0_i32_81 : i32 to vector<1x512xi32>
    %209 = arith.cmpi sge, %207, %208 : vector<1x512xi32>
    %210 = arith.andi %205, %209 : vector<1x512xi1>
    %c0_i32_82 = arith.constant 0 : i32
    %211 = vector.broadcast %c0_i32_82 : i32 to vector<1x512xi32>
    %212 = arith.addi %6, %211 : vector<1x512xi32>
    %c16_i32_83 = arith.constant 16 : i32
    %213 = vector.broadcast %c16_i32_83 : i32 to vector<1x512xi32>
    %214 = arith.cmpi slt, %212, %213 : vector<1x512xi32>
    %215 = arith.andi %210, %214 : vector<1x512xi1>
    %cst_84 = arith.constant 0.000000e+00 : f32
    %216 = vector.shape_cast %215 : vector<1x512xi1> to vector<1x512xi1>
    %217 = vector.broadcast %216 : vector<1x512xi1> to vector<8x512xi1>
    %218 = vector.broadcast %cst_84 : f32 to vector<8x512xf32>
    %219 = arith.select %217, %196, %218 : vector<8x512xi1>, vector<8x512xf32>
    %c495_i32 = arith.constant 495 : i32
    %220 = tpu.dynamic_rotate %26 by %c495_i32 dim 1 : vector<8x512xf32>, i32 -> vector<8x512xf32>
    %c1_i32_85 = arith.constant 1 : i32
    %221 = vector.broadcast %c1_i32_85 : i32 to vector<1x512xi32>
    %222 = arith.addi %4, %221 : vector<1x512xi32>
    %c0_i32_86 = arith.constant 0 : i32
    %223 = vector.broadcast %c0_i32_86 : i32 to vector<1x512xi32>
    %224 = arith.cmpi sge, %222, %223 : vector<1x512xi32>
    %c1_i32_87 = arith.constant 1 : i32
    %225 = vector.broadcast %c1_i32_87 : i32 to vector<1x512xi32>
    %226 = arith.addi %4, %225 : vector<1x512xi32>
    %c16_i32_88 = arith.constant 16 : i32
    %227 = vector.broadcast %c16_i32_88 : i32 to vector<1x512xi32>
    %228 = arith.cmpi slt, %226, %227 : vector<1x512xi32>
    %229 = arith.andi %224, %228 : vector<1x512xi1>
    %c1_i32_89 = arith.constant 1 : i32
    %230 = vector.broadcast %c1_i32_89 : i32 to vector<1x512xi32>
    %231 = arith.addi %6, %230 : vector<1x512xi32>
    %c0_i32_90 = arith.constant 0 : i32
    %232 = vector.broadcast %c0_i32_90 : i32 to vector<1x512xi32>
    %233 = arith.cmpi sge, %231, %232 : vector<1x512xi32>
    %234 = arith.andi %229, %233 : vector<1x512xi1>
    %c1_i32_91 = arith.constant 1 : i32
    %235 = vector.broadcast %c1_i32_91 : i32 to vector<1x512xi32>
    %236 = arith.addi %6, %235 : vector<1x512xi32>
    %c16_i32_92 = arith.constant 16 : i32
    %237 = vector.broadcast %c16_i32_92 : i32 to vector<1x512xi32>
    %238 = arith.cmpi slt, %236, %237 : vector<1x512xi32>
    %239 = arith.andi %234, %238 : vector<1x512xi1>
    %cst_93 = arith.constant 0.000000e+00 : f32
    %240 = vector.shape_cast %239 : vector<1x512xi1> to vector<1x512xi1>
    %241 = vector.broadcast %240 : vector<1x512xi1> to vector<8x512xi1>
    %242 = vector.broadcast %cst_93 : f32 to vector<8x512xf32>
    %243 = arith.select %241, %220, %242 : vector<8x512xi1>, vector<8x512xf32>
    %244 = tpu.concatenate %52, %76, %100, %124, %147, %171, %195, %219, %243 in 0 : vector<8x512xf32>, vector<8x512xf32>, vector<8x512xf32>, vector<8x512xf32>, vector<8x512xf32>, vector<8x512xf32>, vector<8x512xf32>, vector<8x512xf32>, vector<8x512xf32> -> vector<72x512xf32>
    %cst_94 = arith.constant dense<0.000000e+00> : vector<8x512xf32>
    %245 = tpu.matmul %27, %244, %cst_94 {dimension_numbers = #tpu.dot_dimension_numbers<[1], [0], [0], [1], [0, 0, 1, 1], [], []>} : vector<8x72xf32>, vector<72x512xf32>, vector<8x512xf32> -> vector<8x512xf32>
    %246 = vector.broadcast %28 : vector<8x1xf32> to vector<8x512xf32>
    %247 = arith.addf %245, %246 : vector<8x512xf32>
    %c0_95 = arith.constant 0 : index
    %248 = memref.load %arg1[%c0_95] : memref<9xf32, #tpu.memory_space<smem>>
    %cst_96 = arith.constant 0.000000e+00 : f32
    %249 = vector.broadcast %cst_96 : f32 to vector<8x512xf32>
    %250 = arith.cmpf oge, %247, %249 : vector<8x512xf32>
    %251 = vector.broadcast %248 : f32 to vector<8x512xf32>
    %252 = arith.mulf %251, %247 : vector<8x512xf32>
    %253 = arith.select %250, %247, %252 : vector<8x512xi1>, vector<8x512xf32>
    %c24 = arith.constant 24 : index
    %c0_97 = arith.constant 0 : index
    %254 = vector.load %arg3[%c24, %c0_97] : memref<320x144xf32, #tpu.memory_space<vmem>>, vector<16x72xf32>
    %c0_98 = arith.constant 0 : index
    %c3 = arith.constant 3 : index
    %255 = vector.load %arg4[%c0_98, %c3] : memref<16x32xf32, #tpu.memory_space<vmem>>, vector<16x1xf32>
    %c17_i32_99 = arith.constant 17 : i32
    %256 = tpu.dynamic_rotate %253 by %c17_i32_99 dim 1 : vector<8x512xf32>, i32 -> vector<8x512xf32>
    %c-1_i32_100 = arith.constant -1 : i32
    %257 = vector.broadcast %c-1_i32_100 : i32 to vector<1x512xi32>
    %258 = arith.addi %4, %257 : vector<1x512xi32>
    %c0_i32_101 = arith.constant 0 : i32
    %259 = vector.broadcast %c0_i32_101 : i32 to vector<1x512xi32>
    %260 = arith.cmpi sge, %258, %259 : vector<1x512xi32>
    %c-1_i32_102 = arith.constant -1 : i32
    %261 = vector.broadcast %c-1_i32_102 : i32 to vector<1x512xi32>
    %262 = arith.addi %4, %261 : vector<1x512xi32>
    %c16_i32_103 = arith.constant 16 : i32
    %263 = vector.broadcast %c16_i32_103 : i32 to vector<1x512xi32>
    %264 = arith.cmpi slt, %262, %263 : vector<1x512xi32>
    %265 = arith.andi %260, %264 : vector<1x512xi1>
    %c-1_i32_104 = arith.constant -1 : i32
    %266 = vector.broadcast %c-1_i32_104 : i32 to vector<1x512xi32>
    %267 = arith.addi %6, %266 : vector<1x512xi32>
    %c0_i32_105 = arith.constant 0 : i32
    %268 = vector.broadcast %c0_i32_105 : i32 to vector<1x512xi32>
    %269 = arith.cmpi sge, %267, %268 : vector<1x512xi32>
    %270 = arith.andi %265, %269 : vector<1x512xi1>
    %c-1_i32_106 = arith.constant -1 : i32
    %271 = vector.broadcast %c-1_i32_106 : i32 to vector<1x512xi32>
    %272 = arith.addi %6, %271 : vector<1x512xi32>
    %c16_i32_107 = arith.constant 16 : i32
    %273 = vector.broadcast %c16_i32_107 : i32 to vector<1x512xi32>
    %274 = arith.cmpi slt, %272, %273 : vector<1x512xi32>
    %275 = arith.andi %270, %274 : vector<1x512xi1>
    %cst_108 = arith.constant 0.000000e+00 : f32
    %276 = vector.shape_cast %275 : vector<1x512xi1> to vector<1x512xi1>
    %277 = vector.broadcast %276 : vector<1x512xi1> to vector<8x512xi1>
    %278 = vector.broadcast %cst_108 : f32 to vector<8x512xf32>
    %279 = arith.select %277, %256, %278 : vector<8x512xi1>, vector<8x512xf32>
    %c16_i32_109 = arith.constant 16 : i32
    %280 = tpu.dynamic_rotate %253 by %c16_i32_109 dim 1 : vector<8x512xf32>, i32 -> vector<8x512xf32>
    %c-1_i32_110 = arith.constant -1 : i32
    %281 = vector.broadcast %c-1_i32_110 : i32 to vector<1x512xi32>
    %282 = arith.addi %4, %281 : vector<1x512xi32>
    %c0_i32_111 = arith.constant 0 : i32
    %283 = vector.broadcast %c0_i32_111 : i32 to vector<1x512xi32>
    %284 = arith.cmpi sge, %282, %283 : vector<1x512xi32>
    %c-1_i32_112 = arith.constant -1 : i32
    %285 = vector.broadcast %c-1_i32_112 : i32 to vector<1x512xi32>
    %286 = arith.addi %4, %285 : vector<1x512xi32>
    %c16_i32_113 = arith.constant 16 : i32
    %287 = vector.broadcast %c16_i32_113 : i32 to vector<1x512xi32>
    %288 = arith.cmpi slt, %286, %287 : vector<1x512xi32>
    %289 = arith.andi %284, %288 : vector<1x512xi1>
    %c0_i32_114 = arith.constant 0 : i32
    %290 = vector.broadcast %c0_i32_114 : i32 to vector<1x512xi32>
    %291 = arith.addi %6, %290 : vector<1x512xi32>
    %c0_i32_115 = arith.constant 0 : i32
    %292 = vector.broadcast %c0_i32_115 : i32 to vector<1x512xi32>
    %293 = arith.cmpi sge, %291, %292 : vector<1x512xi32>
    %294 = arith.andi %289, %293 : vector<1x512xi1>
    %c0_i32_116 = arith.constant 0 : i32
    %295 = vector.broadcast %c0_i32_116 : i32 to vector<1x512xi32>
    %296 = arith.addi %6, %295 : vector<1x512xi32>
    %c16_i32_117 = arith.constant 16 : i32
    %297 = vector.broadcast %c16_i32_117 : i32 to vector<1x512xi32>
    %298 = arith.cmpi slt, %296, %297 : vector<1x512xi32>
    %299 = arith.andi %294, %298 : vector<1x512xi1>
    %cst_118 = arith.constant 0.000000e+00 : f32
    %300 = vector.shape_cast %299 : vector<1x512xi1> to vector<1x512xi1>
    %301 = vector.broadcast %300 : vector<1x512xi1> to vector<8x512xi1>
    %302 = vector.broadcast %cst_118 : f32 to vector<8x512xf32>
    %303 = arith.select %301, %280, %302 : vector<8x512xi1>, vector<8x512xf32>
    %c15_i32_119 = arith.constant 15 : i32
    %304 = tpu.dynamic_rotate %253 by %c15_i32_119 dim 1 : vector<8x512xf32>, i32 -> vector<8x512xf32>
    %c-1_i32_120 = arith.constant -1 : i32
    %305 = vector.broadcast %c-1_i32_120 : i32 to vector<1x512xi32>
    %306 = arith.addi %4, %305 : vector<1x512xi32>
    %c0_i32_121 = arith.constant 0 : i32
    %307 = vector.broadcast %c0_i32_121 : i32 to vector<1x512xi32>
    %308 = arith.cmpi sge, %306, %307 : vector<1x512xi32>
    %c-1_i32_122 = arith.constant -1 : i32
    %309 = vector.broadcast %c-1_i32_122 : i32 to vector<1x512xi32>
    %310 = arith.addi %4, %309 : vector<1x512xi32>
    %c16_i32_123 = arith.constant 16 : i32
    %311 = vector.broadcast %c16_i32_123 : i32 to vector<1x512xi32>
    %312 = arith.cmpi slt, %310, %311 : vector<1x512xi32>
    %313 = arith.andi %308, %312 : vector<1x512xi1>
    %c1_i32_124 = arith.constant 1 : i32
    %314 = vector.broadcast %c1_i32_124 : i32 to vector<1x512xi32>
    %315 = arith.addi %6, %314 : vector<1x512xi32>
    %c0_i32_125 = arith.constant 0 : i32
    %316 = vector.broadcast %c0_i32_125 : i32 to vector<1x512xi32>
    %317 = arith.cmpi sge, %315, %316 : vector<1x512xi32>
    %318 = arith.andi %313, %317 : vector<1x512xi1>
    %c1_i32_126 = arith.constant 1 : i32
    %319 = vector.broadcast %c1_i32_126 : i32 to vector<1x512xi32>
    %320 = arith.addi %6, %319 : vector<1x512xi32>
    %c16_i32_127 = arith.constant 16 : i32
    %321 = vector.broadcast %c16_i32_127 : i32 to vector<1x512xi32>
    %322 = arith.cmpi slt, %320, %321 : vector<1x512xi32>
    %323 = arith.andi %318, %322 : vector<1x512xi1>
    %cst_128 = arith.constant 0.000000e+00 : f32
    %324 = vector.shape_cast %323 : vector<1x512xi1> to vector<1x512xi1>
    %325 = vector.broadcast %324 : vector<1x512xi1> to vector<8x512xi1>
    %326 = vector.broadcast %cst_128 : f32 to vector<8x512xf32>
    %327 = arith.select %325, %304, %326 : vector<8x512xi1>, vector<8x512xf32>
    %c1_i32_129 = arith.constant 1 : i32
    %328 = tpu.dynamic_rotate %253 by %c1_i32_129 dim 1 : vector<8x512xf32>, i32 -> vector<8x512xf32>
    %c0_i32_130 = arith.constant 0 : i32
    %329 = vector.broadcast %c0_i32_130 : i32 to vector<1x512xi32>
    %330 = arith.addi %4, %329 : vector<1x512xi32>
    %c0_i32_131 = arith.constant 0 : i32
    %331 = vector.broadcast %c0_i32_131 : i32 to vector<1x512xi32>
    %332 = arith.cmpi sge, %330, %331 : vector<1x512xi32>
    %c0_i32_132 = arith.constant 0 : i32
    %333 = vector.broadcast %c0_i32_132 : i32 to vector<1x512xi32>
    %334 = arith.addi %4, %333 : vector<1x512xi32>
    %c16_i32_133 = arith.constant 16 : i32
    %335 = vector.broadcast %c16_i32_133 : i32 to vector<1x512xi32>
    %336 = arith.cmpi slt, %334, %335 : vector<1x512xi32>
    %337 = arith.andi %332, %336 : vector<1x512xi1>
    %c-1_i32_134 = arith.constant -1 : i32
    %338 = vector.broadcast %c-1_i32_134 : i32 to vector<1x512xi32>
    %339 = arith.addi %6, %338 : vector<1x512xi32>
    %c0_i32_135 = arith.constant 0 : i32
    %340 = vector.broadcast %c0_i32_135 : i32 to vector<1x512xi32>
    %341 = arith.cmpi sge, %339, %340 : vector<1x512xi32>
    %342 = arith.andi %337, %341 : vector<1x512xi1>
    %c-1_i32_136 = arith.constant -1 : i32
    %343 = vector.broadcast %c-1_i32_136 : i32 to vector<1x512xi32>
    %344 = arith.addi %6, %343 : vector<1x512xi32>
    %c16_i32_137 = arith.constant 16 : i32
    %345 = vector.broadcast %c16_i32_137 : i32 to vector<1x512xi32>
    %346 = arith.cmpi slt, %344, %345 : vector<1x512xi32>
    %347 = arith.andi %342, %346 : vector<1x512xi1>
    %cst_138 = arith.constant 0.000000e+00 : f32
    %348 = vector.shape_cast %347 : vector<1x512xi1> to vector<1x512xi1>
    %349 = vector.broadcast %348 : vector<1x512xi1> to vector<8x512xi1>
    %350 = vector.broadcast %cst_138 : f32 to vector<8x512xf32>
    %351 = arith.select %349, %328, %350 : vector<8x512xi1>, vector<8x512xf32>
    %c0_i32_139 = arith.constant 0 : i32
    %352 = vector.broadcast %c0_i32_139 : i32 to vector<1x512xi32>
    %353 = arith.addi %4, %352 : vector<1x512xi32>
    %c0_i32_140 = arith.constant 0 : i32
    %354 = vector.broadcast %c0_i32_140 : i32 to vector<1x512xi32>
    %355 = arith.cmpi sge, %353, %354 : vector<1x512xi32>
    %c0_i32_141 = arith.constant 0 : i32
    %356 = vector.broadcast %c0_i32_141 : i32 to vector<1x512xi32>
    %357 = arith.addi %4, %356 : vector<1x512xi32>
    %c16_i32_142 = arith.constant 16 : i32
    %358 = vector.broadcast %c16_i32_142 : i32 to vector<1x512xi32>
    %359 = arith.cmpi slt, %357, %358 : vector<1x512xi32>
    %360 = arith.andi %355, %359 : vector<1x512xi1>
    %c0_i32_143 = arith.constant 0 : i32
    %361 = vector.broadcast %c0_i32_143 : i32 to vector<1x512xi32>
    %362 = arith.addi %6, %361 : vector<1x512xi32>
    %c0_i32_144 = arith.constant 0 : i32
    %363 = vector.broadcast %c0_i32_144 : i32 to vector<1x512xi32>
    %364 = arith.cmpi sge, %362, %363 : vector<1x512xi32>
    %365 = arith.andi %360, %364 : vector<1x512xi1>
    %c0_i32_145 = arith.constant 0 : i32
    %366 = vector.broadcast %c0_i32_145 : i32 to vector<1x512xi32>
    %367 = arith.addi %6, %366 : vector<1x512xi32>
    %c16_i32_146 = arith.constant 16 : i32
    %368 = vector.broadcast %c16_i32_146 : i32 to vector<1x512xi32>
    %369 = arith.cmpi slt, %367, %368 : vector<1x512xi32>
    %370 = arith.andi %365, %369 : vector<1x512xi1>
    %cst_147 = arith.constant 0.000000e+00 : f32
    %371 = vector.shape_cast %370 : vector<1x512xi1> to vector<1x512xi1>
    %372 = vector.broadcast %371 : vector<1x512xi1> to vector<8x512xi1>
    %373 = vector.broadcast %cst_147 : f32 to vector<8x512xf32>
    %374 = arith.select %372, %253, %373 : vector<8x512xi1>, vector<8x512xf32>
    %c511_i32_148 = arith.constant 511 : i32
    %375 = tpu.dynamic_rotate %253 by %c511_i32_148 dim 1 : vector<8x512xf32>, i32 -> vector<8x512xf32>
    %c0_i32_149 = arith.constant 0 : i32
    %376 = vector.broadcast %c0_i32_149 : i32 to vector<1x512xi32>
    %377 = arith.addi %4, %376 : vector<1x512xi32>
    %c0_i32_150 = arith.constant 0 : i32
    %378 = vector.broadcast %c0_i32_150 : i32 to vector<1x512xi32>
    %379 = arith.cmpi sge, %377, %378 : vector<1x512xi32>
    %c0_i32_151 = arith.constant 0 : i32
    %380 = vector.broadcast %c0_i32_151 : i32 to vector<1x512xi32>
    %381 = arith.addi %4, %380 : vector<1x512xi32>
    %c16_i32_152 = arith.constant 16 : i32
    %382 = vector.broadcast %c16_i32_152 : i32 to vector<1x512xi32>
    %383 = arith.cmpi slt, %381, %382 : vector<1x512xi32>
    %384 = arith.andi %379, %383 : vector<1x512xi1>
    %c1_i32_153 = arith.constant 1 : i32
    %385 = vector.broadcast %c1_i32_153 : i32 to vector<1x512xi32>
    %386 = arith.addi %6, %385 : vector<1x512xi32>
    %c0_i32_154 = arith.constant 0 : i32
    %387 = vector.broadcast %c0_i32_154 : i32 to vector<1x512xi32>
    %388 = arith.cmpi sge, %386, %387 : vector<1x512xi32>
    %389 = arith.andi %384, %388 : vector<1x512xi1>
    %c1_i32_155 = arith.constant 1 : i32
    %390 = vector.broadcast %c1_i32_155 : i32 to vector<1x512xi32>
    %391 = arith.addi %6, %390 : vector<1x512xi32>
    %c16_i32_156 = arith.constant 16 : i32
    %392 = vector.broadcast %c16_i32_156 : i32 to vector<1x512xi32>
    %393 = arith.cmpi slt, %391, %392 : vector<1x512xi32>
    %394 = arith.andi %389, %393 : vector<1x512xi1>
    %cst_157 = arith.constant 0.000000e+00 : f32
    %395 = vector.shape_cast %394 : vector<1x512xi1> to vector<1x512xi1>
    %396 = vector.broadcast %395 : vector<1x512xi1> to vector<8x512xi1>
    %397 = vector.broadcast %cst_157 : f32 to vector<8x512xf32>
    %398 = arith.select %396, %375, %397 : vector<8x512xi1>, vector<8x512xf32>
    %c497_i32_158 = arith.constant 497 : i32
    %399 = tpu.dynamic_rotate %253 by %c497_i32_158 dim 1 : vector<8x512xf32>, i32 -> vector<8x512xf32>
    %c1_i32_159 = arith.constant 1 : i32
    %400 = vector.broadcast %c1_i32_159 : i32 to vector<1x512xi32>
    %401 = arith.addi %4, %400 : vector<1x512xi32>
    %c0_i32_160 = arith.constant 0 : i32
    %402 = vector.broadcast %c0_i32_160 : i32 to vector<1x512xi32>
    %403 = arith.cmpi sge, %401, %402 : vector<1x512xi32>
    %c1_i32_161 = arith.constant 1 : i32
    %404 = vector.broadcast %c1_i32_161 : i32 to vector<1x512xi32>
    %405 = arith.addi %4, %404 : vector<1x512xi32>
    %c16_i32_162 = arith.constant 16 : i32
    %406 = vector.broadcast %c16_i32_162 : i32 to vector<1x512xi32>
    %407 = arith.cmpi slt, %405, %406 : vector<1x512xi32>
    %408 = arith.andi %403, %407 : vector<1x512xi1>
    %c-1_i32_163 = arith.constant -1 : i32
    %409 = vector.broadcast %c-1_i32_163 : i32 to vector<1x512xi32>
    %410 = arith.addi %6, %409 : vector<1x512xi32>
    %c0_i32_164 = arith.constant 0 : i32
    %411 = vector.broadcast %c0_i32_164 : i32 to vector<1x512xi32>
    %412 = arith.cmpi sge, %410, %411 : vector<1x512xi32>
    %413 = arith.andi %408, %412 : vector<1x512xi1>
    %c-1_i32_165 = arith.constant -1 : i32
    %414 = vector.broadcast %c-1_i32_165 : i32 to vector<1x512xi32>
    %415 = arith.addi %6, %414 : vector<1x512xi32>
    %c16_i32_166 = arith.constant 16 : i32
    %416 = vector.broadcast %c16_i32_166 : i32 to vector<1x512xi32>
    %417 = arith.cmpi slt, %415, %416 : vector<1x512xi32>
    %418 = arith.andi %413, %417 : vector<1x512xi1>
    %cst_167 = arith.constant 0.000000e+00 : f32
    %419 = vector.shape_cast %418 : vector<1x512xi1> to vector<1x512xi1>
    %420 = vector.broadcast %419 : vector<1x512xi1> to vector<8x512xi1>
    %421 = vector.broadcast %cst_167 : f32 to vector<8x512xf32>
    %422 = arith.select %420, %399, %421 : vector<8x512xi1>, vector<8x512xf32>
    %c496_i32_168 = arith.constant 496 : i32
    %423 = tpu.dynamic_rotate %253 by %c496_i32_168 dim 1 : vector<8x512xf32>, i32 -> vector<8x512xf32>
    %c1_i32_169 = arith.constant 1 : i32
    %424 = vector.broadcast %c1_i32_169 : i32 to vector<1x512xi32>
    %425 = arith.addi %4, %424 : vector<1x512xi32>
    %c0_i32_170 = arith.constant 0 : i32
    %426 = vector.broadcast %c0_i32_170 : i32 to vector<1x512xi32>
    %427 = arith.cmpi sge, %425, %426 : vector<1x512xi32>
    %c1_i32_171 = arith.constant 1 : i32
    %428 = vector.broadcast %c1_i32_171 : i32 to vector<1x512xi32>
    %429 = arith.addi %4, %428 : vector<1x512xi32>
    %c16_i32_172 = arith.constant 16 : i32
    %430 = vector.broadcast %c16_i32_172 : i32 to vector<1x512xi32>
    %431 = arith.cmpi slt, %429, %430 : vector<1x512xi32>
    %432 = arith.andi %427, %431 : vector<1x512xi1>
    %c0_i32_173 = arith.constant 0 : i32
    %433 = vector.broadcast %c0_i32_173 : i32 to vector<1x512xi32>
    %434 = arith.addi %6, %433 : vector<1x512xi32>
    %c0_i32_174 = arith.constant 0 : i32
    %435 = vector.broadcast %c0_i32_174 : i32 to vector<1x512xi32>
    %436 = arith.cmpi sge, %434, %435 : vector<1x512xi32>
    %437 = arith.andi %432, %436 : vector<1x512xi1>
    %c0_i32_175 = arith.constant 0 : i32
    %438 = vector.broadcast %c0_i32_175 : i32 to vector<1x512xi32>
    %439 = arith.addi %6, %438 : vector<1x512xi32>
    %c16_i32_176 = arith.constant 16 : i32
    %440 = vector.broadcast %c16_i32_176 : i32 to vector<1x512xi32>
    %441 = arith.cmpi slt, %439, %440 : vector<1x512xi32>
    %442 = arith.andi %437, %441 : vector<1x512xi1>
    %cst_177 = arith.constant 0.000000e+00 : f32
    %443 = vector.shape_cast %442 : vector<1x512xi1> to vector<1x512xi1>
    %444 = vector.broadcast %443 : vector<1x512xi1> to vector<8x512xi1>
    %445 = vector.broadcast %cst_177 : f32 to vector<8x512xf32>
    %446 = arith.select %444, %423, %445 : vector<8x512xi1>, vector<8x512xf32>
    %c495_i32_178 = arith.constant 495 : i32
    %447 = tpu.dynamic_rotate %253 by %c495_i32_178 dim 1 : vector<8x512xf32>, i32 -> vector<8x512xf32>
    %c1_i32_179 = arith.constant 1 : i32
    %448 = vector.broadcast %c1_i32_179 : i32 to vector<1x512xi32>
    %449 = arith.addi %4, %448 : vector<1x512xi32>
    %c0_i32_180 = arith.constant 0 : i32
    %450 = vector.broadcast %c0_i32_180 : i32 to vector<1x512xi32>
    %451 = arith.cmpi sge, %449, %450 : vector<1x512xi32>
    %c1_i32_181 = arith.constant 1 : i32
    %452 = vector.broadcast %c1_i32_181 : i32 to vector<1x512xi32>
    %453 = arith.addi %4, %452 : vector<1x512xi32>
    %c16_i32_182 = arith.constant 16 : i32
    %454 = vector.broadcast %c16_i32_182 : i32 to vector<1x512xi32>
    %455 = arith.cmpi slt, %453, %454 : vector<1x512xi32>
    %456 = arith.andi %451, %455 : vector<1x512xi1>
    %c1_i32_183 = arith.constant 1 : i32
    %457 = vector.broadcast %c1_i32_183 : i32 to vector<1x512xi32>
    %458 = arith.addi %6, %457 : vector<1x512xi32>
    %c0_i32_184 = arith.constant 0 : i32
    %459 = vector.broadcast %c0_i32_184 : i32 to vector<1x512xi32>
    %460 = arith.cmpi sge, %458, %459 : vector<1x512xi32>
    %461 = arith.andi %456, %460 : vector<1x512xi1>
    %c1_i32_185 = arith.constant 1 : i32
    %462 = vector.broadcast %c1_i32_185 : i32 to vector<1x512xi32>
    %463 = arith.addi %6, %462 : vector<1x512xi32>
    %c16_i32_186 = arith.constant 16 : i32
    %464 = vector.broadcast %c16_i32_186 : i32 to vector<1x512xi32>
    %465 = arith.cmpi slt, %463, %464 : vector<1x512xi32>
    %466 = arith.andi %461, %465 : vector<1x512xi1>
    %cst_187 = arith.constant 0.000000e+00 : f32
    %467 = vector.shape_cast %466 : vector<1x512xi1> to vector<1x512xi1>
    %468 = vector.broadcast %467 : vector<1x512xi1> to vector<8x512xi1>
    %469 = vector.broadcast %cst_187 : f32 to vector<8x512xf32>
    %470 = arith.select %468, %447, %469 : vector<8x512xi1>, vector<8x512xf32>
    %471 = tpu.concatenate %279, %303, %327, %351, %374, %398, %422, %446, %470 in 0 : vector<8x512xf32>, vector<8x512xf32>, vector<8x512xf32>, vector<8x512xf32>, vector<8x512xf32>, vector<8x512xf32>, vector<8x512xf32>, vector<8x512xf32>, vector<8x512xf32> -> vector<72x512xf32>
    %cst_188 = arith.constant dense<0.000000e+00> : vector<16x512xf32>
    %472 = tpu.matmul %254, %471, %cst_188 {dimension_numbers = #tpu.dot_dimension_numbers<[1], [0], [0], [1], [0, 0, 1, 1], [], []>} : vector<16x72xf32>, vector<72x512xf32>, vector<16x512xf32> -> vector<16x512xf32>
    %473 = vector.broadcast %255 : vector<16x1xf32> to vector<16x512xf32>
    %474 = arith.addf %472, %473 : vector<16x512xf32>
    %c1_189 = arith.constant 1 : index
    %475 = memref.load %arg1[%c1_189] : memref<9xf32, #tpu.memory_space<smem>>
    %cst_190 = arith.constant 0.000000e+00 : f32
    %476 = vector.broadcast %cst_190 : f32 to vector<16x512xf32>
    %477 = arith.cmpf oge, %474, %476 : vector<16x512xf32>
    %478 = vector.broadcast %475 : f32 to vector<16x512xf32>
    %479 = arith.mulf %478, %474 : vector<16x512xf32>
    %480 = arith.select %477, %474, %479 : vector<16x512xi1>, vector<16x512xf32>
    %c0_191 = arith.constant 0 : index
    %c4 = arith.constant 4 : index
    %481 = vector.load %arg4[%c0_191, %c4] : memref<16x32xf32, #tpu.memory_space<vmem>>, vector<16x1xf32>
    %482 = vector.broadcast %481 : vector<16x1xf32> to vector<16x512xf32>
    %483 = arith.mulf %480, %482 : vector<16x512xf32>
    %c0_192 = arith.constant 0 : index
    %c5 = arith.constant 5 : index
    %484 = vector.load %arg4[%c0_192, %c5] : memref<16x32xf32, #tpu.memory_space<vmem>>, vector<16x1xf32>
    %485 = vector.broadcast %484 : vector<16x1xf32> to vector<16x512xf32>
    %486 = arith.addf %483, %485 : vector<16x512xf32>
    %c40 = arith.constant 40 : index
    %c0_193 = arith.constant 0 : index
    %487 = vector.load %arg3[%c40, %c0_193] : memref<320x144xf32, #tpu.memory_space<vmem>>, vector<8x16xf32>
    %cst_194 = arith.constant dense<0.000000e+00> : vector<8x512xf32>
    %488 = tpu.matmul %487, %486, %cst_194 {dimension_numbers = #tpu.dot_dimension_numbers<[1], [0], [0], [1], [0, 0, 1, 1], [], []>} : vector<8x16xf32>, vector<16x512xf32>, vector<8x512xf32> -> vector<8x512xf32>
    %c0_195 = arith.constant 0 : index
    %c6 = arith.constant 6 : index
    %489 = vector.load %arg4[%c0_195, %c6] : memref<16x32xf32, #tpu.memory_space<vmem>>, vector<8x1xf32>
    %490 = vector.broadcast %489 : vector<8x1xf32> to vector<8x512xf32>
    %491 = arith.addf %488, %490 : vector<8x512xf32>
    %c48 = arith.constant 48 : index
    %c0_196 = arith.constant 0 : index
    %492 = vector.load %arg3[%c48, %c0_196] : memref<320x144xf32, #tpu.memory_space<vmem>>, vector<8x8xf32>
    %cst_197 = arith.constant dense<0.000000e+00> : vector<8x512xf32>
    %493 = tpu.matmul %492, %491, %cst_197 {dimension_numbers = #tpu.dot_dimension_numbers<[1], [0], [0], [1], [0, 0, 1, 1], [], []>} : vector<8x8xf32>, vector<8x512xf32>, vector<8x512xf32> -> vector<8x512xf32>
    %c0_198 = arith.constant 0 : index
    %c7 = arith.constant 7 : index
    %494 = vector.load %arg4[%c0_198, %c7] : memref<16x32xf32, #tpu.memory_space<vmem>>, vector<8x1xf32>
    %495 = vector.broadcast %494 : vector<8x1xf32> to vector<8x512xf32>
    %496 = arith.addf %493, %495 : vector<8x512xf32>
    %c17_i32_199 = arith.constant 17 : i32
    %497 = tpu.dynamic_rotate %496 by %c17_i32_199 dim 1 : vector<8x512xf32>, i32 -> vector<8x512xf32>
    %c-1_i32_200 = arith.constant -1 : i32
    %498 = vector.broadcast %c-1_i32_200 : i32 to vector<1x512xi32>
    %499 = arith.addi %4, %498 : vector<1x512xi32>
    %c0_i32_201 = arith.constant 0 : i32
    %500 = vector.broadcast %c0_i32_201 : i32 to vector<1x512xi32>
    %501 = arith.cmpi sge, %499, %500 : vector<1x512xi32>
    %c-1_i32_202 = arith.constant -1 : i32
    %502 = vector.broadcast %c-1_i32_202 : i32 to vector<1x512xi32>
    %503 = arith.addi %4, %502 : vector<1x512xi32>
    %c16_i32_203 = arith.constant 16 : i32
    %504 = vector.broadcast %c16_i32_203 : i32 to vector<1x512xi32>
    %505 = arith.cmpi slt, %503, %504 : vector<1x512xi32>
    %506 = arith.andi %501, %505 : vector<1x512xi1>
    %c-1_i32_204 = arith.constant -1 : i32
    %507 = vector.broadcast %c-1_i32_204 : i32 to vector<1x512xi32>
    %508 = arith.addi %6, %507 : vector<1x512xi32>
    %c0_i32_205 = arith.constant 0 : i32
    %509 = vector.broadcast %c0_i32_205 : i32 to vector<1x512xi32>
    %510 = arith.cmpi sge, %508, %509 : vector<1x512xi32>
    %511 = arith.andi %506, %510 : vector<1x512xi1>
    %c-1_i32_206 = arith.constant -1 : i32
    %512 = vector.broadcast %c-1_i32_206 : i32 to vector<1x512xi32>
    %513 = arith.addi %6, %512 : vector<1x512xi32>
    %c16_i32_207 = arith.constant 16 : i32
    %514 = vector.broadcast %c16_i32_207 : i32 to vector<1x512xi32>
    %515 = arith.cmpi slt, %513, %514 : vector<1x512xi32>
    %516 = arith.andi %511, %515 : vector<1x512xi1>
    %cst_208 = arith.constant -3.000000e+38 : f32
    %517 = vector.shape_cast %516 : vector<1x512xi1> to vector<1x512xi1>
    %518 = vector.broadcast %517 : vector<1x512xi1> to vector<8x512xi1>
    %519 = vector.broadcast %cst_208 : f32 to vector<8x512xf32>
    %520 = arith.select %518, %497, %519 : vector<8x512xi1>, vector<8x512xf32>
    %c16_i32_209 = arith.constant 16 : i32
    %521 = tpu.dynamic_rotate %496 by %c16_i32_209 dim 1 : vector<8x512xf32>, i32 -> vector<8x512xf32>
    %c-1_i32_210 = arith.constant -1 : i32
    %522 = vector.broadcast %c-1_i32_210 : i32 to vector<1x512xi32>
    %523 = arith.addi %4, %522 : vector<1x512xi32>
    %c0_i32_211 = arith.constant 0 : i32
    %524 = vector.broadcast %c0_i32_211 : i32 to vector<1x512xi32>
    %525 = arith.cmpi sge, %523, %524 : vector<1x512xi32>
    %c-1_i32_212 = arith.constant -1 : i32
    %526 = vector.broadcast %c-1_i32_212 : i32 to vector<1x512xi32>
    %527 = arith.addi %4, %526 : vector<1x512xi32>
    %c16_i32_213 = arith.constant 16 : i32
    %528 = vector.broadcast %c16_i32_213 : i32 to vector<1x512xi32>
    %529 = arith.cmpi slt, %527, %528 : vector<1x512xi32>
    %530 = arith.andi %525, %529 : vector<1x512xi1>
    %c0_i32_214 = arith.constant 0 : i32
    %531 = vector.broadcast %c0_i32_214 : i32 to vector<1x512xi32>
    %532 = arith.addi %6, %531 : vector<1x512xi32>
    %c0_i32_215 = arith.constant 0 : i32
    %533 = vector.broadcast %c0_i32_215 : i32 to vector<1x512xi32>
    %534 = arith.cmpi sge, %532, %533 : vector<1x512xi32>
    %535 = arith.andi %530, %534 : vector<1x512xi1>
    %c0_i32_216 = arith.constant 0 : i32
    %536 = vector.broadcast %c0_i32_216 : i32 to vector<1x512xi32>
    %537 = arith.addi %6, %536 : vector<1x512xi32>
    %c16_i32_217 = arith.constant 16 : i32
    %538 = vector.broadcast %c16_i32_217 : i32 to vector<1x512xi32>
    %539 = arith.cmpi slt, %537, %538 : vector<1x512xi32>
    %540 = arith.andi %535, %539 : vector<1x512xi1>
    %cst_218 = arith.constant -3.000000e+38 : f32
    %541 = vector.shape_cast %540 : vector<1x512xi1> to vector<1x512xi1>
    %542 = vector.broadcast %541 : vector<1x512xi1> to vector<8x512xi1>
    %543 = vector.broadcast %cst_218 : f32 to vector<8x512xf32>
    %544 = arith.select %542, %521, %543 : vector<8x512xi1>, vector<8x512xf32>
    %c15_i32_219 = arith.constant 15 : i32
    %545 = tpu.dynamic_rotate %496 by %c15_i32_219 dim 1 : vector<8x512xf32>, i32 -> vector<8x512xf32>
    %c-1_i32_220 = arith.constant -1 : i32
    %546 = vector.broadcast %c-1_i32_220 : i32 to vector<1x512xi32>
    %547 = arith.addi %4, %546 : vector<1x512xi32>
    %c0_i32_221 = arith.constant 0 : i32
    %548 = vector.broadcast %c0_i32_221 : i32 to vector<1x512xi32>
    %549 = arith.cmpi sge, %547, %548 : vector<1x512xi32>
    %c-1_i32_222 = arith.constant -1 : i32
    %550 = vector.broadcast %c-1_i32_222 : i32 to vector<1x512xi32>
    %551 = arith.addi %4, %550 : vector<1x512xi32>
    %c16_i32_223 = arith.constant 16 : i32
    %552 = vector.broadcast %c16_i32_223 : i32 to vector<1x512xi32>
    %553 = arith.cmpi slt, %551, %552 : vector<1x512xi32>
    %554 = arith.andi %549, %553 : vector<1x512xi1>
    %c1_i32_224 = arith.constant 1 : i32
    %555 = vector.broadcast %c1_i32_224 : i32 to vector<1x512xi32>
    %556 = arith.addi %6, %555 : vector<1x512xi32>
    %c0_i32_225 = arith.constant 0 : i32
    %557 = vector.broadcast %c0_i32_225 : i32 to vector<1x512xi32>
    %558 = arith.cmpi sge, %556, %557 : vector<1x512xi32>
    %559 = arith.andi %554, %558 : vector<1x512xi1>
    %c1_i32_226 = arith.constant 1 : i32
    %560 = vector.broadcast %c1_i32_226 : i32 to vector<1x512xi32>
    %561 = arith.addi %6, %560 : vector<1x512xi32>
    %c16_i32_227 = arith.constant 16 : i32
    %562 = vector.broadcast %c16_i32_227 : i32 to vector<1x512xi32>
    %563 = arith.cmpi slt, %561, %562 : vector<1x512xi32>
    %564 = arith.andi %559, %563 : vector<1x512xi1>
    %cst_228 = arith.constant -3.000000e+38 : f32
    %565 = vector.shape_cast %564 : vector<1x512xi1> to vector<1x512xi1>
    %566 = vector.broadcast %565 : vector<1x512xi1> to vector<8x512xi1>
    %567 = vector.broadcast %cst_228 : f32 to vector<8x512xf32>
    %568 = arith.select %566, %545, %567 : vector<8x512xi1>, vector<8x512xf32>
    %c1_i32_229 = arith.constant 1 : i32
    %569 = tpu.dynamic_rotate %496 by %c1_i32_229 dim 1 : vector<8x512xf32>, i32 -> vector<8x512xf32>
    %c0_i32_230 = arith.constant 0 : i32
    %570 = vector.broadcast %c0_i32_230 : i32 to vector<1x512xi32>
    %571 = arith.addi %4, %570 : vector<1x512xi32>
    %c0_i32_231 = arith.constant 0 : i32
    %572 = vector.broadcast %c0_i32_231 : i32 to vector<1x512xi32>
    %573 = arith.cmpi sge, %571, %572 : vector<1x512xi32>
    %c0_i32_232 = arith.constant 0 : i32
    %574 = vector.broadcast %c0_i32_232 : i32 to vector<1x512xi32>
    %575 = arith.addi %4, %574 : vector<1x512xi32>
    %c16_i32_233 = arith.constant 16 : i32
    %576 = vector.broadcast %c16_i32_233 : i32 to vector<1x512xi32>
    %577 = arith.cmpi slt, %575, %576 : vector<1x512xi32>
    %578 = arith.andi %573, %577 : vector<1x512xi1>
    %c-1_i32_234 = arith.constant -1 : i32
    %579 = vector.broadcast %c-1_i32_234 : i32 to vector<1x512xi32>
    %580 = arith.addi %6, %579 : vector<1x512xi32>
    %c0_i32_235 = arith.constant 0 : i32
    %581 = vector.broadcast %c0_i32_235 : i32 to vector<1x512xi32>
    %582 = arith.cmpi sge, %580, %581 : vector<1x512xi32>
    %583 = arith.andi %578, %582 : vector<1x512xi1>
    %c-1_i32_236 = arith.constant -1 : i32
    %584 = vector.broadcast %c-1_i32_236 : i32 to vector<1x512xi32>
    %585 = arith.addi %6, %584 : vector<1x512xi32>
    %c16_i32_237 = arith.constant 16 : i32
    %586 = vector.broadcast %c16_i32_237 : i32 to vector<1x512xi32>
    %587 = arith.cmpi slt, %585, %586 : vector<1x512xi32>
    %588 = arith.andi %583, %587 : vector<1x512xi1>
    %cst_238 = arith.constant -3.000000e+38 : f32
    %589 = vector.shape_cast %588 : vector<1x512xi1> to vector<1x512xi1>
    %590 = vector.broadcast %589 : vector<1x512xi1> to vector<8x512xi1>
    %591 = vector.broadcast %cst_238 : f32 to vector<8x512xf32>
    %592 = arith.select %590, %569, %591 : vector<8x512xi1>, vector<8x512xf32>
    %c0_i32_239 = arith.constant 0 : i32
    %593 = vector.broadcast %c0_i32_239 : i32 to vector<1x512xi32>
    %594 = arith.addi %4, %593 : vector<1x512xi32>
    %c0_i32_240 = arith.constant 0 : i32
    %595 = vector.broadcast %c0_i32_240 : i32 to vector<1x512xi32>
    %596 = arith.cmpi sge, %594, %595 : vector<1x512xi32>
    %c0_i32_241 = arith.constant 0 : i32
    %597 = vector.broadcast %c0_i32_241 : i32 to vector<1x512xi32>
    %598 = arith.addi %4, %597 : vector<1x512xi32>
    %c16_i32_242 = arith.constant 16 : i32
    %599 = vector.broadcast %c16_i32_242 : i32 to vector<1x512xi32>
    %600 = arith.cmpi slt, %598, %599 : vector<1x512xi32>
    %601 = arith.andi %596, %600 : vector<1x512xi1>
    %c0_i32_243 = arith.constant 0 : i32
    %602 = vector.broadcast %c0_i32_243 : i32 to vector<1x512xi32>
    %603 = arith.addi %6, %602 : vector<1x512xi32>
    %c0_i32_244 = arith.constant 0 : i32
    %604 = vector.broadcast %c0_i32_244 : i32 to vector<1x512xi32>
    %605 = arith.cmpi sge, %603, %604 : vector<1x512xi32>
    %606 = arith.andi %601, %605 : vector<1x512xi1>
    %c0_i32_245 = arith.constant 0 : i32
    %607 = vector.broadcast %c0_i32_245 : i32 to vector<1x512xi32>
    %608 = arith.addi %6, %607 : vector<1x512xi32>
    %c16_i32_246 = arith.constant 16 : i32
    %609 = vector.broadcast %c16_i32_246 : i32 to vector<1x512xi32>
    %610 = arith.cmpi slt, %608, %609 : vector<1x512xi32>
    %611 = arith.andi %606, %610 : vector<1x512xi1>
    %cst_247 = arith.constant -3.000000e+38 : f32
    %612 = vector.shape_cast %611 : vector<1x512xi1> to vector<1x512xi1>
    %613 = vector.broadcast %612 : vector<1x512xi1> to vector<8x512xi1>
    %614 = vector.broadcast %cst_247 : f32 to vector<8x512xf32>
    %615 = arith.select %613, %496, %614 : vector<8x512xi1>, vector<8x512xf32>
    %c511_i32_248 = arith.constant 511 : i32
    %616 = tpu.dynamic_rotate %496 by %c511_i32_248 dim 1 : vector<8x512xf32>, i32 -> vector<8x512xf32>
    %c0_i32_249 = arith.constant 0 : i32
    %617 = vector.broadcast %c0_i32_249 : i32 to vector<1x512xi32>
    %618 = arith.addi %4, %617 : vector<1x512xi32>
    %c0_i32_250 = arith.constant 0 : i32
    %619 = vector.broadcast %c0_i32_250 : i32 to vector<1x512xi32>
    %620 = arith.cmpi sge, %618, %619 : vector<1x512xi32>
    %c0_i32_251 = arith.constant 0 : i32
    %621 = vector.broadcast %c0_i32_251 : i32 to vector<1x512xi32>
    %622 = arith.addi %4, %621 : vector<1x512xi32>
    %c16_i32_252 = arith.constant 16 : i32
    %623 = vector.broadcast %c16_i32_252 : i32 to vector<1x512xi32>
    %624 = arith.cmpi slt, %622, %623 : vector<1x512xi32>
    %625 = arith.andi %620, %624 : vector<1x512xi1>
    %c1_i32_253 = arith.constant 1 : i32
    %626 = vector.broadcast %c1_i32_253 : i32 to vector<1x512xi32>
    %627 = arith.addi %6, %626 : vector<1x512xi32>
    %c0_i32_254 = arith.constant 0 : i32
    %628 = vector.broadcast %c0_i32_254 : i32 to vector<1x512xi32>
    %629 = arith.cmpi sge, %627, %628 : vector<1x512xi32>
    %630 = arith.andi %625, %629 : vector<1x512xi1>
    %c1_i32_255 = arith.constant 1 : i32
    %631 = vector.broadcast %c1_i32_255 : i32 to vector<1x512xi32>
    %632 = arith.addi %6, %631 : vector<1x512xi32>
    %c16_i32_256 = arith.constant 16 : i32
    %633 = vector.broadcast %c16_i32_256 : i32 to vector<1x512xi32>
    %634 = arith.cmpi slt, %632, %633 : vector<1x512xi32>
    %635 = arith.andi %630, %634 : vector<1x512xi1>
    %cst_257 = arith.constant -3.000000e+38 : f32
    %636 = vector.shape_cast %635 : vector<1x512xi1> to vector<1x512xi1>
    %637 = vector.broadcast %636 : vector<1x512xi1> to vector<8x512xi1>
    %638 = vector.broadcast %cst_257 : f32 to vector<8x512xf32>
    %639 = arith.select %637, %616, %638 : vector<8x512xi1>, vector<8x512xf32>
    %c497_i32_258 = arith.constant 497 : i32
    %640 = tpu.dynamic_rotate %496 by %c497_i32_258 dim 1 : vector<8x512xf32>, i32 -> vector<8x512xf32>
    %c1_i32_259 = arith.constant 1 : i32
    %641 = vector.broadcast %c1_i32_259 : i32 to vector<1x512xi32>
    %642 = arith.addi %4, %641 : vector<1x512xi32>
    %c0_i32_260 = arith.constant 0 : i32
    %643 = vector.broadcast %c0_i32_260 : i32 to vector<1x512xi32>
    %644 = arith.cmpi sge, %642, %643 : vector<1x512xi32>
    %c1_i32_261 = arith.constant 1 : i32
    %645 = vector.broadcast %c1_i32_261 : i32 to vector<1x512xi32>
    %646 = arith.addi %4, %645 : vector<1x512xi32>
    %c16_i32_262 = arith.constant 16 : i32
    %647 = vector.broadcast %c16_i32_262 : i32 to vector<1x512xi32>
    %648 = arith.cmpi slt, %646, %647 : vector<1x512xi32>
    %649 = arith.andi %644, %648 : vector<1x512xi1>
    %c-1_i32_263 = arith.constant -1 : i32
    %650 = vector.broadcast %c-1_i32_263 : i32 to vector<1x512xi32>
    %651 = arith.addi %6, %650 : vector<1x512xi32>
    %c0_i32_264 = arith.constant 0 : i32
    %652 = vector.broadcast %c0_i32_264 : i32 to vector<1x512xi32>
    %653 = arith.cmpi sge, %651, %652 : vector<1x512xi32>
    %654 = arith.andi %649, %653 : vector<1x512xi1>
    %c-1_i32_265 = arith.constant -1 : i32
    %655 = vector.broadcast %c-1_i32_265 : i32 to vector<1x512xi32>
    %656 = arith.addi %6, %655 : vector<1x512xi32>
    %c16_i32_266 = arith.constant 16 : i32
    %657 = vector.broadcast %c16_i32_266 : i32 to vector<1x512xi32>
    %658 = arith.cmpi slt, %656, %657 : vector<1x512xi32>
    %659 = arith.andi %654, %658 : vector<1x512xi1>
    %cst_267 = arith.constant -3.000000e+38 : f32
    %660 = vector.shape_cast %659 : vector<1x512xi1> to vector<1x512xi1>
    %661 = vector.broadcast %660 : vector<1x512xi1> to vector<8x512xi1>
    %662 = vector.broadcast %cst_267 : f32 to vector<8x512xf32>
    %663 = arith.select %661, %640, %662 : vector<8x512xi1>, vector<8x512xf32>
    %c496_i32_268 = arith.constant 496 : i32
    %664 = tpu.dynamic_rotate %496 by %c496_i32_268 dim 1 : vector<8x512xf32>, i32 -> vector<8x512xf32>
    %c1_i32_269 = arith.constant 1 : i32
    %665 = vector.broadcast %c1_i32_269 : i32 to vector<1x512xi32>
    %666 = arith.addi %4, %665 : vector<1x512xi32>
    %c0_i32_270 = arith.constant 0 : i32
    %667 = vector.broadcast %c0_i32_270 : i32 to vector<1x512xi32>
    %668 = arith.cmpi sge, %666, %667 : vector<1x512xi32>
    %c1_i32_271 = arith.constant 1 : i32
    %669 = vector.broadcast %c1_i32_271 : i32 to vector<1x512xi32>
    %670 = arith.addi %4, %669 : vector<1x512xi32>
    %c16_i32_272 = arith.constant 16 : i32
    %671 = vector.broadcast %c16_i32_272 : i32 to vector<1x512xi32>
    %672 = arith.cmpi slt, %670, %671 : vector<1x512xi32>
    %673 = arith.andi %668, %672 : vector<1x512xi1>
    %c0_i32_273 = arith.constant 0 : i32
    %674 = vector.broadcast %c0_i32_273 : i32 to vector<1x512xi32>
    %675 = arith.addi %6, %674 : vector<1x512xi32>
    %c0_i32_274 = arith.constant 0 : i32
    %676 = vector.broadcast %c0_i32_274 : i32 to vector<1x512xi32>
    %677 = arith.cmpi sge, %675, %676 : vector<1x512xi32>
    %678 = arith.andi %673, %677 : vector<1x512xi1>
    %c0_i32_275 = arith.constant 0 : i32
    %679 = vector.broadcast %c0_i32_275 : i32 to vector<1x512xi32>
    %680 = arith.addi %6, %679 : vector<1x512xi32>
    %c16_i32_276 = arith.constant 16 : i32
    %681 = vector.broadcast %c16_i32_276 : i32 to vector<1x512xi32>
    %682 = arith.cmpi slt, %680, %681 : vector<1x512xi32>
    %683 = arith.andi %678, %682 : vector<1x512xi1>
    %cst_277 = arith.constant -3.000000e+38 : f32
    %684 = vector.shape_cast %683 : vector<1x512xi1> to vector<1x512xi1>
    %685 = vector.broadcast %684 : vector<1x512xi1> to vector<8x512xi1>
    %686 = vector.broadcast %cst_277 : f32 to vector<8x512xf32>
    %687 = arith.select %685, %664, %686 : vector<8x512xi1>, vector<8x512xf32>
    %c495_i32_278 = arith.constant 495 : i32
    %688 = tpu.dynamic_rotate %496 by %c495_i32_278 dim 1 : vector<8x512xf32>, i32 -> vector<8x512xf32>
    %c1_i32_279 = arith.constant 1 : i32
    %689 = vector.broadcast %c1_i32_279 : i32 to vector<1x512xi32>
    %690 = arith.addi %4, %689 : vector<1x512xi32>
    %c0_i32_280 = arith.constant 0 : i32
    %691 = vector.broadcast %c0_i32_280 : i32 to vector<1x512xi32>
    %692 = arith.cmpi sge, %690, %691 : vector<1x512xi32>
    %c1_i32_281 = arith.constant 1 : i32
    %693 = vector.broadcast %c1_i32_281 : i32 to vector<1x512xi32>
    %694 = arith.addi %4, %693 : vector<1x512xi32>
    %c16_i32_282 = arith.constant 16 : i32
    %695 = vector.broadcast %c16_i32_282 : i32 to vector<1x512xi32>
    %696 = arith.cmpi slt, %694, %695 : vector<1x512xi32>
    %697 = arith.andi %692, %696 : vector<1x512xi1>
    %c1_i32_283 = arith.constant 1 : i32
    %698 = vector.broadcast %c1_i32_283 : i32 to vector<1x512xi32>
    %699 = arith.addi %6, %698 : vector<1x512xi32>
    %c0_i32_284 = arith.constant 0 : i32
    %700 = vector.broadcast %c0_i32_284 : i32 to vector<1x512xi32>
    %701 = arith.cmpi sge, %699, %700 : vector<1x512xi32>
    %702 = arith.andi %697, %701 : vector<1x512xi1>
    %c1_i32_285 = arith.constant 1 : i32
    %703 = vector.broadcast %c1_i32_285 : i32 to vector<1x512xi32>
    %704 = arith.addi %6, %703 : vector<1x512xi32>
    %c16_i32_286 = arith.constant 16 : i32
    %705 = vector.broadcast %c16_i32_286 : i32 to vector<1x512xi32>
    %706 = arith.cmpi slt, %704, %705 : vector<1x512xi32>
    %707 = arith.andi %702, %706 : vector<1x512xi1>
    %cst_287 = arith.constant -3.000000e+38 : f32
    %708 = vector.shape_cast %707 : vector<1x512xi1> to vector<1x512xi1>
    %709 = vector.broadcast %708 : vector<1x512xi1> to vector<8x512xi1>
    %710 = vector.broadcast %cst_287 : f32 to vector<8x512xf32>
    %711 = arith.select %709, %688, %710 : vector<8x512xi1>, vector<8x512xf32>
    %712 = arith.maximumf %520, %544 : vector<8x512xf32>
    %713 = arith.maximumf %712, %568 : vector<8x512xf32>
    %714 = arith.maximumf %713, %592 : vector<8x512xf32>
    %715 = arith.maximumf %714, %615 : vector<8x512xf32>
    %716 = arith.maximumf %715, %639 : vector<8x512xf32>
    %717 = arith.maximumf %716, %663 : vector<8x512xf32>
    %718 = arith.maximumf %717, %687 : vector<8x512xf32>
    %719 = arith.maximumf %718, %711 : vector<8x512xf32>
    %cst_288 = arith.constant dense<0.000000e+00> : vector<8x128xf32>
    %720 = tpu.matmul %719, %14, %cst_288 {dimension_numbers = #tpu.dot_dimension_numbers<[1], [0], [0], [1], [0, 0, 1, 1], [], []>} : vector<8x512xf32>, vector<512x128xf32>, vector<8x128xf32> -> vector<8x128xf32>
    %cst_289 = arith.constant dense<0.000000e+00> : vector<16x128xf32>
    %721 = tpu.matmul %486, %14, %cst_289 {dimension_numbers = #tpu.dot_dimension_numbers<[1], [0], [0], [1], [0, 0, 1, 1], [], []>} : vector<16x512xf32>, vector<512x128xf32>, vector<16x128xf32> -> vector<16x128xf32>
    %c56 = arith.constant 56 : index
    %c0_290 = arith.constant 0 : index
    %722 = vector.load %arg3[%c56, %c0_290] : memref<320x144xf32, #tpu.memory_space<vmem>>, vector<16x16xf32>
    %cst_291 = arith.constant dense<0.000000e+00> : vector<16x128xf32>
    %723 = tpu.matmul %722, %721, %cst_291 {dimension_numbers = #tpu.dot_dimension_numbers<[1], [0], [0], [1], [0, 0, 1, 1], [], []>} : vector<16x16xf32>, vector<16x128xf32>, vector<16x128xf32> -> vector<16x128xf32>
    %c0_292 = arith.constant 0 : index
    %c8_293 = arith.constant 8 : index
    %724 = vector.load %arg4[%c0_292, %c8_293] : memref<16x32xf32, #tpu.memory_space<vmem>>, vector<16x1xf32>
    %725 = vector.broadcast %724 : vector<16x1xf32> to vector<16x128xf32>
    %726 = arith.addf %723, %725 : vector<16x128xf32>
    %c72 = arith.constant 72 : index
    %c0_294 = arith.constant 0 : index
    %727 = vector.load %arg3[%c72, %c0_294] : memref<320x144xf32, #tpu.memory_space<vmem>>, vector<16x8xf32>
    %cst_295 = arith.constant dense<0.000000e+00> : vector<16x128xf32>
    %728 = tpu.matmul %727, %720, %cst_295 {dimension_numbers = #tpu.dot_dimension_numbers<[1], [0], [0], [1], [0, 0, 1, 1], [], []>} : vector<16x8xf32>, vector<8x128xf32>, vector<16x128xf32> -> vector<16x128xf32>
    %c0_296 = arith.constant 0 : index
    %c9 = arith.constant 9 : index
    %729 = vector.load %arg4[%c0_296, %c9] : memref<16x32xf32, #tpu.memory_space<vmem>>, vector<16x1xf32>
    %730 = vector.broadcast %729 : vector<16x1xf32> to vector<16x128xf32>
    %731 = arith.addf %728, %730 : vector<16x128xf32>
    %c104 = arith.constant 104 : index
    %c0_297 = arith.constant 0 : index
    %732 = vector.load %arg3[%c104, %c0_297] : memref<320x144xf32, #tpu.memory_space<vmem>>, vector<16x16xf32>
    %cst_298 = arith.constant dense<0.000000e+00> : vector<16x128xf32>
    %733 = tpu.matmul %732, %726, %cst_298 {dimension_numbers = #tpu.dot_dimension_numbers<[1], [0], [0], [1], [0, 0, 1, 1], [], []>} : vector<16x16xf32>, vector<16x128xf32>, vector<16x128xf32> -> vector<16x128xf32>
    %c0_299 = arith.constant 0 : index
    %c11 = arith.constant 11 : index
    %734 = vector.load %arg4[%c0_299, %c11] : memref<16x32xf32, #tpu.memory_space<vmem>>, vector<16x1xf32>
    %735 = vector.broadcast %734 : vector<16x1xf32> to vector<16x128xf32>
    %736 = arith.addf %733, %735 : vector<16x128xf32>
    %c120 = arith.constant 120 : index
    %c0_300 = arith.constant 0 : index
    %737 = vector.load %arg3[%c120, %c0_300] : memref<320x144xf32, #tpu.memory_space<vmem>>, vector<16x16xf32>
    %cst_301 = arith.constant dense<0.000000e+00> : vector<16x128xf32>
    %738 = tpu.matmul %737, %731, %cst_301 {dimension_numbers = #tpu.dot_dimension_numbers<[1], [0], [0], [1], [0, 0, 1, 1], [], []>} : vector<16x16xf32>, vector<16x128xf32>, vector<16x128xf32> -> vector<16x128xf32>
    %c0_302 = arith.constant 0 : index
    %c12 = arith.constant 12 : index
    %739 = vector.load %arg4[%c0_302, %c12] : memref<16x32xf32, #tpu.memory_space<vmem>>, vector<16x1xf32>
    %740 = vector.broadcast %739 : vector<16x1xf32> to vector<16x128xf32>
    %741 = arith.addf %738, %740 : vector<16x128xf32>
    %742 = arith.addf %736, %741 : vector<16x128xf32>
    %cst_303 = arith.constant 0.000000e+00 : f32
    %743 = vector.broadcast %cst_303 : f32 to vector<16x128xf32>
    %744 = arith.maximumf %742, %743 : vector<16x128xf32>
    %c136 = arith.constant 136 : index
    %c0_304 = arith.constant 0 : index
    %745 = vector.load %arg3[%c136, %c0_304] : memref<320x144xf32, #tpu.memory_space<vmem>>, vector<1x16xf32>
    %cst_305 = arith.constant dense<0.000000e+00> : vector<1x128xf32>
    %746 = tpu.matmul %745, %744, %cst_305 {dimension_numbers = #tpu.dot_dimension_numbers<[1], [0], [0], [1], [0, 0, 1, 1], [], []>} : vector<1x16xf32>, vector<16x128xf32>, vector<1x128xf32> -> vector<1x128xf32>
    %c2_306 = arith.constant 2 : index
    %747 = memref.load %arg1[%c2_306] : memref<9xf32, #tpu.memory_space<smem>>
    %748 = vector.broadcast %747 : f32 to vector<1x128xf32>
    %749 = arith.addf %746, %748 : vector<1x128xf32>
    %750 = math.absf %749 : vector<1x128xf32>
    %cst_307 = arith.constant 0.000000e+00 : f32
    %751 = vector.broadcast %cst_307 : f32 to vector<1x128xf32>
    %752 = arith.subf %751, %750 : vector<1x128xf32>
    %753 = math.exp %752 : vector<1x128xf32>
    %cst_308 = arith.constant 0.000000e+00 : f32
    %754 = vector.broadcast %cst_308 : f32 to vector<1x128xf32>
    %755 = arith.cmpf oge, %749, %754 : vector<1x128xf32>
    %cst_309 = arith.constant 1.000000e+00 : f32
    %756 = vector.broadcast %cst_309 : f32 to vector<1x128xf32>
    %757 = arith.select %755, %756, %753 : vector<1x128xi1>, vector<1x128xf32>
    %cst_310 = arith.constant 1.000000e+00 : f32
    %758 = vector.broadcast %cst_310 : f32 to vector<1x128xf32>
    %759 = arith.addf %758, %753 : vector<1x128xf32>
    %760 = arith.divf %757, %759 : vector<1x128xf32>
    %761 = vector.broadcast %760 : vector<1x128xf32> to vector<16x128xf32>
    %762 = arith.mulf %731, %761 : vector<16x128xf32>
    %763 = tpu.concatenate %726, %762 in 0 : vector<16x128xf32>, vector<16x128xf32> -> vector<32x128xf32>
    %c88 = arith.constant 88 : index
    %c0_311 = arith.constant 0 : index
    %764 = vector.load %arg3[%c88, %c0_311] : memref<320x144xf32, #tpu.memory_space<vmem>>, vector<16x32xf32>
    %cst_312 = arith.constant dense<0.000000e+00> : vector<16x128xf32>
    %765 = tpu.matmul %764, %763, %cst_312 {dimension_numbers = #tpu.dot_dimension_numbers<[1], [0], [0], [1], [0, 0, 1, 1], [], []>} : vector<16x32xf32>, vector<32x128xf32>, vector<16x128xf32> -> vector<16x128xf32>
    %c0_313 = arith.constant 0 : index
    %c10 = arith.constant 10 : index
    %766 = vector.load %arg4[%c0_313, %c10] : memref<16x32xf32, #tpu.memory_space<vmem>>, vector<16x1xf32>
    %767 = vector.broadcast %766 : vector<16x1xf32> to vector<16x128xf32>
    %768 = arith.addf %765, %767 : vector<16x128xf32>
    %c144 = arith.constant 144 : index
    %c0_314 = arith.constant 0 : index
    %769 = vector.load %arg3[%c144, %c0_314] : memref<320x144xf32, #tpu.memory_space<vmem>>, vector<16x144xf32>
    %c0_315 = arith.constant 0 : index
    %c13 = arith.constant 13 : index
    %770 = vector.load %arg4[%c0_315, %c13] : memref<16x32xf32, #tpu.memory_space<vmem>>, vector<16x1xf32>
    %c9_i32 = arith.constant 9 : i32
    %771 = tpu.dynamic_rotate %768 by %c9_i32 dim 1 : vector<16x128xf32>, i32 -> vector<16x128xf32>
    %c-1_i32_316 = arith.constant -1 : i32
    %772 = vector.broadcast %c-1_i32_316 : i32 to vector<1x128xi32>
    %773 = arith.addi %11, %772 : vector<1x128xi32>
    %c0_i32_317 = arith.constant 0 : i32
    %774 = vector.broadcast %c0_i32_317 : i32 to vector<1x128xi32>
    %775 = arith.cmpi sge, %773, %774 : vector<1x128xi32>
    %c-1_i32_318 = arith.constant -1 : i32
    %776 = vector.broadcast %c-1_i32_318 : i32 to vector<1x128xi32>
    %777 = arith.addi %11, %776 : vector<1x128xi32>
    %c8_i32 = arith.constant 8 : i32
    %778 = vector.broadcast %c8_i32 : i32 to vector<1x128xi32>
    %779 = arith.cmpi slt, %777, %778 : vector<1x128xi32>
    %780 = arith.andi %775, %779 : vector<1x128xi1>
    %c-1_i32_319 = arith.constant -1 : i32
    %781 = vector.broadcast %c-1_i32_319 : i32 to vector<1x128xi32>
    %782 = arith.addi %13, %781 : vector<1x128xi32>
    %c0_i32_320 = arith.constant 0 : i32
    %783 = vector.broadcast %c0_i32_320 : i32 to vector<1x128xi32>
    %784 = arith.cmpi sge, %782, %783 : vector<1x128xi32>
    %785 = arith.andi %780, %784 : vector<1x128xi1>
    %c-1_i32_321 = arith.constant -1 : i32
    %786 = vector.broadcast %c-1_i32_321 : i32 to vector<1x128xi32>
    %787 = arith.addi %13, %786 : vector<1x128xi32>
    %c8_i32_322 = arith.constant 8 : i32
    %788 = vector.broadcast %c8_i32_322 : i32 to vector<1x128xi32>
    %789 = arith.cmpi slt, %787, %788 : vector<1x128xi32>
    %790 = arith.andi %785, %789 : vector<1x128xi1>
    %cst_323 = arith.constant 0.000000e+00 : f32
    %791 = vector.shape_cast %790 : vector<1x128xi1> to vector<1x128xi1>
    %792 = vector.broadcast %791 : vector<1x128xi1> to vector<16x128xi1>
    %793 = vector.broadcast %cst_323 : f32 to vector<16x128xf32>
    %794 = arith.select %792, %771, %793 : vector<16x128xi1>, vector<16x128xf32>
    %c8_i32_324 = arith.constant 8 : i32
    %795 = tpu.dynamic_rotate %768 by %c8_i32_324 dim 1 : vector<16x128xf32>, i32 -> vector<16x128xf32>
    %c-1_i32_325 = arith.constant -1 : i32
    %796 = vector.broadcast %c-1_i32_325 : i32 to vector<1x128xi32>
    %797 = arith.addi %11, %796 : vector<1x128xi32>
    %c0_i32_326 = arith.constant 0 : i32
    %798 = vector.broadcast %c0_i32_326 : i32 to vector<1x128xi32>
    %799 = arith.cmpi sge, %797, %798 : vector<1x128xi32>
    %c-1_i32_327 = arith.constant -1 : i32
    %800 = vector.broadcast %c-1_i32_327 : i32 to vector<1x128xi32>
    %801 = arith.addi %11, %800 : vector<1x128xi32>
    %c8_i32_328 = arith.constant 8 : i32
    %802 = vector.broadcast %c8_i32_328 : i32 to vector<1x128xi32>
    %803 = arith.cmpi slt, %801, %802 : vector<1x128xi32>
    %804 = arith.andi %799, %803 : vector<1x128xi1>
    %c0_i32_329 = arith.constant 0 : i32
    %805 = vector.broadcast %c0_i32_329 : i32 to vector<1x128xi32>
    %806 = arith.addi %13, %805 : vector<1x128xi32>
    %c0_i32_330 = arith.constant 0 : i32
    %807 = vector.broadcast %c0_i32_330 : i32 to vector<1x128xi32>
    %808 = arith.cmpi sge, %806, %807 : vector<1x128xi32>
    %809 = arith.andi %804, %808 : vector<1x128xi1>
    %c0_i32_331 = arith.constant 0 : i32
    %810 = vector.broadcast %c0_i32_331 : i32 to vector<1x128xi32>
    %811 = arith.addi %13, %810 : vector<1x128xi32>
    %c8_i32_332 = arith.constant 8 : i32
    %812 = vector.broadcast %c8_i32_332 : i32 to vector<1x128xi32>
    %813 = arith.cmpi slt, %811, %812 : vector<1x128xi32>
    %814 = arith.andi %809, %813 : vector<1x128xi1>
    %cst_333 = arith.constant 0.000000e+00 : f32
    %815 = vector.shape_cast %814 : vector<1x128xi1> to vector<1x128xi1>
    %816 = vector.broadcast %815 : vector<1x128xi1> to vector<16x128xi1>
    %817 = vector.broadcast %cst_333 : f32 to vector<16x128xf32>
    %818 = arith.select %816, %795, %817 : vector<16x128xi1>, vector<16x128xf32>
    %c7_i32_334 = arith.constant 7 : i32
    %819 = tpu.dynamic_rotate %768 by %c7_i32_334 dim 1 : vector<16x128xf32>, i32 -> vector<16x128xf32>
    %c-1_i32_335 = arith.constant -1 : i32
    %820 = vector.broadcast %c-1_i32_335 : i32 to vector<1x128xi32>
    %821 = arith.addi %11, %820 : vector<1x128xi32>
    %c0_i32_336 = arith.constant 0 : i32
    %822 = vector.broadcast %c0_i32_336 : i32 to vector<1x128xi32>
    %823 = arith.cmpi sge, %821, %822 : vector<1x128xi32>
    %c-1_i32_337 = arith.constant -1 : i32
    %824 = vector.broadcast %c-1_i32_337 : i32 to vector<1x128xi32>
    %825 = arith.addi %11, %824 : vector<1x128xi32>
    %c8_i32_338 = arith.constant 8 : i32
    %826 = vector.broadcast %c8_i32_338 : i32 to vector<1x128xi32>
    %827 = arith.cmpi slt, %825, %826 : vector<1x128xi32>
    %828 = arith.andi %823, %827 : vector<1x128xi1>
    %c1_i32_339 = arith.constant 1 : i32
    %829 = vector.broadcast %c1_i32_339 : i32 to vector<1x128xi32>
    %830 = arith.addi %13, %829 : vector<1x128xi32>
    %c0_i32_340 = arith.constant 0 : i32
    %831 = vector.broadcast %c0_i32_340 : i32 to vector<1x128xi32>
    %832 = arith.cmpi sge, %830, %831 : vector<1x128xi32>
    %833 = arith.andi %828, %832 : vector<1x128xi1>
    %c1_i32_341 = arith.constant 1 : i32
    %834 = vector.broadcast %c1_i32_341 : i32 to vector<1x128xi32>
    %835 = arith.addi %13, %834 : vector<1x128xi32>
    %c8_i32_342 = arith.constant 8 : i32
    %836 = vector.broadcast %c8_i32_342 : i32 to vector<1x128xi32>
    %837 = arith.cmpi slt, %835, %836 : vector<1x128xi32>
    %838 = arith.andi %833, %837 : vector<1x128xi1>
    %cst_343 = arith.constant 0.000000e+00 : f32
    %839 = vector.shape_cast %838 : vector<1x128xi1> to vector<1x128xi1>
    %840 = vector.broadcast %839 : vector<1x128xi1> to vector<16x128xi1>
    %841 = vector.broadcast %cst_343 : f32 to vector<16x128xf32>
    %842 = arith.select %840, %819, %841 : vector<16x128xi1>, vector<16x128xf32>
    %c1_i32_344 = arith.constant 1 : i32
    %843 = tpu.dynamic_rotate %768 by %c1_i32_344 dim 1 : vector<16x128xf32>, i32 -> vector<16x128xf32>
    %c0_i32_345 = arith.constant 0 : i32
    %844 = vector.broadcast %c0_i32_345 : i32 to vector<1x128xi32>
    %845 = arith.addi %11, %844 : vector<1x128xi32>
    %c0_i32_346 = arith.constant 0 : i32
    %846 = vector.broadcast %c0_i32_346 : i32 to vector<1x128xi32>
    %847 = arith.cmpi sge, %845, %846 : vector<1x128xi32>
    %c0_i32_347 = arith.constant 0 : i32
    %848 = vector.broadcast %c0_i32_347 : i32 to vector<1x128xi32>
    %849 = arith.addi %11, %848 : vector<1x128xi32>
    %c8_i32_348 = arith.constant 8 : i32
    %850 = vector.broadcast %c8_i32_348 : i32 to vector<1x128xi32>
    %851 = arith.cmpi slt, %849, %850 : vector<1x128xi32>
    %852 = arith.andi %847, %851 : vector<1x128xi1>
    %c-1_i32_349 = arith.constant -1 : i32
    %853 = vector.broadcast %c-1_i32_349 : i32 to vector<1x128xi32>
    %854 = arith.addi %13, %853 : vector<1x128xi32>
    %c0_i32_350 = arith.constant 0 : i32
    %855 = vector.broadcast %c0_i32_350 : i32 to vector<1x128xi32>
    %856 = arith.cmpi sge, %854, %855 : vector<1x128xi32>
    %857 = arith.andi %852, %856 : vector<1x128xi1>
    %c-1_i32_351 = arith.constant -1 : i32
    %858 = vector.broadcast %c-1_i32_351 : i32 to vector<1x128xi32>
    %859 = arith.addi %13, %858 : vector<1x128xi32>
    %c8_i32_352 = arith.constant 8 : i32
    %860 = vector.broadcast %c8_i32_352 : i32 to vector<1x128xi32>
    %861 = arith.cmpi slt, %859, %860 : vector<1x128xi32>
    %862 = arith.andi %857, %861 : vector<1x128xi1>
    %cst_353 = arith.constant 0.000000e+00 : f32
    %863 = vector.shape_cast %862 : vector<1x128xi1> to vector<1x128xi1>
    %864 = vector.broadcast %863 : vector<1x128xi1> to vector<16x128xi1>
    %865 = vector.broadcast %cst_353 : f32 to vector<16x128xf32>
    %866 = arith.select %864, %843, %865 : vector<16x128xi1>, vector<16x128xf32>
    %c0_i32_354 = arith.constant 0 : i32
    %867 = vector.broadcast %c0_i32_354 : i32 to vector<1x128xi32>
    %868 = arith.addi %11, %867 : vector<1x128xi32>
    %c0_i32_355 = arith.constant 0 : i32
    %869 = vector.broadcast %c0_i32_355 : i32 to vector<1x128xi32>
    %870 = arith.cmpi sge, %868, %869 : vector<1x128xi32>
    %c0_i32_356 = arith.constant 0 : i32
    %871 = vector.broadcast %c0_i32_356 : i32 to vector<1x128xi32>
    %872 = arith.addi %11, %871 : vector<1x128xi32>
    %c8_i32_357 = arith.constant 8 : i32
    %873 = vector.broadcast %c8_i32_357 : i32 to vector<1x128xi32>
    %874 = arith.cmpi slt, %872, %873 : vector<1x128xi32>
    %875 = arith.andi %870, %874 : vector<1x128xi1>
    %c0_i32_358 = arith.constant 0 : i32
    %876 = vector.broadcast %c0_i32_358 : i32 to vector<1x128xi32>
    %877 = arith.addi %13, %876 : vector<1x128xi32>
    %c0_i32_359 = arith.constant 0 : i32
    %878 = vector.broadcast %c0_i32_359 : i32 to vector<1x128xi32>
    %879 = arith.cmpi sge, %877, %878 : vector<1x128xi32>
    %880 = arith.andi %875, %879 : vector<1x128xi1>
    %c0_i32_360 = arith.constant 0 : i32
    %881 = vector.broadcast %c0_i32_360 : i32 to vector<1x128xi32>
    %882 = arith.addi %13, %881 : vector<1x128xi32>
    %c8_i32_361 = arith.constant 8 : i32
    %883 = vector.broadcast %c8_i32_361 : i32 to vector<1x128xi32>
    %884 = arith.cmpi slt, %882, %883 : vector<1x128xi32>
    %885 = arith.andi %880, %884 : vector<1x128xi1>
    %cst_362 = arith.constant 0.000000e+00 : f32
    %886 = vector.shape_cast %885 : vector<1x128xi1> to vector<1x128xi1>
    %887 = vector.broadcast %886 : vector<1x128xi1> to vector<16x128xi1>
    %888 = vector.broadcast %cst_362 : f32 to vector<16x128xf32>
    %889 = arith.select %887, %768, %888 : vector<16x128xi1>, vector<16x128xf32>
    %c127_i32 = arith.constant 127 : i32
    %890 = tpu.dynamic_rotate %768 by %c127_i32 dim 1 : vector<16x128xf32>, i32 -> vector<16x128xf32>
    %c0_i32_363 = arith.constant 0 : i32
    %891 = vector.broadcast %c0_i32_363 : i32 to vector<1x128xi32>
    %892 = arith.addi %11, %891 : vector<1x128xi32>
    %c0_i32_364 = arith.constant 0 : i32
    %893 = vector.broadcast %c0_i32_364 : i32 to vector<1x128xi32>
    %894 = arith.cmpi sge, %892, %893 : vector<1x128xi32>
    %c0_i32_365 = arith.constant 0 : i32
    %895 = vector.broadcast %c0_i32_365 : i32 to vector<1x128xi32>
    %896 = arith.addi %11, %895 : vector<1x128xi32>
    %c8_i32_366 = arith.constant 8 : i32
    %897 = vector.broadcast %c8_i32_366 : i32 to vector<1x128xi32>
    %898 = arith.cmpi slt, %896, %897 : vector<1x128xi32>
    %899 = arith.andi %894, %898 : vector<1x128xi1>
    %c1_i32_367 = arith.constant 1 : i32
    %900 = vector.broadcast %c1_i32_367 : i32 to vector<1x128xi32>
    %901 = arith.addi %13, %900 : vector<1x128xi32>
    %c0_i32_368 = arith.constant 0 : i32
    %902 = vector.broadcast %c0_i32_368 : i32 to vector<1x128xi32>
    %903 = arith.cmpi sge, %901, %902 : vector<1x128xi32>
    %904 = arith.andi %899, %903 : vector<1x128xi1>
    %c1_i32_369 = arith.constant 1 : i32
    %905 = vector.broadcast %c1_i32_369 : i32 to vector<1x128xi32>
    %906 = arith.addi %13, %905 : vector<1x128xi32>
    %c8_i32_370 = arith.constant 8 : i32
    %907 = vector.broadcast %c8_i32_370 : i32 to vector<1x128xi32>
    %908 = arith.cmpi slt, %906, %907 : vector<1x128xi32>
    %909 = arith.andi %904, %908 : vector<1x128xi1>
    %cst_371 = arith.constant 0.000000e+00 : f32
    %910 = vector.shape_cast %909 : vector<1x128xi1> to vector<1x128xi1>
    %911 = vector.broadcast %910 : vector<1x128xi1> to vector<16x128xi1>
    %912 = vector.broadcast %cst_371 : f32 to vector<16x128xf32>
    %913 = arith.select %911, %890, %912 : vector<16x128xi1>, vector<16x128xf32>
    %c121_i32 = arith.constant 121 : i32
    %914 = tpu.dynamic_rotate %768 by %c121_i32 dim 1 : vector<16x128xf32>, i32 -> vector<16x128xf32>
    %c1_i32_372 = arith.constant 1 : i32
    %915 = vector.broadcast %c1_i32_372 : i32 to vector<1x128xi32>
    %916 = arith.addi %11, %915 : vector<1x128xi32>
    %c0_i32_373 = arith.constant 0 : i32
    %917 = vector.broadcast %c0_i32_373 : i32 to vector<1x128xi32>
    %918 = arith.cmpi sge, %916, %917 : vector<1x128xi32>
    %c1_i32_374 = arith.constant 1 : i32
    %919 = vector.broadcast %c1_i32_374 : i32 to vector<1x128xi32>
    %920 = arith.addi %11, %919 : vector<1x128xi32>
    %c8_i32_375 = arith.constant 8 : i32
    %921 = vector.broadcast %c8_i32_375 : i32 to vector<1x128xi32>
    %922 = arith.cmpi slt, %920, %921 : vector<1x128xi32>
    %923 = arith.andi %918, %922 : vector<1x128xi1>
    %c-1_i32_376 = arith.constant -1 : i32
    %924 = vector.broadcast %c-1_i32_376 : i32 to vector<1x128xi32>
    %925 = arith.addi %13, %924 : vector<1x128xi32>
    %c0_i32_377 = arith.constant 0 : i32
    %926 = vector.broadcast %c0_i32_377 : i32 to vector<1x128xi32>
    %927 = arith.cmpi sge, %925, %926 : vector<1x128xi32>
    %928 = arith.andi %923, %927 : vector<1x128xi1>
    %c-1_i32_378 = arith.constant -1 : i32
    %929 = vector.broadcast %c-1_i32_378 : i32 to vector<1x128xi32>
    %930 = arith.addi %13, %929 : vector<1x128xi32>
    %c8_i32_379 = arith.constant 8 : i32
    %931 = vector.broadcast %c8_i32_379 : i32 to vector<1x128xi32>
    %932 = arith.cmpi slt, %930, %931 : vector<1x128xi32>
    %933 = arith.andi %928, %932 : vector<1x128xi1>
    %cst_380 = arith.constant 0.000000e+00 : f32
    %934 = vector.shape_cast %933 : vector<1x128xi1> to vector<1x128xi1>
    %935 = vector.broadcast %934 : vector<1x128xi1> to vector<16x128xi1>
    %936 = vector.broadcast %cst_380 : f32 to vector<16x128xf32>
    %937 = arith.select %935, %914, %936 : vector<16x128xi1>, vector<16x128xf32>
    %c120_i32 = arith.constant 120 : i32
    %938 = tpu.dynamic_rotate %768 by %c120_i32 dim 1 : vector<16x128xf32>, i32 -> vector<16x128xf32>
    %c1_i32_381 = arith.constant 1 : i32
    %939 = vector.broadcast %c1_i32_381 : i32 to vector<1x128xi32>
    %940 = arith.addi %11, %939 : vector<1x128xi32>
    %c0_i32_382 = arith.constant 0 : i32
    %941 = vector.broadcast %c0_i32_382 : i32 to vector<1x128xi32>
    %942 = arith.cmpi sge, %940, %941 : vector<1x128xi32>
    %c1_i32_383 = arith.constant 1 : i32
    %943 = vector.broadcast %c1_i32_383 : i32 to vector<1x128xi32>
    %944 = arith.addi %11, %943 : vector<1x128xi32>
    %c8_i32_384 = arith.constant 8 : i32
    %945 = vector.broadcast %c8_i32_384 : i32 to vector<1x128xi32>
    %946 = arith.cmpi slt, %944, %945 : vector<1x128xi32>
    %947 = arith.andi %942, %946 : vector<1x128xi1>
    %c0_i32_385 = arith.constant 0 : i32
    %948 = vector.broadcast %c0_i32_385 : i32 to vector<1x128xi32>
    %949 = arith.addi %13, %948 : vector<1x128xi32>
    %c0_i32_386 = arith.constant 0 : i32
    %950 = vector.broadcast %c0_i32_386 : i32 to vector<1x128xi32>
    %951 = arith.cmpi sge, %949, %950 : vector<1x128xi32>
    %952 = arith.andi %947, %951 : vector<1x128xi1>
    %c0_i32_387 = arith.constant 0 : i32
    %953 = vector.broadcast %c0_i32_387 : i32 to vector<1x128xi32>
    %954 = arith.addi %13, %953 : vector<1x128xi32>
    %c8_i32_388 = arith.constant 8 : i32
    %955 = vector.broadcast %c8_i32_388 : i32 to vector<1x128xi32>
    %956 = arith.cmpi slt, %954, %955 : vector<1x128xi32>
    %957 = arith.andi %952, %956 : vector<1x128xi1>
    %cst_389 = arith.constant 0.000000e+00 : f32
    %958 = vector.shape_cast %957 : vector<1x128xi1> to vector<1x128xi1>
    %959 = vector.broadcast %958 : vector<1x128xi1> to vector<16x128xi1>
    %960 = vector.broadcast %cst_389 : f32 to vector<16x128xf32>
    %961 = arith.select %959, %938, %960 : vector<16x128xi1>, vector<16x128xf32>
    %c119_i32 = arith.constant 119 : i32
    %962 = tpu.dynamic_rotate %768 by %c119_i32 dim 1 : vector<16x128xf32>, i32 -> vector<16x128xf32>
    %c1_i32_390 = arith.constant 1 : i32
    %963 = vector.broadcast %c1_i32_390 : i32 to vector<1x128xi32>
    %964 = arith.addi %11, %963 : vector<1x128xi32>
    %c0_i32_391 = arith.constant 0 : i32
    %965 = vector.broadcast %c0_i32_391 : i32 to vector<1x128xi32>
    %966 = arith.cmpi sge, %964, %965 : vector<1x128xi32>
    %c1_i32_392 = arith.constant 1 : i32
    %967 = vector.broadcast %c1_i32_392 : i32 to vector<1x128xi32>
    %968 = arith.addi %11, %967 : vector<1x128xi32>
    %c8_i32_393 = arith.constant 8 : i32
    %969 = vector.broadcast %c8_i32_393 : i32 to vector<1x128xi32>
    %970 = arith.cmpi slt, %968, %969 : vector<1x128xi32>
    %971 = arith.andi %966, %970 : vector<1x128xi1>
    %c1_i32_394 = arith.constant 1 : i32
    %972 = vector.broadcast %c1_i32_394 : i32 to vector<1x128xi32>
    %973 = arith.addi %13, %972 : vector<1x128xi32>
    %c0_i32_395 = arith.constant 0 : i32
    %974 = vector.broadcast %c0_i32_395 : i32 to vector<1x128xi32>
    %975 = arith.cmpi sge, %973, %974 : vector<1x128xi32>
    %976 = arith.andi %971, %975 : vector<1x128xi1>
    %c1_i32_396 = arith.constant 1 : i32
    %977 = vector.broadcast %c1_i32_396 : i32 to vector<1x128xi32>
    %978 = arith.addi %13, %977 : vector<1x128xi32>
    %c8_i32_397 = arith.constant 8 : i32
    %979 = vector.broadcast %c8_i32_397 : i32 to vector<1x128xi32>
    %980 = arith.cmpi slt, %978, %979 : vector<1x128xi32>
    %981 = arith.andi %976, %980 : vector<1x128xi1>
    %cst_398 = arith.constant 0.000000e+00 : f32
    %982 = vector.shape_cast %981 : vector<1x128xi1> to vector<1x128xi1>
    %983 = vector.broadcast %982 : vector<1x128xi1> to vector<16x128xi1>
    %984 = vector.broadcast %cst_398 : f32 to vector<16x128xf32>
    %985 = arith.select %983, %962, %984 : vector<16x128xi1>, vector<16x128xf32>
    %986 = tpu.concatenate %794, %818, %842, %866, %889, %913, %937, %961, %985 in 0 : vector<16x128xf32>, vector<16x128xf32>, vector<16x128xf32>, vector<16x128xf32>, vector<16x128xf32>, vector<16x128xf32>, vector<16x128xf32>, vector<16x128xf32>, vector<16x128xf32> -> vector<144x128xf32>
    %cst_399 = arith.constant dense<0.000000e+00> : vector<16x128xf32>
    %987 = tpu.matmul %769, %986, %cst_399 {dimension_numbers = #tpu.dot_dimension_numbers<[1], [0], [0], [1], [0, 0, 1, 1], [], []>} : vector<16x144xf32>, vector<144x128xf32>, vector<16x128xf32> -> vector<16x128xf32>
    %988 = vector.broadcast %770 : vector<16x1xf32> to vector<16x128xf32>
    %989 = arith.addf %987, %988 : vector<16x128xf32>
    %c3_400 = arith.constant 3 : index
    %990 = memref.load %arg1[%c3_400] : memref<9xf32, #tpu.memory_space<smem>>
    %cst_401 = arith.constant 0.000000e+00 : f32
    %991 = vector.broadcast %cst_401 : f32 to vector<16x128xf32>
    %992 = arith.cmpf oge, %989, %991 : vector<16x128xf32>
    %993 = vector.broadcast %990 : f32 to vector<16x128xf32>
    %994 = arith.mulf %993, %989 : vector<16x128xf32>
    %995 = arith.select %992, %989, %994 : vector<16x128xi1>, vector<16x128xf32>
    %c160 = arith.constant 160 : index
    %c0_402 = arith.constant 0 : index
    %996 = vector.load %arg3[%c160, %c0_402] : memref<320x144xf32, #tpu.memory_space<vmem>>, vector<8x144xf32>
    %c0_403 = arith.constant 0 : index
    %c14 = arith.constant 14 : index
    %997 = vector.load %arg4[%c0_403, %c14] : memref<16x32xf32, #tpu.memory_space<vmem>>, vector<8x1xf32>
    %c9_i32_404 = arith.constant 9 : i32
    %998 = tpu.dynamic_rotate %995 by %c9_i32_404 dim 1 : vector<16x128xf32>, i32 -> vector<16x128xf32>
    %c-1_i32_405 = arith.constant -1 : i32
    %999 = vector.broadcast %c-1_i32_405 : i32 to vector<1x128xi32>
    %1000 = arith.addi %11, %999 : vector<1x128xi32>
    %c0_i32_406 = arith.constant 0 : i32
    %1001 = vector.broadcast %c0_i32_406 : i32 to vector<1x128xi32>
    %1002 = arith.cmpi sge, %1000, %1001 : vector<1x128xi32>
    %c-1_i32_407 = arith.constant -1 : i32
    %1003 = vector.broadcast %c-1_i32_407 : i32 to vector<1x128xi32>
    %1004 = arith.addi %11, %1003 : vector<1x128xi32>
    %c8_i32_408 = arith.constant 8 : i32
    %1005 = vector.broadcast %c8_i32_408 : i32 to vector<1x128xi32>
    %1006 = arith.cmpi slt, %1004, %1005 : vector<1x128xi32>
    %1007 = arith.andi %1002, %1006 : vector<1x128xi1>
    %c-1_i32_409 = arith.constant -1 : i32
    %1008 = vector.broadcast %c-1_i32_409 : i32 to vector<1x128xi32>
    %1009 = arith.addi %13, %1008 : vector<1x128xi32>
    %c0_i32_410 = arith.constant 0 : i32
    %1010 = vector.broadcast %c0_i32_410 : i32 to vector<1x128xi32>
    %1011 = arith.cmpi sge, %1009, %1010 : vector<1x128xi32>
    %1012 = arith.andi %1007, %1011 : vector<1x128xi1>
    %c-1_i32_411 = arith.constant -1 : i32
    %1013 = vector.broadcast %c-1_i32_411 : i32 to vector<1x128xi32>
    %1014 = arith.addi %13, %1013 : vector<1x128xi32>
    %c8_i32_412 = arith.constant 8 : i32
    %1015 = vector.broadcast %c8_i32_412 : i32 to vector<1x128xi32>
    %1016 = arith.cmpi slt, %1014, %1015 : vector<1x128xi32>
    %1017 = arith.andi %1012, %1016 : vector<1x128xi1>
    %cst_413 = arith.constant 0.000000e+00 : f32
    %1018 = vector.shape_cast %1017 : vector<1x128xi1> to vector<1x128xi1>
    %1019 = vector.broadcast %1018 : vector<1x128xi1> to vector<16x128xi1>
    %1020 = vector.broadcast %cst_413 : f32 to vector<16x128xf32>
    %1021 = arith.select %1019, %998, %1020 : vector<16x128xi1>, vector<16x128xf32>
    %c8_i32_414 = arith.constant 8 : i32
    %1022 = tpu.dynamic_rotate %995 by %c8_i32_414 dim 1 : vector<16x128xf32>, i32 -> vector<16x128xf32>
    %c-1_i32_415 = arith.constant -1 : i32
    %1023 = vector.broadcast %c-1_i32_415 : i32 to vector<1x128xi32>
    %1024 = arith.addi %11, %1023 : vector<1x128xi32>
    %c0_i32_416 = arith.constant 0 : i32
    %1025 = vector.broadcast %c0_i32_416 : i32 to vector<1x128xi32>
    %1026 = arith.cmpi sge, %1024, %1025 : vector<1x128xi32>
    %c-1_i32_417 = arith.constant -1 : i32
    %1027 = vector.broadcast %c-1_i32_417 : i32 to vector<1x128xi32>
    %1028 = arith.addi %11, %1027 : vector<1x128xi32>
    %c8_i32_418 = arith.constant 8 : i32
    %1029 = vector.broadcast %c8_i32_418 : i32 to vector<1x128xi32>
    %1030 = arith.cmpi slt, %1028, %1029 : vector<1x128xi32>
    %1031 = arith.andi %1026, %1030 : vector<1x128xi1>
    %c0_i32_419 = arith.constant 0 : i32
    %1032 = vector.broadcast %c0_i32_419 : i32 to vector<1x128xi32>
    %1033 = arith.addi %13, %1032 : vector<1x128xi32>
    %c0_i32_420 = arith.constant 0 : i32
    %1034 = vector.broadcast %c0_i32_420 : i32 to vector<1x128xi32>
    %1035 = arith.cmpi sge, %1033, %1034 : vector<1x128xi32>
    %1036 = arith.andi %1031, %1035 : vector<1x128xi1>
    %c0_i32_421 = arith.constant 0 : i32
    %1037 = vector.broadcast %c0_i32_421 : i32 to vector<1x128xi32>
    %1038 = arith.addi %13, %1037 : vector<1x128xi32>
    %c8_i32_422 = arith.constant 8 : i32
    %1039 = vector.broadcast %c8_i32_422 : i32 to vector<1x128xi32>
    %1040 = arith.cmpi slt, %1038, %1039 : vector<1x128xi32>
    %1041 = arith.andi %1036, %1040 : vector<1x128xi1>
    %cst_423 = arith.constant 0.000000e+00 : f32
    %1042 = vector.shape_cast %1041 : vector<1x128xi1> to vector<1x128xi1>
    %1043 = vector.broadcast %1042 : vector<1x128xi1> to vector<16x128xi1>
    %1044 = vector.broadcast %cst_423 : f32 to vector<16x128xf32>
    %1045 = arith.select %1043, %1022, %1044 : vector<16x128xi1>, vector<16x128xf32>
    %c7_i32_424 = arith.constant 7 : i32
    %1046 = tpu.dynamic_rotate %995 by %c7_i32_424 dim 1 : vector<16x128xf32>, i32 -> vector<16x128xf32>
    %c-1_i32_425 = arith.constant -1 : i32
    %1047 = vector.broadcast %c-1_i32_425 : i32 to vector<1x128xi32>
    %1048 = arith.addi %11, %1047 : vector<1x128xi32>
    %c0_i32_426 = arith.constant 0 : i32
    %1049 = vector.broadcast %c0_i32_426 : i32 to vector<1x128xi32>
    %1050 = arith.cmpi sge, %1048, %1049 : vector<1x128xi32>
    %c-1_i32_427 = arith.constant -1 : i32
    %1051 = vector.broadcast %c-1_i32_427 : i32 to vector<1x128xi32>
    %1052 = arith.addi %11, %1051 : vector<1x128xi32>
    %c8_i32_428 = arith.constant 8 : i32
    %1053 = vector.broadcast %c8_i32_428 : i32 to vector<1x128xi32>
    %1054 = arith.cmpi slt, %1052, %1053 : vector<1x128xi32>
    %1055 = arith.andi %1050, %1054 : vector<1x128xi1>
    %c1_i32_429 = arith.constant 1 : i32
    %1056 = vector.broadcast %c1_i32_429 : i32 to vector<1x128xi32>
    %1057 = arith.addi %13, %1056 : vector<1x128xi32>
    %c0_i32_430 = arith.constant 0 : i32
    %1058 = vector.broadcast %c0_i32_430 : i32 to vector<1x128xi32>
    %1059 = arith.cmpi sge, %1057, %1058 : vector<1x128xi32>
    %1060 = arith.andi %1055, %1059 : vector<1x128xi1>
    %c1_i32_431 = arith.constant 1 : i32
    %1061 = vector.broadcast %c1_i32_431 : i32 to vector<1x128xi32>
    %1062 = arith.addi %13, %1061 : vector<1x128xi32>
    %c8_i32_432 = arith.constant 8 : i32
    %1063 = vector.broadcast %c8_i32_432 : i32 to vector<1x128xi32>
    %1064 = arith.cmpi slt, %1062, %1063 : vector<1x128xi32>
    %1065 = arith.andi %1060, %1064 : vector<1x128xi1>
    %cst_433 = arith.constant 0.000000e+00 : f32
    %1066 = vector.shape_cast %1065 : vector<1x128xi1> to vector<1x128xi1>
    %1067 = vector.broadcast %1066 : vector<1x128xi1> to vector<16x128xi1>
    %1068 = vector.broadcast %cst_433 : f32 to vector<16x128xf32>
    %1069 = arith.select %1067, %1046, %1068 : vector<16x128xi1>, vector<16x128xf32>
    %c1_i32_434 = arith.constant 1 : i32
    %1070 = tpu.dynamic_rotate %995 by %c1_i32_434 dim 1 : vector<16x128xf32>, i32 -> vector<16x128xf32>
    %c0_i32_435 = arith.constant 0 : i32
    %1071 = vector.broadcast %c0_i32_435 : i32 to vector<1x128xi32>
    %1072 = arith.addi %11, %1071 : vector<1x128xi32>
    %c0_i32_436 = arith.constant 0 : i32
    %1073 = vector.broadcast %c0_i32_436 : i32 to vector<1x128xi32>
    %1074 = arith.cmpi sge, %1072, %1073 : vector<1x128xi32>
    %c0_i32_437 = arith.constant 0 : i32
    %1075 = vector.broadcast %c0_i32_437 : i32 to vector<1x128xi32>
    %1076 = arith.addi %11, %1075 : vector<1x128xi32>
    %c8_i32_438 = arith.constant 8 : i32
    %1077 = vector.broadcast %c8_i32_438 : i32 to vector<1x128xi32>
    %1078 = arith.cmpi slt, %1076, %1077 : vector<1x128xi32>
    %1079 = arith.andi %1074, %1078 : vector<1x128xi1>
    %c-1_i32_439 = arith.constant -1 : i32
    %1080 = vector.broadcast %c-1_i32_439 : i32 to vector<1x128xi32>
    %1081 = arith.addi %13, %1080 : vector<1x128xi32>
    %c0_i32_440 = arith.constant 0 : i32
    %1082 = vector.broadcast %c0_i32_440 : i32 to vector<1x128xi32>
    %1083 = arith.cmpi sge, %1081, %1082 : vector<1x128xi32>
    %1084 = arith.andi %1079, %1083 : vector<1x128xi1>
    %c-1_i32_441 = arith.constant -1 : i32
    %1085 = vector.broadcast %c-1_i32_441 : i32 to vector<1x128xi32>
    %1086 = arith.addi %13, %1085 : vector<1x128xi32>
    %c8_i32_442 = arith.constant 8 : i32
    %1087 = vector.broadcast %c8_i32_442 : i32 to vector<1x128xi32>
    %1088 = arith.cmpi slt, %1086, %1087 : vector<1x128xi32>
    %1089 = arith.andi %1084, %1088 : vector<1x128xi1>
    %cst_443 = arith.constant 0.000000e+00 : f32
    %1090 = vector.shape_cast %1089 : vector<1x128xi1> to vector<1x128xi1>
    %1091 = vector.broadcast %1090 : vector<1x128xi1> to vector<16x128xi1>
    %1092 = vector.broadcast %cst_443 : f32 to vector<16x128xf32>
    %1093 = arith.select %1091, %1070, %1092 : vector<16x128xi1>, vector<16x128xf32>
    %c0_i32_444 = arith.constant 0 : i32
    %1094 = vector.broadcast %c0_i32_444 : i32 to vector<1x128xi32>
    %1095 = arith.addi %11, %1094 : vector<1x128xi32>
    %c0_i32_445 = arith.constant 0 : i32
    %1096 = vector.broadcast %c0_i32_445 : i32 to vector<1x128xi32>
    %1097 = arith.cmpi sge, %1095, %1096 : vector<1x128xi32>
    %c0_i32_446 = arith.constant 0 : i32
    %1098 = vector.broadcast %c0_i32_446 : i32 to vector<1x128xi32>
    %1099 = arith.addi %11, %1098 : vector<1x128xi32>
    %c8_i32_447 = arith.constant 8 : i32
    %1100 = vector.broadcast %c8_i32_447 : i32 to vector<1x128xi32>
    %1101 = arith.cmpi slt, %1099, %1100 : vector<1x128xi32>
    %1102 = arith.andi %1097, %1101 : vector<1x128xi1>
    %c0_i32_448 = arith.constant 0 : i32
    %1103 = vector.broadcast %c0_i32_448 : i32 to vector<1x128xi32>
    %1104 = arith.addi %13, %1103 : vector<1x128xi32>
    %c0_i32_449 = arith.constant 0 : i32
    %1105 = vector.broadcast %c0_i32_449 : i32 to vector<1x128xi32>
    %1106 = arith.cmpi sge, %1104, %1105 : vector<1x128xi32>
    %1107 = arith.andi %1102, %1106 : vector<1x128xi1>
    %c0_i32_450 = arith.constant 0 : i32
    %1108 = vector.broadcast %c0_i32_450 : i32 to vector<1x128xi32>
    %1109 = arith.addi %13, %1108 : vector<1x128xi32>
    %c8_i32_451 = arith.constant 8 : i32
    %1110 = vector.broadcast %c8_i32_451 : i32 to vector<1x128xi32>
    %1111 = arith.cmpi slt, %1109, %1110 : vector<1x128xi32>
    %1112 = arith.andi %1107, %1111 : vector<1x128xi1>
    %cst_452 = arith.constant 0.000000e+00 : f32
    %1113 = vector.shape_cast %1112 : vector<1x128xi1> to vector<1x128xi1>
    %1114 = vector.broadcast %1113 : vector<1x128xi1> to vector<16x128xi1>
    %1115 = vector.broadcast %cst_452 : f32 to vector<16x128xf32>
    %1116 = arith.select %1114, %995, %1115 : vector<16x128xi1>, vector<16x128xf32>
    %c127_i32_453 = arith.constant 127 : i32
    %1117 = tpu.dynamic_rotate %995 by %c127_i32_453 dim 1 : vector<16x128xf32>, i32 -> vector<16x128xf32>
    %c0_i32_454 = arith.constant 0 : i32
    %1118 = vector.broadcast %c0_i32_454 : i32 to vector<1x128xi32>
    %1119 = arith.addi %11, %1118 : vector<1x128xi32>
    %c0_i32_455 = arith.constant 0 : i32
    %1120 = vector.broadcast %c0_i32_455 : i32 to vector<1x128xi32>
    %1121 = arith.cmpi sge, %1119, %1120 : vector<1x128xi32>
    %c0_i32_456 = arith.constant 0 : i32
    %1122 = vector.broadcast %c0_i32_456 : i32 to vector<1x128xi32>
    %1123 = arith.addi %11, %1122 : vector<1x128xi32>
    %c8_i32_457 = arith.constant 8 : i32
    %1124 = vector.broadcast %c8_i32_457 : i32 to vector<1x128xi32>
    %1125 = arith.cmpi slt, %1123, %1124 : vector<1x128xi32>
    %1126 = arith.andi %1121, %1125 : vector<1x128xi1>
    %c1_i32_458 = arith.constant 1 : i32
    %1127 = vector.broadcast %c1_i32_458 : i32 to vector<1x128xi32>
    %1128 = arith.addi %13, %1127 : vector<1x128xi32>
    %c0_i32_459 = arith.constant 0 : i32
    %1129 = vector.broadcast %c0_i32_459 : i32 to vector<1x128xi32>
    %1130 = arith.cmpi sge, %1128, %1129 : vector<1x128xi32>
    %1131 = arith.andi %1126, %1130 : vector<1x128xi1>
    %c1_i32_460 = arith.constant 1 : i32
    %1132 = vector.broadcast %c1_i32_460 : i32 to vector<1x128xi32>
    %1133 = arith.addi %13, %1132 : vector<1x128xi32>
    %c8_i32_461 = arith.constant 8 : i32
    %1134 = vector.broadcast %c8_i32_461 : i32 to vector<1x128xi32>
    %1135 = arith.cmpi slt, %1133, %1134 : vector<1x128xi32>
    %1136 = arith.andi %1131, %1135 : vector<1x128xi1>
    %cst_462 = arith.constant 0.000000e+00 : f32
    %1137 = vector.shape_cast %1136 : vector<1x128xi1> to vector<1x128xi1>
    %1138 = vector.broadcast %1137 : vector<1x128xi1> to vector<16x128xi1>
    %1139 = vector.broadcast %cst_462 : f32 to vector<16x128xf32>
    %1140 = arith.select %1138, %1117, %1139 : vector<16x128xi1>, vector<16x128xf32>
    %c121_i32_463 = arith.constant 121 : i32
    %1141 = tpu.dynamic_rotate %995 by %c121_i32_463 dim 1 : vector<16x128xf32>, i32 -> vector<16x128xf32>
    %c1_i32_464 = arith.constant 1 : i32
    %1142 = vector.broadcast %c1_i32_464 : i32 to vector<1x128xi32>
    %1143 = arith.addi %11, %1142 : vector<1x128xi32>
    %c0_i32_465 = arith.constant 0 : i32
    %1144 = vector.broadcast %c0_i32_465 : i32 to vector<1x128xi32>
    %1145 = arith.cmpi sge, %1143, %1144 : vector<1x128xi32>
    %c1_i32_466 = arith.constant 1 : i32
    %1146 = vector.broadcast %c1_i32_466 : i32 to vector<1x128xi32>
    %1147 = arith.addi %11, %1146 : vector<1x128xi32>
    %c8_i32_467 = arith.constant 8 : i32
    %1148 = vector.broadcast %c8_i32_467 : i32 to vector<1x128xi32>
    %1149 = arith.cmpi slt, %1147, %1148 : vector<1x128xi32>
    %1150 = arith.andi %1145, %1149 : vector<1x128xi1>
    %c-1_i32_468 = arith.constant -1 : i32
    %1151 = vector.broadcast %c-1_i32_468 : i32 to vector<1x128xi32>
    %1152 = arith.addi %13, %1151 : vector<1x128xi32>
    %c0_i32_469 = arith.constant 0 : i32
    %1153 = vector.broadcast %c0_i32_469 : i32 to vector<1x128xi32>
    %1154 = arith.cmpi sge, %1152, %1153 : vector<1x128xi32>
    %1155 = arith.andi %1150, %1154 : vector<1x128xi1>
    %c-1_i32_470 = arith.constant -1 : i32
    %1156 = vector.broadcast %c-1_i32_470 : i32 to vector<1x128xi32>
    %1157 = arith.addi %13, %1156 : vector<1x128xi32>
    %c8_i32_471 = arith.constant 8 : i32
    %1158 = vector.broadcast %c8_i32_471 : i32 to vector<1x128xi32>
    %1159 = arith.cmpi slt, %1157, %1158 : vector<1x128xi32>
    %1160 = arith.andi %1155, %1159 : vector<1x128xi1>
    %cst_472 = arith.constant 0.000000e+00 : f32
    %1161 = vector.shape_cast %1160 : vector<1x128xi1> to vector<1x128xi1>
    %1162 = vector.broadcast %1161 : vector<1x128xi1> to vector<16x128xi1>
    %1163 = vector.broadcast %cst_472 : f32 to vector<16x128xf32>
    %1164 = arith.select %1162, %1141, %1163 : vector<16x128xi1>, vector<16x128xf32>
    %c120_i32_473 = arith.constant 120 : i32
    %1165 = tpu.dynamic_rotate %995 by %c120_i32_473 dim 1 : vector<16x128xf32>, i32 -> vector<16x128xf32>
    %c1_i32_474 = arith.constant 1 : i32
    %1166 = vector.broadcast %c1_i32_474 : i32 to vector<1x128xi32>
    %1167 = arith.addi %11, %1166 : vector<1x128xi32>
    %c0_i32_475 = arith.constant 0 : i32
    %1168 = vector.broadcast %c0_i32_475 : i32 to vector<1x128xi32>
    %1169 = arith.cmpi sge, %1167, %1168 : vector<1x128xi32>
    %c1_i32_476 = arith.constant 1 : i32
    %1170 = vector.broadcast %c1_i32_476 : i32 to vector<1x128xi32>
    %1171 = arith.addi %11, %1170 : vector<1x128xi32>
    %c8_i32_477 = arith.constant 8 : i32
    %1172 = vector.broadcast %c8_i32_477 : i32 to vector<1x128xi32>
    %1173 = arith.cmpi slt, %1171, %1172 : vector<1x128xi32>
    %1174 = arith.andi %1169, %1173 : vector<1x128xi1>
    %c0_i32_478 = arith.constant 0 : i32
    %1175 = vector.broadcast %c0_i32_478 : i32 to vector<1x128xi32>
    %1176 = arith.addi %13, %1175 : vector<1x128xi32>
    %c0_i32_479 = arith.constant 0 : i32
    %1177 = vector.broadcast %c0_i32_479 : i32 to vector<1x128xi32>
    %1178 = arith.cmpi sge, %1176, %1177 : vector<1x128xi32>
    %1179 = arith.andi %1174, %1178 : vector<1x128xi1>
    %c0_i32_480 = arith.constant 0 : i32
    %1180 = vector.broadcast %c0_i32_480 : i32 to vector<1x128xi32>
    %1181 = arith.addi %13, %1180 : vector<1x128xi32>
    %c8_i32_481 = arith.constant 8 : i32
    %1182 = vector.broadcast %c8_i32_481 : i32 to vector<1x128xi32>
    %1183 = arith.cmpi slt, %1181, %1182 : vector<1x128xi32>
    %1184 = arith.andi %1179, %1183 : vector<1x128xi1>
    %cst_482 = arith.constant 0.000000e+00 : f32
    %1185 = vector.shape_cast %1184 : vector<1x128xi1> to vector<1x128xi1>
    %1186 = vector.broadcast %1185 : vector<1x128xi1> to vector<16x128xi1>
    %1187 = vector.broadcast %cst_482 : f32 to vector<16x128xf32>
    %1188 = arith.select %1186, %1165, %1187 : vector<16x128xi1>, vector<16x128xf32>
    %c119_i32_483 = arith.constant 119 : i32
    %1189 = tpu.dynamic_rotate %995 by %c119_i32_483 dim 1 : vector<16x128xf32>, i32 -> vector<16x128xf32>
    %c1_i32_484 = arith.constant 1 : i32
    %1190 = vector.broadcast %c1_i32_484 : i32 to vector<1x128xi32>
    %1191 = arith.addi %11, %1190 : vector<1x128xi32>
    %c0_i32_485 = arith.constant 0 : i32
    %1192 = vector.broadcast %c0_i32_485 : i32 to vector<1x128xi32>
    %1193 = arith.cmpi sge, %1191, %1192 : vector<1x128xi32>
    %c1_i32_486 = arith.constant 1 : i32
    %1194 = vector.broadcast %c1_i32_486 : i32 to vector<1x128xi32>
    %1195 = arith.addi %11, %1194 : vector<1x128xi32>
    %c8_i32_487 = arith.constant 8 : i32
    %1196 = vector.broadcast %c8_i32_487 : i32 to vector<1x128xi32>
    %1197 = arith.cmpi slt, %1195, %1196 : vector<1x128xi32>
    %1198 = arith.andi %1193, %1197 : vector<1x128xi1>
    %c1_i32_488 = arith.constant 1 : i32
    %1199 = vector.broadcast %c1_i32_488 : i32 to vector<1x128xi32>
    %1200 = arith.addi %13, %1199 : vector<1x128xi32>
    %c0_i32_489 = arith.constant 0 : i32
    %1201 = vector.broadcast %c0_i32_489 : i32 to vector<1x128xi32>
    %1202 = arith.cmpi sge, %1200, %1201 : vector<1x128xi32>
    %1203 = arith.andi %1198, %1202 : vector<1x128xi1>
    %c1_i32_490 = arith.constant 1 : i32
    %1204 = vector.broadcast %c1_i32_490 : i32 to vector<1x128xi32>
    %1205 = arith.addi %13, %1204 : vector<1x128xi32>
    %c8_i32_491 = arith.constant 8 : i32
    %1206 = vector.broadcast %c8_i32_491 : i32 to vector<1x128xi32>
    %1207 = arith.cmpi slt, %1205, %1206 : vector<1x128xi32>
    %1208 = arith.andi %1203, %1207 : vector<1x128xi1>
    %cst_492 = arith.constant 0.000000e+00 : f32
    %1209 = vector.shape_cast %1208 : vector<1x128xi1> to vector<1x128xi1>
    %1210 = vector.broadcast %1209 : vector<1x128xi1> to vector<16x128xi1>
    %1211 = vector.broadcast %cst_492 : f32 to vector<16x128xf32>
    %1212 = arith.select %1210, %1189, %1211 : vector<16x128xi1>, vector<16x128xf32>
    %1213 = tpu.concatenate %1021, %1045, %1069, %1093, %1116, %1140, %1164, %1188, %1212 in 0 : vector<16x128xf32>, vector<16x128xf32>, vector<16x128xf32>, vector<16x128xf32>, vector<16x128xf32>, vector<16x128xf32>, vector<16x128xf32>, vector<16x128xf32>, vector<16x128xf32> -> vector<144x128xf32>
    %cst_493 = arith.constant dense<0.000000e+00> : vector<8x128xf32>
    %1214 = tpu.matmul %996, %1213, %cst_493 {dimension_numbers = #tpu.dot_dimension_numbers<[1], [0], [0], [1], [0, 0, 1, 1], [], []>} : vector<8x144xf32>, vector<144x128xf32>, vector<8x128xf32> -> vector<8x128xf32>
    %1215 = vector.broadcast %997 : vector<8x1xf32> to vector<8x128xf32>
    %1216 = arith.addf %1214, %1215 : vector<8x128xf32>
    %c4_494 = arith.constant 4 : index
    %1217 = memref.load %arg1[%c4_494] : memref<9xf32, #tpu.memory_space<smem>>
    %cst_495 = arith.constant 0.000000e+00 : f32
    %1218 = vector.broadcast %cst_495 : f32 to vector<8x128xf32>
    %1219 = arith.cmpf oge, %1216, %1218 : vector<8x128xf32>
    %1220 = vector.broadcast %1217 : f32 to vector<8x128xf32>
    %1221 = arith.mulf %1220, %1216 : vector<8x128xf32>
    %1222 = arith.select %1219, %1216, %1221 : vector<8x128xi1>, vector<8x128xf32>
    %c0_496 = arith.constant 0 : index
    %c15 = arith.constant 15 : index
    %1223 = vector.load %arg4[%c0_496, %c15] : memref<16x32xf32, #tpu.memory_space<vmem>>, vector<8x1xf32>
    %1224 = vector.broadcast %1223 : vector<8x1xf32> to vector<8x128xf32>
    %1225 = arith.mulf %1222, %1224 : vector<8x128xf32>
    %c0_497 = arith.constant 0 : index
    %c16_498 = arith.constant 16 : index
    %1226 = vector.load %arg4[%c0_497, %c16_498] : memref<16x32xf32, #tpu.memory_space<vmem>>, vector<8x1xf32>
    %1227 = vector.broadcast %1226 : vector<8x1xf32> to vector<8x128xf32>
    %1228 = arith.addf %1225, %1227 : vector<8x128xf32>
    %c168 = arith.constant 168 : index
    %c0_499 = arith.constant 0 : index
    %1229 = vector.load %arg3[%c168, %c0_499] : memref<320x144xf32, #tpu.memory_space<vmem>>, vector<16x8xf32>
    %cst_500 = arith.constant dense<0.000000e+00> : vector<16x128xf32>
    %1230 = tpu.matmul %1229, %720, %cst_500 {dimension_numbers = #tpu.dot_dimension_numbers<[1], [0], [0], [1], [0, 0, 1, 1], [], []>} : vector<16x8xf32>, vector<8x128xf32>, vector<16x128xf32> -> vector<16x128xf32>
    %c0_501 = arith.constant 0 : index
    %c17 = arith.constant 17 : index
    %1231 = vector.load %arg4[%c0_501, %c17] : memref<16x32xf32, #tpu.memory_space<vmem>>, vector<16x1xf32>
    %1232 = vector.broadcast %1231 : vector<16x1xf32> to vector<16x128xf32>
    %1233 = arith.addf %1230, %1232 : vector<16x128xf32>
    %c184 = arith.constant 184 : index
    %c0_502 = arith.constant 0 : index
    %1234 = vector.load %arg3[%c184, %c0_502] : memref<320x144xf32, #tpu.memory_space<vmem>>, vector<16x8xf32>
    %cst_503 = arith.constant dense<0.000000e+00> : vector<16x128xf32>
    %1235 = tpu.matmul %1234, %1228, %cst_503 {dimension_numbers = #tpu.dot_dimension_numbers<[1], [0], [0], [1], [0, 0, 1, 1], [], []>} : vector<16x8xf32>, vector<8x128xf32>, vector<16x128xf32> -> vector<16x128xf32>
    %c0_504 = arith.constant 0 : index
    %c18 = arith.constant 18 : index
    %1236 = vector.load %arg4[%c0_504, %c18] : memref<16x32xf32, #tpu.memory_space<vmem>>, vector<16x1xf32>
    %1237 = vector.broadcast %1236 : vector<16x1xf32> to vector<16x128xf32>
    %1238 = arith.addf %1235, %1237 : vector<16x128xf32>
    %c216 = arith.constant 216 : index
    %c0_505 = arith.constant 0 : index
    %1239 = vector.load %arg3[%c216, %c0_505] : memref<320x144xf32, #tpu.memory_space<vmem>>, vector<16x16xf32>
    %cst_506 = arith.constant dense<0.000000e+00> : vector<16x128xf32>
    %1240 = tpu.matmul %1239, %1233, %cst_506 {dimension_numbers = #tpu.dot_dimension_numbers<[1], [0], [0], [1], [0, 0, 1, 1], [], []>} : vector<16x16xf32>, vector<16x128xf32>, vector<16x128xf32> -> vector<16x128xf32>
    %c0_507 = arith.constant 0 : index
    %c20 = arith.constant 20 : index
    %1241 = vector.load %arg4[%c0_507, %c20] : memref<16x32xf32, #tpu.memory_space<vmem>>, vector<16x1xf32>
    %1242 = vector.broadcast %1241 : vector<16x1xf32> to vector<16x128xf32>
    %1243 = arith.addf %1240, %1242 : vector<16x128xf32>
    %c232 = arith.constant 232 : index
    %c0_508 = arith.constant 0 : index
    %1244 = vector.load %arg3[%c232, %c0_508] : memref<320x144xf32, #tpu.memory_space<vmem>>, vector<16x16xf32>
    %cst_509 = arith.constant dense<0.000000e+00> : vector<16x128xf32>
    %1245 = tpu.matmul %1244, %1238, %cst_509 {dimension_numbers = #tpu.dot_dimension_numbers<[1], [0], [0], [1], [0, 0, 1, 1], [], []>} : vector<16x16xf32>, vector<16x128xf32>, vector<16x128xf32> -> vector<16x128xf32>
    %c0_510 = arith.constant 0 : index
    %c21 = arith.constant 21 : index
    %1246 = vector.load %arg4[%c0_510, %c21] : memref<16x32xf32, #tpu.memory_space<vmem>>, vector<16x1xf32>
    %1247 = vector.broadcast %1246 : vector<16x1xf32> to vector<16x128xf32>
    %1248 = arith.addf %1245, %1247 : vector<16x128xf32>
    %1249 = arith.addf %1243, %1248 : vector<16x128xf32>
    %cst_511 = arith.constant 0.000000e+00 : f32
    %1250 = vector.broadcast %cst_511 : f32 to vector<16x128xf32>
    %1251 = arith.maximumf %1249, %1250 : vector<16x128xf32>
    %c248 = arith.constant 248 : index
    %c0_512 = arith.constant 0 : index
    %1252 = vector.load %arg3[%c248, %c0_512] : memref<320x144xf32, #tpu.memory_space<vmem>>, vector<1x16xf32>
    %cst_513 = arith.constant dense<0.000000e+00> : vector<1x128xf32>
    %1253 = tpu.matmul %1252, %1251, %cst_513 {dimension_numbers = #tpu.dot_dimension_numbers<[1], [0], [0], [1], [0, 0, 1, 1], [], []>} : vector<1x16xf32>, vector<16x128xf32>, vector<1x128xf32> -> vector<1x128xf32>
    %c5_514 = arith.constant 5 : index
    %1254 = memref.load %arg1[%c5_514] : memref<9xf32, #tpu.memory_space<smem>>
    %1255 = vector.broadcast %1254 : f32 to vector<1x128xf32>
    %1256 = arith.addf %1253, %1255 : vector<1x128xf32>
    %1257 = math.absf %1256 : vector<1x128xf32>
    %cst_515 = arith.constant 0.000000e+00 : f32
    %1258 = vector.broadcast %cst_515 : f32 to vector<1x128xf32>
    %1259 = arith.subf %1258, %1257 : vector<1x128xf32>
    %1260 = math.exp %1259 : vector<1x128xf32>
    %cst_516 = arith.constant 0.000000e+00 : f32
    %1261 = vector.broadcast %cst_516 : f32 to vector<1x128xf32>
    %1262 = arith.cmpf oge, %1256, %1261 : vector<1x128xf32>
    %cst_517 = arith.constant 1.000000e+00 : f32
    %1263 = vector.broadcast %cst_517 : f32 to vector<1x128xf32>
    %1264 = arith.select %1262, %1263, %1260 : vector<1x128xi1>, vector<1x128xf32>
    %cst_518 = arith.constant 1.000000e+00 : f32
    %1265 = vector.broadcast %cst_518 : f32 to vector<1x128xf32>
    %1266 = arith.addf %1265, %1260 : vector<1x128xf32>
    %1267 = arith.divf %1264, %1266 : vector<1x128xf32>
    %1268 = vector.broadcast %1267 : vector<1x128xf32> to vector<16x128xf32>
    %1269 = arith.mulf %1238, %1268 : vector<16x128xf32>
    %1270 = tpu.concatenate %1233, %1269 in 0 : vector<16x128xf32>, vector<16x128xf32> -> vector<32x128xf32>
    %c200 = arith.constant 200 : index
    %c0_519 = arith.constant 0 : index
    %1271 = vector.load %arg3[%c200, %c0_519] : memref<320x144xf32, #tpu.memory_space<vmem>>, vector<16x32xf32>
    %cst_520 = arith.constant dense<0.000000e+00> : vector<16x128xf32>
    %1272 = tpu.matmul %1271, %1270, %cst_520 {dimension_numbers = #tpu.dot_dimension_numbers<[1], [0], [0], [1], [0, 0, 1, 1], [], []>} : vector<16x32xf32>, vector<32x128xf32>, vector<16x128xf32> -> vector<16x128xf32>
    %c0_521 = arith.constant 0 : index
    %c19 = arith.constant 19 : index
    %1273 = vector.load %arg4[%c0_521, %c19] : memref<16x32xf32, #tpu.memory_space<vmem>>, vector<16x1xf32>
    %1274 = vector.broadcast %1273 : vector<16x1xf32> to vector<16x128xf32>
    %1275 = arith.addf %1272, %1274 : vector<16x128xf32>
    %cst_522 = arith.constant dense<0.000000e+00> : vector<16x512xf32>
    %1276 = tpu.matmul %1275, %15, %cst_522 {dimension_numbers = #tpu.dot_dimension_numbers<[1], [0], [0], [1], [0, 0, 1, 1], [], []>} : vector<16x128xf32>, vector<128x512xf32>, vector<16x512xf32> -> vector<16x512xf32>
    %cst_523 = arith.constant dense<0.000000e+00> : vector<8x512xf32>
    %1277 = tpu.matmul %1228, %15, %cst_523 {dimension_numbers = #tpu.dot_dimension_numbers<[1], [0], [0], [1], [0, 0, 1, 1], [], []>} : vector<8x128xf32>, vector<128x512xf32>, vector<8x512xf32> -> vector<8x512xf32>
    %c256 = arith.constant 256 : index
    %c0_524 = arith.constant 0 : index
    %1278 = vector.load %arg3[%c256, %c0_524] : memref<320x144xf32, #tpu.memory_space<vmem>>, vector<8x8xf32>
    %cst_525 = arith.constant dense<0.000000e+00> : vector<8x512xf32>
    %1279 = tpu.matmul %1278, %1277, %cst_525 {dimension_numbers = #tpu.dot_dimension_numbers<[1], [0], [0], [1], [0, 0, 1, 1], [], []>} : vector<8x8xf32>, vector<8x512xf32>, vector<8x512xf32> -> vector<8x512xf32>
    %c0_526 = arith.constant 0 : index
    %c22 = arith.constant 22 : index
    %1280 = vector.load %arg4[%c0_526, %c22] : memref<16x32xf32, #tpu.memory_space<vmem>>, vector<8x1xf32>
    %1281 = vector.broadcast %1280 : vector<8x1xf32> to vector<8x512xf32>
    %1282 = arith.addf %1279, %1281 : vector<8x512xf32>
    %c264 = arith.constant 264 : index
    %c0_527 = arith.constant 0 : index
    %1283 = vector.load %arg3[%c264, %c0_527] : memref<320x144xf32, #tpu.memory_space<vmem>>, vector<8x16xf32>
    %cst_528 = arith.constant dense<0.000000e+00> : vector<8x512xf32>
    %1284 = tpu.matmul %1283, %1276, %cst_528 {dimension_numbers = #tpu.dot_dimension_numbers<[1], [0], [0], [1], [0, 0, 1, 1], [], []>} : vector<8x16xf32>, vector<16x512xf32>, vector<8x512xf32> -> vector<8x512xf32>
    %c0_529 = arith.constant 0 : index
    %c23 = arith.constant 23 : index
    %1285 = vector.load %arg4[%c0_529, %c23] : memref<16x32xf32, #tpu.memory_space<vmem>>, vector<8x1xf32>
    %1286 = vector.broadcast %1285 : vector<8x1xf32> to vector<8x512xf32>
    %1287 = arith.addf %1284, %1286 : vector<8x512xf32>
    %c280 = arith.constant 280 : index
    %c0_530 = arith.constant 0 : index
    %1288 = vector.load %arg3[%c280, %c0_530] : memref<320x144xf32, #tpu.memory_space<vmem>>, vector<8x8xf32>
    %cst_531 = arith.constant dense<0.000000e+00> : vector<8x512xf32>
    %1289 = tpu.matmul %1288, %1282, %cst_531 {dimension_numbers = #tpu.dot_dimension_numbers<[1], [0], [0], [1], [0, 0, 1, 1], [], []>} : vector<8x8xf32>, vector<8x512xf32>, vector<8x512xf32> -> vector<8x512xf32>
    %c0_532 = arith.constant 0 : index
    %c25 = arith.constant 25 : index
    %1290 = vector.load %arg4[%c0_532, %c25] : memref<16x32xf32, #tpu.memory_space<vmem>>, vector<8x1xf32>
    %1291 = vector.broadcast %1290 : vector<8x1xf32> to vector<8x512xf32>
    %1292 = arith.addf %1289, %1291 : vector<8x512xf32>
    %c288 = arith.constant 288 : index
    %c0_533 = arith.constant 0 : index
    %1293 = vector.load %arg3[%c288, %c0_533] : memref<320x144xf32, #tpu.memory_space<vmem>>, vector<8x8xf32>
    %cst_534 = arith.constant dense<0.000000e+00> : vector<8x512xf32>
    %1294 = tpu.matmul %1293, %1287, %cst_534 {dimension_numbers = #tpu.dot_dimension_numbers<[1], [0], [0], [1], [0, 0, 1, 1], [], []>} : vector<8x8xf32>, vector<8x512xf32>, vector<8x512xf32> -> vector<8x512xf32>
    %c0_535 = arith.constant 0 : index
    %c26 = arith.constant 26 : index
    %1295 = vector.load %arg4[%c0_535, %c26] : memref<16x32xf32, #tpu.memory_space<vmem>>, vector<8x1xf32>
    %1296 = vector.broadcast %1295 : vector<8x1xf32> to vector<8x512xf32>
    %1297 = arith.addf %1294, %1296 : vector<8x512xf32>
    %1298 = arith.addf %1292, %1297 : vector<8x512xf32>
    %cst_536 = arith.constant 0.000000e+00 : f32
    %1299 = vector.broadcast %cst_536 : f32 to vector<8x512xf32>
    %1300 = arith.maximumf %1298, %1299 : vector<8x512xf32>
    %c296 = arith.constant 296 : index
    %c0_537 = arith.constant 0 : index
    %1301 = vector.load %arg3[%c296, %c0_537] : memref<320x144xf32, #tpu.memory_space<vmem>>, vector<1x8xf32>
    %cst_538 = arith.constant dense<0.000000e+00> : vector<1x512xf32>
    %1302 = tpu.matmul %1301, %1300, %cst_538 {dimension_numbers = #tpu.dot_dimension_numbers<[1], [0], [0], [1], [0, 0, 1, 1], [], []>} : vector<1x8xf32>, vector<8x512xf32>, vector<1x512xf32> -> vector<1x512xf32>
    %c6_539 = arith.constant 6 : index
    %1303 = memref.load %arg1[%c6_539] : memref<9xf32, #tpu.memory_space<smem>>
    %1304 = vector.broadcast %1303 : f32 to vector<1x512xf32>
    %1305 = arith.addf %1302, %1304 : vector<1x512xf32>
    %1306 = math.absf %1305 : vector<1x512xf32>
    %cst_540 = arith.constant 0.000000e+00 : f32
    %1307 = vector.broadcast %cst_540 : f32 to vector<1x512xf32>
    %1308 = arith.subf %1307, %1306 : vector<1x512xf32>
    %1309 = math.exp %1308 : vector<1x512xf32>
    %cst_541 = arith.constant 0.000000e+00 : f32
    %1310 = vector.broadcast %cst_541 : f32 to vector<1x512xf32>
    %1311 = arith.cmpf oge, %1305, %1310 : vector<1x512xf32>
    %cst_542 = arith.constant 1.000000e+00 : f32
    %1312 = vector.broadcast %cst_542 : f32 to vector<1x512xf32>
    %1313 = arith.select %1311, %1312, %1309 : vector<1x512xi1>, vector<1x512xf32>
    %cst_543 = arith.constant 1.000000e+00 : f32
    %1314 = vector.broadcast %cst_543 : f32 to vector<1x512xf32>
    %1315 = arith.addf %1314, %1309 : vector<1x512xf32>
    %1316 = arith.divf %1313, %1315 : vector<1x512xf32>
    %1317 = vector.broadcast %1316 : vector<1x512xf32> to vector<8x512xf32>
    %1318 = arith.mulf %1287, %1317 : vector<8x512xf32>
    %1319 = tpu.concatenate %1282, %1318 in 0 : vector<8x512xf32>, vector<8x512xf32> -> vector<16x512xf32>
    %c272 = arith.constant 272 : index
    %c0_544 = arith.constant 0 : index
    %1320 = vector.load %arg3[%c272, %c0_544] : memref<320x144xf32, #tpu.memory_space<vmem>>, vector<8x16xf32>
    %cst_545 = arith.constant dense<0.000000e+00> : vector<8x512xf32>
    %1321 = tpu.matmul %1320, %1319, %cst_545 {dimension_numbers = #tpu.dot_dimension_numbers<[1], [0], [0], [1], [0, 0, 1, 1], [], []>} : vector<8x16xf32>, vector<16x512xf32>, vector<8x512xf32> -> vector<8x512xf32>
    %c0_546 = arith.constant 0 : index
    %c24_547 = arith.constant 24 : index
    %1322 = vector.load %arg4[%c0_546, %c24_547] : memref<16x32xf32, #tpu.memory_space<vmem>>, vector<8x1xf32>
    %1323 = vector.broadcast %1322 : vector<8x1xf32> to vector<8x512xf32>
    %1324 = arith.addf %1321, %1323 : vector<8x512xf32>
    %c304 = arith.constant 304 : index
    %c0_548 = arith.constant 0 : index
    %1325 = vector.load %arg3[%c304, %c0_548] : memref<320x144xf32, #tpu.memory_space<vmem>>, vector<8x72xf32>
    %c0_549 = arith.constant 0 : index
    %c27 = arith.constant 27 : index
    %1326 = vector.load %arg4[%c0_549, %c27] : memref<16x32xf32, #tpu.memory_space<vmem>>, vector<8x1xf32>
    %c17_i32_550 = arith.constant 17 : i32
    %1327 = tpu.dynamic_rotate %1324 by %c17_i32_550 dim 1 : vector<8x512xf32>, i32 -> vector<8x512xf32>
    %c-1_i32_551 = arith.constant -1 : i32
    %1328 = vector.broadcast %c-1_i32_551 : i32 to vector<1x512xi32>
    %1329 = arith.addi %4, %1328 : vector<1x512xi32>
    %c0_i32_552 = arith.constant 0 : i32
    %1330 = vector.broadcast %c0_i32_552 : i32 to vector<1x512xi32>
    %1331 = arith.cmpi sge, %1329, %1330 : vector<1x512xi32>
    %c-1_i32_553 = arith.constant -1 : i32
    %1332 = vector.broadcast %c-1_i32_553 : i32 to vector<1x512xi32>
    %1333 = arith.addi %4, %1332 : vector<1x512xi32>
    %c16_i32_554 = arith.constant 16 : i32
    %1334 = vector.broadcast %c16_i32_554 : i32 to vector<1x512xi32>
    %1335 = arith.cmpi slt, %1333, %1334 : vector<1x512xi32>
    %1336 = arith.andi %1331, %1335 : vector<1x512xi1>
    %c-1_i32_555 = arith.constant -1 : i32
    %1337 = vector.broadcast %c-1_i32_555 : i32 to vector<1x512xi32>
    %1338 = arith.addi %6, %1337 : vector<1x512xi32>
    %c0_i32_556 = arith.constant 0 : i32
    %1339 = vector.broadcast %c0_i32_556 : i32 to vector<1x512xi32>
    %1340 = arith.cmpi sge, %1338, %1339 : vector<1x512xi32>
    %1341 = arith.andi %1336, %1340 : vector<1x512xi1>
    %c-1_i32_557 = arith.constant -1 : i32
    %1342 = vector.broadcast %c-1_i32_557 : i32 to vector<1x512xi32>
    %1343 = arith.addi %6, %1342 : vector<1x512xi32>
    %c16_i32_558 = arith.constant 16 : i32
    %1344 = vector.broadcast %c16_i32_558 : i32 to vector<1x512xi32>
    %1345 = arith.cmpi slt, %1343, %1344 : vector<1x512xi32>
    %1346 = arith.andi %1341, %1345 : vector<1x512xi1>
    %cst_559 = arith.constant 0.000000e+00 : f32
    %1347 = vector.shape_cast %1346 : vector<1x512xi1> to vector<1x512xi1>
    %1348 = vector.broadcast %1347 : vector<1x512xi1> to vector<8x512xi1>
    %1349 = vector.broadcast %cst_559 : f32 to vector<8x512xf32>
    %1350 = arith.select %1348, %1327, %1349 : vector<8x512xi1>, vector<8x512xf32>
    %c16_i32_560 = arith.constant 16 : i32
    %1351 = tpu.dynamic_rotate %1324 by %c16_i32_560 dim 1 : vector<8x512xf32>, i32 -> vector<8x512xf32>
    %c-1_i32_561 = arith.constant -1 : i32
    %1352 = vector.broadcast %c-1_i32_561 : i32 to vector<1x512xi32>
    %1353 = arith.addi %4, %1352 : vector<1x512xi32>
    %c0_i32_562 = arith.constant 0 : i32
    %1354 = vector.broadcast %c0_i32_562 : i32 to vector<1x512xi32>
    %1355 = arith.cmpi sge, %1353, %1354 : vector<1x512xi32>
    %c-1_i32_563 = arith.constant -1 : i32
    %1356 = vector.broadcast %c-1_i32_563 : i32 to vector<1x512xi32>
    %1357 = arith.addi %4, %1356 : vector<1x512xi32>
    %c16_i32_564 = arith.constant 16 : i32
    %1358 = vector.broadcast %c16_i32_564 : i32 to vector<1x512xi32>
    %1359 = arith.cmpi slt, %1357, %1358 : vector<1x512xi32>
    %1360 = arith.andi %1355, %1359 : vector<1x512xi1>
    %c0_i32_565 = arith.constant 0 : i32
    %1361 = vector.broadcast %c0_i32_565 : i32 to vector<1x512xi32>
    %1362 = arith.addi %6, %1361 : vector<1x512xi32>
    %c0_i32_566 = arith.constant 0 : i32
    %1363 = vector.broadcast %c0_i32_566 : i32 to vector<1x512xi32>
    %1364 = arith.cmpi sge, %1362, %1363 : vector<1x512xi32>
    %1365 = arith.andi %1360, %1364 : vector<1x512xi1>
    %c0_i32_567 = arith.constant 0 : i32
    %1366 = vector.broadcast %c0_i32_567 : i32 to vector<1x512xi32>
    %1367 = arith.addi %6, %1366 : vector<1x512xi32>
    %c16_i32_568 = arith.constant 16 : i32
    %1368 = vector.broadcast %c16_i32_568 : i32 to vector<1x512xi32>
    %1369 = arith.cmpi slt, %1367, %1368 : vector<1x512xi32>
    %1370 = arith.andi %1365, %1369 : vector<1x512xi1>
    %cst_569 = arith.constant 0.000000e+00 : f32
    %1371 = vector.shape_cast %1370 : vector<1x512xi1> to vector<1x512xi1>
    %1372 = vector.broadcast %1371 : vector<1x512xi1> to vector<8x512xi1>
    %1373 = vector.broadcast %cst_569 : f32 to vector<8x512xf32>
    %1374 = arith.select %1372, %1351, %1373 : vector<8x512xi1>, vector<8x512xf32>
    %c15_i32_570 = arith.constant 15 : i32
    %1375 = tpu.dynamic_rotate %1324 by %c15_i32_570 dim 1 : vector<8x512xf32>, i32 -> vector<8x512xf32>
    %c-1_i32_571 = arith.constant -1 : i32
    %1376 = vector.broadcast %c-1_i32_571 : i32 to vector<1x512xi32>
    %1377 = arith.addi %4, %1376 : vector<1x512xi32>
    %c0_i32_572 = arith.constant 0 : i32
    %1378 = vector.broadcast %c0_i32_572 : i32 to vector<1x512xi32>
    %1379 = arith.cmpi sge, %1377, %1378 : vector<1x512xi32>
    %c-1_i32_573 = arith.constant -1 : i32
    %1380 = vector.broadcast %c-1_i32_573 : i32 to vector<1x512xi32>
    %1381 = arith.addi %4, %1380 : vector<1x512xi32>
    %c16_i32_574 = arith.constant 16 : i32
    %1382 = vector.broadcast %c16_i32_574 : i32 to vector<1x512xi32>
    %1383 = arith.cmpi slt, %1381, %1382 : vector<1x512xi32>
    %1384 = arith.andi %1379, %1383 : vector<1x512xi1>
    %c1_i32_575 = arith.constant 1 : i32
    %1385 = vector.broadcast %c1_i32_575 : i32 to vector<1x512xi32>
    %1386 = arith.addi %6, %1385 : vector<1x512xi32>
    %c0_i32_576 = arith.constant 0 : i32
    %1387 = vector.broadcast %c0_i32_576 : i32 to vector<1x512xi32>
    %1388 = arith.cmpi sge, %1386, %1387 : vector<1x512xi32>
    %1389 = arith.andi %1384, %1388 : vector<1x512xi1>
    %c1_i32_577 = arith.constant 1 : i32
    %1390 = vector.broadcast %c1_i32_577 : i32 to vector<1x512xi32>
    %1391 = arith.addi %6, %1390 : vector<1x512xi32>
    %c16_i32_578 = arith.constant 16 : i32
    %1392 = vector.broadcast %c16_i32_578 : i32 to vector<1x512xi32>
    %1393 = arith.cmpi slt, %1391, %1392 : vector<1x512xi32>
    %1394 = arith.andi %1389, %1393 : vector<1x512xi1>
    %cst_579 = arith.constant 0.000000e+00 : f32
    %1395 = vector.shape_cast %1394 : vector<1x512xi1> to vector<1x512xi1>
    %1396 = vector.broadcast %1395 : vector<1x512xi1> to vector<8x512xi1>
    %1397 = vector.broadcast %cst_579 : f32 to vector<8x512xf32>
    %1398 = arith.select %1396, %1375, %1397 : vector<8x512xi1>, vector<8x512xf32>
    %c1_i32_580 = arith.constant 1 : i32
    %1399 = tpu.dynamic_rotate %1324 by %c1_i32_580 dim 1 : vector<8x512xf32>, i32 -> vector<8x512xf32>
    %c0_i32_581 = arith.constant 0 : i32
    %1400 = vector.broadcast %c0_i32_581 : i32 to vector<1x512xi32>
    %1401 = arith.addi %4, %1400 : vector<1x512xi32>
    %c0_i32_582 = arith.constant 0 : i32
    %1402 = vector.broadcast %c0_i32_582 : i32 to vector<1x512xi32>
    %1403 = arith.cmpi sge, %1401, %1402 : vector<1x512xi32>
    %c0_i32_583 = arith.constant 0 : i32
    %1404 = vector.broadcast %c0_i32_583 : i32 to vector<1x512xi32>
    %1405 = arith.addi %4, %1404 : vector<1x512xi32>
    %c16_i32_584 = arith.constant 16 : i32
    %1406 = vector.broadcast %c16_i32_584 : i32 to vector<1x512xi32>
    %1407 = arith.cmpi slt, %1405, %1406 : vector<1x512xi32>
    %1408 = arith.andi %1403, %1407 : vector<1x512xi1>
    %c-1_i32_585 = arith.constant -1 : i32
    %1409 = vector.broadcast %c-1_i32_585 : i32 to vector<1x512xi32>
    %1410 = arith.addi %6, %1409 : vector<1x512xi32>
    %c0_i32_586 = arith.constant 0 : i32
    %1411 = vector.broadcast %c0_i32_586 : i32 to vector<1x512xi32>
    %1412 = arith.cmpi sge, %1410, %1411 : vector<1x512xi32>
    %1413 = arith.andi %1408, %1412 : vector<1x512xi1>
    %c-1_i32_587 = arith.constant -1 : i32
    %1414 = vector.broadcast %c-1_i32_587 : i32 to vector<1x512xi32>
    %1415 = arith.addi %6, %1414 : vector<1x512xi32>
    %c16_i32_588 = arith.constant 16 : i32
    %1416 = vector.broadcast %c16_i32_588 : i32 to vector<1x512xi32>
    %1417 = arith.cmpi slt, %1415, %1416 : vector<1x512xi32>
    %1418 = arith.andi %1413, %1417 : vector<1x512xi1>
    %cst_589 = arith.constant 0.000000e+00 : f32
    %1419 = vector.shape_cast %1418 : vector<1x512xi1> to vector<1x512xi1>
    %1420 = vector.broadcast %1419 : vector<1x512xi1> to vector<8x512xi1>
    %1421 = vector.broadcast %cst_589 : f32 to vector<8x512xf32>
    %1422 = arith.select %1420, %1399, %1421 : vector<8x512xi1>, vector<8x512xf32>
    %c0_i32_590 = arith.constant 0 : i32
    %1423 = vector.broadcast %c0_i32_590 : i32 to vector<1x512xi32>
    %1424 = arith.addi %4, %1423 : vector<1x512xi32>
    %c0_i32_591 = arith.constant 0 : i32
    %1425 = vector.broadcast %c0_i32_591 : i32 to vector<1x512xi32>
    %1426 = arith.cmpi sge, %1424, %1425 : vector<1x512xi32>
    %c0_i32_592 = arith.constant 0 : i32
    %1427 = vector.broadcast %c0_i32_592 : i32 to vector<1x512xi32>
    %1428 = arith.addi %4, %1427 : vector<1x512xi32>
    %c16_i32_593 = arith.constant 16 : i32
    %1429 = vector.broadcast %c16_i32_593 : i32 to vector<1x512xi32>
    %1430 = arith.cmpi slt, %1428, %1429 : vector<1x512xi32>
    %1431 = arith.andi %1426, %1430 : vector<1x512xi1>
    %c0_i32_594 = arith.constant 0 : i32
    %1432 = vector.broadcast %c0_i32_594 : i32 to vector<1x512xi32>
    %1433 = arith.addi %6, %1432 : vector<1x512xi32>
    %c0_i32_595 = arith.constant 0 : i32
    %1434 = vector.broadcast %c0_i32_595 : i32 to vector<1x512xi32>
    %1435 = arith.cmpi sge, %1433, %1434 : vector<1x512xi32>
    %1436 = arith.andi %1431, %1435 : vector<1x512xi1>
    %c0_i32_596 = arith.constant 0 : i32
    %1437 = vector.broadcast %c0_i32_596 : i32 to vector<1x512xi32>
    %1438 = arith.addi %6, %1437 : vector<1x512xi32>
    %c16_i32_597 = arith.constant 16 : i32
    %1439 = vector.broadcast %c16_i32_597 : i32 to vector<1x512xi32>
    %1440 = arith.cmpi slt, %1438, %1439 : vector<1x512xi32>
    %1441 = arith.andi %1436, %1440 : vector<1x512xi1>
    %cst_598 = arith.constant 0.000000e+00 : f32
    %1442 = vector.shape_cast %1441 : vector<1x512xi1> to vector<1x512xi1>
    %1443 = vector.broadcast %1442 : vector<1x512xi1> to vector<8x512xi1>
    %1444 = vector.broadcast %cst_598 : f32 to vector<8x512xf32>
    %1445 = arith.select %1443, %1324, %1444 : vector<8x512xi1>, vector<8x512xf32>
    %c511_i32_599 = arith.constant 511 : i32
    %1446 = tpu.dynamic_rotate %1324 by %c511_i32_599 dim 1 : vector<8x512xf32>, i32 -> vector<8x512xf32>
    %c0_i32_600 = arith.constant 0 : i32
    %1447 = vector.broadcast %c0_i32_600 : i32 to vector<1x512xi32>
    %1448 = arith.addi %4, %1447 : vector<1x512xi32>
    %c0_i32_601 = arith.constant 0 : i32
    %1449 = vector.broadcast %c0_i32_601 : i32 to vector<1x512xi32>
    %1450 = arith.cmpi sge, %1448, %1449 : vector<1x512xi32>
    %c0_i32_602 = arith.constant 0 : i32
    %1451 = vector.broadcast %c0_i32_602 : i32 to vector<1x512xi32>
    %1452 = arith.addi %4, %1451 : vector<1x512xi32>
    %c16_i32_603 = arith.constant 16 : i32
    %1453 = vector.broadcast %c16_i32_603 : i32 to vector<1x512xi32>
    %1454 = arith.cmpi slt, %1452, %1453 : vector<1x512xi32>
    %1455 = arith.andi %1450, %1454 : vector<1x512xi1>
    %c1_i32_604 = arith.constant 1 : i32
    %1456 = vector.broadcast %c1_i32_604 : i32 to vector<1x512xi32>
    %1457 = arith.addi %6, %1456 : vector<1x512xi32>
    %c0_i32_605 = arith.constant 0 : i32
    %1458 = vector.broadcast %c0_i32_605 : i32 to vector<1x512xi32>
    %1459 = arith.cmpi sge, %1457, %1458 : vector<1x512xi32>
    %1460 = arith.andi %1455, %1459 : vector<1x512xi1>
    %c1_i32_606 = arith.constant 1 : i32
    %1461 = vector.broadcast %c1_i32_606 : i32 to vector<1x512xi32>
    %1462 = arith.addi %6, %1461 : vector<1x512xi32>
    %c16_i32_607 = arith.constant 16 : i32
    %1463 = vector.broadcast %c16_i32_607 : i32 to vector<1x512xi32>
    %1464 = arith.cmpi slt, %1462, %1463 : vector<1x512xi32>
    %1465 = arith.andi %1460, %1464 : vector<1x512xi1>
    %cst_608 = arith.constant 0.000000e+00 : f32
    %1466 = vector.shape_cast %1465 : vector<1x512xi1> to vector<1x512xi1>
    %1467 = vector.broadcast %1466 : vector<1x512xi1> to vector<8x512xi1>
    %1468 = vector.broadcast %cst_608 : f32 to vector<8x512xf32>
    %1469 = arith.select %1467, %1446, %1468 : vector<8x512xi1>, vector<8x512xf32>
    %c497_i32_609 = arith.constant 497 : i32
    %1470 = tpu.dynamic_rotate %1324 by %c497_i32_609 dim 1 : vector<8x512xf32>, i32 -> vector<8x512xf32>
    %c1_i32_610 = arith.constant 1 : i32
    %1471 = vector.broadcast %c1_i32_610 : i32 to vector<1x512xi32>
    %1472 = arith.addi %4, %1471 : vector<1x512xi32>
    %c0_i32_611 = arith.constant 0 : i32
    %1473 = vector.broadcast %c0_i32_611 : i32 to vector<1x512xi32>
    %1474 = arith.cmpi sge, %1472, %1473 : vector<1x512xi32>
    %c1_i32_612 = arith.constant 1 : i32
    %1475 = vector.broadcast %c1_i32_612 : i32 to vector<1x512xi32>
    %1476 = arith.addi %4, %1475 : vector<1x512xi32>
    %c16_i32_613 = arith.constant 16 : i32
    %1477 = vector.broadcast %c16_i32_613 : i32 to vector<1x512xi32>
    %1478 = arith.cmpi slt, %1476, %1477 : vector<1x512xi32>
    %1479 = arith.andi %1474, %1478 : vector<1x512xi1>
    %c-1_i32_614 = arith.constant -1 : i32
    %1480 = vector.broadcast %c-1_i32_614 : i32 to vector<1x512xi32>
    %1481 = arith.addi %6, %1480 : vector<1x512xi32>
    %c0_i32_615 = arith.constant 0 : i32
    %1482 = vector.broadcast %c0_i32_615 : i32 to vector<1x512xi32>
    %1483 = arith.cmpi sge, %1481, %1482 : vector<1x512xi32>
    %1484 = arith.andi %1479, %1483 : vector<1x512xi1>
    %c-1_i32_616 = arith.constant -1 : i32
    %1485 = vector.broadcast %c-1_i32_616 : i32 to vector<1x512xi32>
    %1486 = arith.addi %6, %1485 : vector<1x512xi32>
    %c16_i32_617 = arith.constant 16 : i32
    %1487 = vector.broadcast %c16_i32_617 : i32 to vector<1x512xi32>
    %1488 = arith.cmpi slt, %1486, %1487 : vector<1x512xi32>
    %1489 = arith.andi %1484, %1488 : vector<1x512xi1>
    %cst_618 = arith.constant 0.000000e+00 : f32
    %1490 = vector.shape_cast %1489 : vector<1x512xi1> to vector<1x512xi1>
    %1491 = vector.broadcast %1490 : vector<1x512xi1> to vector<8x512xi1>
    %1492 = vector.broadcast %cst_618 : f32 to vector<8x512xf32>
    %1493 = arith.select %1491, %1470, %1492 : vector<8x512xi1>, vector<8x512xf32>
    %c496_i32_619 = arith.constant 496 : i32
    %1494 = tpu.dynamic_rotate %1324 by %c496_i32_619 dim 1 : vector<8x512xf32>, i32 -> vector<8x512xf32>
    %c1_i32_620 = arith.constant 1 : i32
    %1495 = vector.broadcast %c1_i32_620 : i32 to vector<1x512xi32>
    %1496 = arith.addi %4, %1495 : vector<1x512xi32>
    %c0_i32_621 = arith.constant 0 : i32
    %1497 = vector.broadcast %c0_i32_621 : i32 to vector<1x512xi32>
    %1498 = arith.cmpi sge, %1496, %1497 : vector<1x512xi32>
    %c1_i32_622 = arith.constant 1 : i32
    %1499 = vector.broadcast %c1_i32_622 : i32 to vector<1x512xi32>
    %1500 = arith.addi %4, %1499 : vector<1x512xi32>
    %c16_i32_623 = arith.constant 16 : i32
    %1501 = vector.broadcast %c16_i32_623 : i32 to vector<1x512xi32>
    %1502 = arith.cmpi slt, %1500, %1501 : vector<1x512xi32>
    %1503 = arith.andi %1498, %1502 : vector<1x512xi1>
    %c0_i32_624 = arith.constant 0 : i32
    %1504 = vector.broadcast %c0_i32_624 : i32 to vector<1x512xi32>
    %1505 = arith.addi %6, %1504 : vector<1x512xi32>
    %c0_i32_625 = arith.constant 0 : i32
    %1506 = vector.broadcast %c0_i32_625 : i32 to vector<1x512xi32>
    %1507 = arith.cmpi sge, %1505, %1506 : vector<1x512xi32>
    %1508 = arith.andi %1503, %1507 : vector<1x512xi1>
    %c0_i32_626 = arith.constant 0 : i32
    %1509 = vector.broadcast %c0_i32_626 : i32 to vector<1x512xi32>
    %1510 = arith.addi %6, %1509 : vector<1x512xi32>
    %c16_i32_627 = arith.constant 16 : i32
    %1511 = vector.broadcast %c16_i32_627 : i32 to vector<1x512xi32>
    %1512 = arith.cmpi slt, %1510, %1511 : vector<1x512xi32>
    %1513 = arith.andi %1508, %1512 : vector<1x512xi1>
    %cst_628 = arith.constant 0.000000e+00 : f32
    %1514 = vector.shape_cast %1513 : vector<1x512xi1> to vector<1x512xi1>
    %1515 = vector.broadcast %1514 : vector<1x512xi1> to vector<8x512xi1>
    %1516 = vector.broadcast %cst_628 : f32 to vector<8x512xf32>
    %1517 = arith.select %1515, %1494, %1516 : vector<8x512xi1>, vector<8x512xf32>
    %c495_i32_629 = arith.constant 495 : i32
    %1518 = tpu.dynamic_rotate %1324 by %c495_i32_629 dim 1 : vector<8x512xf32>, i32 -> vector<8x512xf32>
    %c1_i32_630 = arith.constant 1 : i32
    %1519 = vector.broadcast %c1_i32_630 : i32 to vector<1x512xi32>
    %1520 = arith.addi %4, %1519 : vector<1x512xi32>
    %c0_i32_631 = arith.constant 0 : i32
    %1521 = vector.broadcast %c0_i32_631 : i32 to vector<1x512xi32>
    %1522 = arith.cmpi sge, %1520, %1521 : vector<1x512xi32>
    %c1_i32_632 = arith.constant 1 : i32
    %1523 = vector.broadcast %c1_i32_632 : i32 to vector<1x512xi32>
    %1524 = arith.addi %4, %1523 : vector<1x512xi32>
    %c16_i32_633 = arith.constant 16 : i32
    %1525 = vector.broadcast %c16_i32_633 : i32 to vector<1x512xi32>
    %1526 = arith.cmpi slt, %1524, %1525 : vector<1x512xi32>
    %1527 = arith.andi %1522, %1526 : vector<1x512xi1>
    %c1_i32_634 = arith.constant 1 : i32
    %1528 = vector.broadcast %c1_i32_634 : i32 to vector<1x512xi32>
    %1529 = arith.addi %6, %1528 : vector<1x512xi32>
    %c0_i32_635 = arith.constant 0 : i32
    %1530 = vector.broadcast %c0_i32_635 : i32 to vector<1x512xi32>
    %1531 = arith.cmpi sge, %1529, %1530 : vector<1x512xi32>
    %1532 = arith.andi %1527, %1531 : vector<1x512xi1>
    %c1_i32_636 = arith.constant 1 : i32
    %1533 = vector.broadcast %c1_i32_636 : i32 to vector<1x512xi32>
    %1534 = arith.addi %6, %1533 : vector<1x512xi32>
    %c16_i32_637 = arith.constant 16 : i32
    %1535 = vector.broadcast %c16_i32_637 : i32 to vector<1x512xi32>
    %1536 = arith.cmpi slt, %1534, %1535 : vector<1x512xi32>
    %1537 = arith.andi %1532, %1536 : vector<1x512xi1>
    %cst_638 = arith.constant 0.000000e+00 : f32
    %1538 = vector.shape_cast %1537 : vector<1x512xi1> to vector<1x512xi1>
    %1539 = vector.broadcast %1538 : vector<1x512xi1> to vector<8x512xi1>
    %1540 = vector.broadcast %cst_638 : f32 to vector<8x512xf32>
    %1541 = arith.select %1539, %1518, %1540 : vector<8x512xi1>, vector<8x512xf32>
    %1542 = tpu.concatenate %1350, %1374, %1398, %1422, %1445, %1469, %1493, %1517, %1541 in 0 : vector<8x512xf32>, vector<8x512xf32>, vector<8x512xf32>, vector<8x512xf32>, vector<8x512xf32>, vector<8x512xf32>, vector<8x512xf32>, vector<8x512xf32>, vector<8x512xf32> -> vector<72x512xf32>
    %cst_639 = arith.constant dense<0.000000e+00> : vector<8x512xf32>
    %1543 = tpu.matmul %1325, %1542, %cst_639 {dimension_numbers = #tpu.dot_dimension_numbers<[1], [0], [0], [1], [0, 0, 1, 1], [], []>} : vector<8x72xf32>, vector<72x512xf32>, vector<8x512xf32> -> vector<8x512xf32>
    %1544 = vector.broadcast %1326 : vector<8x1xf32> to vector<8x512xf32>
    %1545 = arith.addf %1543, %1544 : vector<8x512xf32>
    %c7_640 = arith.constant 7 : index
    %1546 = memref.load %arg1[%c7_640] : memref<9xf32, #tpu.memory_space<smem>>
    %cst_641 = arith.constant 0.000000e+00 : f32
    %1547 = vector.broadcast %cst_641 : f32 to vector<8x512xf32>
    %1548 = arith.cmpf oge, %1545, %1547 : vector<8x512xf32>
    %1549 = vector.broadcast %1546 : f32 to vector<8x512xf32>
    %1550 = arith.mulf %1549, %1545 : vector<8x512xf32>
    %1551 = arith.select %1548, %1545, %1550 : vector<8x512xi1>, vector<8x512xf32>
    %c312 = arith.constant 312 : index
    %c0_642 = arith.constant 0 : index
    %1552 = vector.load %arg3[%c312, %c0_642] : memref<320x144xf32, #tpu.memory_space<vmem>>, vector<8x72xf32>
    %c0_643 = arith.constant 0 : index
    %c28 = arith.constant 28 : index
    %1553 = vector.load %arg4[%c0_643, %c28] : memref<16x32xf32, #tpu.memory_space<vmem>>, vector<8x1xf32>
    %c17_i32_644 = arith.constant 17 : i32
    %1554 = tpu.dynamic_rotate %1551 by %c17_i32_644 dim 1 : vector<8x512xf32>, i32 -> vector<8x512xf32>
    %c-1_i32_645 = arith.constant -1 : i32
    %1555 = vector.broadcast %c-1_i32_645 : i32 to vector<1x512xi32>
    %1556 = arith.addi %4, %1555 : vector<1x512xi32>
    %c0_i32_646 = arith.constant 0 : i32
    %1557 = vector.broadcast %c0_i32_646 : i32 to vector<1x512xi32>
    %1558 = arith.cmpi sge, %1556, %1557 : vector<1x512xi32>
    %c-1_i32_647 = arith.constant -1 : i32
    %1559 = vector.broadcast %c-1_i32_647 : i32 to vector<1x512xi32>
    %1560 = arith.addi %4, %1559 : vector<1x512xi32>
    %c16_i32_648 = arith.constant 16 : i32
    %1561 = vector.broadcast %c16_i32_648 : i32 to vector<1x512xi32>
    %1562 = arith.cmpi slt, %1560, %1561 : vector<1x512xi32>
    %1563 = arith.andi %1558, %1562 : vector<1x512xi1>
    %c-1_i32_649 = arith.constant -1 : i32
    %1564 = vector.broadcast %c-1_i32_649 : i32 to vector<1x512xi32>
    %1565 = arith.addi %6, %1564 : vector<1x512xi32>
    %c0_i32_650 = arith.constant 0 : i32
    %1566 = vector.broadcast %c0_i32_650 : i32 to vector<1x512xi32>
    %1567 = arith.cmpi sge, %1565, %1566 : vector<1x512xi32>
    %1568 = arith.andi %1563, %1567 : vector<1x512xi1>
    %c-1_i32_651 = arith.constant -1 : i32
    %1569 = vector.broadcast %c-1_i32_651 : i32 to vector<1x512xi32>
    %1570 = arith.addi %6, %1569 : vector<1x512xi32>
    %c16_i32_652 = arith.constant 16 : i32
    %1571 = vector.broadcast %c16_i32_652 : i32 to vector<1x512xi32>
    %1572 = arith.cmpi slt, %1570, %1571 : vector<1x512xi32>
    %1573 = arith.andi %1568, %1572 : vector<1x512xi1>
    %cst_653 = arith.constant 0.000000e+00 : f32
    %1574 = vector.shape_cast %1573 : vector<1x512xi1> to vector<1x512xi1>
    %1575 = vector.broadcast %1574 : vector<1x512xi1> to vector<8x512xi1>
    %1576 = vector.broadcast %cst_653 : f32 to vector<8x512xf32>
    %1577 = arith.select %1575, %1554, %1576 : vector<8x512xi1>, vector<8x512xf32>
    %c16_i32_654 = arith.constant 16 : i32
    %1578 = tpu.dynamic_rotate %1551 by %c16_i32_654 dim 1 : vector<8x512xf32>, i32 -> vector<8x512xf32>
    %c-1_i32_655 = arith.constant -1 : i32
    %1579 = vector.broadcast %c-1_i32_655 : i32 to vector<1x512xi32>
    %1580 = arith.addi %4, %1579 : vector<1x512xi32>
    %c0_i32_656 = arith.constant 0 : i32
    %1581 = vector.broadcast %c0_i32_656 : i32 to vector<1x512xi32>
    %1582 = arith.cmpi sge, %1580, %1581 : vector<1x512xi32>
    %c-1_i32_657 = arith.constant -1 : i32
    %1583 = vector.broadcast %c-1_i32_657 : i32 to vector<1x512xi32>
    %1584 = arith.addi %4, %1583 : vector<1x512xi32>
    %c16_i32_658 = arith.constant 16 : i32
    %1585 = vector.broadcast %c16_i32_658 : i32 to vector<1x512xi32>
    %1586 = arith.cmpi slt, %1584, %1585 : vector<1x512xi32>
    %1587 = arith.andi %1582, %1586 : vector<1x512xi1>
    %c0_i32_659 = arith.constant 0 : i32
    %1588 = vector.broadcast %c0_i32_659 : i32 to vector<1x512xi32>
    %1589 = arith.addi %6, %1588 : vector<1x512xi32>
    %c0_i32_660 = arith.constant 0 : i32
    %1590 = vector.broadcast %c0_i32_660 : i32 to vector<1x512xi32>
    %1591 = arith.cmpi sge, %1589, %1590 : vector<1x512xi32>
    %1592 = arith.andi %1587, %1591 : vector<1x512xi1>
    %c0_i32_661 = arith.constant 0 : i32
    %1593 = vector.broadcast %c0_i32_661 : i32 to vector<1x512xi32>
    %1594 = arith.addi %6, %1593 : vector<1x512xi32>
    %c16_i32_662 = arith.constant 16 : i32
    %1595 = vector.broadcast %c16_i32_662 : i32 to vector<1x512xi32>
    %1596 = arith.cmpi slt, %1594, %1595 : vector<1x512xi32>
    %1597 = arith.andi %1592, %1596 : vector<1x512xi1>
    %cst_663 = arith.constant 0.000000e+00 : f32
    %1598 = vector.shape_cast %1597 : vector<1x512xi1> to vector<1x512xi1>
    %1599 = vector.broadcast %1598 : vector<1x512xi1> to vector<8x512xi1>
    %1600 = vector.broadcast %cst_663 : f32 to vector<8x512xf32>
    %1601 = arith.select %1599, %1578, %1600 : vector<8x512xi1>, vector<8x512xf32>
    %c15_i32_664 = arith.constant 15 : i32
    %1602 = tpu.dynamic_rotate %1551 by %c15_i32_664 dim 1 : vector<8x512xf32>, i32 -> vector<8x512xf32>
    %c-1_i32_665 = arith.constant -1 : i32
    %1603 = vector.broadcast %c-1_i32_665 : i32 to vector<1x512xi32>
    %1604 = arith.addi %4, %1603 : vector<1x512xi32>
    %c0_i32_666 = arith.constant 0 : i32
    %1605 = vector.broadcast %c0_i32_666 : i32 to vector<1x512xi32>
    %1606 = arith.cmpi sge, %1604, %1605 : vector<1x512xi32>
    %c-1_i32_667 = arith.constant -1 : i32
    %1607 = vector.broadcast %c-1_i32_667 : i32 to vector<1x512xi32>
    %1608 = arith.addi %4, %1607 : vector<1x512xi32>
    %c16_i32_668 = arith.constant 16 : i32
    %1609 = vector.broadcast %c16_i32_668 : i32 to vector<1x512xi32>
    %1610 = arith.cmpi slt, %1608, %1609 : vector<1x512xi32>
    %1611 = arith.andi %1606, %1610 : vector<1x512xi1>
    %c1_i32_669 = arith.constant 1 : i32
    %1612 = vector.broadcast %c1_i32_669 : i32 to vector<1x512xi32>
    %1613 = arith.addi %6, %1612 : vector<1x512xi32>
    %c0_i32_670 = arith.constant 0 : i32
    %1614 = vector.broadcast %c0_i32_670 : i32 to vector<1x512xi32>
    %1615 = arith.cmpi sge, %1613, %1614 : vector<1x512xi32>
    %1616 = arith.andi %1611, %1615 : vector<1x512xi1>
    %c1_i32_671 = arith.constant 1 : i32
    %1617 = vector.broadcast %c1_i32_671 : i32 to vector<1x512xi32>
    %1618 = arith.addi %6, %1617 : vector<1x512xi32>
    %c16_i32_672 = arith.constant 16 : i32
    %1619 = vector.broadcast %c16_i32_672 : i32 to vector<1x512xi32>
    %1620 = arith.cmpi slt, %1618, %1619 : vector<1x512xi32>
    %1621 = arith.andi %1616, %1620 : vector<1x512xi1>
    %cst_673 = arith.constant 0.000000e+00 : f32
    %1622 = vector.shape_cast %1621 : vector<1x512xi1> to vector<1x512xi1>
    %1623 = vector.broadcast %1622 : vector<1x512xi1> to vector<8x512xi1>
    %1624 = vector.broadcast %cst_673 : f32 to vector<8x512xf32>
    %1625 = arith.select %1623, %1602, %1624 : vector<8x512xi1>, vector<8x512xf32>
    %c1_i32_674 = arith.constant 1 : i32
    %1626 = tpu.dynamic_rotate %1551 by %c1_i32_674 dim 1 : vector<8x512xf32>, i32 -> vector<8x512xf32>
    %c0_i32_675 = arith.constant 0 : i32
    %1627 = vector.broadcast %c0_i32_675 : i32 to vector<1x512xi32>
    %1628 = arith.addi %4, %1627 : vector<1x512xi32>
    %c0_i32_676 = arith.constant 0 : i32
    %1629 = vector.broadcast %c0_i32_676 : i32 to vector<1x512xi32>
    %1630 = arith.cmpi sge, %1628, %1629 : vector<1x512xi32>
    %c0_i32_677 = arith.constant 0 : i32
    %1631 = vector.broadcast %c0_i32_677 : i32 to vector<1x512xi32>
    %1632 = arith.addi %4, %1631 : vector<1x512xi32>
    %c16_i32_678 = arith.constant 16 : i32
    %1633 = vector.broadcast %c16_i32_678 : i32 to vector<1x512xi32>
    %1634 = arith.cmpi slt, %1632, %1633 : vector<1x512xi32>
    %1635 = arith.andi %1630, %1634 : vector<1x512xi1>
    %c-1_i32_679 = arith.constant -1 : i32
    %1636 = vector.broadcast %c-1_i32_679 : i32 to vector<1x512xi32>
    %1637 = arith.addi %6, %1636 : vector<1x512xi32>
    %c0_i32_680 = arith.constant 0 : i32
    %1638 = vector.broadcast %c0_i32_680 : i32 to vector<1x512xi32>
    %1639 = arith.cmpi sge, %1637, %1638 : vector<1x512xi32>
    %1640 = arith.andi %1635, %1639 : vector<1x512xi1>
    %c-1_i32_681 = arith.constant -1 : i32
    %1641 = vector.broadcast %c-1_i32_681 : i32 to vector<1x512xi32>
    %1642 = arith.addi %6, %1641 : vector<1x512xi32>
    %c16_i32_682 = arith.constant 16 : i32
    %1643 = vector.broadcast %c16_i32_682 : i32 to vector<1x512xi32>
    %1644 = arith.cmpi slt, %1642, %1643 : vector<1x512xi32>
    %1645 = arith.andi %1640, %1644 : vector<1x512xi1>
    %cst_683 = arith.constant 0.000000e+00 : f32
    %1646 = vector.shape_cast %1645 : vector<1x512xi1> to vector<1x512xi1>
    %1647 = vector.broadcast %1646 : vector<1x512xi1> to vector<8x512xi1>
    %1648 = vector.broadcast %cst_683 : f32 to vector<8x512xf32>
    %1649 = arith.select %1647, %1626, %1648 : vector<8x512xi1>, vector<8x512xf32>
    %c0_i32_684 = arith.constant 0 : i32
    %1650 = vector.broadcast %c0_i32_684 : i32 to vector<1x512xi32>
    %1651 = arith.addi %4, %1650 : vector<1x512xi32>
    %c0_i32_685 = arith.constant 0 : i32
    %1652 = vector.broadcast %c0_i32_685 : i32 to vector<1x512xi32>
    %1653 = arith.cmpi sge, %1651, %1652 : vector<1x512xi32>
    %c0_i32_686 = arith.constant 0 : i32
    %1654 = vector.broadcast %c0_i32_686 : i32 to vector<1x512xi32>
    %1655 = arith.addi %4, %1654 : vector<1x512xi32>
    %c16_i32_687 = arith.constant 16 : i32
    %1656 = vector.broadcast %c16_i32_687 : i32 to vector<1x512xi32>
    %1657 = arith.cmpi slt, %1655, %1656 : vector<1x512xi32>
    %1658 = arith.andi %1653, %1657 : vector<1x512xi1>
    %c0_i32_688 = arith.constant 0 : i32
    %1659 = vector.broadcast %c0_i32_688 : i32 to vector<1x512xi32>
    %1660 = arith.addi %6, %1659 : vector<1x512xi32>
    %c0_i32_689 = arith.constant 0 : i32
    %1661 = vector.broadcast %c0_i32_689 : i32 to vector<1x512xi32>
    %1662 = arith.cmpi sge, %1660, %1661 : vector<1x512xi32>
    %1663 = arith.andi %1658, %1662 : vector<1x512xi1>
    %c0_i32_690 = arith.constant 0 : i32
    %1664 = vector.broadcast %c0_i32_690 : i32 to vector<1x512xi32>
    %1665 = arith.addi %6, %1664 : vector<1x512xi32>
    %c16_i32_691 = arith.constant 16 : i32
    %1666 = vector.broadcast %c16_i32_691 : i32 to vector<1x512xi32>
    %1667 = arith.cmpi slt, %1665, %1666 : vector<1x512xi32>
    %1668 = arith.andi %1663, %1667 : vector<1x512xi1>
    %cst_692 = arith.constant 0.000000e+00 : f32
    %1669 = vector.shape_cast %1668 : vector<1x512xi1> to vector<1x512xi1>
    %1670 = vector.broadcast %1669 : vector<1x512xi1> to vector<8x512xi1>
    %1671 = vector.broadcast %cst_692 : f32 to vector<8x512xf32>
    %1672 = arith.select %1670, %1551, %1671 : vector<8x512xi1>, vector<8x512xf32>
    %c511_i32_693 = arith.constant 511 : i32
    %1673 = tpu.dynamic_rotate %1551 by %c511_i32_693 dim 1 : vector<8x512xf32>, i32 -> vector<8x512xf32>
    %c0_i32_694 = arith.constant 0 : i32
    %1674 = vector.broadcast %c0_i32_694 : i32 to vector<1x512xi32>
    %1675 = arith.addi %4, %1674 : vector<1x512xi32>
    %c0_i32_695 = arith.constant 0 : i32
    %1676 = vector.broadcast %c0_i32_695 : i32 to vector<1x512xi32>
    %1677 = arith.cmpi sge, %1675, %1676 : vector<1x512xi32>
    %c0_i32_696 = arith.constant 0 : i32
    %1678 = vector.broadcast %c0_i32_696 : i32 to vector<1x512xi32>
    %1679 = arith.addi %4, %1678 : vector<1x512xi32>
    %c16_i32_697 = arith.constant 16 : i32
    %1680 = vector.broadcast %c16_i32_697 : i32 to vector<1x512xi32>
    %1681 = arith.cmpi slt, %1679, %1680 : vector<1x512xi32>
    %1682 = arith.andi %1677, %1681 : vector<1x512xi1>
    %c1_i32_698 = arith.constant 1 : i32
    %1683 = vector.broadcast %c1_i32_698 : i32 to vector<1x512xi32>
    %1684 = arith.addi %6, %1683 : vector<1x512xi32>
    %c0_i32_699 = arith.constant 0 : i32
    %1685 = vector.broadcast %c0_i32_699 : i32 to vector<1x512xi32>
    %1686 = arith.cmpi sge, %1684, %1685 : vector<1x512xi32>
    %1687 = arith.andi %1682, %1686 : vector<1x512xi1>
    %c1_i32_700 = arith.constant 1 : i32
    %1688 = vector.broadcast %c1_i32_700 : i32 to vector<1x512xi32>
    %1689 = arith.addi %6, %1688 : vector<1x512xi32>
    %c16_i32_701 = arith.constant 16 : i32
    %1690 = vector.broadcast %c16_i32_701 : i32 to vector<1x512xi32>
    %1691 = arith.cmpi slt, %1689, %1690 : vector<1x512xi32>
    %1692 = arith.andi %1687, %1691 : vector<1x512xi1>
    %cst_702 = arith.constant 0.000000e+00 : f32
    %1693 = vector.shape_cast %1692 : vector<1x512xi1> to vector<1x512xi1>
    %1694 = vector.broadcast %1693 : vector<1x512xi1> to vector<8x512xi1>
    %1695 = vector.broadcast %cst_702 : f32 to vector<8x512xf32>
    %1696 = arith.select %1694, %1673, %1695 : vector<8x512xi1>, vector<8x512xf32>
    %c497_i32_703 = arith.constant 497 : i32
    %1697 = tpu.dynamic_rotate %1551 by %c497_i32_703 dim 1 : vector<8x512xf32>, i32 -> vector<8x512xf32>
    %c1_i32_704 = arith.constant 1 : i32
    %1698 = vector.broadcast %c1_i32_704 : i32 to vector<1x512xi32>
    %1699 = arith.addi %4, %1698 : vector<1x512xi32>
    %c0_i32_705 = arith.constant 0 : i32
    %1700 = vector.broadcast %c0_i32_705 : i32 to vector<1x512xi32>
    %1701 = arith.cmpi sge, %1699, %1700 : vector<1x512xi32>
    %c1_i32_706 = arith.constant 1 : i32
    %1702 = vector.broadcast %c1_i32_706 : i32 to vector<1x512xi32>
    %1703 = arith.addi %4, %1702 : vector<1x512xi32>
    %c16_i32_707 = arith.constant 16 : i32
    %1704 = vector.broadcast %c16_i32_707 : i32 to vector<1x512xi32>
    %1705 = arith.cmpi slt, %1703, %1704 : vector<1x512xi32>
    %1706 = arith.andi %1701, %1705 : vector<1x512xi1>
    %c-1_i32_708 = arith.constant -1 : i32
    %1707 = vector.broadcast %c-1_i32_708 : i32 to vector<1x512xi32>
    %1708 = arith.addi %6, %1707 : vector<1x512xi32>
    %c0_i32_709 = arith.constant 0 : i32
    %1709 = vector.broadcast %c0_i32_709 : i32 to vector<1x512xi32>
    %1710 = arith.cmpi sge, %1708, %1709 : vector<1x512xi32>
    %1711 = arith.andi %1706, %1710 : vector<1x512xi1>
    %c-1_i32_710 = arith.constant -1 : i32
    %1712 = vector.broadcast %c-1_i32_710 : i32 to vector<1x512xi32>
    %1713 = arith.addi %6, %1712 : vector<1x512xi32>
    %c16_i32_711 = arith.constant 16 : i32
    %1714 = vector.broadcast %c16_i32_711 : i32 to vector<1x512xi32>
    %1715 = arith.cmpi slt, %1713, %1714 : vector<1x512xi32>
    %1716 = arith.andi %1711, %1715 : vector<1x512xi1>
    %cst_712 = arith.constant 0.000000e+00 : f32
    %1717 = vector.shape_cast %1716 : vector<1x512xi1> to vector<1x512xi1>
    %1718 = vector.broadcast %1717 : vector<1x512xi1> to vector<8x512xi1>
    %1719 = vector.broadcast %cst_712 : f32 to vector<8x512xf32>
    %1720 = arith.select %1718, %1697, %1719 : vector<8x512xi1>, vector<8x512xf32>
    %c496_i32_713 = arith.constant 496 : i32
    %1721 = tpu.dynamic_rotate %1551 by %c496_i32_713 dim 1 : vector<8x512xf32>, i32 -> vector<8x512xf32>
    %c1_i32_714 = arith.constant 1 : i32
    %1722 = vector.broadcast %c1_i32_714 : i32 to vector<1x512xi32>
    %1723 = arith.addi %4, %1722 : vector<1x512xi32>
    %c0_i32_715 = arith.constant 0 : i32
    %1724 = vector.broadcast %c0_i32_715 : i32 to vector<1x512xi32>
    %1725 = arith.cmpi sge, %1723, %1724 : vector<1x512xi32>
    %c1_i32_716 = arith.constant 1 : i32
    %1726 = vector.broadcast %c1_i32_716 : i32 to vector<1x512xi32>
    %1727 = arith.addi %4, %1726 : vector<1x512xi32>
    %c16_i32_717 = arith.constant 16 : i32
    %1728 = vector.broadcast %c16_i32_717 : i32 to vector<1x512xi32>
    %1729 = arith.cmpi slt, %1727, %1728 : vector<1x512xi32>
    %1730 = arith.andi %1725, %1729 : vector<1x512xi1>
    %c0_i32_718 = arith.constant 0 : i32
    %1731 = vector.broadcast %c0_i32_718 : i32 to vector<1x512xi32>
    %1732 = arith.addi %6, %1731 : vector<1x512xi32>
    %c0_i32_719 = arith.constant 0 : i32
    %1733 = vector.broadcast %c0_i32_719 : i32 to vector<1x512xi32>
    %1734 = arith.cmpi sge, %1732, %1733 : vector<1x512xi32>
    %1735 = arith.andi %1730, %1734 : vector<1x512xi1>
    %c0_i32_720 = arith.constant 0 : i32
    %1736 = vector.broadcast %c0_i32_720 : i32 to vector<1x512xi32>
    %1737 = arith.addi %6, %1736 : vector<1x512xi32>
    %c16_i32_721 = arith.constant 16 : i32
    %1738 = vector.broadcast %c16_i32_721 : i32 to vector<1x512xi32>
    %1739 = arith.cmpi slt, %1737, %1738 : vector<1x512xi32>
    %1740 = arith.andi %1735, %1739 : vector<1x512xi1>
    %cst_722 = arith.constant 0.000000e+00 : f32
    %1741 = vector.shape_cast %1740 : vector<1x512xi1> to vector<1x512xi1>
    %1742 = vector.broadcast %1741 : vector<1x512xi1> to vector<8x512xi1>
    %1743 = vector.broadcast %cst_722 : f32 to vector<8x512xf32>
    %1744 = arith.select %1742, %1721, %1743 : vector<8x512xi1>, vector<8x512xf32>
    %c495_i32_723 = arith.constant 495 : i32
    %1745 = tpu.dynamic_rotate %1551 by %c495_i32_723 dim 1 : vector<8x512xf32>, i32 -> vector<8x512xf32>
    %c1_i32_724 = arith.constant 1 : i32
    %1746 = vector.broadcast %c1_i32_724 : i32 to vector<1x512xi32>
    %1747 = arith.addi %4, %1746 : vector<1x512xi32>
    %c0_i32_725 = arith.constant 0 : i32
    %1748 = vector.broadcast %c0_i32_725 : i32 to vector<1x512xi32>
    %1749 = arith.cmpi sge, %1747, %1748 : vector<1x512xi32>
    %c1_i32_726 = arith.constant 1 : i32
    %1750 = vector.broadcast %c1_i32_726 : i32 to vector<1x512xi32>
    %1751 = arith.addi %4, %1750 : vector<1x512xi32>
    %c16_i32_727 = arith.constant 16 : i32
    %1752 = vector.broadcast %c16_i32_727 : i32 to vector<1x512xi32>
    %1753 = arith.cmpi slt, %1751, %1752 : vector<1x512xi32>
    %1754 = arith.andi %1749, %1753 : vector<1x512xi1>
    %c1_i32_728 = arith.constant 1 : i32
    %1755 = vector.broadcast %c1_i32_728 : i32 to vector<1x512xi32>
    %1756 = arith.addi %6, %1755 : vector<1x512xi32>
    %c0_i32_729 = arith.constant 0 : i32
    %1757 = vector.broadcast %c0_i32_729 : i32 to vector<1x512xi32>
    %1758 = arith.cmpi sge, %1756, %1757 : vector<1x512xi32>
    %1759 = arith.andi %1754, %1758 : vector<1x512xi1>
    %c1_i32_730 = arith.constant 1 : i32
    %1760 = vector.broadcast %c1_i32_730 : i32 to vector<1x512xi32>
    %1761 = arith.addi %6, %1760 : vector<1x512xi32>
    %c16_i32_731 = arith.constant 16 : i32
    %1762 = vector.broadcast %c16_i32_731 : i32 to vector<1x512xi32>
    %1763 = arith.cmpi slt, %1761, %1762 : vector<1x512xi32>
    %1764 = arith.andi %1759, %1763 : vector<1x512xi1>
    %cst_732 = arith.constant 0.000000e+00 : f32
    %1765 = vector.shape_cast %1764 : vector<1x512xi1> to vector<1x512xi1>
    %1766 = vector.broadcast %1765 : vector<1x512xi1> to vector<8x512xi1>
    %1767 = vector.broadcast %cst_732 : f32 to vector<8x512xf32>
    %1768 = arith.select %1766, %1745, %1767 : vector<8x512xi1>, vector<8x512xf32>
    %1769 = tpu.concatenate %1577, %1601, %1625, %1649, %1672, %1696, %1720, %1744, %1768 in 0 : vector<8x512xf32>, vector<8x512xf32>, vector<8x512xf32>, vector<8x512xf32>, vector<8x512xf32>, vector<8x512xf32>, vector<8x512xf32>, vector<8x512xf32>, vector<8x512xf32> -> vector<72x512xf32>
    %cst_733 = arith.constant dense<0.000000e+00> : vector<8x512xf32>
    %1770 = tpu.matmul %1552, %1769, %cst_733 {dimension_numbers = #tpu.dot_dimension_numbers<[1], [0], [0], [1], [0, 0, 1, 1], [], []>} : vector<8x72xf32>, vector<72x512xf32>, vector<8x512xf32> -> vector<8x512xf32>
    %1771 = vector.broadcast %1553 : vector<8x1xf32> to vector<8x512xf32>
    %1772 = arith.addf %1770, %1771 : vector<8x512xf32>
    %c8_734 = arith.constant 8 : index
    %1773 = memref.load %arg1[%c8_734] : memref<9xf32, #tpu.memory_space<smem>>
    %cst_735 = arith.constant 0.000000e+00 : f32
    %1774 = vector.broadcast %cst_735 : f32 to vector<8x512xf32>
    %1775 = arith.cmpf oge, %1772, %1774 : vector<8x512xf32>
    %1776 = vector.broadcast %1773 : f32 to vector<8x512xf32>
    %1777 = arith.mulf %1776, %1772 : vector<8x512xf32>
    %1778 = arith.select %1775, %1772, %1777 : vector<8x512xi1>, vector<8x512xf32>
    %c0_736 = arith.constant 0 : index
    %c29 = arith.constant 29 : index
    %1779 = vector.load %arg4[%c0_736, %c29] : memref<16x32xf32, #tpu.memory_space<vmem>>, vector<8x1xf32>
    %1780 = vector.broadcast %1779 : vector<8x1xf32> to vector<8x512xf32>
    %1781 = arith.mulf %1778, %1780 : vector<8x512xf32>
    %c0_737 = arith.constant 0 : index
    %c30 = arith.constant 30 : index
    %1782 = vector.load %arg4[%c0_737, %c30] : memref<16x32xf32, #tpu.memory_space<vmem>>, vector<8x1xf32>
    %1783 = vector.broadcast %1782 : vector<8x1xf32> to vector<8x512xf32>
    %1784 = arith.addf %1781, %1783 : vector<8x512xf32>
    %c0_738 = arith.constant 0 : index
    %c0_739 = arith.constant 0 : index
    %1785 = vector.load %arg7[%c0_738, %c0_739] : memref<8x512xf32, #tpu.memory_space<vmem>>, vector<8x512xf32>
    tpu.vector_store %arg7[%c0_738, %c0_739], %1784 {strides = array<i32>} : memref<8x512xf32, #tpu.memory_space<vmem>>, vector<8x512xf32>,
    return
  }
  func.func @transform_0(%arg0: i32) -> i32 {
    %c0_i32 = arith.constant 0 : i32
    %c0_i32_0 = arith.constant 0 : i32
    return %c0_i32 : i32
  }
  func.func @transform_1(%arg0: i32) -> (i32, i32) {
    %c0_i32 = arith.constant 0 : i32
    %c0_i32_0 = arith.constant 0 : i32
    %c0_i32_1 = arith.constant 0 : i32
    return %c0_i32, %c0_i32_0 : i32, i32
  }
  func.func @transform_2(%arg0: i32) -> (i32, i32) {
    %c0_i32 = arith.constant 0 : i32
    %c0_i32_0 = arith.constant 0 : i32
    %c0_i32_1 = arith.constant 0 : i32
    return %c0_i32, %c0_i32_0 : i32, i32
  }
  func.func @transform_3(%arg0: i32) -> (i32, i32) {
    %c0_i32 = arith.constant 0 : i32
    %c0_i32_0 = arith.constant 0 : i32
    %c0_i32_1 = arith.constant 0 : i32
    return %c0_i32, %c0_i32_0 : i32, i32
  }
  func.func @transform_4(%arg0: i32) -> (i32, i32) {
    %c0_i32 = arith.constant 0 : i32
    %c0_i32_0 = arith.constant 0 : i32
    %c0_i32_1 = arith.constant 0 : i32
    return %c0_i32, %c0_i32_0 : i32, i32
  }
  func.func @transform_5(%arg0: i32) -> (i32, i32) {
    %c0_i32 = arith.constant 0 : i32
    %c0_i32_0 = arith.constant 0 : i32
    %c0_i32_1 = arith.constant 0 : i32
    return %c0_i32, %c0_i32_0 : i32, i32
  }
  func.func @transform_6(%arg0: i32) -> (i32, i32) {
    %c0_i32 = arith.constant 0 : i32
    %c0_i32_0 = arith.constant 0 : i32
    %c0_i32_1 = arith.constant 0 : i32
    return %c0_i32, %c0_i32_0 : i32, i32
  }
}

</mosaic_0001>

<llo_original>
// kernel: randwire_forward.1
$region0: #{randwire_forward.1}
  #allocation0 [shape = 'u32[]', space=smem, size = 0x4, offset = 0x4, fixed_abs, tag = 'smem constant byte address 0x4 - core index']
  #allocation1 [shape = 'u32[72,128]{1,0:T(1,128)}', space=vmem, size = 0x9000, scoped, tag = 'internal scratch']
  %s0 = inlined_call_operand.vmem [shape: f32[9], index: 0, kind: input, shape index: {}]
  %s1 = inlined_call_operand.vmem [shape: f32[4,512], index: 1, kind: input, shape index: {}]
  %s2 = inlined_call_operand.vmem [shape: f32[320,144], index: 2, kind: input, shape index: {}]
  %s3 = inlined_call_operand.vmem [shape: f32[16,32], index: 3, kind: input, shape index: {}]
  %s4 = inlined_call_operand.vmem [shape: f32[512,128], index: 4, kind: input, shape index: {}]
  %s5 = inlined_call_operand.vmem [shape: f32[128,512], index: 5, kind: input, shape index: {}]
  %s6 = inlined_call_operand.vmem [shape: f32[8,512], index: 6, kind: output, shape index: {}]
  %s7 = sld [smem:[#allocation0]]
  $region38: #{randwire_forward.1} parent=0
    _
  %s9 = ssub.s32 1, %s7
  %s10 = scalar_select 0, %s9, %s7
  $region1: #{randwire_forward.1} parent=0
    #allocation2 [shape = 'u8[512]{0}', space=smem, size = 0x200, scoped, tag = 'input window, operand 0, single buffered']
    #allocation3 [shape = 's32[1]{0}', space=sflag, size = 0x4, scoped, tag = 'scoped memory for randwire_forward.1']
    %11 = vsyncpa [#allocation3], 0
    // Predicated region
    $region2: #{randwire_forward.1} parent=1 // pred_check
      _
    $region3: #{randwire_forward.1} parent=1 // pred_check_branch
      %13 = sbr.rel (0) target = $region5
    $region4: #{randwire_forward.1} parent=1 // pred_region
      %15 = vsyncadd [#allocation3], 0
      %s17 = sshll.u32 %s0, 4
      %s18 = int_to_ptr.vmem [resolvable:$true] %s17
      %20 = dma.vmem_to_smem %s18, 16, [#allocation2], [#allocation3]
    $region5: #{randwire_forward.1} parent=1 // pred_fallthru
      _
    // Predicated region
    $region6: #{randwire_forward.1} parent=1 // pred_check
      _
    $region7: #{randwire_forward.1} parent=1 // pred_check_branch
      %22 = sbr.rel (0) target = $region9
    $region8: #{randwire_forward.1} parent=1 // pred_region
      _
    $region9: #{randwire_forward.1} parent=1 // pred_fallthru
      _
    // Predicated region
    $region10: #{randwire_forward.1} parent=1 // pred_check
      _
    $region11: #{randwire_forward.1} parent=1 // pred_check_branch
      %24 = sbr.rel (0) target = $region13
    $region12: #{randwire_forward.1} parent=1 // pred_region
      _
    $region13: #{randwire_forward.1} parent=1 // pred_fallthru
      _
    // Predicated region
    $region14: #{randwire_forward.1} parent=1 // pred_check
      _
    $region15: #{randwire_forward.1} parent=1 // pred_check_branch
      %26 = sbr.rel (0) target = $region17
    $region16: #{randwire_forward.1} parent=1 // pred_region
      _
    $region17: #{randwire_forward.1} parent=1 // pred_fallthru
      _
    // Predicated region
    $region18: #{randwire_forward.1} parent=1 // pred_check
      _
    $region19: #{randwire_forward.1} parent=1 // pred_check_branch
      %28 = sbr.rel (0) target = $region21
    $region20: #{randwire_forward.1} parent=1 // pred_region
      _
    $region21: #{randwire_forward.1} parent=1 // pred_fallthru
      _
    // Predicated region
    $region22: #{randwire_forward.1} parent=1 // pred_check
      _
    $region23: #{randwire_forward.1} parent=1 // pred_check_branch
      %30 = sbr.rel (0) target = $region25
    $region24: #{randwire_forward.1} parent=1 // pred_region
      _
    $region25: #{randwire_forward.1} parent=1 // pred_fallthru
      _
    // Predicated region
    $region26: #{randwire_forward.1} parent=1 // pred_check
      _
    $region27: #{randwire_forward.1} parent=1 // pred_check_branch
      %32 = sbr.rel (0) target = $region29
    $region28: #{randwire_forward.1} parent=1 // pred_region
      %34 = dma.done [#allocation3], 16
    $region29: #{randwire_forward.1} parent=1 // pred_fallthru
      _
    %35 = sfence
    %v36 = vlaneseq
    %v37 = vand.u32 %v36, 127
    %v38 = vadd.s32 %v37, 128
    %v39 = vadd.s32 %v37, 256
    %v40 = vadd.s32 %v37, 384
    %v41 = vand.u32 %v37, 255
    %v42 = vand.u32 %v38, 255
    %v43 = vand.u32 %v39, 255
    %v44 = vand.u32 %v40, 255
    %v45 = vshra.s32 %v41, 4
    %v46 = vshra.s32 %v42, 4
    %v47 = vshra.s32 %v43, 4
    %v48 = vshra.s32 %v44, 4
    %v49 = vand.u32 %v41, 15
    %v50 = vand.u32 %v42, 15
    %v51 = vand.u32 %v43, 15
    %v52 = vand.u32 %v44, 15
    %v53 = vand.u32 %v37, 63
    %v54 = vshra.s32 %v53, 3
    %v55 = vand.u32 %v53, 7
    %v56 = vld [vmem:[%s4] sm:$0xff]
    %v57 = vld [vmem:[%s4 + $0x8] sm:$0xff]
    %v58 = vld [vmem:[%s4 + $0x10] sm:$0xff]
    %v59 = vld [vmem:[%s4 + $0x18] sm:$0xff]
    %v60 = vld [vmem:[%s4 + $0x20] sm:$0xff]
    %v61 = vld [vmem:[%s4 + $0x28] sm:$0xff]
    %v62 = vld [vmem:[%s4 + $0x30] sm:$0xff]
    %v63 = vld [vmem:[%s4 + $0x38] sm:$0xff]
    %v64 = vld [vmem:[%s4 + $0x40] sm:$0xff]
    %v65 = vld [vmem:[%s4 + $0x48] sm:$0xff]
    %v66 = vld [vmem:[%s4 + $0x50] sm:$0xff]
    %v67 = vld [vmem:[%s4 + $0x58] sm:$0xff]
    %v68 = vld [vmem:[%s4 + $0x60] sm:$0xff]
    %v69 = vld [vmem:[%s4 + $0x68] sm:$0xff]
    %v70 = vld [vmem:[%s4 + $0x70] sm:$0xff]
    %v71 = vld [vmem:[%s4 + $0x78] sm:$0xff]
    %v72 = vld [vmem:[%s4 + $0x80] sm:$0xff]
    %v73 = vld [vmem:[%s4 + $0x88] sm:$0xff]
    %v74 = vld [vmem:[%s4 + $0x90] sm:$0xff]
    %v75 = vld [vmem:[%s4 + $0x98] sm:$0xff]
    %v76 = vld [vmem:[%s4 + $0xa0] sm:$0xff]
    %v77 = vld [vmem:[%s4 + $0xa8] sm:$0xff]
    %v78 = vld [vmem:[%s4 + $0xb0] sm:$0xff]
    %v79 = vld [vmem:[%s4 + $0xb8] sm:$0xff]
    %v80 = vld [vmem:[%s4 + $0xc0] sm:$0xff]
    %v81 = vld [vmem:[%s4 + $0xc8] sm:$0xff]
    %v82 = vld [vmem:[%s4 + $0xd0] sm:$0xff]
    %v83 = vld [vmem:[%s4 + $0xd8] sm:$0xff]
    %v84 = vld [vmem:[%s4 + $0xe0] sm:$0xff]
    %v85 = vld [vmem:[%s4 + $0xe8] sm:$0xff]
    %v86 = vld [vmem:[%s4 + $0xf0] sm:$0xff]
    %v87 = vld [vmem:[%s4 + $0xf8] sm:$0xff]
    %v88 = vld [vmem:[%s4 + $0x100] sm:$0xff]
    %v89 = vld [vmem:[%s4 + $0x108] sm:$0xff]
    %v90 = vld [vmem:[%s4 + $0x110] sm:$0xff]
    %v91 = vld [vmem:[%s4 + $0x118] sm:$0xff]
    %v92 = vld [vmem:[%s4 + $0x120] sm:$0xff]
    %v93 = vld [vmem:[%s4 + $0x128] sm:$0xff]
    %v94 = vld [vmem:[%s4 + $0x130] sm:$0xff]
    %v95 = vld [vmem:[%s4 + $0x138] sm:$0xff]
    %v96 = vld [vmem:[%s4 + $0x140] sm:$0xff]
    %v97 = vld [vmem:[%s4 + $0x148] sm:$0xff]
    %v98 = vld [vmem:[%s4 + $0x150] sm:$0xff]
    %v99 = vld [vmem:[%s4 + $0x158] sm:$0xff]
    %v100 = vld [vmem:[%s4 + $0x160] sm:$0xff]
    %v101 = vld [vmem:[%s4 + $0x168] sm:$0xff]
    %v102 = vld [vmem:[%s4 + $0x170] sm:$0xff]
    %v103 = vld [vmem:[%s4 + $0x178] sm:$0xff]
    %v104 = vld [vmem:[%s4 + $0x180] sm:$0xff]
    %v105 = vld [vmem:[%s4 + $0x188] sm:$0xff]
    %v106 = vld [vmem:[%s4 + $0x190] sm:$0xff]
    %v107 = vld [vmem:[%s4 + $0x198] sm:$0xff]
    %v108 = vld [vmem:[%s4 + $0x1a0] sm:$0xff]
    %v109 = vld [vmem:[%s4 + $0x1a8] sm:$0xff]
    %v110 = vld [vmem:[%s4 + $0x1b0] sm:$0xff]
    %v111 = vld [vmem:[%s4 + $0x1b8] sm:$0xff]
    %v112 = vld [vmem:[%s4 + $0x1c0] sm:$0xff]
    %v113 = vld [vmem:[%s4 + $0x1c8] sm:$0xff]
    %v114 = vld [vmem:[%s4 + $0x1d0] sm:$0xff]
    %v115 = vld [vmem:[%s4 + $0x1d8] sm:$0xff]
    %v116 = vld [vmem:[%s4 + $0x1e0] sm:$0xff]
    %v117 = vld [vmem:[%s4 + $0x1e8] sm:$0xff]
    %v118 = vld [vmem:[%s4 + $0x1f0] sm:$0xff]
    %v119 = vld [vmem:[%s4 + $0x1f8] sm:$0xff]
    %v120 = vld [vmem:[%s5] sm:$0xff]
    %v121 = vld [vmem:[%s5 + $0x8] sm:$0xff]
    %v122 = vld [vmem:[%s5 + $0x10] sm:$0xff]
    %v123 = vld [vmem:[%s5 + $0x18] sm:$0xff]
    %v124 = vld [vmem:[%s5 + $0x20] sm:$0xff]
    %v125 = vld [vmem:[%s5 + $0x28] sm:$0xff]
    %v126 = vld [vmem:[%s5 + $0x30] sm:$0xff]
    %v127 = vld [vmem:[%s5 + $0x38] sm:$0xff]
    %v128 = vld [vmem:[%s5 + $0x40] sm:$0xff]
    %v129 = vld [vmem:[%s5 + $0x48] sm:$0xff]
    %v130 = vld [vmem:[%s5 + $0x50] sm:$0xff]
    %v131 = vld [vmem:[%s5 + $0x58] sm:$0xff]
    %v132 = vld [vmem:[%s5 + $0x60] sm:$0xff]
    %v133 = vld [vmem:[%s5 + $0x68] sm:$0xff]
    %v134 = vld [vmem:[%s5 + $0x70] sm:$0xff]
    %v135 = vld [vmem:[%s5 + $0x78] sm:$0xff]
    %v136 = vld [vmem:[%s5 + $0x80] sm:$0xff]
    %v137 = vld [vmem:[%s5 + $0x88] sm:$0xff]
    %v138 = vld [vmem:[%s5 + $0x90] sm:$0xff]
    %v139 = vld [vmem:[%s5 + $0x98] sm:$0xff]
    %v140 = vld [vmem:[%s5 + $0xa0] sm:$0xff]
    %v141 = vld [vmem:[%s5 + $0xa8] sm:$0xff]
    %v142 = vld [vmem:[%s5 + $0xb0] sm:$0xff]
    %v143 = vld [vmem:[%s5 + $0xb8] sm:$0xff]
    %v144 = vld [vmem:[%s5 + $0xc0] sm:$0xff]
    %v145 = vld [vmem:[%s5 + $0xc8] sm:$0xff]
    %v146 = vld [vmem:[%s5 + $0xd0] sm:$0xff]
    %v147 = vld [vmem:[%s5 + $0xd8] sm:$0xff]
    %v148 = vld [vmem:[%s5 + $0xe0] sm:$0xff]
    %v149 = vld [vmem:[%s5 + $0xe8] sm:$0xff]
    %v150 = vld [vmem:[%s5 + $0xf0] sm:$0xff]
    %v151 = vld [vmem:[%s5 + $0xf8] sm:$0xff]
    %v152 = vld [vmem:[%s5 + $0x100] sm:$0xff]
    %v153 = vld [vmem:[%s5 + $0x108] sm:$0xff]
    %v154 = vld [vmem:[%s5 + $0x110] sm:$0xff]
    %v155 = vld [vmem:[%s5 + $0x118] sm:$0xff]
    %v156 = vld [vmem:[%s5 + $0x120] sm:$0xff]
    %v157 = vld [vmem:[%s5 + $0x128] sm:$0xff]
    %v158 = vld [vmem:[%s5 + $0x130] sm:$0xff]
    %v159 = vld [vmem:[%s5 + $0x138] sm:$0xff]
    %v160 = vld [vmem:[%s5 + $0x140] sm:$0xff]
    %v161 = vld [vmem:[%s5 + $0x148] sm:$0xff]
    %v162 = vld [vmem:[%s5 + $0x150] sm:$0xff]
    %v163 = vld [vmem:[%s5 + $0x158] sm:$0xff]
    %v164 = vld [vmem:[%s5 + $0x160] sm:$0xff]
    %v165 = vld [vmem:[%s5 + $0x168] sm:$0xff]
    %v166 = vld [vmem:[%s5 + $0x170] sm:$0xff]
    %v167 = vld [vmem:[%s5 + $0x178] sm:$0xff]
    %v168 = vld [vmem:[%s5 + $0x180] sm:$0xff]
    %v169 = vld [vmem:[%s5 + $0x188] sm:$0xff]
    %v170 = vld [vmem:[%s5 + $0x190] sm:$0xff]
    %v171 = vld [vmem:[%s5 + $0x198] sm:$0xff]
    %v172 = vld [vmem:[%s5 + $0x1a0] sm:$0xff]
    %v173 = vld [vmem:[%s5 + $0x1a8] sm:$0xff]
    %v174 = vld [vmem:[%s5 + $0x1b0] sm:$0xff]
    %v175 = vld [vmem:[%s5 + $0x1b8] sm:$0xff]
    %v176 = vld [vmem:[%s5 + $0x1c0] sm:$0xff]
    %v177 = vld [vmem:[%s5 + $0x1c8] sm:$0xff]
    %v178 = vld [vmem:[%s5 + $0x1d0] sm:$0xff]
    %v179 = vld [vmem:[%s5 + $0x1d8] sm:$0xff]
    %v180 = vld [vmem:[%s5 + $0x1e0] sm:$0xff]
    %v181 = vld [vmem:[%s5 + $0x1e8] sm:$0xff]
    %v182 = vld [vmem:[%s5 + $0x1f0] sm:$0xff]
    %v183 = vld [vmem:[%s5 + $0x1f8] sm:$0xff]
    %v184 = vld [vmem:[%s1] sm:$0xff]
    %v185 = vld [vmem:[%s1 + $0x8] sm:$0xff]
    %v186 = vld [vmem:[%s2] sm:$0xff]
    %v187 = vld [vmem:[%s3] sm:$0xff]
    %189 = vset.pattern.permute.xlu0 0
    %190 = vperm.xlu0 %189, %v187
    %v191 = vpop.permute.xlu0 %190
    %195 = vst [vmem:[#allocation1] ss:$2 sm:$0xff] %v184
    %s196 = scalar_lea.vmem [#allocation1], 16
    %197 = vst [vmem:[%s196] ss:$2 sm:$0xff] %v185
    %v198 = vld.sshfl [vmem:[#allocation1] sm:$0xff pattern:$0x75316420]
    %v199 = vld.sshfl [vmem:[#allocation1 + $0x8] sm:$0xff pattern:$0x75316420]
    %v200 = vld.sshfl [vmem:[#allocation1 + $0x10] sm:$0xff pattern:$0x75316420]
    %v201 = vld.sshfl [vmem:[#allocation1 + $0x18] sm:$0xff pattern:$0x75316420]
    %vm202 = vcmask 31744
    %v204 = vsel %vm202, %v186, 0
    %vm206 = vcmask 1043456
    %v207 = vsel %vm206, %v198, 0
    %v209 = vsel %vm206, %v199, 0
    %v211 = vsel %vm206, %v200, 0
    %v213 = vsel %vm206, %v201, 0
    %215 = vmatpush.msra.mxu0 0.0
    %216 = vmatpush.msra.mxu0 0.0
    %217 = vmatpush.msra.mxu0 0.0
    %218 = vmatpush.msra.mxu0 0.0
    %219 = vmatpush.msra.mxu0 0.0
    %220 = vmatpush.msra.mxu0 0.0
    %221 = vmatpush.msra.mxu0 0.0
    %222 = vmatpush.msra.mxu0 0.0
    %223 = vmatpush.msra.mxu0 0.0
    %224 = vmatpush.msra.mxu0 0.0
    %225 = vmatpush.msra.mxu0 0.0
    %226 = vmatpush.msra.mxu0 0.0
    %227 = vmatpush.msra.mxu0 0.0
    %228 = vmatpush.msra.mxu0 0.0
    %229 = vmatpush.msra.mxu0 0.0
    %230 = vmatpush.msra.mxu0 %v207
    %231 = vmatmul.f32.gmra.mxu0 %v204
    %v232 = vpop.f32.mrf.mxu0
    %v233 = vadd.f32 %v191, %v232
    %234 = vdwg.mxu0
    %235 = vmatpush.msra.mxu0 0.0
    %236 = vmatpush.msra.mxu0 0.0
    %237 = vmatpush.msra.mxu0 0.0
    %238 = vmatpush.msra.mxu0 0.0
    %239 = vmatpush.msra.mxu0 0.0
    %240 = vmatpush.msra.mxu0 0.0
    %241 = vmatpush.msra.mxu0 0.0
    %242 = vmatpush.msra.mxu0 0.0
    %243 = vmatpush.msra.mxu0 0.0
    %244 = vmatpush.msra.mxu0 0.0
    %245 = vmatpush.msra.mxu0 0.0
    %246 = vmatpush.msra.mxu0 0.0
    %247 = vmatpush.msra.mxu0 0.0
    %248 = vmatpush.msra.mxu0 0.0
    %249 = vmatpush.msra.mxu0 0.0
    %250 = vmatpush.msra.mxu0 %v209
    %251 = vmatmul.f32.gmra.mxu0 %v204
    %v252 = vpop.f32.mrf.mxu0
    %v253 = vadd.f32 %v191, %v252
    %254 = vdwg.mxu0
    %255 = vmatpush.msra.mxu0 0.0
    %256 = vmatpush.msra.mxu0 0.0
    %257 = vmatpush.msra.mxu0 0.0
    %258 = vmatpush.msra.mxu0 0.0
    %259 = vmatpush.msra.mxu0 0.0
    %260 = vmatpush.msra.mxu0 0.0
    %261 = vmatpush.msra.mxu0 0.0
    %262 = vmatpush.msra.mxu0 0.0
    %263 = vmatpush.msra.mxu0 0.0
    %264 = vmatpush.msra.mxu0 0.0
    %265 = vmatpush.msra.mxu0 0.0
    %266 = vmatpush.msra.mxu0 0.0
    %267 = vmatpush.msra.mxu0 0.0
    %268 = vmatpush.msra.mxu0 0.0
    %269 = vmatpush.msra.mxu0 0.0
    %270 = vmatpush.msra.mxu0 %v211
    %271 = vmatmul.f32.gmra.mxu0 %v204
    %v272 = vpop.f32.mrf.mxu0
    %v273 = vadd.f32 %v191, %v272
    %274 = vdwg.mxu0
    %275 = vmatpush.msra.mxu0 0.0
    %276 = vmatpush.msra.mxu0 0.0
    %277 = vmatpush.msra.mxu0 0.0
    %278 = vmatpush.msra.mxu0 0.0
    %279 = vmatpush.msra.mxu0 0.0
    %280 = vmatpush.msra.mxu0 0.0
    %281 = vmatpush.msra.mxu0 0.0
    %282 = vmatpush.msra.mxu0 0.0
    %283 = vmatpush.msra.mxu0 0.0
    %284 = vmatpush.msra.mxu0 0.0
    %285 = vmatpush.msra.mxu0 0.0
    %286 = vmatpush.msra.mxu0 0.0
    %287 = vmatpush.msra.mxu0 0.0
    %288 = vmatpush.msra.mxu0 0.0
    %289 = vmatpush.msra.mxu0 0.0
    %290 = vmatpush.msra.mxu0 %v213
    %291 = vmatmul.f32.gmra.mxu0 %v204
    %v292 = vpop.f32.mrf.mxu0
    %v293 = vadd.f32 %v191, %v292
    %294 = vdwg.mxu0
    %v295 = vld [vmem:[%s2 + $0x10] sm:$0xff]
    %v296 = vld [vmem:[%s3] sm:$0xff]
    %298 = vset.pattern.permute.xlu0 1
    %299 = vperm.xlu0 %298, %v296
    %v300 = vpop.permute.xlu0 %299
    %vm302 = vcmask 64512
    %v304 = vsel %vm302, %v295, 0
    %306 = vmatpush.msra.mxu0 0.0
    %307 = vmatpush.msra.mxu0 0.0
    %308 = vmatpush.msra.mxu0 0.0
    %309 = vmatpush.msra.mxu0 0.0
    %310 = vmatpush.msra.mxu0 0.0
    %311 = vmatpush.msra.mxu0 0.0
    %312 = vmatpush.msra.mxu0 0.0
    %313 = vmatpush.msra.mxu0 0.0
    %314 = vmatpush.msra.mxu0 0.0
    %315 = vmatpush.msra.mxu0 0.0
    %316 = vmatpush.msra.mxu0 0.0
    %317 = vmatpush.msra.mxu0 0.0
    %318 = vmatpush.msra.mxu0 0.0
    %319 = vmatpush.msra.mxu0 0.0
    %320 = vmatpush.msra.mxu0 0.0
    %321 = vmatpush.msra.mxu0 %v233
    %322 = vmatmul.f32.gmra.mxu0 %v304
    %v323 = vpop.f32.mrf.mxu0
    %v324 = vadd.f32 %v300, %v323
    %325 = vdwg.mxu0
    %326 = vmatpush.msra.mxu0 0.0
    %327 = vmatpush.msra.mxu0 0.0
    %328 = vmatpush.msra.mxu0 0.0
    %329 = vmatpush.msra.mxu0 0.0
    %330 = vmatpush.msra.mxu0 0.0
    %331 = vmatpush.msra.mxu0 0.0
    %332 = vmatpush.msra.mxu0 0.0
    %333 = vmatpush.msra.mxu0 0.0
    %334 = vmatpush.msra.mxu0 0.0
    %335 = vmatpush.msra.mxu0 0.0
    %336 = vmatpush.msra.mxu0 0.0
    %337 = vmatpush.msra.mxu0 0.0
    %338 = vmatpush.msra.mxu0 0.0
    %339 = vmatpush.msra.mxu0 0.0
    %340 = vmatpush.msra.mxu0 0.0
    %341 = vmatpush.msra.mxu0 %v253
    %342 = vmatmul.f32.gmra.mxu0 %v304
    %v343 = vpop.f32.mrf.mxu0
    %v344 = vadd.f32 %v300, %v343
    %345 = vdwg.mxu0
    %346 = vmatpush.msra.mxu0 0.0
    %347 = vmatpush.msra.mxu0 0.0
    %348 = vmatpush.msra.mxu0 0.0
    %349 = vmatpush.msra.mxu0 0.0
    %350 = vmatpush.msra.mxu0 0.0
    %351 = vmatpush.msra.mxu0 0.0
    %352 = vmatpush.msra.mxu0 0.0
    %353 = vmatpush.msra.mxu0 0.0
    %354 = vmatpush.msra.mxu0 0.0
    %355 = vmatpush.msra.mxu0 0.0
    %356 = vmatpush.msra.mxu0 0.0
    %357 = vmatpush.msra.mxu0 0.0
    %358 = vmatpush.msra.mxu0 0.0
    %359 = vmatpush.msra.mxu0 0.0
    %360 = vmatpush.msra.mxu0 0.0
    %361 = vmatpush.msra.mxu0 %v273
    %362 = vmatmul.f32.gmra.mxu0 %v304
    %v363 = vpop.f32.mrf.mxu0
    %v364 = vadd.f32 %v300, %v363
    %365 = vdwg.mxu0
    %366 = vmatpush.msra.mxu0 0.0
    %367 = vmatpush.msra.mxu0 0.0
    %368 = vmatpush.msra.mxu0 0.0
    %369 = vmatpush.msra.mxu0 0.0
    %370 = vmatpush.msra.mxu0 0.0
    %371 = vmatpush.msra.mxu0 0.0
    %372 = vmatpush.msra.mxu0 0.0
    %373 = vmatpush.msra.mxu0 0.0
    %374 = vmatpush.msra.mxu0 0.0
    %375 = vmatpush.msra.mxu0 0.0
    %376 = vmatpush.msra.mxu0 0.0
    %377 = vmatpush.msra.mxu0 0.0
    %378 = vmatpush.msra.mxu0 0.0
    %379 = vmatpush.msra.mxu0 0.0
    %380 = vmatpush.msra.mxu0 0.0
    %381 = vmatpush.msra.mxu0 %v293
    %382 = vmatmul.f32.gmra.mxu0 %v304
    %v383 = vpop.f32.mrf.mxu0
    %v384 = vadd.f32 %v300, %v383
    %385 = vdwg.mxu0
    %v386 = vld [vmem:[%s2 + $0x20] sm:$0xff]
    %387 = vrot.lane.b32.xlu0 %v324, 17
    %v388 = vpop.permute.xlu0 %387
    %389 = vrot.lane.b32.xlu0 %v344, 17
    %v390 = vpop.permute.xlu0 %389
    %391 = vrot.lane.b32.xlu0 %v364, 17
    %v392 = vpop.permute.xlu0 %391
    %393 = vrot.lane.b32.xlu0 %v384, 17
    %v394 = vpop.permute.xlu0 %393
    %vm395 = vcmp.lt.s32.totalorder %v37, 17
    %v396 = vsel %vm395, %v392, %v394
    %v397 = vsel %vm395, %v390, %v392
    %v398 = vsel %vm395, %v388, %v390
    %v399 = vsel %vm395, %v394, %v388
    %v400 = vadd.s32 %v45, 4294967295
    %v401 = vadd.s32 %v46, 4294967295
    %v402 = vadd.s32 %v47, 4294967295
    %v403 = vadd.s32 %v48, 4294967295
    %vm404 = vcmp.ge.s32.totalorder %v400, 0
    %vm405 = vcmp.ge.s32.totalorder %v401, 0
    %vm406 = vcmp.ge.s32.totalorder %v402, 0
    %vm407 = vcmp.ge.s32.totalorder %v403, 0
    %vm408 = vcmp.lt.s32.totalorder %v400, 16
    %vm409 = vcmp.lt.s32.totalorder %v401, 16
    %vm410 = vcmp.lt.s32.totalorder %v402, 16
    %vm411 = vcmp.lt.s32.totalorder %v403, 16
    %vm412 = vmand %vm404, %vm408
    %vm413 = vmand %vm405, %vm409
    %vm414 = vmand %vm406, %vm410
    %vm415 = vmand %vm407, %vm411
    %v416 = vadd.s32 %v49, 4294967295
    %v417 = vadd.s32 %v50, 4294967295
    %v418 = vadd.s32 %v51, 4294967295
    %v419 = vadd.s32 %v52, 4294967295
    %vm420 = vcmp.ge.s32.totalorder %v416, 0
    %vm421 = vcmp.ge.s32.totalorder %v417, 0
    %vm422 = vcmp.ge.s32.totalorder %v418, 0
    %vm423 = vcmp.ge.s32.totalorder %v419, 0
    %vm424 = vmand %vm412, %vm420
    %vm425 = vmand %vm413, %vm421
    %vm426 = vmand %vm414, %vm422
    %vm427 = vmand %vm415, %vm423
    %vm428 = vcmp.lt.s32.totalorder %v416, 16
    %vm429 = vcmp.lt.s32.totalorder %v417, 16
    %vm430 = vcmp.lt.s32.totalorder %v418, 16
    %vm431 = vcmp.lt.s32.totalorder %v419, 16
    %vm432 = vmand %vm424, %vm428
    %vm433 = vmand %vm425, %vm429
    %vm434 = vmand %vm426, %vm430
    %vm435 = vmand %vm427, %vm431
    %v436 = vsel %vm432, 1, 0
    %v437 = vsel %vm433, 1, 0
    %v438 = vsel %vm434, 1, 0
    %v439 = vsel %vm435, 1, 0
    %vm440 = vcmp.eq.s32.totalorder %v436, 1
    %vm441 = vcmp.eq.s32.totalorder %v437, 1
    %vm442 = vcmp.eq.s32.totalorder %v438, 1
    %vm443 = vcmp.eq.s32.totalorder %v439, 1
    %v444 = vsel %vm440, %v399, 0.0
    %v445 = vsel %vm441, %v398, 0.0
    %v446 = vsel %vm442, %v397, 0.0
    %v447 = vsel %vm443, %v396, 0.0
    %448 = vrot.lane.b32.xlu0 %v324, 16
    %v449 = vpop.permute.xlu0 %448
    %450 = vrot.lane.b32.xlu0 %v344, 16
    %v451 = vpop.permute.xlu0 %450
    %452 = vrot.lane.b32.xlu0 %v364, 16
    %v453 = vpop.permute.xlu0 %452
    %454 = vrot.lane.b32.xlu0 %v384, 16
    %v455 = vpop.permute.xlu0 %454
    %vm456 = vcmp.lt.s32.totalorder %v37, 16
    %v457 = vsel %vm456, %v453, %v455
    %v458 = vsel %vm456, %v451, %v453
    %v459 = vsel %vm456, %v449, %v451
    %v460 = vsel %vm456, %v455, %v449
    %vm461 = vcmp.ge.s32.totalorder %v49, 0
    %vm462 = vcmp.ge.s32.totalorder %v50, 0
    %vm463 = vcmp.ge.s32.totalorder %v51, 0
    %vm464 = vcmp.ge.s32.totalorder %v52, 0
    %vm465 = vmand %vm412, %vm461
    %vm466 = vmand %vm413, %vm462
    %vm467 = vmand %vm414, %vm463
    %vm468 = vmand %vm415, %vm464
    %vm469 = vcmp.lt.s32.totalorder %v49, 16
    %vm470 = vcmp.lt.s32.totalorder %v50, 16
    %vm471 = vcmp.lt.s32.totalorder %v51, 16
    %vm472 = vcmp.lt.s32.totalorder %v52, 16
    %vm473 = vmand %vm465, %vm469
    %vm474 = vmand %vm466, %vm470
    %vm475 = vmand %vm467, %vm471
    %vm476 = vmand %vm468, %vm472
    %v477 = vsel %vm473, 1, 0
    %v478 = vsel %vm474, 1, 0
    %v479 = vsel %vm475, 1, 0
    %v480 = vsel %vm476, 1, 0
    %vm481 = vcmp.eq.s32.totalorder %v477, 1
    %vm482 = vcmp.eq.s32.totalorder %v478, 1
    %vm483 = vcmp.eq.s32.totalorder %v479, 1
    %vm484 = vcmp.eq.s32.totalorder %v480, 1
    %v485 = vsel %vm481, %v460, 0.0
    %v486 = vsel %vm482, %v459, 0.0
    %v487 = vsel %vm483, %v458, 0.0
    %v488 = vsel %vm484, %v457, 0.0
    %489 = vrot.lane.b32.xlu0 %v324, 15
    %v490 = vpop.permute.xlu0 %489
    %491 = vrot.lane.b32.xlu0 %v344, 15
    %v492 = vpop.permute.xlu0 %491
    %493 = vrot.lane.b32.xlu0 %v364, 15
    %v494 = vpop.permute.xlu0 %493
    %495 = vrot.lane.b32.xlu0 %v384, 15
    %v496 = vpop.permute.xlu0 %495
    %vm497 = vcmp.lt.s32.totalorder %v37, 15
    %v498 = vsel %vm497, %v494, %v496
    %v499 = vsel %vm497, %v492, %v494
    %v500 = vsel %vm497, %v490, %v492
    %v501 = vsel %vm497, %v496, %v490
    %v502 = vadd.s32 %v49, 1
    %v503 = vadd.s32 %v50, 1
    %v504 = vadd.s32 %v51, 1
    %v505 = vadd.s32 %v52, 1
    %vm506 = vcmp.ge.s32.totalorder %v502, 0
    %vm507 = vcmp.ge.s32.totalorder %v503, 0
    %vm508 = vcmp.ge.s32.totalorder %v504, 0
    %vm509 = vcmp.ge.s32.totalorder %v505, 0
    %vm510 = vmand %vm412, %vm506
    %vm511 = vmand %vm413, %vm507
    %vm512 = vmand %vm414, %vm508
    %vm513 = vmand %vm415, %vm509
    %vm514 = vcmp.lt.s32.totalorder %v502, 16
    %vm515 = vcmp.lt.s32.totalorder %v503, 16
    %vm516 = vcmp.lt.s32.totalorder %v504, 16
    %vm517 = vcmp.lt.s32.totalorder %v505, 16
    %vm518 = vmand %vm510, %vm514
    %vm519 = vmand %vm511, %vm515
    %vm520 = vmand %vm512, %vm516
    %vm521 = vmand %vm513, %vm517
    %v522 = vsel %vm518, 1, 0
    %v523 = vsel %vm519, 1, 0
    %v524 = vsel %vm520, 1, 0
    %v525 = vsel %vm521, 1, 0
    %vm526 = vcmp.eq.s32.totalorder %v522, 1
    %vm527 = vcmp.eq.s32.totalorder %v523, 1
    %vm528 = vcmp.eq.s32.totalorder %v524, 1
    %vm529 = vcmp.eq.s32.totalorder %v525, 1
    %v530 = vsel %vm526, %v501, 0.0
    %v531 = vsel %vm527, %v500, 0.0
    %v532 = vsel %vm528, %v499, 0.0
    %v533 = vsel %vm529, %v498, 0.0
    %534 = vrot.lane.b32.xlu0 %v324, 1
    %v535 = vpop.permute.xlu0 %534
    %536 = vrot.lane.b32.xlu0 %v344, 1
    %v537 = vpop.permute.xlu0 %536
    %538 = vrot.lane.b32.xlu0 %v364, 1
    %v539 = vpop.permute.xlu0 %538
    %540 = vrot.lane.b32.xlu0 %v384, 1
    %v541 = vpop.permute.xlu0 %540
    %vm542 = vcmp.lt.s32.totalorder %v37, 1
    %v543 = vsel %vm542, %v539, %v541
    %v544 = vsel %vm542, %v537, %v539
    %v545 = vsel %vm542, %v535, %v537
    %v546 = vsel %vm542, %v541, %v535
    %vm547 = vcmp.ge.s32.totalorder %v45, 0
    %vm548 = vcmp.ge.s32.totalorder %v46, 0
    %vm549 = vcmp.ge.s32.totalorder %v47, 0
    %vm550 = vcmp.ge.s32.totalorder %v48, 0
    %vm551 = vcmp.lt.s32.totalorder %v45, 16
    %vm552 = vcmp.lt.s32.totalorder %v46, 16
    %vm553 = vcmp.lt.s32.totalorder %v47, 16
    %vm554 = vcmp.lt.s32.totalorder %v48, 16
    %vm555 = vmand %vm547, %vm551
    %vm556 = vmand %vm548, %vm552
    %vm557 = vmand %vm549, %vm553
    %vm558 = vmand %vm550, %vm554
    %vm559 = vmand %vm555, %vm420
    %vm560 = vmand %vm556, %vm421
    %vm561 = vmand %vm557, %vm422
    %vm562 = vmand %vm558, %vm423
    %vm563 = vmand %vm559, %vm428
    %vm564 = vmand %vm560, %vm429
    %vm565 = vmand %vm561, %vm430
    %vm566 = vmand %vm562, %vm431
    %v567 = vsel %vm563, 1, 0
    %v568 = vsel %vm564, 1, 0
    %v569 = vsel %vm565, 1, 0
    %v570 = vsel %vm566, 1, 0
    %vm571 = vcmp.eq.s32.totalorder %v567, 1
    %vm572 = vcmp.eq.s32.totalorder %v568, 1
    %vm573 = vcmp.eq.s32.totalorder %v569, 1
    %vm574 = vcmp.eq.s32.totalorder %v570, 1
    %v575 = vsel %vm571, %v546, 0.0
    %v576 = vsel %vm572, %v545, 0.0
    %v577 = vsel %vm573, %v544, 0.0
    %v578 = vsel %vm574, %v543, 0.0
    %vm579 = vmand %vm555, %vm461
    %vm580 = vmand %vm556, %vm462
    %vm581 = vmand %vm557, %vm463
    %vm582 = vmand %vm558, %vm464
    %vm583 = vmand %vm579, %vm469
    %vm584 = vmand %vm580, %vm470
    %vm585 = vmand %vm581, %vm471
    %vm586 = vmand %vm582, %vm472
    %v587 = vsel %vm583, 1, 0
    %v588 = vsel %vm584, 1, 0
    %v589 = vsel %vm585, 1, 0
    %v590 = vsel %vm586, 1, 0
    %vm591 = vcmp.eq.s32.totalorder %v587, 1
    %vm592 = vcmp.eq.s32.totalorder %v588, 1
    %vm593 = vcmp.eq.s32.totalorder %v589, 1
    %vm594 = vcmp.eq.s32.totalorder %v590, 1
    %v595 = vsel %vm591, %v324, 0.0
    %v596 = vsel %vm592, %v344, 0.0
    %v597 = vsel %vm593, %v364, 0.0
    %v598 = vsel %vm594, %v384, 0.0
    %599 = vrot.lane.b32.xlu0 %v324, 127
    %v600 = vpop.permute.xlu0 %599
    %601 = vrot.lane.b32.xlu0 %v344, 127
    %v602 = vpop.permute.xlu0 %601
    %603 = vrot.lane.b32.xlu0 %v364, 127
    %v604 = vpop.permute.xlu0 %603
    %605 = vrot.lane.b32.xlu0 %v384, 127
    %v606 = vpop.permute.xlu0 %605
    %vm607 = vcmp.lt.s32.totalorder %v37, 127
    %v608 = vsel %vm607, %v604, %v606
    %v609 = vsel %vm607, %v602, %v604
    %v610 = vsel %vm607, %v600, %v602
    %v611 = vsel %vm607, %v606, %v600
    %vm612 = vmand %vm555, %vm506
    %vm613 = vmand %vm556, %vm507
    %vm614 = vmand %vm557, %vm508
    %vm615 = vmand %vm558, %vm509
    %vm616 = vmand %vm612, %vm514
    %vm617 = vmand %vm613, %vm515
    %vm618 = vmand %vm614, %vm516
    %vm619 = vmand %vm615, %vm517
    %v620 = vsel %vm616, 1, 0
    %v621 = vsel %vm617, 1, 0
    %v622 = vsel %vm618, 1, 0
    %v623 = vsel %vm619, 1, 0
    %vm624 = vcmp.eq.s32.totalorder %v620, 1
    %vm625 = vcmp.eq.s32.totalorder %v621, 1
    %vm626 = vcmp.eq.s32.totalorder %v622, 1
    %vm627 = vcmp.eq.s32.totalorder %v623, 1
    %v628 = vsel %vm624, %v610, 0.0
    %v629 = vsel %vm625, %v609, 0.0
    %v630 = vsel %vm626, %v608, 0.0
    %v631 = vsel %vm627, %v611, 0.0
    %632 = vrot.lane.b32.xlu0 %v324, 113
    %v633 = vpop.permute.xlu0 %632
    %634 = vrot.lane.b32.xlu0 %v344, 113
    %v635 = vpop.permute.xlu0 %634
    %636 = vrot.lane.b32.xlu0 %v364, 113
    %v637 = vpop.permute.xlu0 %636
    %638 = vrot.lane.b32.xlu0 %v384, 113
    %v639 = vpop.permute.xlu0 %638
    %vm640 = vcmp.lt.s32.totalorder %v37, 113
    %v641 = vsel %vm640, %v637, %v639
    %v642 = vsel %vm640, %v635, %v637
    %v643 = vsel %vm640, %v633, %v635
    %v644 = vsel %vm640, %v639, %v633
    %v645 = vadd.s32 %v45, 1
    %v646 = vadd.s32 %v46, 1
    %v647 = vadd.s32 %v47, 1
    %v648 = vadd.s32 %v48, 1
    %vm649 = vcmp.ge.s32.totalorder %v645, 0
    %vm650 = vcmp.ge.s32.totalorder %v646, 0
    %vm651 = vcmp.ge.s32.totalorder %v647, 0
    %vm652 = vcmp.ge.s32.totalorder %v648, 0
    %vm653 = vcmp.lt.s32.totalorder %v645, 16
    %vm654 = vcmp.lt.s32.totalorder %v646, 16
    %vm655 = vcmp.lt.s32.totalorder %v647, 16
    %vm656 = vcmp.lt.s32.totalorder %v648, 16
    %vm657 = vmand %vm649, %vm653
    %vm658 = vmand %vm650, %vm654
    %vm659 = vmand %vm651, %vm655
    %vm660 = vmand %vm652, %vm656
    %vm661 = vmand %vm657, %vm420
    %vm662 = vmand %vm658, %vm421
    %vm663 = vmand %vm659, %vm422
    %vm664 = vmand %vm660, %vm423
    %vm665 = vmand %vm661, %vm428
    %vm666 = vmand %vm662, %vm429
    %vm667 = vmand %vm663, %vm430
    %vm668 = vmand %vm664, %vm431
    %v669 = vsel %vm665, 1, 0
    %v670 = vsel %vm666, 1, 0
    %v671 = vsel %vm667, 1, 0
    %v672 = vsel %vm668, 1, 0
    %vm673 = vcmp.eq.s32.totalorder %v669, 1
    %vm674 = vcmp.eq.s32.totalorder %v670, 1
    %vm675 = vcmp.eq.s32.totalorder %v671, 1
    %vm676 = vcmp.eq.s32.totalorder %v672, 1
    %v677 = vsel %vm673, %v643, 0.0
    %v678 = vsel %vm674, %v642, 0.0
    %v679 = vsel %vm675, %v641, 0.0
    %v680 = vsel %vm676, %v644, 0.0
    %681 = vrot.lane.b32.xlu0 %v324, 112
    %v682 = vpop.permute.xlu0 %681
    %683 = vrot.lane.b32.xlu0 %v344, 112
    %v684 = vpop.permute.xlu0 %683
    %685 = vrot.lane.b32.xlu0 %v364, 112
    %v686 = vpop.permute.xlu0 %685
    %687 = vrot.lane.b32.xlu0 %v384, 112
    %v688 = vpop.permute.xlu0 %687
    %vm689 = vcmp.lt.s32.totalorder %v37, 112
    %v690 = vsel %vm689, %v686, %v688
    %v691 = vsel %vm689, %v684, %v686
    %v692 = vsel %vm689, %v682, %v684
    %v693 = vsel %vm689, %v688, %v682
    %vm694 = vmand %vm657, %vm461
    %vm695 = vmand %vm658, %vm462
    %vm696 = vmand %vm659, %vm463
    %vm697 = vmand %vm660, %vm464
    %vm698 = vmand %vm694, %vm469
    %vm699 = vmand %vm695, %vm470
    %vm700 = vmand %vm696, %vm471
    %vm701 = vmand %vm697, %vm472
    %v702 = vsel %vm698, 1, 0
    %v703 = vsel %vm699, 1, 0
    %v704 = vsel %vm700, 1, 0
    %v705 = vsel %vm701, 1, 0
    %vm706 = vcmp.eq.s32.totalorder %v702, 1
    %vm707 = vcmp.eq.s32.totalorder %v703, 1
    %vm708 = vcmp.eq.s32.totalorder %v704, 1
    %vm709 = vcmp.eq.s32.totalorder %v705, 1
    %v710 = vsel %vm706, %v692, 0.0
    %v711 = vsel %vm707, %v691, 0.0
    %v712 = vsel %vm708, %v690, 0.0
    %v713 = vsel %vm709, %v693, 0.0
    %714 = vrot.lane.b32.xlu0 %v324, 111
    %v715 = vpop.permute.xlu0 %714
    %716 = vrot.lane.b32.xlu0 %v344, 111
    %v717 = vpop.permute.xlu0 %716
    %718 = vrot.lane.b32.xlu0 %v364, 111
    %v719 = vpop.permute.xlu0 %718
    %720 = vrot.lane.b32.xlu0 %v384, 111
    %v721 = vpop.permute.xlu0 %720
    %vm722 = vcmp.lt.s32.totalorder %v37, 111
    %v723 = vsel %vm722, %v719, %v721
    %v724 = vsel %vm722, %v717, %v719
    %v725 = vsel %vm722, %v715, %v717
    %v726 = vsel %vm722, %v721, %v715
    %vm727 = vmand %vm657, %vm506
    %vm728 = vmand %vm658, %vm507
    %vm729 = vmand %vm659, %vm508
    %vm730 = vmand %vm660, %vm509
    %vm731 = vmand %vm727, %vm514
    %vm732 = vmand %vm728, %vm515
    %vm733 = vmand %vm729, %vm516
    %vm734 = vmand %vm730, %vm517
    %v735 = vsel %vm731, 1, 0
    %v736 = vsel %vm732, 1, 0
    %v737 = vsel %vm733, 1, 0
    %v738 = vsel %vm734, 1, 0
    %vm739 = vcmp.eq.s32.totalorder %v735, 1
    %vm740 = vcmp.eq.s32.totalorder %v736, 1
    %vm741 = vcmp.eq.s32.totalorder %v737, 1
    %vm742 = vcmp.eq.s32.totalorder %v738, 1
    %v743 = vsel %vm739, %v725, 0.0
    %v744 = vsel %vm740, %v724, 0.0
    %v745 = vsel %vm741, %v723, 0.0
    %v746 = vsel %vm742, %v726, 0.0
    %747 = vset.pattern.permute.xlu0 2
    %748 = vperm.xlu0 %747, %v296
    %v749 = vpop.permute.xlu0 %748
    %vm751 = vcmask 588800
    %v753 = vsel %vm751, %v386, 0
    %755 = vmatpush.msra.mxu0 0.0
    %756 = vmatpush.msra.mxu0 0.0
    %757 = vmatpush.msra.mxu0 0.0
    %758 = vmatpush.msra.mxu0 0.0
    %759 = vmatpush.msra.mxu0 0.0
    %760 = vmatpush.msra.mxu0 0.0
    %761 = vmatpush.msra.mxu0 0.0
    %762 = vmatpush.msra.mxu0 %v743
    %763 = vmatpush.msra.mxu0 %v710
    %764 = vmatpush.msra.mxu0 %v677
    %765 = vmatpush.msra.mxu0 %v628
    %766 = vmatpush.msra.mxu0 %v595
    %767 = vmatpush.msra.mxu0 %v575
    %768 = vmatpush.msra.mxu0 %v530
    %769 = vmatpush.msra.mxu0 %v485
    %770 = vmatpush.msra.mxu0 %v444
    %771 = vmatmul.f32.gmra.mxu0 %v753
    %v772 = vpop.f32.mrf.mxu0
    %v773 = vadd.f32 %v749, %v772
    %774 = vdwg.mxu0
    %775 = vmatpush.msra.mxu0 0.0
    %776 = vmatpush.msra.mxu0 0.0
    %777 = vmatpush.msra.mxu0 0.0
    %778 = vmatpush.msra.mxu0 0.0
    %779 = vmatpush.msra.mxu0 0.0
    %780 = vmatpush.msra.mxu0 0.0
    %781 = vmatpush.msra.mxu0 0.0
    %782 = vmatpush.msra.mxu0 %v744
    %783 = vmatpush.msra.mxu0 %v711
    %784 = vmatpush.msra.mxu0 %v678
    %785 = vmatpush.msra.mxu0 %v629
    %786 = vmatpush.msra.mxu0 %v596
    %787 = vmatpush.msra.mxu0 %v576
    %788 = vmatpush.msra.mxu0 %v531
    %789 = vmatpush.msra.mxu0 %v486
    %790 = vmatpush.msra.mxu0 %v445
    %791 = vmatmul.f32.gmra.mxu0 %v753
    %v792 = vpop.f32.mrf.mxu0
    %v793 = vadd.f32 %v749, %v792
    %794 = vdwg.mxu0
    %795 = vmatpush.msra.mxu0 0.0
    %796 = vmatpush.msra.mxu0 0.0
    %797 = vmatpush.msra.mxu0 0.0
    %798 = vmatpush.msra.mxu0 0.0
    %799 = vmatpush.msra.mxu0 0.0
    %800 = vmatpush.msra.mxu0 0.0
    %801 = vmatpush.msra.mxu0 0.0
    %802 = vmatpush.msra.mxu0 %v745
    %803 = vmatpush.msra.mxu0 %v712
    %804 = vmatpush.msra.mxu0 %v679
    %805 = vmatpush.msra.mxu0 %v630
    %806 = vmatpush.msra.mxu0 %v597
    %807 = vmatpush.msra.mxu0 %v577
    %808 = vmatpush.msra.mxu0 %v532
    %809 = vmatpush.msra.mxu0 %v487
    %810 = vmatpush.msra.mxu0 %v446
    %811 = vmatmul.f32.gmra.mxu0 %v753
    %v812 = vpop.f32.mrf.mxu0
    %v813 = vadd.f32 %v749, %v812
    %814 = vdwg.mxu0
    %815 = vmatpush.msra.mxu0 0.0
    %816 = vmatpush.msra.mxu0 0.0
    %817 = vmatpush.msra.mxu0 0.0
    %818 = vmatpush.msra.mxu0 0.0
    %819 = vmatpush.msra.mxu0 0.0
    %820 = vmatpush.msra.mxu0 0.0
    %821 = vmatpush.msra.mxu0 0.0
    %822 = vmatpush.msra.mxu0 %v746
    %823 = vmatpush.msra.mxu0 %v713
    %824 = vmatpush.msra.mxu0 %v680
    %825 = vmatpush.msra.mxu0 %v631
    %826 = vmatpush.msra.mxu0 %v598
    %827 = vmatpush.msra.mxu0 %v578
    %828 = vmatpush.msra.mxu0 %v533
    %829 = vmatpush.msra.mxu0 %v488
    %830 = vmatpush.msra.mxu0 %v447
    %831 = vmatmul.f32.gmra.mxu0 %v753
    %v832 = vpop.f32.mrf.mxu0
    %v833 = vadd.f32 %v749, %v832
    %834 = vdwg.mxu0
    %s835 = sld [smem:[#allocation2]]
    %vm836 = vcmp.ge.f32.partialorder %v773, 0.0
    %vm837 = vcmp.ge.f32.partialorder %v793, 0.0
    %vm838 = vcmp.ge.f32.partialorder %v813, 0.0
    %vm839 = vcmp.ge.f32.partialorder %v833, 0.0
    %v840 = vstv %s835
    %v841 = vmul.f32 %v840, %v773
    %v842 = vmul.f32 %v840, %v793
    %v843 = vmul.f32 %v840, %v813
    %v844 = vmul.f32 %v840, %v833
    %v845 = vsel %vm836, %v773, %v841
    %v846 = vsel %vm837, %v793, %v842
    %v847 = vsel %vm838, %v813, %v843
    %v848 = vsel %vm839, %v833, %v844
    %v849 = vld [vmem:[%s2 + $0x30] sm:$0xff]
    %v850 = vld [vmem:[%s2 + $0x40] sm:$0xff]
    %v851 = vld [vmem:[%s3] sm:$0xff]
    %v852 = vld [vmem:[%s3 + $0x8] sm:$0xff]
    %853 = vrot.lane.b32.xlu0 %v845, 17
    %v854 = vpop.permute.xlu0 %853
    %855 = vrot.lane.b32.xlu0 %v846, 17
    %v856 = vpop.permute.xlu0 %855
    %857 = vrot.lane.b32.xlu0 %v847, 17
    %v858 = vpop.permute.xlu0 %857
    %859 = vrot.lane.b32.xlu0 %v848, 17
    %v860 = vpop.permute.xlu0 %859
    %v861 = vsel %vm395, %v858, %v860
    %v862 = vsel %vm395, %v856, %v858
    %v863 = vsel %vm395, %v854, %v856
    %v864 = vsel %vm395, %v860, %v854
    %v865 = vsel %vm440, %v864, 0.0
    %v866 = vsel %vm441, %v863, 0.0
    %v867 = vsel %vm442, %v862, 0.0
    %v868 = vsel %vm443, %v861, 0.0
    %869 = vrot.lane.b32.xlu0 %v845, 16
    %v870 = vpop.permute.xlu0 %869
    %871 = vrot.lane.b32.xlu0 %v846, 16
    %v872 = vpop.permute.xlu0 %871
    %873 = vrot.lane.b32.xlu0 %v847, 16
    %v874 = vpop.permute.xlu0 %873
    %875 = vrot.lane.b32.xlu0 %v848, 16
    %v876 = vpop.permute.xlu0 %875
    %v877 = vsel %vm456, %v874, %v876
    %v878 = vsel %vm456, %v872, %v874
    %v879 = vsel %vm456, %v870, %v872
    %v880 = vsel %vm456, %v876, %v870
    %v881 = vsel %vm481, %v880, 0.0
    %v882 = vsel %vm482, %v879, 0.0
    %v883 = vsel %vm483, %v878, 0.0
    %v884 = vsel %vm484, %v877, 0.0
    %885 = vrot.lane.b32.xlu0 %v845, 15
    %v886 = vpop.permute.xlu0 %885
    %887 = vrot.lane.b32.xlu0 %v846, 15
    %v888 = vpop.permute.xlu0 %887
    %889 = vrot.lane.b32.xlu0 %v847, 15
    %v890 = vpop.permute.xlu0 %889
    %891 = vrot.lane.b32.xlu0 %v848, 15
    %v892 = vpop.permute.xlu0 %891
    %v893 = vsel %vm497, %v890, %v892
    %v894 = vsel %vm497, %v888, %v890
    %v895 = vsel %vm497, %v886, %v888
    %v896 = vsel %vm497, %v892, %v886
    %v897 = vsel %vm526, %v896, 0.0
    %v898 = vsel %vm527, %v895, 0.0
    %v899 = vsel %vm528, %v894, 0.0
    %v900 = vsel %vm529, %v893, 0.0
    %901 = vrot.lane.b32.xlu0 %v845, 1
    %v902 = vpop.permute.xlu0 %901
    %903 = vrot.lane.b32.xlu0 %v846, 1
    %v904 = vpop.permute.xlu0 %903
    %905 = vrot.lane.b32.xlu0 %v847, 1
    %v906 = vpop.permute.xlu0 %905
    %907 = vrot.lane.b32.xlu0 %v848, 1
    %v908 = vpop.permute.xlu0 %907
    %v909 = vsel %vm542, %v906, %v908
    %v910 = vsel %vm542, %v904, %v906
    %v911 = vsel %vm542, %v902, %v904
    %v912 = vsel %vm542, %v908, %v902
    %v913 = vsel %vm571, %v912, 0.0
    %v914 = vsel %vm572, %v911, 0.0
    %v915 = vsel %vm573, %v910, 0.0
    %v916 = vsel %vm574, %v909, 0.0
    %v917 = vsel %vm591, %v845, 0.0
    %v918 = vsel %vm592, %v846, 0.0
    %v919 = vsel %vm593, %v847, 0.0
    %v920 = vsel %vm594, %v848, 0.0
    %921 = vrot.lane.b32.xlu0 %v845, 127
    %v922 = vpop.permute.xlu0 %921
    %923 = vrot.lane.b32.xlu0 %v846, 127
    %v924 = vpop.permute.xlu0 %923
    %925 = vrot.lane.b32.xlu0 %v847, 127
    %v926 = vpop.permute.xlu0 %925
    %927 = vrot.lane.b32.xlu0 %v848, 127
    %v928 = vpop.permute.xlu0 %927
    %v929 = vsel %vm607, %v926, %v928
    %v930 = vsel %vm607, %v924, %v926
    %v931 = vsel %vm607, %v922, %v924
    %v932 = vsel %vm607, %v928, %v922
    %v933 = vsel %vm624, %v931, 0.0
    %v934 = vsel %vm625, %v930, 0.0
    %v935 = vsel %vm626, %v929, 0.0
    %v936 = vsel %vm627, %v932, 0.0
    %937 = vrot.lane.b32.xlu0 %v845, 113
    %v938 = vpop.permute.xlu0 %937
    %939 = vrot.lane.b32.xlu0 %v846, 113
    %v940 = vpop.permute.xlu0 %939
    %941 = vrot.lane.b32.xlu0 %v847, 113
    %v942 = vpop.permute.xlu0 %941
    %943 = vrot.lane.b32.xlu0 %v848, 113
    %v944 = vpop.permute.xlu0 %943
    %v945 = vsel %vm640, %v942, %v944
    %v946 = vsel %vm640, %v940, %v942
    %v947 = vsel %vm640, %v938, %v940
    %v948 = vsel %vm640, %v944, %v938
    %v949 = vsel %vm673, %v947, 0.0
    %v950 = vsel %vm674, %v946, 0.0
    %v951 = vsel %vm675, %v945, 0.0
    %v952 = vsel %vm676, %v948, 0.0
    %953 = vrot.lane.b32.xlu0 %v845, 112
    %v954 = vpop.permute.xlu0 %953
    %955 = vrot.lane.b32.xlu0 %v846, 112
    %v956 = vpop.permute.xlu0 %955
    %957 = vrot.lane.b32.xlu0 %v847, 112
    %v958 = vpop.permute.xlu0 %957
    %959 = vrot.lane.b32.xlu0 %v848, 112
    %v960 = vpop.permute.xlu0 %959
    %v961 = vsel %vm689, %v958, %v960
    %v962 = vsel %vm689, %v956, %v958
    %v963 = vsel %vm689, %v954, %v956
    %v964 = vsel %vm689, %v960, %v954
    %v965 = vsel %vm706, %v963, 0.0
    %v966 = vsel %vm707, %v962, 0.0
    %v967 = vsel %vm708, %v961, 0.0
    %v968 = vsel %vm709, %v964, 0.0
    %969 = vrot.lane.b32.xlu0 %v845, 111
    %v970 = vpop.permute.xlu0 %969
    %971 = vrot.lane.b32.xlu0 %v846, 111
    %v972 = vpop.permute.xlu0 %971
    %973 = vrot.lane.b32.xlu0 %v847, 111
    %v974 = vpop.permute.xlu0 %973
    %975 = vrot.lane.b32.xlu0 %v848, 111
    %v976 = vpop.permute.xlu0 %975
    %v977 = vsel %vm722, %v974, %v976
    %v978 = vsel %vm722, %v972, %v974
    %v979 = vsel %vm722, %v970, %v972
    %v980 = vsel %vm722, %v976, %v970
    %v981 = vsel %vm739, %v979, 0.0
    %v982 = vsel %vm740, %v978, 0.0
    %v983 = vsel %vm741, %v977, 0.0
    %v984 = vsel %vm742, %v980, 0.0
    %986 = vset.pattern.permute.xlu0 3
    %987 = vperm.xlu0 %986, %v851
    %v988 = vpop.permute.xlu0 %987
    %991 = vset.pattern.permute.xlu0 3
    %992 = vperm.xlu0 %991, %v852
    %v993 = vpop.permute.xlu0 %992
    %v996 = vsel %vm751, %v849, 0
    %v999 = vsel %vm751, %v850, 0
    %1001 = vmatpush.msra.mxu0 0.0
    %1002 = vmatpush.msra.mxu0 0.0
    %1003 = vmatpush.msra.mxu0 0.0
    %1004 = vmatpush.msra.mxu0 0.0
    %1005 = vmatpush.msra.mxu0 0.0
    %1006 = vmatpush.msra.mxu0 0.0
    %1007 = vmatpush.msra.mxu0 0.0
    %1008 = vmatpush.msra.mxu0 %v981
    %1009 = vmatpush.msra.mxu0 %v965
    %1010 = vmatpush.msra.mxu0 %v949
    %1011 = vmatpush.msra.mxu0 %v933
    %1012 = vmatpush.msra.mxu0 %v917
    %1013 = vmatpush.msra.mxu0 %v913
    %1014 = vmatpush.msra.mxu0 %v897
    %1015 = vmatpush.msra.mxu0 %v881
    %1016 = vmatpush.msra.mxu0 %v865
    %1017 = vmatmul.f32.gmra.mxu0 %v996
    %v1018 = vpop.f32.mrf.mxu0
    %v1019 = vadd.f32 %v988, %v1018
    %1020 = vmatmul.f32.gmra.mxu0 %v999
    %v1021 = vpop.f32.mrf.mxu0
    %v1022 = vadd.f32 %v993, %v1021
    %1023 = vdwg.mxu0
    %1024 = vmatpush.msra.mxu0 0.0
    %1025 = vmatpush.msra.mxu0 0.0
    %1026 = vmatpush.msra.mxu0 0.0
    %1027 = vmatpush.msra.mxu0 0.0
    %1028 = vmatpush.msra.mxu0 0.0
    %1029 = vmatpush.msra.mxu0 0.0
    %1030 = vmatpush.msra.mxu0 0.0
    %1031 = vmatpush.msra.mxu0 %v982
    %1032 = vmatpush.msra.mxu0 %v966
    %1033 = vmatpush.msra.mxu0 %v950
    %1034 = vmatpush.msra.mxu0 %v934
    %1035 = vmatpush.msra.mxu0 %v918
    %1036 = vmatpush.msra.mxu0 %v914
    %1037 = vmatpush.msra.mxu0 %v898
    %1038 = vmatpush.msra.mxu0 %v882
    %1039 = vmatpush.msra.mxu0 %v866
    %1040 = vmatmul.f32.gmra.mxu0 %v996
    %v1041 = vpop.f32.mrf.mxu0
    %v1042 = vadd.f32 %v988, %v1041
    %1043 = vmatmul.f32.gmra.mxu0 %v999
    %v1044 = vpop.f32.mrf.mxu0
    %v1045 = vadd.f32 %v993, %v1044
    %1046 = vdwg.mxu0
    %1047 = vmatpush.msra.mxu0 0.0
    %1048 = vmatpush.msra.mxu0 0.0
    %1049 = vmatpush.msra.mxu0 0.0
    %1050 = vmatpush.msra.mxu0 0.0
    %1051 = vmatpush.msra.mxu0 0.0
    %1052 = vmatpush.msra.mxu0 0.0
    %1053 = vmatpush.msra.mxu0 0.0
    %1054 = vmatpush.msra.mxu0 %v983
    %1055 = vmatpush.msra.mxu0 %v967
    %1056 = vmatpush.msra.mxu0 %v951
    %1057 = vmatpush.msra.mxu0 %v935
    %1058 = vmatpush.msra.mxu0 %v919
    %1059 = vmatpush.msra.mxu0 %v915
    %1060 = vmatpush.msra.mxu0 %v899
    %1061 = vmatpush.msra.mxu0 %v883
    %1062 = vmatpush.msra.mxu0 %v867
    %1063 = vmatmul.f32.gmra.mxu0 %v996
    %v1064 = vpop.f32.mrf.mxu0
    %v1065 = vadd.f32 %v988, %v1064
    %1066 = vmatmul.f32.gmra.mxu0 %v999
    %v1067 = vpop.f32.mrf.mxu0
    %v1068 = vadd.f32 %v993, %v1067
    %1069 = vdwg.mxu0
    %1070 = vmatpush.msra.mxu0 0.0
    %1071 = vmatpush.msra.mxu0 0.0
    %1072 = vmatpush.msra.mxu0 0.0
    %1073 = vmatpush.msra.mxu0 0.0
    %1074 = vmatpush.msra.mxu0 0.0
    %1075 = vmatpush.msra.mxu0 0.0
    %1076 = vmatpush.msra.mxu0 0.0
    %1077 = vmatpush.msra.mxu0 %v984
    %1078 = vmatpush.msra.mxu0 %v968
    %1079 = vmatpush.msra.mxu0 %v952
    %1080 = vmatpush.msra.mxu0 %v936
    %1081 = vmatpush.msra.mxu0 %v920
    %1082 = vmatpush.msra.mxu0 %v916
    %1083 = vmatpush.msra.mxu0 %v900
    %1084 = vmatpush.msra.mxu0 %v884
    %1085 = vmatpush.msra.mxu0 %v868
    %1086 = vmatmul.f32.gmra.mxu0 %v996
    %v1087 = vpop.f32.mrf.mxu0
    %v1088 = vadd.f32 %v988, %v1087
    %1089 = vmatmul.f32.gmra.mxu0 %v999
    %v1090 = vpop.f32.mrf.mxu0
    %v1091 = vadd.f32 %v993, %v1090
    %1092 = vdwg.mxu0
    %s1093 = sld [smem:[#allocation2 + $0x1]]
    %vm1094 = vcmp.ge.f32.partialorder %v1019, 0.0
    %vm1095 = vcmp.ge.f32.partialorder %v1042, 0.0
    %vm1096 = vcmp.ge.f32.partialorder %v1065, 0.0
    %vm1097 = vcmp.ge.f32.partialorder %v1088, 0.0
    %vm1098 = vcmp.ge.f32.partialorder %v1022, 0.0
    %vm1099 = vcmp.ge.f32.partialorder %v1045, 0.0
    %vm1100 = vcmp.ge.f32.partialorder %v1068, 0.0
    %vm1101 = vcmp.ge.f32.partialorder %v1091, 0.0
    %v1102 = vstv %s1093
    %v1103 = vmul.f32 %v1102, %v1019
    %v1104 = vmul.f32 %v1102, %v1042
    %v1105 = vmul.f32 %v1102, %v1065
    %v1106 = vmul.f32 %v1102, %v1088
    %v1107 = vmul.f32 %v1102, %v1022
    %v1108 = vmul.f32 %v1102, %v1045
    %v1109 = vmul.f32 %v1102, %v1068
    %v1110 = vmul.f32 %v1102, %v1091
    %v1111 = vsel %vm1094, %v1019, %v1103
    %v1112 = vsel %vm1095, %v1042, %v1104
    %v1113 = vsel %vm1096, %v1065, %v1105
    %v1114 = vsel %vm1097, %v1088, %v1106
    %v1115 = vsel %vm1098, %v1022, %v1107
    %v1116 = vsel %vm1099, %v1045, %v1108
    %v1117 = vsel %vm1100, %v1068, %v1109
    %v1118 = vsel %vm1101, %v1091, %v1110
    %1119 = vset.pattern.permute.xlu0 4
    %1120 = vperm.xlu0 %1119, %v851
    %v1121 = vpop.permute.xlu0 %1120
    %1123 = vset.pattern.permute.xlu0 4
    %1124 = vperm.xlu0 %1123, %v852
    %v1125 = vpop.permute.xlu0 %1124
    %v1127 = vmul.f32 %v1111, %v1121
    %v1128 = vmul.f32 %v1112, %v1121
    %v1129 = vmul.f32 %v1113, %v1121
    %v1130 = vmul.f32 %v1114, %v1121
    %v1131 = vmul.f32 %v1115, %v1125
    %v1132 = vmul.f32 %v1116, %v1125
    %v1133 = vmul.f32 %v1117, %v1125
    %v1134 = vmul.f32 %v1118, %v1125
    %1135 = vset.pattern.permute.xlu0 5
    %1136 = vperm.xlu0 %1135, %v851
    %v1137 = vpop.permute.xlu0 %1136
    %1139 = vset.pattern.permute.xlu0 5
    %1140 = vperm.xlu0 %1139, %v852
    %v1141 = vpop.permute.xlu0 %1140
    %v1143 = vadd.f32 %v1127, %v1137
    %v1144 = vadd.f32 %v1128, %v1137
    %v1145 = vadd.f32 %v1129, %v1137
    %v1146 = vadd.f32 %v1130, %v1137
    %v1147 = vadd.f32 %v1131, %v1141
    %v1148 = vadd.f32 %v1132, %v1141
    %v1149 = vadd.f32 %v1133, %v1141
    %v1150 = vadd.f32 %v1134, %v1141
    %v1151 = vld [vmem:[%s2 + $0x50] sm:$0xff]
    %1152 = vset.pattern.permute.xlu0 6
    %1153 = vperm.xlu0 %1152, %v296
    %v1154 = vpop.permute.xlu0 %1153
    %vm1156 = vcmask 130048
    %v1158 = vsel %vm1156, %v1151, 0
    %1160 = vmatpush.msra.mxu0 0.0
    %1161 = vmatpush.msra.mxu0 0.0
    %1162 = vmatpush.msra.mxu0 0.0
    %1163 = vmatpush.msra.mxu0 0.0
    %1164 = vmatpush.msra.mxu0 0.0
    %1165 = vmatpush.msra.mxu0 0.0
    %1166 = vmatpush.msra.mxu0 0.0
    %1167 = vmatpush.msra.mxu0 0.0
    %1168 = vmatpush.msra.mxu0 0.0
    %1169 = vmatpush.msra.mxu0 0.0
    %1170 = vmatpush.msra.mxu0 0.0
    %1171 = vmatpush.msra.mxu0 0.0
    %1172 = vmatpush.msra.mxu0 0.0
    %1173 = vmatpush.msra.mxu0 0.0
    %1174 = vmatpush.msra.mxu0 %v1147
    %1175 = vmatpush.msra.mxu0 %v1143
    %1176 = vmatmul.f32.gmra.mxu0 %v1158
    %v1177 = vpop.f32.mrf.mxu0
    %v1178 = vadd.f32 %v1154, %v1177
    %1179 = vdwg.mxu0
    %1180 = vmatpush.msra.mxu0 0.0
    %1181 = vmatpush.msra.mxu0 0.0
    %1182 = vmatpush.msra.mxu0 0.0
    %1183 = vmatpush.msra.mxu0 0.0
    %1184 = vmatpush.msra.mxu0 0.0
    %1185 = vmatpush.msra.mxu0 0.0
    %1186 = vmatpush.msra.mxu0 0.0
    %1187 = vmatpush.msra.mxu0 0.0
    %1188 = vmatpush.msra.mxu0 0.0
    %1189 = vmatpush.msra.mxu0 0.0
    %1190 = vmatpush.msra.mxu0 0.0
    %1191 = vmatpush.msra.mxu0 0.0
    %1192 = vmatpush.msra.mxu0 0.0
    %1193 = vmatpush.msra.mxu0 0.0
    %1194 = vmatpush.msra.mxu0 %v1148
    %1195 = vmatpush.msra.mxu0 %v1144
    %1196 = vmatmul.f32.gmra.mxu0 %v1158
    %v1197 = vpop.f32.mrf.mxu0
    %v1198 = vadd.f32 %v1154, %v1197
    %1199 = vdwg.mxu0
    %1200 = vmatpush.msra.mxu0 0.0
    %1201 = vmatpush.msra.mxu0 0.0
    %1202 = vmatpush.msra.mxu0 0.0
    %1203 = vmatpush.msra.mxu0 0.0
    %1204 = vmatpush.msra.mxu0 0.0
    %1205 = vmatpush.msra.mxu0 0.0
    %1206 = vmatpush.msra.mxu0 0.0
    %1207 = vmatpush.msra.mxu0 0.0
    %1208 = vmatpush.msra.mxu0 0.0
    %1209 = vmatpush.msra.mxu0 0.0
    %1210 = vmatpush.msra.mxu0 0.0
    %1211 = vmatpush.msra.mxu0 0.0
    %1212 = vmatpush.msra.mxu0 0.0
    %1213 = vmatpush.msra.mxu0 0.0
    %1214 = vmatpush.msra.mxu0 %v1149
    %1215 = vmatpush.msra.mxu0 %v1145
    %1216 = vmatmul.f32.gmra.mxu0 %v1158
    %v1217 = vpop.f32.mrf.mxu0
    %v1218 = vadd.f32 %v1154, %v1217
    %1219 = vdwg.mxu0
    %1220 = vmatpush.msra.mxu0 0.0
    %1221 = vmatpush.msra.mxu0 0.0
    %1222 = vmatpush.msra.mxu0 0.0
    %1223 = vmatpush.msra.mxu0 0.0
    %1224 = vmatpush.msra.mxu0 0.0
    %1225 = vmatpush.msra.mxu0 0.0
    %1226 = vmatpush.msra.mxu0 0.0
    %1227 = vmatpush.msra.mxu0 0.0
    %1228 = vmatpush.msra.mxu0 0.0
    %1229 = vmatpush.msra.mxu0 0.0
    %1230 = vmatpush.msra.mxu0 0.0
    %1231 = vmatpush.msra.mxu0 0.0
    %1232 = vmatpush.msra.mxu0 0.0
    %1233 = vmatpush.msra.mxu0 0.0
    %1234 = vmatpush.msra.mxu0 %v1150
    %1235 = vmatpush.msra.mxu0 %v1146
    %1236 = vmatmul.f32.gmra.mxu0 %v1158
    %v1237 = vpop.f32.mrf.mxu0
    %v1238 = vadd.f32 %v1154, %v1237
    %1239 = vdwg.mxu0
    %v1240 = vld [vmem:[%s2 + $0x60] sm:$0xff]
    %1241 = vset.pattern.permute.xlu0 7
    %1242 = vperm.xlu0 %1241, %v296
    %v1243 = vpop.permute.xlu0 %1242
    %v1246 = vsel %vm302, %v1240, 0
    %1248 = vmatpush.msra.mxu0 0.0
    %1249 = vmatpush.msra.mxu0 0.0
    %1250 = vmatpush.msra.mxu0 0.0
    %1251 = vmatpush.msra.mxu0 0.0
    %1252 = vmatpush.msra.mxu0 0.0
    %1253 = vmatpush.msra.mxu0 0.0
    %1254 = vmatpush.msra.mxu0 0.0
    %1255 = vmatpush.msra.mxu0 0.0
    %1256 = vmatpush.msra.mxu0 0.0
    %1257 = vmatpush.msra.mxu0 0.0
    %1258 = vmatpush.msra.mxu0 0.0
    %1259 = vmatpush.msra.mxu0 0.0
    %1260 = vmatpush.msra.mxu0 0.0
    %1261 = vmatpush.msra.mxu0 0.0
    %1262 = vmatpush.msra.mxu0 0.0
    %1263 = vmatpush.msra.mxu0 %v1178
    %1264 = vmatmul.f32.gmra.mxu0 %v1246
    %v1265 = vpop.f32.mrf.mxu0
    %v1266 = vadd.f32 %v1243, %v1265
    %1267 = vdwg.mxu0
    %1268 = vmatpush.msra.mxu0 0.0
    %1269 = vmatpush.msra.mxu0 0.0
    %1270 = vmatpush.msra.mxu0 0.0
    %1271 = vmatpush.msra.mxu0 0.0
    %1272 = vmatpush.msra.mxu0 0.0
    %1273 = vmatpush.msra.mxu0 0.0
    %1274 = vmatpush.msra.mxu0 0.0
    %1275 = vmatpush.msra.mxu0 0.0
    %1276 = vmatpush.msra.mxu0 0.0
    %1277 = vmatpush.msra.mxu0 0.0
    %1278 = vmatpush.msra.mxu0 0.0
    %1279 = vmatpush.msra.mxu0 0.0
    %1280 = vmatpush.msra.mxu0 0.0
    %1281 = vmatpush.msra.mxu0 0.0
    %1282 = vmatpush.msra.mxu0 0.0
    %1283 = vmatpush.msra.mxu0 %v1198
    %1284 = vmatmul.f32.gmra.mxu0 %v1246
    %v1285 = vpop.f32.mrf.mxu0
    %v1286 = vadd.f32 %v1243, %v1285
    %1287 = vdwg.mxu0
    %1288 = vmatpush.msra.mxu0 0.0
    %1289 = vmatpush.msra.mxu0 0.0
    %1290 = vmatpush.msra.mxu0 0.0
    %1291 = vmatpush.msra.mxu0 0.0
    %1292 = vmatpush.msra.mxu0 0.0
    %1293 = vmatpush.msra.mxu0 0.0
    %1294 = vmatpush.msra.mxu0 0.0
    %1295 = vmatpush.msra.mxu0 0.0
    %1296 = vmatpush.msra.mxu0 0.0
    %1297 = vmatpush.msra.mxu0 0.0
    %1298 = vmatpush.msra.mxu0 0.0
    %1299 = vmatpush.msra.mxu0 0.0
    %1300 = vmatpush.msra.mxu0 0.0
    %1301 = vmatpush.msra.mxu0 0.0
    %1302 = vmatpush.msra.mxu0 0.0
    %1303 = vmatpush.msra.mxu0 %v1218
    %1304 = vmatmul.f32.gmra.mxu0 %v1246
    %v1305 = vpop.f32.mrf.mxu0
    %v1306 = vadd.f32 %v1243, %v1305
    %1307 = vdwg.mxu0
    %1308 = vmatpush.msra.mxu0 0.0
    %1309 = vmatpush.msra.mxu0 0.0
    %1310 = vmatpush.msra.mxu0 0.0
    %1311 = vmatpush.msra.mxu0 0.0
    %1312 = vmatpush.msra.mxu0 0.0
    %1313 = vmatpush.msra.mxu0 0.0
    %1314 = vmatpush.msra.mxu0 0.0
    %1315 = vmatpush.msra.mxu0 0.0
    %1316 = vmatpush.msra.mxu0 0.0
    %1317 = vmatpush.msra.mxu0 0.0
    %1318 = vmatpush.msra.mxu0 0.0
    %1319 = vmatpush.msra.mxu0 0.0
    %1320 = vmatpush.msra.mxu0 0.0
    %1321 = vmatpush.msra.mxu0 0.0
    %1322 = vmatpush.msra.mxu0 0.0
    %1323 = vmatpush.msra.mxu0 %v1238
    %1324 = vmatmul.f32.gmra.mxu0 %v1246
    %v1325 = vpop.f32.mrf.mxu0
    %v1326 = vadd.f32 %v1243, %v1325
    %1327 = vdwg.mxu0
    %1328 = vrot.lane.b32.xlu0 %v1266, 17
    %v1329 = vpop.permute.xlu0 %1328
    %1330 = vrot.lane.b32.xlu0 %v1286, 17
    %v1331 = vpop.permute.xlu0 %1330
    %1332 = vrot.lane.b32.xlu0 %v1306, 17
    %v1333 = vpop.permute.xlu0 %1332
    %1334 = vrot.lane.b32.xlu0 %v1326, 17
    %v1335 = vpop.permute.xlu0 %1334
    %v1336 = vsel %vm395, %v1333, %v1335
    %v1337 = vsel %vm395, %v1331, %v1333
    %v1338 = vsel %vm395, %v1329, %v1331
    %v1339 = vsel %vm395, %v1335, %v1329
    %v1340 = vsel %vm440, %v1339, -3e+38
    %v1341 = vsel %vm441, %v1338, -3e+38
    %v1342 = vsel %vm442, %v1337, -3e+38
    %v1343 = vsel %vm443, %v1336, -3e+38
    %1344 = vrot.lane.b32.xlu0 %v1266, 16
    %v1345 = vpop.permute.xlu0 %1344
    %1346 = vrot.lane.b32.xlu0 %v1286, 16
    %v1347 = vpop.permute.xlu0 %1346
    %1348 = vrot.lane.b32.xlu0 %v1306, 16
    %v1349 = vpop.permute.xlu0 %1348
    %1350 = vrot.lane.b32.xlu0 %v1326, 16
    %v1351 = vpop.permute.xlu0 %1350
    %v1352 = vsel %vm456, %v1349, %v1351
    %v1353 = vsel %vm456, %v1347, %v1349
    %v1354 = vsel %vm456, %v1345, %v1347
    %v1355 = vsel %vm456, %v1351, %v1345
    %v1356 = vsel %vm481, %v1355, -3e+38
    %v1357 = vsel %vm482, %v1354, -3e+38
    %v1358 = vsel %vm483, %v1353, -3e+38
    %v1359 = vsel %vm484, %v1352, -3e+38
    %1360 = vrot.lane.b32.xlu0 %v1266, 15
    %v1361 = vpop.permute.xlu0 %1360
    %1362 = vrot.lane.b32.xlu0 %v1286, 15
    %v1363 = vpop.permute.xlu0 %1362
    %1364 = vrot.lane.b32.xlu0 %v1306, 15
    %v1365 = vpop.permute.xlu0 %1364
    %1366 = vrot.lane.b32.xlu0 %v1326, 15
    %v1367 = vpop.permute.xlu0 %1366
    %v1368 = vsel %vm497, %v1365, %v1367
    %v1369 = vsel %vm497, %v1363, %v1365
    %v1370 = vsel %vm497, %v1361, %v1363
    %v1371 = vsel %vm497, %v1367, %v1361
    %v1372 = vsel %vm526, %v1371, -3e+38
    %v1373 = vsel %vm527, %v1370, -3e+38
    %v1374 = vsel %vm528, %v1369, -3e+38
    %v1375 = vsel %vm529, %v1368, -3e+38
    %1376 = vrot.lane.b32.xlu0 %v1266, 1
    %v1377 = vpop.permute.xlu0 %1376
    %1378 = vrot.lane.b32.xlu0 %v1286, 1
    %v1379 = vpop.permute.xlu0 %1378
    %1380 = vrot.lane.b32.xlu0 %v1306, 1
    %v1381 = vpop.permute.xlu0 %1380
    %1382 = vrot.lane.b32.xlu0 %v1326, 1
    %v1383 = vpop.permute.xlu0 %1382
    %v1384 = vsel %vm542, %v1381, %v1383
    %v1385 = vsel %vm542, %v1379, %v1381
    %v1386 = vsel %vm542, %v1377, %v1379
    %v1387 = vsel %vm542, %v1383, %v1377
    %v1388 = vsel %vm571, %v1387, -3e+38
    %v1389 = vsel %vm572, %v1386, -3e+38
    %v1390 = vsel %vm573, %v1385, -3e+38
    %v1391 = vsel %vm574, %v1384, -3e+38
    %v1392 = vsel %vm591, %v1266, -3e+38
    %v1393 = vsel %vm592, %v1286, -3e+38
    %v1394 = vsel %vm593, %v1306, -3e+38
    %v1395 = vsel %vm594, %v1326, -3e+38
    %1396 = vrot.lane.b32.xlu0 %v1266, 127
    %v1397 = vpop.permute.xlu0 %1396
    %1398 = vrot.lane.b32.xlu0 %v1286, 127
    %v1399 = vpop.permute.xlu0 %1398
    %1400 = vrot.lane.b32.xlu0 %v1306, 127
    %v1401 = vpop.permute.xlu0 %1400
    %1402 = vrot.lane.b32.xlu0 %v1326, 127
    %v1403 = vpop.permute.xlu0 %1402
    %v1404 = vsel %vm607, %v1401, %v1403
    %v1405 = vsel %vm607, %v1399, %v1401
    %v1406 = vsel %vm607, %v1397, %v1399
    %v1407 = vsel %vm607, %v1403, %v1397
    %v1408 = vsel %vm624, %v1406, -3e+38
    %v1409 = vsel %vm625, %v1405, -3e+38
    %v1410 = vsel %vm626, %v1404, -3e+38
    %v1411 = vsel %vm627, %v1407, -3e+38
    %1412 = vrot.lane.b32.xlu0 %v1266, 113
    %v1413 = vpop.permute.xlu0 %1412
    %1414 = vrot.lane.b32.xlu0 %v1286, 113
    %v1415 = vpop.permute.xlu0 %1414
    %1416 = vrot.lane.b32.xlu0 %v1306, 113
    %v1417 = vpop.permute.xlu0 %1416
    %1418 = vrot.lane.b32.xlu0 %v1326, 113
    %v1419 = vpop.permute.xlu0 %1418
    %v1420 = vsel %vm640, %v1417, %v1419
    %v1421 = vsel %vm640, %v1415, %v1417
    %v1422 = vsel %vm640, %v1413, %v1415
    %v1423 = vsel %vm640, %v1419, %v1413
    %v1424 = vsel %vm673, %v1422, -3e+38
    %v1425 = vsel %vm674, %v1421, -3e+38
    %v1426 = vsel %vm675, %v1420, -3e+38
    %v1427 = vsel %vm676, %v1423, -3e+38
    %1428 = vrot.lane.b32.xlu0 %v1266, 112
    %v1429 = vpop.permute.xlu0 %1428
    %1430 = vrot.lane.b32.xlu0 %v1286, 112
    %v1431 = vpop.permute.xlu0 %1430
    %1432 = vrot.lane.b32.xlu0 %v1306, 112
    %v1433 = vpop.permute.xlu0 %1432
    %1434 = vrot.lane.b32.xlu0 %v1326, 112
    %v1435 = vpop.permute.xlu0 %1434
    %v1436 = vsel %vm689, %v1433, %v1435
    %v1437 = vsel %vm689, %v1431, %v1433
    %v1438 = vsel %vm689, %v1429, %v1431
    %v1439 = vsel %vm689, %v1435, %v1429
    %v1440 = vsel %vm706, %v1438, -3e+38
    %v1441 = vsel %vm707, %v1437, -3e+38
    %v1442 = vsel %vm708, %v1436, -3e+38
    %v1443 = vsel %vm709, %v1439, -3e+38
    %1444 = vrot.lane.b32.xlu0 %v1266, 111
    %v1445 = vpop.permute.xlu0 %1444
    %1446 = vrot.lane.b32.xlu0 %v1286, 111
    %v1447 = vpop.permute.xlu0 %1446
    %1448 = vrot.lane.b32.xlu0 %v1306, 111
    %v1449 = vpop.permute.xlu0 %1448
    %1450 = vrot.lane.b32.xlu0 %v1326, 111
    %v1451 = vpop.permute.xlu0 %1450
    %v1452 = vsel %vm722, %v1449, %v1451
    %v1453 = vsel %vm722, %v1447, %v1449
    %v1454 = vsel %vm722, %v1445, %v1447
    %v1455 = vsel %vm722, %v1451, %v1445
    %v1456 = vsel %vm739, %v1454, -3e+38
    %v1457 = vsel %vm740, %v1453, -3e+38
    %v1458 = vsel %vm741, %v1452, -3e+38
    %v1459 = vsel %vm742, %v1455, -3e+38
    %v1460 = vmax.f32 %v1340, %v1356
    %v1461 = vmax.f32 %v1341, %v1357
    %v1462 = vmax.f32 %v1342, %v1358
    %v1463 = vmax.f32 %v1343, %v1359
    %v1464 = vmax.f32 %v1460, %v1372
    %v1465 = vmax.f32 %v1461, %v1373
    %v1466 = vmax.f32 %v1462, %v1374
    %v1467 = vmax.f32 %v1463, %v1375
    %v1468 = vmax.f32 %v1464, %v1388
    %v1469 = vmax.f32 %v1465, %v1389
    %v1470 = vmax.f32 %v1466, %v1390
    %v1471 = vmax.f32 %v1467, %v1391
    %v1472 = vmax.f32 %v1468, %v1392
    %v1473 = vmax.f32 %v1469, %v1393
    %v1474 = vmax.f32 %v1470, %v1394
    %v1475 = vmax.f32 %v1471, %v1395
    %v1476 = vmax.f32 %v1472, %v1408
    %v1477 = vmax.f32 %v1473, %v1409
    %v1478 = vmax.f32 %v1474, %v1410
    %v1479 = vmax.f32 %v1475, %v1411
    %v1480 = vmax.f32 %v1476, %v1424
    %v1481 = vmax.f32 %v1477, %v1425
    %v1482 = vmax.f32 %v1478, %v1426
    %v1483 = vmax.f32 %v1479, %v1427
    %v1484 = vmax.f32 %v1480, %v1440
    %v1485 = vmax.f32 %v1481, %v1441
    %v1486 = vmax.f32 %v1482, %v1442
    %v1487 = vmax.f32 %v1483, %v1443
    %v1488 = vmax.f32 %v1484, %v1456
    %v1489 = vmax.f32 %v1485, %v1457
    %v1490 = vmax.f32 %v1486, %v1458
    %v1491 = vmax.f32 %v1487, %v1459
    %1492 = vmatpush.msra.mxu0 %v71
    %1493 = vmatpush.msra.mxu0 %v70
    %1494 = vmatpush.msra.mxu0 %v69
    %1495 = vmatpush.msra.mxu0 %v68
    %1496 = vmatpush.msra.mxu0 %v67
    %1497 = vmatpush.msra.mxu0 %v66
    %1498 = vmatpush.msra.mxu0 %v65
    %1499 = vmatpush.msra.mxu0 %v64
    %1500 = vmatpush.msra.mxu0 %v63
    %1501 = vmatpush.msra.mxu0 %v62
    %1502 = vmatpush.msra.mxu0 %v61
    %1503 = vmatpush.msra.mxu0 %v60
    %1504 = vmatpush.msra.mxu0 %v59
    %1505 = vmatpush.msra.mxu0 %v58
    %1506 = vmatpush.msra.mxu0 %v57
    %1507 = vmatpush.msra.mxu0 %v56
    %1508 = vmatmul.f32.gmra.mxu0 %v1488
    %v1509 = vpop.f32.mrf.mxu0
    %v1510 = vadd.f32 0.0, %v1509
    %1511 = vdwg.mxu0
    %1512 = vmatpush.msra.mxu0 %v87
    %1513 = vmatpush.msra.mxu0 %v86
    %1514 = vmatpush.msra.mxu0 %v85
    %1515 = vmatpush.msra.mxu0 %v84
    %1516 = vmatpush.msra.mxu0 %v83
    %1517 = vmatpush.msra.mxu0 %v82
    %1518 = vmatpush.msra.mxu0 %v81
    %1519 = vmatpush.msra.mxu0 %v80
    %1520 = vmatpush.msra.mxu0 %v79
    %1521 = vmatpush.msra.mxu0 %v78
    %1522 = vmatpush.msra.mxu0 %v77
    %1523 = vmatpush.msra.mxu0 %v76
    %1524 = vmatpush.msra.mxu0 %v75
    %1525 = vmatpush.msra.mxu0 %v74
    %1526 = vmatpush.msra.mxu0 %v73
    %1527 = vmatpush.msra.mxu0 %v72
    %1528 = vmatmul.f32.gmra.mxu0 %v1489
    %v1529 = vpop.f32.mrf.mxu0
    %v1530 = vadd.f32 %v1510, %v1529
    %1531 = vdwg.mxu0
    %1532 = vmatpush.msra.mxu0 %v103
    %1533 = vmatpush.msra.mxu0 %v102
    %1534 = vmatpush.msra.mxu0 %v101
    %1535 = vmatpush.msra.mxu0 %v100
    %1536 = vmatpush.msra.mxu0 %v99
    %1537 = vmatpush.msra.mxu0 %v98
    %1538 = vmatpush.msra.mxu0 %v97
    %1539 = vmatpush.msra.mxu0 %v96
    %1540 = vmatpush.msra.mxu0 %v95
    %1541 = vmatpush.msra.mxu0 %v94
    %1542 = vmatpush.msra.mxu0 %v93
    %1543 = vmatpush.msra.mxu0 %v92
    %1544 = vmatpush.msra.mxu0 %v91
    %1545 = vmatpush.msra.mxu0 %v90
    %1546 = vmatpush.msra.mxu0 %v89
    %1547 = vmatpush.msra.mxu0 %v88
    %1548 = vmatmul.f32.gmra.mxu0 %v1490
    %v1549 = vpop.f32.mrf.mxu0
    %v1550 = vadd.f32 %v1530, %v1549
    %1551 = vdwg.mxu0
    %1552 = vmatpush.msra.mxu0 %v119
    %1553 = vmatpush.msra.mxu0 %v118
    %1554 = vmatpush.msra.mxu0 %v117
    %1555 = vmatpush.msra.mxu0 %v116
    %1556 = vmatpush.msra.mxu0 %v115
    %1557 = vmatpush.msra.mxu0 %v114
    %1558 = vmatpush.msra.mxu0 %v113
    %1559 = vmatpush.msra.mxu0 %v112
    %1560 = vmatpush.msra.mxu0 %v111
    %1561 = vmatpush.msra.mxu0 %v110
    %1562 = vmatpush.msra.mxu0 %v109
    %1563 = vmatpush.msra.mxu0 %v108
    %1564 = vmatpush.msra.mxu0 %v107
    %1565 = vmatpush.msra.mxu0 %v106
    %1566 = vmatpush.msra.mxu0 %v105
    %1567 = vmatpush.msra.mxu0 %v104
    %1568 = vmatmul.f32.gmra.mxu0 %v1491
    %v1569 = vpop.f32.mrf.mxu0
    %v1570 = vadd.f32 %v1550, %v1569
    %1571 = vdwg.mxu0
    %1572 = vmatpush.msra.mxu0 %v71
    %1573 = vmatpush.msra.mxu0 %v70
    %1574 = vmatpush.msra.mxu0 %v69
    %1575 = vmatpush.msra.mxu0 %v68
    %1576 = vmatpush.msra.mxu0 %v67
    %1577 = vmatpush.msra.mxu0 %v66
    %1578 = vmatpush.msra.mxu0 %v65
    %1579 = vmatpush.msra.mxu0 %v64
    %1580 = vmatpush.msra.mxu0 %v63
    %1581 = vmatpush.msra.mxu0 %v62
    %1582 = vmatpush.msra.mxu0 %v61
    %1583 = vmatpush.msra.mxu0 %v60
    %1584 = vmatpush.msra.mxu0 %v59
    %1585 = vmatpush.msra.mxu0 %v58
    %1586 = vmatpush.msra.mxu0 %v57
    %1587 = vmatpush.msra.mxu0 %v56
    %1588 = vmatmul.f32.gmra.mxu0 %v1143
    %v1589 = vpop.f32.mrf.mxu0
    %v1590 = vadd.f32 0.0, %v1589
    %1591 = vmatmul.f32.gmra.mxu0 %v1147
    %v1592 = vpop.f32.mrf.mxu0
    %v1593 = vadd.f32 0.0, %v1592
    %1594 = vdwg.mxu0
    %1595 = vmatpush.msra.mxu0 %v87
    %1596 = vmatpush.msra.mxu0 %v86
    %1597 = vmatpush.msra.mxu0 %v85
    %1598 = vmatpush.msra.mxu0 %v84
    %1599 = vmatpush.msra.mxu0 %v83
    %1600 = vmatpush.msra.mxu0 %v82
    %1601 = vmatpush.msra.mxu0 %v81
    %1602 = vmatpush.msra.mxu0 %v80
    %1603 = vmatpush.msra.mxu0 %v79
    %1604 = vmatpush.msra.mxu0 %v78
    %1605 = vmatpush.msra.mxu0 %v77
    %1606 = vmatpush.msra.mxu0 %v76
    %1607 = vmatpush.msra.mxu0 %v75
    %1608 = vmatpush.msra.mxu0 %v74
    %1609 = vmatpush.msra.mxu0 %v73
    %1610 = vmatpush.msra.mxu0 %v72
    %1611 = vmatmul.f32.gmra.mxu0 %v1144
    %v1612 = vpop.f32.mrf.mxu0
    %v1613 = vadd.f32 %v1590, %v1612
    %1614 = vmatmul.f32.gmra.mxu0 %v1148
    %v1615 = vpop.f32.mrf.mxu0
    %v1616 = vadd.f32 %v1593, %v1615
    %1617 = vdwg.mxu0
    %1618 = vmatpush.msra.mxu0 %v103
    %1619 = vmatpush.msra.mxu0 %v102
    %1620 = vmatpush.msra.mxu0 %v101
    %1621 = vmatpush.msra.mxu0 %v100
    %1622 = vmatpush.msra.mxu0 %v99
    %1623 = vmatpush.msra.mxu0 %v98
    %1624 = vmatpush.msra.mxu0 %v97
    %1625 = vmatpush.msra.mxu0 %v96
    %1626 = vmatpush.msra.mxu0 %v95
    %1627 = vmatpush.msra.mxu0 %v94
    %1628 = vmatpush.msra.mxu0 %v93
    %1629 = vmatpush.msra.mxu0 %v92
    %1630 = vmatpush.msra.mxu0 %v91
    %1631 = vmatpush.msra.mxu0 %v90
    %1632 = vmatpush.msra.mxu0 %v89
    %1633 = vmatpush.msra.mxu0 %v88
    %1634 = vmatmul.f32.gmra.mxu0 %v1145
    %v1635 = vpop.f32.mrf.mxu0
    %v1636 = vadd.f32 %v1613, %v1635
    %1637 = vmatmul.f32.gmra.mxu0 %v1149
    %v1638 = vpop.f32.mrf.mxu0
    %v1639 = vadd.f32 %v1616, %v1638
    %1640 = vdwg.mxu0
    %1641 = vmatpush.msra.mxu0 %v119
    %1642 = vmatpush.msra.mxu0 %v118
    %1643 = vmatpush.msra.mxu0 %v117
    %1644 = vmatpush.msra.mxu0 %v116
    %1645 = vmatpush.msra.mxu0 %v115
    %1646 = vmatpush.msra.mxu0 %v114
    %1647 = vmatpush.msra.mxu0 %v113
    %1648 = vmatpush.msra.mxu0 %v112
    %1649 = vmatpush.msra.mxu0 %v111
    %1650 = vmatpush.msra.mxu0 %v110
    %1651 = vmatpush.msra.mxu0 %v109
    %1652 = vmatpush.msra.mxu0 %v108
    %1653 = vmatpush.msra.mxu0 %v107
    %1654 = vmatpush.msra.mxu0 %v106
    %1655 = vmatpush.msra.mxu0 %v105
    %1656 = vmatpush.msra.mxu0 %v104
    %1657 = vmatmul.f32.gmra.mxu0 %v1146
    %v1658 = vpop.f32.mrf.mxu0
    %v1659 = vadd.f32 %v1636, %v1658
    %1660 = vmatmul.f32.gmra.mxu0 %v1150
    %v1661 = vpop.f32.mrf.mxu0
    %v1662 = vadd.f32 %v1639, %v1661
    %1663 = vdwg.mxu0
    %v1664 = vld [vmem:[%s2 + $0x70] sm:$0xff]
    %v1665 = vld [vmem:[%s2 + $0x80] sm:$0xff]
    %1666 = vset.pattern.permute.xlu0 8
    %1667 = vperm.xlu0 %1666, %v851
    %v1668 = vpop.permute.xlu0 %1667
    %1670 = vset.pattern.permute.xlu0 8
    %1671 = vperm.xlu0 %1670, %v852
    %v1672 = vpop.permute.xlu0 %1671
    %v1675 = vsel %vm1156, %v1664, 0
    %v1678 = vsel %vm1156, %v1665, 0
    %1680 = vmatpush.msra.mxu0 0.0
    %1681 = vmatpush.msra.mxu0 0.0
    %1682 = vmatpush.msra.mxu0 0.0
    %1683 = vmatpush.msra.mxu0 0.0
    %1684 = vmatpush.msra.mxu0 0.0
    %1685 = vmatpush.msra.mxu0 0.0
    %1686 = vmatpush.msra.mxu0 0.0
    %1687 = vmatpush.msra.mxu0 0.0
    %1688 = vmatpush.msra.mxu0 0.0
    %1689 = vmatpush.msra.mxu0 0.0
    %1690 = vmatpush.msra.mxu0 0.0
    %1691 = vmatpush.msra.mxu0 0.0
    %1692 = vmatpush.msra.mxu0 0.0
    %1693 = vmatpush.msra.mxu0 0.0
    %1694 = vmatpush.msra.mxu0 %v1662
    %1695 = vmatpush.msra.mxu0 %v1659
    %1696 = vmatmul.f32.gmra.mxu0 %v1675
    %v1697 = vpop.f32.mrf.mxu0
    %v1698 = vadd.f32 %v1668, %v1697
    %1699 = vmatmul.f32.gmra.mxu0 %v1678
    %v1700 = vpop.f32.mrf.mxu0
    %v1701 = vadd.f32 %v1672, %v1700
    %1702 = vdwg.mxu0
    %v1703 = vld [vmem:[%s2 + $0x90] sm:$0xff]
    %v1704 = vld [vmem:[%s2 + $0xa0] sm:$0xff]
    %1705 = vset.pattern.permute.xlu0 9
    %1706 = vperm.xlu0 %1705, %v851
    %v1707 = vpop.permute.xlu0 %1706
    %1709 = vset.pattern.permute.xlu0 9
    %1710 = vperm.xlu0 %1709, %v852
    %v1711 = vpop.permute.xlu0 %1710
    %v1714 = vsel %vm302, %v1703, 0
    %v1717 = vsel %vm302, %v1704, 0
    %1719 = vmatpush.msra.mxu0 0.0
    %1720 = vmatpush.msra.mxu0 0.0
    %1721 = vmatpush.msra.mxu0 0.0
    %1722 = vmatpush.msra.mxu0 0.0
    %1723 = vmatpush.msra.mxu0 0.0
    %1724 = vmatpush.msra.mxu0 0.0
    %1725 = vmatpush.msra.mxu0 0.0
    %1726 = vmatpush.msra.mxu0 0.0
    %1727 = vmatpush.msra.mxu0 0.0
    %1728 = vmatpush.msra.mxu0 0.0
    %1729 = vmatpush.msra.mxu0 0.0
    %1730 = vmatpush.msra.mxu0 0.0
    %1731 = vmatpush.msra.mxu0 0.0
    %1732 = vmatpush.msra.mxu0 0.0
    %1733 = vmatpush.msra.mxu0 0.0
    %1734 = vmatpush.msra.mxu0 %v1570
    %1735 = vmatmul.f32.gmra.mxu0 %v1714
    %v1736 = vpop.f32.mrf.mxu0
    %v1737 = vadd.f32 %v1707, %v1736
    %1738 = vmatmul.f32.gmra.mxu0 %v1717
    %v1739 = vpop.f32.mrf.mxu0
    %v1740 = vadd.f32 %v1711, %v1739
    %1741 = vdwg.mxu0
    %v1742 = vld [vmem:[%s2 + $0xd0] sm:$0xff]
    %v1743 = vld [vmem:[%s2 + $0xe0] sm:$0xff]
    %1744 = vset.pattern.permute.xlu0 11
    %1745 = vperm.xlu0 %1744, %v851
    %v1746 = vpop.permute.xlu0 %1745
    %1748 = vset.pattern.permute.xlu0 11
    %1749 = vperm.xlu0 %1748, %v852
    %v1750 = vpop.permute.xlu0 %1749
    %v1753 = vsel %vm1156, %v1742, 0
    %v1756 = vsel %vm1156, %v1743, 0
    %1758 = vmatpush.msra.mxu0 0.0
    %1759 = vmatpush.msra.mxu0 0.0
    %1760 = vmatpush.msra.mxu0 0.0
    %1761 = vmatpush.msra.mxu0 0.0
    %1762 = vmatpush.msra.mxu0 0.0
    %1763 = vmatpush.msra.mxu0 0.0
    %1764 = vmatpush.msra.mxu0 0.0
    %1765 = vmatpush.msra.mxu0 0.0
    %1766 = vmatpush.msra.mxu0 0.0
    %1767 = vmatpush.msra.mxu0 0.0
    %1768 = vmatpush.msra.mxu0 0.0
    %1769 = vmatpush.msra.mxu0 0.0
    %1770 = vmatpush.msra.mxu0 0.0
    %1771 = vmatpush.msra.mxu0 0.0
    %1772 = vmatpush.msra.mxu0 %v1701
    %1773 = vmatpush.msra.mxu0 %v1698
    %1774 = vmatmul.f32.gmra.mxu0 %v1753
    %v1775 = vpop.f32.mrf.mxu0
    %v1776 = vadd.f32 %v1746, %v1775
    %1777 = vmatmul.f32.gmra.mxu0 %v1756
    %v1778 = vpop.f32.mrf.mxu0
    %v1779 = vadd.f32 %v1750, %v1778
    %1780 = vdwg.mxu0
    %v1781 = vld [vmem:[%s2 + $0xf0] sm:$0xff]
    %v1782 = vld [vmem:[%s2 + $0x100] sm:$0xff]
    %1783 = vset.pattern.permute.xlu0 12
    %1784 = vperm.xlu0 %1783, %v851
    %v1785 = vpop.permute.xlu0 %1784
    %1787 = vset.pattern.permute.xlu0 12
    %1788 = vperm.xlu0 %1787, %v852
    %v1789 = vpop.permute.xlu0 %1788
    %v1792 = vsel %vm1156, %v1781, 0
    %v1795 = vsel %vm1156, %v1782, 0
    %1797 = vmatpush.msra.mxu0 0.0
    %1798 = vmatpush.msra.mxu0 0.0
    %1799 = vmatpush.msra.mxu0 0.0
    %1800 = vmatpush.msra.mxu0 0.0
    %1801 = vmatpush.msra.mxu0 0.0
    %1802 = vmatpush.msra.mxu0 0.0
    %1803 = vmatpush.msra.mxu0 0.0
    %1804 = vmatpush.msra.mxu0 0.0
    %1805 = vmatpush.msra.mxu0 0.0
    %1806 = vmatpush.msra.mxu0 0.0
    %1807 = vmatpush.msra.mxu0 0.0
    %1808 = vmatpush.msra.mxu0 0.0
    %1809 = vmatpush.msra.mxu0 0.0
    %1810 = vmatpush.msra.mxu0 0.0
    %1811 = vmatpush.msra.mxu0 %v1740
    %1812 = vmatpush.msra.mxu0 %v1737
    %1813 = vmatmul.f32.gmra.mxu0 %v1792
    %v1814 = vpop.f32.mrf.mxu0
    %v1815 = vadd.f32 %v1785, %v1814
    %1816 = vmatmul.f32.gmra.mxu0 %v1795
    %v1817 = vpop.f32.mrf.mxu0
    %v1818 = vadd.f32 %v1789, %v1817
    %1819 = vdwg.mxu0
    %v1820 = vadd.f32 %v1776, %v1815
    %v1821 = vadd.f32 %v1779, %v1818
    %v1822 = vmax.f32 %v1820, 0.0
    %v1823 = vmax.f32 %v1821, 0.0
    %v1824 = vld [vmem:[%s2 + $0x110] ss:$0 sm:$0xff]
    %s1825 = sld [smem:[#allocation2 + $0x2]]
    %v1826 = vstv %s1825
    %v1828 = vsel %vm1156, %v1824, 0
    %1830 = vmatpush.msra.mxu0 0.0
    %1831 = vmatpush.msra.mxu0 0.0
    %1832 = vmatpush.msra.mxu0 0.0
    %1833 = vmatpush.msra.mxu0 0.0
    %1834 = vmatpush.msra.mxu0 0.0
    %1835 = vmatpush.msra.mxu0 0.0
    %1836 = vmatpush.msra.mxu0 0.0
    %1837 = vmatpush.msra.mxu0 0.0
    %1838 = vmatpush.msra.mxu0 0.0
    %1839 = vmatpush.msra.mxu0 0.0
    %1840 = vmatpush.msra.mxu0 0.0
    %1841 = vmatpush.msra.mxu0 0.0
    %1842 = vmatpush.msra.mxu0 0.0
    %1843 = vmatpush.msra.mxu0 0.0
    %1844 = vmatpush.msra.mxu0 %v1823
    %1845 = vmatpush.msra.mxu0 %v1822
    %1846 = vmatmul.f32.gmra.mxu0 %v1828
    %v1847 = vpop.f32.mrf.mxu0
    %v1848 = vadd.f32 %v1826, %v1847
    %1849 = vdwg.mxu0
    %v1850 = vand.u32 2147483647, %v1848
    %v1851 = vsub.f32 0.0, %v1850
    %v1852 = vmul.f32 %v1851, 1.442695
    %v1853 = vpow.pop %v1852
    %vm1854 = vcmp.ge.f32.partialorder %v1848, 0.0
    %v1855 = vsel %vm1854, 1.0, %v1853
    %v1856 = vadd.f32 %v1853, 1.0
    %v1857 = vrcp.pop %v1856
    %v1858 = vmul.f32 %v1856, %v1857
    %v1859 = vsub.f32 1.0, %v1858
    %v1860 = vmul.f32 %v1857, %v1859
    %v1861 = vadd.f32 %v1857, %v1860
    %vm1862 = vweird.f32 %v1856
    %vm1863 = vweird.f32 %v1857
    %vm1864 = vmor %vm1862, %vm1863
    %v1865 = vsel %vm1864, %v1857, %v1861
    %v1866 = vand.u32 2147483647, %v1856
    %vm1867 = vcmp.eq.f32.partialorder %v1866, 8.507059e+37
    %v1868 = vand.u32 %v1856, 2147483648
    %v1869 = vor.u32 1.1754944e-38, %v1868
    %v1870 = vsel %vm1867, %v1869, %v1865
    %v1871 = vmul.f32 %v1855, %v1870
    %v1872 = vperm.slane %v1871, 0
    %v1873 = vmul.f32 %v1737, %v1872
    %v1874 = vmul.f32 %v1740, %v1872
    %v1875 = vld [vmem:[%s2 + $0xb0] sm:$0xff]
    %v1876 = vld [vmem:[%s2 + $0xc0] sm:$0xff]
    %1877 = vset.pattern.permute.xlu0 10
    %1878 = vperm.xlu0 %1877, %v851
    %v1879 = vpop.permute.xlu0 %1878
    %1881 = vset.pattern.permute.xlu0 10
    %1882 = vperm.xlu0 %1881, %v852
    %v1883 = vpop.permute.xlu0 %1882
    %vm1885 = vcmask 261120
    %v1887 = vsel %vm1885, %v1875, 0
    %v1890 = vsel %vm1885, %v1876, 0
    %1892 = vmatpush.msra.mxu0 0.0
    %1893 = vmatpush.msra.mxu0 0.0
    %1894 = vmatpush.msra.mxu0 0.0
    %1895 = vmatpush.msra.mxu0 0.0
    %1896 = vmatpush.msra.mxu0 0.0
    %1897 = vmatpush.msra.mxu0 0.0
    %1898 = vmatpush.msra.mxu0 0.0
    %1899 = vmatpush.msra.mxu0 0.0
    %1900 = vmatpush.msra.mxu0 0.0
    %1901 = vmatpush.msra.mxu0 0.0
    %1902 = vmatpush.msra.mxu0 0.0
    %1903 = vmatpush.msra.mxu0 0.0
    %1904 = vmatpush.msra.mxu0 %v1874
    %1905 = vmatpush.msra.mxu0 %v1873
    %1906 = vmatpush.msra.mxu0 %v1701
    %1907 = vmatpush.msra.mxu0 %v1698
    %1908 = vmatmul.f32.gmra.mxu0 %v1887
    %v1909 = vpop.f32.mrf.mxu0
    %v1910 = vadd.f32 %v1879, %v1909
    %1911 = vmatmul.f32.gmra.mxu0 %v1890
    %v1912 = vpop.f32.mrf.mxu0
    %v1913 = vadd.f32 %v1883, %v1912
    %1914 = vdwg.mxu0
    %v1915 = vld [vmem:[%s2 + $0x120] sm:$0xff]
    %v1916 = vld [vmem:[%s2 + $0x128] sm:$0xff]
    %v1917 = vld [vmem:[%s2 + $0x130] sm:$0xff]
    %v1918 = vld [vmem:[%s2 + $0x138] sm:$0xff]
    %1919 = vrot.lane.b32.xlu0 %v1910, 9
    %v1920 = vpop.permute.xlu0 %1919
    %1921 = vrot.lane.b32.xlu0 %v1913, 9
    %v1922 = vpop.permute.xlu0 %1921
    %v1923 = vadd.s32 %v54, 4294967295
    %vm1924 = vcmp.ge.s32.totalorder %v1923, 0
    %vm1925 = vcmp.lt.s32.totalorder %v1923, 8
    %vm1926 = vmand %vm1924, %vm1925
    %v1927 = vadd.s32 %v55, 4294967295
    %vm1928 = vcmp.ge.s32.totalorder %v1927, 0
    %vm1929 = vmand %vm1926, %vm1928
    %vm1930 = vcmp.lt.s32.totalorder %v1927, 8
    %vm1931 = vmand %vm1929, %vm1930
    %v1932 = vsel %vm1931, 1, 0
    %vm1933 = vcmp.eq.s32.totalorder %v1932, 1
    %v1934 = vsel %vm1933, %v1920, 0.0
    %v1935 = vsel %vm1933, %v1922, 0.0
    %1936 = vrot.lane.b32.xlu0 %v1910, 8
    %v1937 = vpop.permute.xlu0 %1936
    %1938 = vrot.lane.b32.xlu0 %v1913, 8
    %v1939 = vpop.permute.xlu0 %1938
    %vm1940 = vcmp.ge.s32.totalorder %v55, 0
    %vm1941 = vmand %vm1926, %vm1940
    %vm1942 = vcmp.lt.s32.totalorder %v55, 8
    %vm1943 = vmand %vm1941, %vm1942
    %v1944 = vsel %vm1943, 1, 0
    %vm1945 = vcmp.eq.s32.totalorder %v1944, 1
    %v1946 = vsel %vm1945, %v1937, 0.0
    %v1947 = vsel %vm1945, %v1939, 0.0
    %1948 = vrot.lane.b32.xlu0 %v1910, 7
    %v1949 = vpop.permute.xlu0 %1948
    %1950 = vrot.lane.b32.xlu0 %v1913, 7
    %v1951 = vpop.permute.xlu0 %1950
    %v1952 = vadd.s32 %v55, 1
    %vm1953 = vcmp.ge.s32.totalorder %v1952, 0
    %vm1954 = vmand %vm1926, %vm1953
    %vm1955 = vcmp.lt.s32.totalorder %v1952, 8
    %vm1956 = vmand %vm1954, %vm1955
    %v1957 = vsel %vm1956, 1, 0
    %vm1958 = vcmp.eq.s32.totalorder %v1957, 1
    %v1959 = vsel %vm1958, %v1949, 0.0
    %v1960 = vsel %vm1958, %v1951, 0.0
    %1961 = vrot.lane.b32.xlu0 %v1910, 1
    %v1962 = vpop.permute.xlu0 %1961
    %1963 = vrot.lane.b32.xlu0 %v1913, 1
    %v1964 = vpop.permute.xlu0 %1963
    %vm1965 = vcmp.ge.s32.totalorder %v54, 0
    %vm1966 = vcmp.lt.s32.totalorder %v54, 8
    %vm1967 = vmand %vm1965, %vm1966
    %vm1968 = vmand %vm1967, %vm1928
    %vm1969 = vmand %vm1968, %vm1930
    %v1970 = vsel %vm1969, 1, 0
    %vm1971 = vcmp.eq.s32.totalorder %v1970, 1
    %v1972 = vsel %vm1971, %v1962, 0.0
    %v1973 = vsel %vm1971, %v1964, 0.0
    %vm1974 = vmand %vm1967, %vm1940
    %vm1975 = vmand %vm1974, %vm1942
    %v1976 = vsel %vm1975, 1, 0
    %vm1977 = vcmp.eq.s32.totalorder %v1976, 1
    %v1978 = vsel %vm1977, %v1910, 0.0
    %v1979 = vsel %vm1977, %v1913, 0.0
    %1980 = vrot.lane.b32.xlu0 %v1910, 127
    %v1981 = vpop.permute.xlu0 %1980
    %1982 = vrot.lane.b32.xlu0 %v1913, 127
    %v1983 = vpop.permute.xlu0 %1982
    %vm1984 = vmand %vm1967, %vm1953
    %vm1985 = vmand %vm1984, %vm1955
    %v1986 = vsel %vm1985, 1, 0
    %vm1987 = vcmp.eq.s32.totalorder %v1986, 1
    %v1988 = vsel %vm1987, %v1981, 0.0
    %v1989 = vsel %vm1987, %v1983, 0.0
    %1990 = vrot.lane.b32.xlu0 %v1910, 121
    %v1991 = vpop.permute.xlu0 %1990
    %1992 = vrot.lane.b32.xlu0 %v1913, 121
    %v1993 = vpop.permute.xlu0 %1992
    %v1994 = vadd.s32 %v54, 1
    %vm1995 = vcmp.ge.s32.totalorder %v1994, 0
    %vm1996 = vcmp.lt.s32.totalorder %v1994, 8
    %vm1997 = vmand %vm1995, %vm1996
    %vm1998 = vmand %vm1997, %vm1928
    %vm1999 = vmand %vm1998, %vm1930
    %v2000 = vsel %vm1999, 1, 0
    %vm2001 = vcmp.eq.s32.totalorder %v2000, 1
    %v2002 = vsel %vm2001, %v1991, 0.0
    %v2003 = vsel %vm2001, %v1993, 0.0
    %2004 = vrot.lane.b32.xlu0 %v1910, 120
    %v2005 = vpop.permute.xlu0 %2004
    %2006 = vrot.lane.b32.xlu0 %v1913, 120
    %v2007 = vpop.permute.xlu0 %2006
    %vm2008 = vmand %vm1997, %vm1940
    %vm2009 = vmand %vm2008, %vm1942
    %v2010 = vsel %vm2009, 1, 0
    %vm2011 = vcmp.eq.s32.totalorder %v2010, 1
    %v2012 = vsel %vm2011, %v2005, 0.0
    %v2013 = vsel %vm2011, %v2007, 0.0
    %2014 = vrot.lane.b32.xlu0 %v1910, 119
    %v2015 = vpop.permute.xlu0 %2014
    %2016 = vrot.lane.b32.xlu0 %v1913, 119
    %v2017 = vpop.permute.xlu0 %2016
    %vm2018 = vmand %vm1997, %vm1953
    %vm2019 = vmand %vm2018, %vm1955
    %v2020 = vsel %vm2019, 1, 0
    %vm2021 = vcmp.eq.s32.totalorder %v2020, 1
    %v2022 = vsel %vm2021, %v2015, 0.0
    %v2023 = vsel %vm2021, %v2017, 0.0
    %2024 = vset.pattern.permute.xlu0 13
    %2025 = vperm.xlu0 %2024, %v851
    %v2026 = vpop.permute.xlu0 %2025
    %2028 = vset.pattern.permute.xlu0 13
    %2029 = vperm.xlu0 %2028, %v852
    %v2030 = vpop.permute.xlu0 %2029
    %v2033 = vsel %vm1156, %v1916, 0
    %v2036 = vsel %vm1156, %v1918, 0
    %2038 = vmatpush.msra.mxu0 %v2013
    %2039 = vmatpush.msra.mxu0 %v2012
    %2040 = vmatpush.msra.mxu0 %v2003
    %2041 = vmatpush.msra.mxu0 %v2002
    %2042 = vmatpush.msra.mxu0 %v1989
    %2043 = vmatpush.msra.mxu0 %v1988
    %2044 = vmatpush.msra.mxu0 %v1979
    %2045 = vmatpush.msra.mxu0 %v1978
    %2046 = vmatpush.msra.mxu0 %v1973
    %2047 = vmatpush.msra.mxu0 %v1972
    %2048 = vmatpush.msra.mxu0 %v1960
    %2049 = vmatpush.msra.mxu0 %v1959
    %2050 = vmatpush.msra.mxu0 %v1947
    %2051 = vmatpush.msra.mxu0 %v1946
    %2052 = vmatpush.msra.mxu0 %v1935
    %2053 = vmatpush.msra.mxu0 %v1934
    %2054 = vmatmul.f32.gmra.mxu0 %v1915
    %v2055 = vpop.f32.mrf.mxu0
    %v2056 = vadd.f32 %v2026, %v2055
    %2057 = vmatmul.f32.gmra.mxu0 %v1917
    %v2058 = vpop.f32.mrf.mxu0
    %v2059 = vadd.f32 %v2030, %v2058
    %2060 = vdwg.mxu0
    %2061 = vmatpush.msra.mxu0 0.0
    %2062 = vmatpush.msra.mxu0 0.0
    %2063 = vmatpush.msra.mxu0 0.0
    %2064 = vmatpush.msra.mxu0 0.0
    %2065 = vmatpush.msra.mxu0 0.0
    %2066 = vmatpush.msra.mxu0 0.0
    %2067 = vmatpush.msra.mxu0 0.0
    %2068 = vmatpush.msra.mxu0 0.0
    %2069 = vmatpush.msra.mxu0 0.0
    %2070 = vmatpush.msra.mxu0 0.0
    %2071 = vmatpush.msra.mxu0 0.0
    %2072 = vmatpush.msra.mxu0 0.0
    %2073 = vmatpush.msra.mxu0 0.0
    %2074 = vmatpush.msra.mxu0 0.0
    %2075 = vmatpush.msra.mxu0 %v2023
    %2076 = vmatpush.msra.mxu0 %v2022
    %2077 = vmatmul.f32.gmra.mxu0 %v2033
    %v2078 = vpop.f32.mrf.mxu0
    %v2079 = vadd.f32 %v2056, %v2078
    %2080 = vmatmul.f32.gmra.mxu0 %v2036
    %v2081 = vpop.f32.mrf.mxu0
    %v2082 = vadd.f32 %v2059, %v2081
    %2083 = vdwg.mxu0
    %s2084 = sld [smem:[#allocation2 + $0x3]]
    %vm2085 = vcmp.ge.f32.partialorder %v2079, 0.0
    %vm2086 = vcmp.ge.f32.partialorder %v2082, 0.0
    %v2087 = vstv %s2084
    %v2088 = vmul.f32 %v2087, %v2079
    %v2089 = vmul.f32 %v2087, %v2082
    %v2090 = vsel %vm2085, %v2079, %v2088
    %v2091 = vsel %vm2086, %v2082, %v2089
    %v2092 = vld [vmem:[%s2 + $0x140] sm:$0xff]
    %v2093 = vld [vmem:[%s2 + $0x148] sm:$0xff]
    %2094 = vrot.lane.b32.xlu0 %v2090, 9
    %v2095 = vpop.permute.xlu0 %2094
    %2096 = vrot.lane.b32.xlu0 %v2091, 9
    %v2097 = vpop.permute.xlu0 %2096
    %v2098 = vsel %vm1933, %v2095, 0.0
    %v2099 = vsel %vm1933, %v2097, 0.0
    %2100 = vrot.lane.b32.xlu0 %v2090, 8
    %v2101 = vpop.permute.xlu0 %2100
    %2102 = vrot.lane.b32.xlu0 %v2091, 8
    %v2103 = vpop.permute.xlu0 %2102
    %v2104 = vsel %vm1945, %v2101, 0.0
    %v2105 = vsel %vm1945, %v2103, 0.0
    %2106 = vrot.lane.b32.xlu0 %v2090, 7
    %v2107 = vpop.permute.xlu0 %2106
    %2108 = vrot.lane.b32.xlu0 %v2091, 7
    %v2109 = vpop.permute.xlu0 %2108
    %v2110 = vsel %vm1958, %v2107, 0.0
    %v2111 = vsel %vm1958, %v2109, 0.0
    %2112 = vrot.lane.b32.xlu0 %v2090, 1
    %v2113 = vpop.permute.xlu0 %2112
    %2114 = vrot.lane.b32.xlu0 %v2091, 1
    %v2115 = vpop.permute.xlu0 %2114
    %v2116 = vsel %vm1971, %v2113, 0.0
    %v2117 = vsel %vm1971, %v2115, 0.0
    %v2118 = vsel %vm1977, %v2090, 0.0
    %v2119 = vsel %vm1977, %v2091, 0.0
    %2120 = vrot.lane.b32.xlu0 %v2090, 127
    %v2121 = vpop.permute.xlu0 %2120
    %2122 = vrot.lane.b32.xlu0 %v2091, 127
    %v2123 = vpop.permute.xlu0 %2122
    %v2124 = vsel %vm1987, %v2121, 0.0
    %v2125 = vsel %vm1987, %v2123, 0.0
    %2126 = vrot.lane.b32.xlu0 %v2090, 121
    %v2127 = vpop.permute.xlu0 %2126
    %2128 = vrot.lane.b32.xlu0 %v2091, 121
    %v2129 = vpop.permute.xlu0 %2128
    %v2130 = vsel %vm2001, %v2127, 0.0
    %v2131 = vsel %vm2001, %v2129, 0.0
    %2132 = vrot.lane.b32.xlu0 %v2090, 120
    %v2133 = vpop.permute.xlu0 %2132
    %2134 = vrot.lane.b32.xlu0 %v2091, 120
    %v2135 = vpop.permute.xlu0 %2134
    %v2136 = vsel %vm2011, %v2133, 0.0
    %v2137 = vsel %vm2011, %v2135, 0.0
    %2138 = vrot.lane.b32.xlu0 %v2090, 119
    %v2139 = vpop.permute.xlu0 %2138
    %2140 = vrot.lane.b32.xlu0 %v2091, 119
    %v2141 = vpop.permute.xlu0 %2140
    %v2142 = vsel %vm2021, %v2139, 0.0
    %v2143 = vsel %vm2021, %v2141, 0.0
    %2144 = vset.pattern.permute.xlu0 14
    %2145 = vperm.xlu0 %2144, %v296
    %v2146 = vpop.permute.xlu0 %2145
    %v2149 = vsel %vm1156, %v2093, 0
    %2151 = vmatpush.msra.mxu0 %v2137
    %2152 = vmatpush.msra.mxu0 %v2136
    %2153 = vmatpush.msra.mxu0 %v2131
    %2154 = vmatpush.msra.mxu0 %v2130
    %2155 = vmatpush.msra.mxu0 %v2125
    %2156 = vmatpush.msra.mxu0 %v2124
    %2157 = vmatpush.msra.mxu0 %v2119
    %2158 = vmatpush.msra.mxu0 %v2118
    %2159 = vmatpush.msra.mxu0 %v2117
    %2160 = vmatpush.msra.mxu0 %v2116
    %2161 = vmatpush.msra.mxu0 %v2111
    %2162 = vmatpush.msra.mxu0 %v2110
    %2163 = vmatpush.msra.mxu0 %v2105
    %2164 = vmatpush.msra.mxu0 %v2104
    %2165 = vmatpush.msra.mxu0 %v2099
    %2166 = vmatpush.msra.mxu0 %v2098
    %2167 = vmatmul.f32.gmra.mxu0 %v2092
    %v2168 = vpop.f32.mrf.mxu0
    %v2169 = vadd.f32 %v2146, %v2168
    %2170 = vdwg.mxu0
    %2171 = vmatpush.msra.mxu0 0.0
    %2172 = vmatpush.msra.mxu0 0.0
    %2173 = vmatpush.msra.mxu0 0.0
    %2174 = vmatpush.msra.mxu0 0.0
    %2175 = vmatpush.msra.mxu0 0.0
    %2176 = vmatpush.msra.mxu0 0.0
    %2177 = vmatpush.msra.mxu0 0.0
    %2178 = vmatpush.msra.mxu0 0.0
    %2179 = vmatpush.msra.mxu0 0.0
    %2180 = vmatpush.msra.mxu0 0.0
    %2181 = vmatpush.msra.mxu0 0.0
    %2182 = vmatpush.msra.mxu0 0.0
    %2183 = vmatpush.msra.mxu0 0.0
    %2184 = vmatpush.msra.mxu0 0.0
    %2185 = vmatpush.msra.mxu0 %v2143
    %2186 = vmatpush.msra.mxu0 %v2142
    %2187 = vmatmul.f32.gmra.mxu0 %v2149
    %v2188 = vpop.f32.mrf.mxu0
    %v2189 = vadd.f32 %v2169, %v2188
    %2190 = vdwg.mxu0
    %s2191 = sld [smem:[#allocation2 + $0x4]]
    %vm2192 = vcmp.ge.f32.partialorder %v2189, 0.0
    %v2193 = vstv %s2191
    %v2194 = vmul.f32 %v2193, %v2189
    %v2195 = vsel %vm2192, %v2189, %v2194
    %2196 = vset.pattern.permute.xlu0 15
    %2197 = vperm.xlu0 %2196, %v296
    %v2198 = vpop.permute.xlu0 %2197
    %v2200 = vmul.f32 %v2195, %v2198
    %2201 = vset.pattern.permute.xlu0 16
    %2202 = vperm.xlu0 %2201, %v296
    %v2203 = vpop.permute.xlu0 %2202
    %v2205 = vadd.f32 %v2200, %v2203
    %v2206 = vld [vmem:[%s2 + $0x150] sm:$0xff]
    %v2207 = vld [vmem:[%s2 + $0x160] sm:$0xff]
    %2208 = vset.pattern.permute.xlu0 17
    %2209 = vperm.xlu0 %2208, %v851
    %v2210 = vpop.permute.xlu0 %2209
    %2212 = vset.pattern.permute.xlu0 17
    %2213 = vperm.xlu0 %2212, %v852
    %v2214 = vpop.permute.xlu0 %2213
    %v2217 = vsel %vm302, %v2206, 0
    %v2220 = vsel %vm302, %v2207, 0
    %2222 = vmatpush.msra.mxu0 0.0
    %2223 = vmatpush.msra.mxu0 0.0
    %2224 = vmatpush.msra.mxu0 0.0
    %2225 = vmatpush.msra.mxu0 0.0
    %2226 = vmatpush.msra.mxu0 0.0
    %2227 = vmatpush.msra.mxu0 0.0
    %2228 = vmatpush.msra.mxu0 0.0
    %2229 = vmatpush.msra.mxu0 0.0
    %2230 = vmatpush.msra.mxu0 0.0
    %2231 = vmatpush.msra.mxu0 0.0
    %2232 = vmatpush.msra.mxu0 0.0
    %2233 = vmatpush.msra.mxu0 0.0
    %2234 = vmatpush.msra.mxu0 0.0
    %2235 = vmatpush.msra.mxu0 0.0
    %2236 = vmatpush.msra.mxu0 0.0
    %2237 = vmatpush.msra.mxu0 %v1570
    %2238 = vmatmul.f32.gmra.mxu0 %v2217
    %v2239 = vpop.f32.mrf.mxu0
    %v2240 = vadd.f32 %v2210, %v2239
    %2241 = vmatmul.f32.gmra.mxu0 %v2220
    %v2242 = vpop.f32.mrf.mxu0
    %v2243 = vadd.f32 %v2214, %v2242
    %2244 = vdwg.mxu0
    %v2245 = vld [vmem:[%s2 + $0x170] sm:$0xff]
    %v2246 = vld [vmem:[%s2 + $0x180] sm:$0xff]
    %2247 = vset.pattern.permute.xlu0 18
    %2248 = vperm.xlu0 %2247, %v851
    %v2249 = vpop.permute.xlu0 %2248
    %2251 = vset.pattern.permute.xlu0 18
    %2252 = vperm.xlu0 %2251, %v852
    %v2253 = vpop.permute.xlu0 %2252
    %v2256 = vsel %vm302, %v2245, 0
    %v2259 = vsel %vm302, %v2246, 0
    %2261 = vmatpush.msra.mxu0 0.0
    %2262 = vmatpush.msra.mxu0 0.0
    %2263 = vmatpush.msra.mxu0 0.0
    %2264 = vmatpush.msra.mxu0 0.0
    %2265 = vmatpush.msra.mxu0 0.0
    %2266 = vmatpush.msra.mxu0 0.0
    %2267 = vmatpush.msra.mxu0 0.0
    %2268 = vmatpush.msra.mxu0 0.0
    %2269 = vmatpush.msra.mxu0 0.0
    %2270 = vmatpush.msra.mxu0 0.0
    %2271 = vmatpush.msra.mxu0 0.0
    %2272 = vmatpush.msra.mxu0 0.0
    %2273 = vmatpush.msra.mxu0 0.0
    %2274 = vmatpush.msra.mxu0 0.0
    %2275 = vmatpush.msra.mxu0 0.0
    %2276 = vmatpush.msra.mxu0 %v2205
    %2277 = vmatmul.f32.gmra.mxu0 %v2256
    %v2278 = vpop.f32.mrf.mxu0
    %v2279 = vadd.f32 %v2249, %v2278
    %2280 = vmatmul.f32.gmra.mxu0 %v2259
    %v2281 = vpop.f32.mrf.mxu0
    %v2282 = vadd.f32 %v2253, %v2281
    %2283 = vdwg.mxu0
    %v2284 = vld [vmem:[%s2 + $0x1b0] sm:$0xff]
    %v2285 = vld [vmem:[%s2 + $0x1c0] sm:$0xff]
    %2286 = vset.pattern.permute.xlu0 20
    %2287 = vperm.xlu0 %2286, %v851
    %v2288 = vpop.permute.xlu0 %2287
    %2290 = vset.pattern.permute.xlu0 20
    %2291 = vperm.xlu0 %2290, %v852
    %v2292 = vpop.permute.xlu0 %2291
    %v2295 = vsel %vm1156, %v2284, 0
    %v2298 = vsel %vm1156, %v2285, 0
    %2300 = vmatpush.msra.mxu0 0.0
    %2301 = vmatpush.msra.mxu0 0.0
    %2302 = vmatpush.msra.mxu0 0.0
    %2303 = vmatpush.msra.mxu0 0.0
    %2304 = vmatpush.msra.mxu0 0.0
    %2305 = vmatpush.msra.mxu0 0.0
    %2306 = vmatpush.msra.mxu0 0.0
    %2307 = vmatpush.msra.mxu0 0.0
    %2308 = vmatpush.msra.mxu0 0.0
    %2309 = vmatpush.msra.mxu0 0.0
    %2310 = vmatpush.msra.mxu0 0.0
    %2311 = vmatpush.msra.mxu0 0.0
    %2312 = vmatpush.msra.mxu0 0.0
    %2313 = vmatpush.msra.mxu0 0.0
    %2314 = vmatpush.msra.mxu0 %v2243
    %2315 = vmatpush.msra.mxu0 %v2240
    %2316 = vmatmul.f32.gmra.mxu0 %v2295
    %v2317 = vpop.f32.mrf.mxu0
    %v2318 = vadd.f32 %v2288, %v2317
    %2319 = vmatmul.f32.gmra.mxu0 %v2298
    %v2320 = vpop.f32.mrf.mxu0
    %v2321 = vadd.f32 %v2292, %v2320
    %2322 = vdwg.mxu0
    %v2323 = vld [vmem:[%s2 + $0x1d0] sm:$0xff]
    %v2324 = vld [vmem:[%s2 + $0x1e0] sm:$0xff]
    %2325 = vset.pattern.permute.xlu0 21
    %2326 = vperm.xlu0 %2325, %v851
    %v2327 = vpop.permute.xlu0 %2326
    %2329 = vset.pattern.permute.xlu0 21
    %2330 = vperm.xlu0 %2329, %v852
    %v2331 = vpop.permute.xlu0 %2330
    %v2334 = vsel %vm1156, %v2323, 0
    %v2337 = vsel %vm1156, %v2324, 0
    %2339 = vmatpush.msra.mxu0 0.0
    %2340 = vmatpush.msra.mxu0 0.0
    %2341 = vmatpush.msra.mxu0 0.0
    %2342 = vmatpush.msra.mxu0 0.0
    %2343 = vmatpush.msra.mxu0 0.0
    %2344 = vmatpush.msra.mxu0 0.0
    %2345 = vmatpush.msra.mxu0 0.0
    %2346 = vmatpush.msra.mxu0 0.0
    %2347 = vmatpush.msra.mxu0 0.0
    %2348 = vmatpush.msra.mxu0 0.0
    %2349 = vmatpush.msra.mxu0 0.0
    %2350 = vmatpush.msra.mxu0 0.0
    %2351 = vmatpush.msra.mxu0 0.0
    %2352 = vmatpush.msra.mxu0 0.0
    %2353 = vmatpush.msra.mxu0 %v2282
    %2354 = vmatpush.msra.mxu0 %v2279
    %2355 = vmatmul.f32.gmra.mxu0 %v2334
    %v2356 = vpop.f32.mrf.mxu0
    %v2357 = vadd.f32 %v2327, %v2356
    %2358 = vmatmul.f32.gmra.mxu0 %v2337
    %v2359 = vpop.f32.mrf.mxu0
    %v2360 = vadd.f32 %v2331, %v2359
    %2361 = vdwg.mxu0
    %v2362 = vadd.f32 %v2318, %v2357
    %v2363 = vadd.f32 %v2321, %v2360
    %v2364 = vmax.f32 %v2362, 0.0
    %v2365 = vmax.f32 %v2363, 0.0
    %v2366 = vld [vmem:[%s2 + $0x1f0] ss:$0 sm:$0xff]
    %s2367 = sld [smem:[#allocation2 + $0x5]]
    %v2368 = vstv %s2367
    %v2370 = vsel %vm1156, %v2366, 0
    %2372 = vmatpush.msra.mxu0 0.0
    %2373 = vmatpush.msra.mxu0 0.0
    %2374 = vmatpush.msra.mxu0 0.0
    %2375 = vmatpush.msra.mxu0 0.0
    %2376 = vmatpush.msra.mxu0 0.0
    %2377 = vmatpush.msra.mxu0 0.0
    %2378 = vmatpush.msra.mxu0 0.0
    %2379 = vmatpush.msra.mxu0 0.0
    %2380 = vmatpush.msra.mxu0 0.0
    %2381 = vmatpush.msra.mxu0 0.0
    %2382 = vmatpush.msra.mxu0 0.0
    %2383 = vmatpush.msra.mxu0 0.0
    %2384 = vmatpush.msra.mxu0 0.0
    %2385 = vmatpush.msra.mxu0 0.0
    %2386 = vmatpush.msra.mxu0 %v2365
    %2387 = vmatpush.msra.mxu0 %v2364
    %2388 = vmatmul.f32.gmra.mxu0 %v2370
    %v2389 = vpop.f32.mrf.mxu0
    %v2390 = vadd.f32 %v2368, %v2389
    %2391 = vdwg.mxu0
    %v2392 = vand.u32 2147483647, %v2390
    %v2393 = vsub.f32 0.0, %v2392
    %v2394 = vmul.f32 %v2393, 1.442695
    %v2395 = vpow.pop %v2394
    %vm2396 = vcmp.ge.f32.partialorder %v2390, 0.0
    %v2397 = vsel %vm2396, 1.0, %v2395
    %v2398 = vadd.f32 %v2395, 1.0
    %v2399 = vrcp.pop %v2398
    %v2400 = vmul.f32 %v2398, %v2399
    %v2401 = vsub.f32 1.0, %v2400
    %v2402 = vmul.f32 %v2399, %v2401
    %v2403 = vadd.f32 %v2399, %v2402
    %vm2404 = vweird.f32 %v2398
    %vm2405 = vweird.f32 %v2399
    %vm2406 = vmor %vm2404, %vm2405
    %v2407 = vsel %vm2406, %v2399, %v2403
    %v2408 = vand.u32 2147483647, %v2398
    %vm2409 = vcmp.eq.f32.partialorder %v2408, 8.507059e+37
    %v2410 = vand.u32 %v2398, 2147483648
    %v2411 = vor.u32 1.1754944e-38, %v2410
    %v2412 = vsel %vm2409, %v2411, %v2407
    %v2413 = vmul.f32 %v2397, %v2412
    %v2414 = vperm.slane %v2413, 0
    %v2415 = vmul.f32 %v2279, %v2414
    %v2416 = vmul.f32 %v2282, %v2414
    %v2417 = vld [vmem:[%s2 + $0x190] sm:$0xff]
    %v2418 = vld [vmem:[%s2 + $0x1a0] sm:$0xff]
    %2419 = vset.pattern.permute.xlu0 19
    %2420 = vperm.xlu0 %2419, %v851
    %v2421 = vpop.permute.xlu0 %2420
    %2423 = vset.pattern.permute.xlu0 19
    %2424 = vperm.xlu0 %2423, %v852
    %v2425 = vpop.permute.xlu0 %2424
    %v2428 = vsel %vm1885, %v2417, 0
    %v2431 = vsel %vm1885, %v2418, 0
    %2433 = vmatpush.msra.mxu0 0.0
    %2434 = vmatpush.msra.mxu0 0.0
    %2435 = vmatpush.msra.mxu0 0.0
    %2436 = vmatpush.msra.mxu0 0.0
    %2437 = vmatpush.msra.mxu0 0.0
    %2438 = vmatpush.msra.mxu0 0.0
    %2439 = vmatpush.msra.mxu0 0.0
    %2440 = vmatpush.msra.mxu0 0.0
    %2441 = vmatpush.msra.mxu0 0.0
    %2442 = vmatpush.msra.mxu0 0.0
    %2443 = vmatpush.msra.mxu0 0.0
    %2444 = vmatpush.msra.mxu0 0.0
    %2445 = vmatpush.msra.mxu0 %v2416
    %2446 = vmatpush.msra.mxu0 %v2415
    %2447 = vmatpush.msra.mxu0 %v2243
    %2448 = vmatpush.msra.mxu0 %v2240
    %2449 = vmatmul.f32.gmra.mxu0 %v2428
    %v2450 = vpop.f32.mrf.mxu0
    %v2451 = vadd.f32 %v2421, %v2450
    %2452 = vmatmul.f32.gmra.mxu0 %v2431
    %v2453 = vpop.f32.mrf.mxu0
    %v2454 = vadd.f32 %v2425, %v2453
    %2455 = vdwg.mxu0
    %2456 = vmatpush.msra.mxu0 %v180
    %2457 = vmatpush.msra.mxu0 %v176
    %2458 = vmatpush.msra.mxu0 %v172
    %2459 = vmatpush.msra.mxu0 %v168
    %2460 = vmatpush.msra.mxu0 %v164
    %2461 = vmatpush.msra.mxu0 %v160
    %2462 = vmatpush.msra.mxu0 %v156
    %2463 = vmatpush.msra.mxu0 %v152
    %2464 = vmatpush.msra.mxu0 %v148
    %2465 = vmatpush.msra.mxu0 %v144
    %2466 = vmatpush.msra.mxu0 %v140
    %2467 = vmatpush.msra.mxu0 %v136
    %2468 = vmatpush.msra.mxu0 %v132
    %2469 = vmatpush.msra.mxu0 %v128
    %2470 = vmatpush.msra.mxu0 %v124
    %2471 = vmatpush.msra.mxu0 %v120
    %2472 = vmatmul.f32.gmra.mxu0 %v2451
    %v2473 = vpop.f32.mrf.mxu0
    %v2474 = vadd.f32 0.0, %v2473
    %2475 = vmatmul.f32.gmra.mxu0 %v2454
    %v2476 = vpop.f32.mrf.mxu0
    %v2477 = vadd.f32 0.0, %v2476
    %2478 = vdwg.mxu0
    %2479 = vmatpush.msra.mxu0 %v181
    %2480 = vmatpush.msra.mxu0 %v177
    %2481 = vmatpush.msra.mxu0 %v173
    %2482 = vmatpush.msra.mxu0 %v169
    %2483 = vmatpush.msra.mxu0 %v165
    %2484 = vmatpush.msra.mxu0 %v161
    %2485 = vmatpush.msra.mxu0 %v157
    %2486 = vmatpush.msra.mxu0 %v153
    %2487 = vmatpush.msra.mxu0 %v149
    %2488 = vmatpush.msra.mxu0 %v145
    %2489 = vmatpush.msra.mxu0 %v141
    %2490 = vmatpush.msra.mxu0 %v137
    %2491 = vmatpush.msra.mxu0 %v133
    %2492 = vmatpush.msra.mxu0 %v129
    %2493 = vmatpush.msra.mxu0 %v125
    %2494 = vmatpush.msra.mxu0 %v121
    %2495 = vmatmul.f32.gmra.mxu0 %v2451
    %v2496 = vpop.f32.mrf.mxu0
    %v2497 = vadd.f32 0.0, %v2496
    %2498 = vmatmul.f32.gmra.mxu0 %v2454
    %v2499 = vpop.f32.mrf.mxu0
    %v2500 = vadd.f32 0.0, %v2499
    %2501 = vdwg.mxu0
    %2502 = vmatpush.msra.mxu0 %v182
    %2503 = vmatpush.msra.mxu0 %v178
    %2504 = vmatpush.msra.mxu0 %v174
    %2505 = vmatpush.msra.mxu0 %v170
    %2506 = vmatpush.msra.mxu0 %v166
    %2507 = vmatpush.msra.mxu0 %v162
    %2508 = vmatpush.msra.mxu0 %v158
    %2509 = vmatpush.msra.mxu0 %v154
    %2510 = vmatpush.msra.mxu0 %v150
    %2511 = vmatpush.msra.mxu0 %v146
    %2512 = vmatpush.msra.mxu0 %v142
    %2513 = vmatpush.msra.mxu0 %v138
    %2514 = vmatpush.msra.mxu0 %v134
    %2515 = vmatpush.msra.mxu0 %v130
    %2516 = vmatpush.msra.mxu0 %v126
    %2517 = vmatpush.msra.mxu0 %v122
    %2518 = vmatmul.f32.gmra.mxu0 %v2451
    %v2519 = vpop.f32.mrf.mxu0
    %v2520 = vadd.f32 0.0, %v2519
    %2521 = vmatmul.f32.gmra.mxu0 %v2454
    %v2522 = vpop.f32.mrf.mxu0
    %v2523 = vadd.f32 0.0, %v2522
    %2524 = vdwg.mxu0
    %2525 = vmatpush.msra.mxu0 %v183
    %2526 = vmatpush.msra.mxu0 %v179
    %2527 = vmatpush.msra.mxu0 %v175
    %2528 = vmatpush.msra.mxu0 %v171
    %2529 = vmatpush.msra.mxu0 %v167
    %2530 = vmatpush.msra.mxu0 %v163
    %2531 = vmatpush.msra.mxu0 %v159
    %2532 = vmatpush.msra.mxu0 %v155
    %2533 = vmatpush.msra.mxu0 %v151
    %2534 = vmatpush.msra.mxu0 %v147
    %2535 = vmatpush.msra.mxu0 %v143
    %2536 = vmatpush.msra.mxu0 %v139
    %2537 = vmatpush.msra.mxu0 %v135
    %2538 = vmatpush.msra.mxu0 %v131
    %2539 = vmatpush.msra.mxu0 %v127
    %2540 = vmatpush.msra.mxu0 %v123
    %2541 = vmatmul.f32.gmra.mxu0 %v2451
    %v2542 = vpop.f32.mrf.mxu0
    %v2543 = vadd.f32 0.0, %v2542
    %2544 = vmatmul.f32.gmra.mxu0 %v2454
    %v2545 = vpop.f32.mrf.mxu0
    %v2546 = vadd.f32 0.0, %v2545
    %2547 = vdwg.mxu0
    %2548 = vmatpush.msra.mxu0 %v180
    %2549 = vmatpush.msra.mxu0 %v176
    %2550 = vmatpush.msra.mxu0 %v172
    %2551 = vmatpush.msra.mxu0 %v168
    %2552 = vmatpush.msra.mxu0 %v164
    %2553 = vmatpush.msra.mxu0 %v160
    %2554 = vmatpush.msra.mxu0 %v156
    %2555 = vmatpush.msra.mxu0 %v152
    %2556 = vmatpush.msra.mxu0 %v148
    %2557 = vmatpush.msra.mxu0 %v144
    %2558 = vmatpush.msra.mxu0 %v140
    %2559 = vmatpush.msra.mxu0 %v136
    %2560 = vmatpush.msra.mxu0 %v132
    %2561 = vmatpush.msra.mxu0 %v128
    %2562 = vmatpush.msra.mxu0 %v124
    %2563 = vmatpush.msra.mxu0 %v120
    %2564 = vmatmul.f32.gmra.mxu0 %v2205
    %v2565 = vpop.f32.mrf.mxu0
    %v2566 = vadd.f32 0.0, %v2565
    %2567 = vdwg.mxu0
    %2568 = vmatpush.msra.mxu0 %v181
    %2569 = vmatpush.msra.mxu0 %v177
    %2570 = vmatpush.msra.mxu0 %v173
    %2571 = vmatpush.msra.mxu0 %v169
    %2572 = vmatpush.msra.mxu0 %v165
    %2573 = vmatpush.msra.mxu0 %v161
    %2574 = vmatpush.msra.mxu0 %v157
    %2575 = vmatpush.msra.mxu0 %v153
    %2576 = vmatpush.msra.mxu0 %v149
    %2577 = vmatpush.msra.mxu0 %v145
    %2578 = vmatpush.msra.mxu0 %v141
    %2579 = vmatpush.msra.mxu0 %v137
    %2580 = vmatpush.msra.mxu0 %v133
    %2581 = vmatpush.msra.mxu0 %v129
    %2582 = vmatpush.msra.mxu0 %v125
    %2583 = vmatpush.msra.mxu0 %v121
    %2584 = vmatmul.f32.gmra.mxu0 %v2205
    %v2585 = vpop.f32.mrf.mxu0
    %v2586 = vadd.f32 0.0, %v2585
    %2587 = vdwg.mxu0
    %2588 = vmatpush.msra.mxu0 %v182
    %2589 = vmatpush.msra.mxu0 %v178
    %2590 = vmatpush.msra.mxu0 %v174
    %2591 = vmatpush.msra.mxu0 %v170
    %2592 = vmatpush.msra.mxu0 %v166
    %2593 = vmatpush.msra.mxu0 %v162
    %2594 = vmatpush.msra.mxu0 %v158
    %2595 = vmatpush.msra.mxu0 %v154
    %2596 = vmatpush.msra.mxu0 %v150
    %2597 = vmatpush.msra.mxu0 %v146
    %2598 = vmatpush.msra.mxu0 %v142
    %2599 = vmatpush.msra.mxu0 %v138
    %2600 = vmatpush.msra.mxu0 %v134
    %2601 = vmatpush.msra.mxu0 %v130
    %2602 = vmatpush.msra.mxu0 %v126
    %2603 = vmatpush.msra.mxu0 %v122
    %2604 = vmatmul.f32.gmra.mxu0 %v2205
    %v2605 = vpop.f32.mrf.mxu0
    %v2606 = vadd.f32 0.0, %v2605
    %2607 = vdwg.mxu0
    %2608 = vmatpush.msra.mxu0 %v183
    %2609 = vmatpush.msra.mxu0 %v179
    %2610 = vmatpush.msra.mxu0 %v175
    %2611 = vmatpush.msra.mxu0 %v171
    %2612 = vmatpush.msra.mxu0 %v167
    %2613 = vmatpush.msra.mxu0 %v163
    %2614 = vmatpush.msra.mxu0 %v159
    %2615 = vmatpush.msra.mxu0 %v155
    %2616 = vmatpush.msra.mxu0 %v151
    %2617 = vmatpush.msra.mxu0 %v147
    %2618 = vmatpush.msra.mxu0 %v143
    %2619 = vmatpush.msra.mxu0 %v139
    %2620 = vmatpush.msra.mxu0 %v135
    %2621 = vmatpush.msra.mxu0 %v131
    %2622 = vmatpush.msra.mxu0 %v127
    %2623 = vmatpush.msra.mxu0 %v123
    %2624 = vmatmul.f32.gmra.mxu0 %v2205
    %v2625 = vpop.f32.mrf.mxu0
    %v2626 = vadd.f32 0.0, %v2625
    %2627 = vdwg.mxu0
    %v2628 = vld [vmem:[%s2 + $0x200] sm:$0xff]
    %2629 = vset.pattern.permute.xlu0 22
    %2630 = vperm.xlu0 %2629, %v296
    %v2631 = vpop.permute.xlu0 %2630
    %v2634 = vsel %vm302, %v2628, 0
    %2636 = vmatpush.msra.mxu0 0.0
    %2637 = vmatpush.msra.mxu0 0.0
    %2638 = vmatpush.msra.mxu0 0.0
    %2639 = vmatpush.msra.mxu0 0.0
    %2640 = vmatpush.msra.mxu0 0.0
    %2641 = vmatpush.msra.mxu0 0.0
    %2642 = vmatpush.msra.mxu0 0.0
    %2643 = vmatpush.msra.mxu0 0.0
    %2644 = vmatpush.msra.mxu0 0.0
    %2645 = vmatpush.msra.mxu0 0.0
    %2646 = vmatpush.msra.mxu0 0.0
    %2647 = vmatpush.msra.mxu0 0.0
    %2648 = vmatpush.msra.mxu0 0.0
    %2649 = vmatpush.msra.mxu0 0.0
    %2650 = vmatpush.msra.mxu0 0.0
    %2651 = vmatpush.msra.mxu0 %v2566
    %2652 = vmatmul.f32.gmra.mxu0 %v2634
    %v2653 = vpop.f32.mrf.mxu0
    %v2654 = vadd.f32 %v2631, %v2653
    %2655 = vdwg.mxu0
    %2656 = vmatpush.msra.mxu0 0.0
    %2657 = vmatpush.msra.mxu0 0.0
    %2658 = vmatpush.msra.mxu0 0.0
    %2659 = vmatpush.msra.mxu0 0.0
    %2660 = vmatpush.msra.mxu0 0.0
    %2661 = vmatpush.msra.mxu0 0.0
    %2662 = vmatpush.msra.mxu0 0.0
    %2663 = vmatpush.msra.mxu0 0.0
    %2664 = vmatpush.msra.mxu0 0.0
    %2665 = vmatpush.msra.mxu0 0.0
    %2666 = vmatpush.msra.mxu0 0.0
    %2667 = vmatpush.msra.mxu0 0.0
    %2668 = vmatpush.msra.mxu0 0.0
    %2669 = vmatpush.msra.mxu0 0.0
    %2670 = vmatpush.msra.mxu0 0.0
    %2671 = vmatpush.msra.mxu0 %v2586
    %2672 = vmatmul.f32.gmra.mxu0 %v2634
    %v2673 = vpop.f32.mrf.mxu0
    %v2674 = vadd.f32 %v2631, %v2673
    %2675 = vdwg.mxu0
    %2676 = vmatpush.msra.mxu0 0.0
    %2677 = vmatpush.msra.mxu0 0.0
    %2678 = vmatpush.msra.mxu0 0.0
    %2679 = vmatpush.msra.mxu0 0.0
    %2680 = vmatpush.msra.mxu0 0.0
    %2681 = vmatpush.msra.mxu0 0.0
    %2682 = vmatpush.msra.mxu0 0.0
    %2683 = vmatpush.msra.mxu0 0.0
    %2684 = vmatpush.msra.mxu0 0.0
    %2685 = vmatpush.msra.mxu0 0.0
    %2686 = vmatpush.msra.mxu0 0.0
    %2687 = vmatpush.msra.mxu0 0.0
    %2688 = vmatpush.msra.mxu0 0.0
    %2689 = vmatpush.msra.mxu0 0.0
    %2690 = vmatpush.msra.mxu0 0.0
    %2691 = vmatpush.msra.mxu0 %v2606
    %2692 = vmatmul.f32.gmra.mxu0 %v2634
    %v2693 = vpop.f32.mrf.mxu0
    %v2694 = vadd.f32 %v2631, %v2693
    %2695 = vdwg.mxu0
    %2696 = vmatpush.msra.mxu0 0.0
    %2697 = vmatpush.msra.mxu0 0.0
    %2698 = vmatpush.msra.mxu0 0.0
    %2699 = vmatpush.msra.mxu0 0.0
    %2700 = vmatpush.msra.mxu0 0.0
    %2701 = vmatpush.msra.mxu0 0.0
    %2702 = vmatpush.msra.mxu0 0.0
    %2703 = vmatpush.msra.mxu0 0.0
    %2704 = vmatpush.msra.mxu0 0.0
    %2705 = vmatpush.msra.mxu0 0.0
    %2706 = vmatpush.msra.mxu0 0.0
    %2707 = vmatpush.msra.mxu0 0.0
    %2708 = vmatpush.msra.mxu0 0.0
    %2709 = vmatpush.msra.mxu0 0.0
    %2710 = vmatpush.msra.mxu0 0.0
    %2711 = vmatpush.msra.mxu0 %v2626
    %2712 = vmatmul.f32.gmra.mxu0 %v2634
    %v2713 = vpop.f32.mrf.mxu0
    %v2714 = vadd.f32 %v2631, %v2713
    %2715 = vdwg.mxu0
    %v2716 = vld [vmem:[%s2 + $0x210] sm:$0xff]
    %2717 = vset.pattern.permute.xlu0 23
    %2718 = vperm.xlu0 %2717, %v296
    %v2719 = vpop.permute.xlu0 %2718
    %v2722 = vsel %vm1156, %v2716, 0
    %2724 = vmatpush.msra.mxu0 0.0
    %2725 = vmatpush.msra.mxu0 0.0
    %2726 = vmatpush.msra.mxu0 0.0
    %2727 = vmatpush.msra.mxu0 0.0
    %2728 = vmatpush.msra.mxu0 0.0
    %2729 = vmatpush.msra.mxu0 0.0
    %2730 = vmatpush.msra.mxu0 0.0
    %2731 = vmatpush.msra.mxu0 0.0
    %2732 = vmatpush.msra.mxu0 0.0
    %2733 = vmatpush.msra.mxu0 0.0
    %2734 = vmatpush.msra.mxu0 0.0
    %2735 = vmatpush.msra.mxu0 0.0
    %2736 = vmatpush.msra.mxu0 0.0
    %2737 = vmatpush.msra.mxu0 0.0
    %2738 = vmatpush.msra.mxu0 %v2477
    %2739 = vmatpush.msra.mxu0 %v2474
    %2740 = vmatmul.f32.gmra.mxu0 %v2722
    %v2741 = vpop.f32.mrf.mxu0
    %v2742 = vadd.f32 %v2719, %v2741
    %2743 = vdwg.mxu0
    %2744 = vmatpush.msra.mxu0 0.0
    %2745 = vmatpush.msra.mxu0 0.0
    %2746 = vmatpush.msra.mxu0 0.0
    %2747 = vmatpush.msra.mxu0 0.0
    %2748 = vmatpush.msra.mxu0 0.0
    %2749 = vmatpush.msra.mxu0 0.0
    %2750 = vmatpush.msra.mxu0 0.0
    %2751 = vmatpush.msra.mxu0 0.0
    %2752 = vmatpush.msra.mxu0 0.0
    %2753 = vmatpush.msra.mxu0 0.0
    %2754 = vmatpush.msra.mxu0 0.0
    %2755 = vmatpush.msra.mxu0 0.0
    %2756 = vmatpush.msra.mxu0 0.0
    %2757 = vmatpush.msra.mxu0 0.0
    %2758 = vmatpush.msra.mxu0 %v2500
    %2759 = vmatpush.msra.mxu0 %v2497
    %2760 = vmatmul.f32.gmra.mxu0 %v2722
    %v2761 = vpop.f32.mrf.mxu0
    %v2762 = vadd.f32 %v2719, %v2761
    %2763 = vdwg.mxu0
    %2764 = vmatpush.msra.mxu0 0.0
    %2765 = vmatpush.msra.mxu0 0.0
    %2766 = vmatpush.msra.mxu0 0.0
    %2767 = vmatpush.msra.mxu0 0.0
    %2768 = vmatpush.msra.mxu0 0.0
    %2769 = vmatpush.msra.mxu0 0.0
    %2770 = vmatpush.msra.mxu0 0.0
    %2771 = vmatpush.msra.mxu0 0.0
    %2772 = vmatpush.msra.mxu0 0.0
    %2773 = vmatpush.msra.mxu0 0.0
    %2774 = vmatpush.msra.mxu0 0.0
    %2775 = vmatpush.msra.mxu0 0.0
    %2776 = vmatpush.msra.mxu0 0.0
    %2777 = vmatpush.msra.mxu0 0.0
    %2778 = vmatpush.msra.mxu0 %v2523
    %2779 = vmatpush.msra.mxu0 %v2520
    %2780 = vmatmul.f32.gmra.mxu0 %v2722
    %v2781 = vpop.f32.mrf.mxu0
    %v2782 = vadd.f32 %v2719, %v2781
    %2783 = vdwg.mxu0
    %2784 = vmatpush.msra.mxu0 0.0
    %2785 = vmatpush.msra.mxu0 0.0
    %2786 = vmatpush.msra.mxu0 0.0
    %2787 = vmatpush.msra.mxu0 0.0
    %2788 = vmatpush.msra.mxu0 0.0
    %2789 = vmatpush.msra.mxu0 0.0
    %2790 = vmatpush.msra.mxu0 0.0
    %2791 = vmatpush.msra.mxu0 0.0
    %2792 = vmatpush.msra.mxu0 0.0
    %2793 = vmatpush.msra.mxu0 0.0
    %2794 = vmatpush.msra.mxu0 0.0
    %2795 = vmatpush.msra.mxu0 0.0
    %2796 = vmatpush.msra.mxu0 0.0
    %2797 = vmatpush.msra.mxu0 0.0
    %2798 = vmatpush.msra.mxu0 %v2546
    %2799 = vmatpush.msra.mxu0 %v2543
    %2800 = vmatmul.f32.gmra.mxu0 %v2722
    %v2801 = vpop.f32.mrf.mxu0
    %v2802 = vadd.f32 %v2719, %v2801
    %2803 = vdwg.mxu0
    %v2804 = vld [vmem:[%s2 + $0x230] sm:$0xff]
    %2805 = vset.pattern.permute.xlu0 25
    %2806 = vperm.xlu0 %2805, %v296
    %v2807 = vpop.permute.xlu0 %2806
    %v2810 = vsel %vm302, %v2804, 0
    %2812 = vmatpush.msra.mxu0 0.0
    %2813 = vmatpush.msra.mxu0 0.0
    %2814 = vmatpush.msra.mxu0 0.0
    %2815 = vmatpush.msra.mxu0 0.0
    %2816 = vmatpush.msra.mxu0 0.0
    %2817 = vmatpush.msra.mxu0 0.0
    %2818 = vmatpush.msra.mxu0 0.0
    %2819 = vmatpush.msra.mxu0 0.0
    %2820 = vmatpush.msra.mxu0 0.0
    %2821 = vmatpush.msra.mxu0 0.0
    %2822 = vmatpush.msra.mxu0 0.0
    %2823 = vmatpush.msra.mxu0 0.0
    %2824 = vmatpush.msra.mxu0 0.0
    %2825 = vmatpush.msra.mxu0 0.0
    %2826 = vmatpush.msra.mxu0 0.0
    %2827 = vmatpush.msra.mxu0 %v2654
    %2828 = vmatmul.f32.gmra.mxu0 %v2810
    %v2829 = vpop.f32.mrf.mxu0
    %v2830 = vadd.f32 %v2807, %v2829
    %2831 = vdwg.mxu0
    %2832 = vmatpush.msra.mxu0 0.0
    %2833 = vmatpush.msra.mxu0 0.0
    %2834 = vmatpush.msra.mxu0 0.0
    %2835 = vmatpush.msra.mxu0 0.0
    %2836 = vmatpush.msra.mxu0 0.0
    %2837 = vmatpush.msra.mxu0 0.0
    %2838 = vmatpush.msra.mxu0 0.0
    %2839 = vmatpush.msra.mxu0 0.0
    %2840 = vmatpush.msra.mxu0 0.0
    %2841 = vmatpush.msra.mxu0 0.0
    %2842 = vmatpush.msra.mxu0 0.0
    %2843 = vmatpush.msra.mxu0 0.0
    %2844 = vmatpush.msra.mxu0 0.0
    %2845 = vmatpush.msra.mxu0 0.0
    %2846 = vmatpush.msra.mxu0 0.0
    %2847 = vmatpush.msra.mxu0 %v2674
    %2848 = vmatmul.f32.gmra.mxu0 %v2810
    %v2849 = vpop.f32.mrf.mxu0
    %v2850 = vadd.f32 %v2807, %v2849
    %2851 = vdwg.mxu0
    %2852 = vmatpush.msra.mxu0 0.0
    %2853 = vmatpush.msra.mxu0 0.0
    %2854 = vmatpush.msra.mxu0 0.0
    %2855 = vmatpush.msra.mxu0 0.0
    %2856 = vmatpush.msra.mxu0 0.0
    %2857 = vmatpush.msra.mxu0 0.0
    %2858 = vmatpush.msra.mxu0 0.0
    %2859 = vmatpush.msra.mxu0 0.0
    %2860 = vmatpush.msra.mxu0 0.0
    %2861 = vmatpush.msra.mxu0 0.0
    %2862 = vmatpush.msra.mxu0 0.0
    %2863 = vmatpush.msra.mxu0 0.0
    %2864 = vmatpush.msra.mxu0 0.0
    %2865 = vmatpush.msra.mxu0 0.0
    %2866 = vmatpush.msra.mxu0 0.0
    %2867 = vmatpush.msra.mxu0 %v2694
    %2868 = vmatmul.f32.gmra.mxu0 %v2810
    %v2869 = vpop.f32.mrf.mxu0
    %v2870 = vadd.f32 %v2807, %v2869
    %2871 = vdwg.mxu0
    %2872 = vmatpush.msra.mxu0 0.0
    %2873 = vmatpush.msra.mxu0 0.0
    %2874 = vmatpush.msra.mxu0 0.0
    %2875 = vmatpush.msra.mxu0 0.0
    %2876 = vmatpush.msra.mxu0 0.0
    %2877 = vmatpush.msra.mxu0 0.0
    %2878 = vmatpush.msra.mxu0 0.0
    %2879 = vmatpush.msra.mxu0 0.0
    %2880 = vmatpush.msra.mxu0 0.0
    %2881 = vmatpush.msra.mxu0 0.0
    %2882 = vmatpush.msra.mxu0 0.0
    %2883 = vmatpush.msra.mxu0 0.0
    %2884 = vmatpush.msra.mxu0 0.0
    %2885 = vmatpush.msra.mxu0 0.0
    %2886 = vmatpush.msra.mxu0 0.0
    %2887 = vmatpush.msra.mxu0 %v2714
    %2888 = vmatmul.f32.gmra.mxu0 %v2810
    %v2889 = vpop.f32.mrf.mxu0
    %v2890 = vadd.f32 %v2807, %v2889
    %2891 = vdwg.mxu0
    %v2892 = vld [vmem:[%s2 + $0x240] sm:$0xff]
    %2893 = vset.pattern.permute.xlu0 26
    %2894 = vperm.xlu0 %2893, %v296
    %v2895 = vpop.permute.xlu0 %2894
    %v2898 = vsel %vm302, %v2892, 0
    %2900 = vmatpush.msra.mxu0 0.0
    %2901 = vmatpush.msra.mxu0 0.0
    %2902 = vmatpush.msra.mxu0 0.0
    %2903 = vmatpush.msra.mxu0 0.0
    %2904 = vmatpush.msra.mxu0 0.0
    %2905 = vmatpush.msra.mxu0 0.0
    %2906 = vmatpush.msra.mxu0 0.0
    %2907 = vmatpush.msra.mxu0 0.0
    %2908 = vmatpush.msra.mxu0 0.0
    %2909 = vmatpush.msra.mxu0 0.0
    %2910 = vmatpush.msra.mxu0 0.0
    %2911 = vmatpush.msra.mxu0 0.0
    %2912 = vmatpush.msra.mxu0 0.0
    %2913 = vmatpush.msra.mxu0 0.0
    %2914 = vmatpush.msra.mxu0 0.0
    %2915 = vmatpush.msra.mxu0 %v2742
    %2916 = vmatmul.f32.gmra.mxu0 %v2898
    %v2917 = vpop.f32.mrf.mxu0
    %v2918 = vadd.f32 %v2895, %v2917
    %2919 = vdwg.mxu0
    %2920 = vmatpush.msra.mxu0 0.0
    %2921 = vmatpush.msra.mxu0 0.0
    %2922 = vmatpush.msra.mxu0 0.0
    %2923 = vmatpush.msra.mxu0 0.0
    %2924 = vmatpush.msra.mxu0 0.0
    %2925 = vmatpush.msra.mxu0 0.0
    %2926 = vmatpush.msra.mxu0 0.0
    %2927 = vmatpush.msra.mxu0 0.0
    %2928 = vmatpush.msra.mxu0 0.0
    %2929 = vmatpush.msra.mxu0 0.0
    %2930 = vmatpush.msra.mxu0 0.0
    %2931 = vmatpush.msra.mxu0 0.0
    %2932 = vmatpush.msra.mxu0 0.0
    %2933 = vmatpush.msra.mxu0 0.0
    %2934 = vmatpush.msra.mxu0 0.0
    %2935 = vmatpush.msra.mxu0 %v2762
    %2936 = vmatmul.f32.gmra.mxu0 %v2898
    %v2937 = vpop.f32.mrf.mxu0
    %v2938 = vadd.f32 %v2895, %v2937
    %2939 = vdwg.mxu0
    %2940 = vmatpush.msra.mxu0 0.0
    %2941 = vmatpush.msra.mxu0 0.0
    %2942 = vmatpush.msra.mxu0 0.0
    %2943 = vmatpush.msra.mxu0 0.0
    %2944 = vmatpush.msra.mxu0 0.0
    %2945 = vmatpush.msra.mxu0 0.0
    %2946 = vmatpush.msra.mxu0 0.0
    %2947 = vmatpush.msra.mxu0 0.0
    %2948 = vmatpush.msra.mxu0 0.0
    %2949 = vmatpush.msra.mxu0 0.0
    %2950 = vmatpush.msra.mxu0 0.0
    %2951 = vmatpush.msra.mxu0 0.0
    %2952 = vmatpush.msra.mxu0 0.0
    %2953 = vmatpush.msra.mxu0 0.0
    %2954 = vmatpush.msra.mxu0 0.0
    %2955 = vmatpush.msra.mxu0 %v2782
    %2956 = vmatmul.f32.gmra.mxu0 %v2898
    %v2957 = vpop.f32.mrf.mxu0
    %v2958 = vadd.f32 %v2895, %v2957
    %2959 = vdwg.mxu0
    %2960 = vmatpush.msra.mxu0 0.0
    %2961 = vmatpush.msra.mxu0 0.0
    %2962 = vmatpush.msra.mxu0 0.0
    %2963 = vmatpush.msra.mxu0 0.0
    %2964 = vmatpush.msra.mxu0 0.0
    %2965 = vmatpush.msra.mxu0 0.0
    %2966 = vmatpush.msra.mxu0 0.0
    %2967 = vmatpush.msra.mxu0 0.0
    %2968 = vmatpush.msra.mxu0 0.0
    %2969 = vmatpush.msra.mxu0 0.0
    %2970 = vmatpush.msra.mxu0 0.0
    %2971 = vmatpush.msra.mxu0 0.0
    %2972 = vmatpush.msra.mxu0 0.0
    %2973 = vmatpush.msra.mxu0 0.0
    %2974 = vmatpush.msra.mxu0 0.0
    %2975 = vmatpush.msra.mxu0 %v2802
    %2976 = vmatmul.f32.gmra.mxu0 %v2898
    %v2977 = vpop.f32.mrf.mxu0
    %v2978 = vadd.f32 %v2895, %v2977
    %2979 = vdwg.mxu0
    %v2980 = vadd.f32 %v2830, %v2918
    %v2981 = vadd.f32 %v2850, %v2938
    %v2982 = vadd.f32 %v2870, %v2958
    %v2983 = vadd.f32 %v2890, %v2978
    %v2984 = vmax.f32 %v2980, 0.0
    %v2985 = vmax.f32 %v2981, 0.0
    %v2986 = vmax.f32 %v2982, 0.0
    %v2987 = vmax.f32 %v2983, 0.0
    %v2988 = vld [vmem:[%s2 + $0x250] ss:$0 sm:$0xff]
    %s2989 = sld [smem:[#allocation2 + $0x6]]
    %v2990 = vstv %s2989
    %v2992 = vsel %vm302, %v2988, 0
    %2994 = vmatpush.msra.mxu0 0.0
    %2995 = vmatpush.msra.mxu0 0.0
    %2996 = vmatpush.msra.mxu0 0.0
    %2997 = vmatpush.msra.mxu0 0.0
    %2998 = vmatpush.msra.mxu0 0.0
    %2999 = vmatpush.msra.mxu0 0.0
    %3000 = vmatpush.msra.mxu0 0.0
    %3001 = vmatpush.msra.mxu0 0.0
    %3002 = vmatpush.msra.mxu0 0.0
    %3003 = vmatpush.msra.mxu0 0.0
    %3004 = vmatpush.msra.mxu0 0.0
    %3005 = vmatpush.msra.mxu0 0.0
    %3006 = vmatpush.msra.mxu0 0.0
    %3007 = vmatpush.msra.mxu0 0.0
    %3008 = vmatpush.msra.mxu0 0.0
    %3009 = vmatpush.msra.mxu0 %v2984
    %3010 = vmatmul.f32.gmra.mxu0 %v2992
    %v3011 = vpop.f32.mrf.mxu0
    %v3012 = vadd.f32 %v2990, %v3011
    %3013 = vdwg.mxu0
    %3014 = vmatpush.msra.mxu0 0.0
    %3015 = vmatpush.msra.mxu0 0.0
    %3016 = vmatpush.msra.mxu0 0.0
    %3017 = vmatpush.msra.mxu0 0.0
    %3018 = vmatpush.msra.mxu0 0.0
    %3019 = vmatpush.msra.mxu0 0.0
    %3020 = vmatpush.msra.mxu0 0.0
    %3021 = vmatpush.msra.mxu0 0.0
    %3022 = vmatpush.msra.mxu0 0.0
    %3023 = vmatpush.msra.mxu0 0.0
    %3024 = vmatpush.msra.mxu0 0.0
    %3025 = vmatpush.msra.mxu0 0.0
    %3026 = vmatpush.msra.mxu0 0.0
    %3027 = vmatpush.msra.mxu0 0.0
    %3028 = vmatpush.msra.mxu0 0.0
    %3029 = vmatpush.msra.mxu0 %v2985
    %3030 = vmatmul.f32.gmra.mxu0 %v2992
    %v3031 = vpop.f32.mrf.mxu0
    %v3032 = vadd.f32 %v2990, %v3031
    %3033 = vdwg.mxu0
    %3034 = vmatpush.msra.mxu0 0.0
    %3035 = vmatpush.msra.mxu0 0.0
    %3036 = vmatpush.msra.mxu0 0.0
    %3037 = vmatpush.msra.mxu0 0.0
    %3038 = vmatpush.msra.mxu0 0.0
    %3039 = vmatpush.msra.mxu0 0.0
    %3040 = vmatpush.msra.mxu0 0.0
    %3041 = vmatpush.msra.mxu0 0.0
    %3042 = vmatpush.msra.mxu0 0.0
    %3043 = vmatpush.msra.mxu0 0.0
    %3044 = vmatpush.msra.mxu0 0.0
    %3045 = vmatpush.msra.mxu0 0.0
    %3046 = vmatpush.msra.mxu0 0.0
    %3047 = vmatpush.msra.mxu0 0.0
    %3048 = vmatpush.msra.mxu0 0.0
    %3049 = vmatpush.msra.mxu0 %v2986
    %3050 = vmatmul.f32.gmra.mxu0 %v2992
    %v3051 = vpop.f32.mrf.mxu0
    %v3052 = vadd.f32 %v2990, %v3051
    %3053 = vdwg.mxu0
    %3054 = vmatpush.msra.mxu0 0.0
    %3055 = vmatpush.msra.mxu0 0.0
    %3056 = vmatpush.msra.mxu0 0.0
    %3057 = vmatpush.msra.mxu0 0.0
    %3058 = vmatpush.msra.mxu0 0.0
    %3059 = vmatpush.msra.mxu0 0.0
    %3060 = vmatpush.msra.mxu0 0.0
    %3061 = vmatpush.msra.mxu0 0.0
    %3062 = vmatpush.msra.mxu0 0.0
    %3063 = vmatpush.msra.mxu0 0.0
    %3064 = vmatpush.msra.mxu0 0.0
    %3065 = vmatpush.msra.mxu0 0.0
    %3066 = vmatpush.msra.mxu0 0.0
    %3067 = vmatpush.msra.mxu0 0.0
    %3068 = vmatpush.msra.mxu0 0.0
    %3069 = vmatpush.msra.mxu0 %v2987
    %3070 = vmatmul.f32.gmra.mxu0 %v2992
    %v3071 = vpop.f32.mrf.mxu0
    %v3072 = vadd.f32 %v2990, %v3071
    %3073 = vdwg.mxu0
    %v3074 = vand.u32 2147483647, %v3012
    %v3075 = vand.u32 2147483647, %v3032
    %v3076 = vand.u32 2147483647, %v3052
    %v3077 = vand.u32 2147483647, %v3072
    %v3078 = vsub.f32 0.0, %v3074
    %v3079 = vsub.f32 0.0, %v3075
    %v3080 = vsub.f32 0.0, %v3076
    %v3081 = vsub.f32 0.0, %v3077
    %v3082 = vmul.f32 %v3078, 1.442695
    %v3083 = vpow.pop %v3082
    %v3084 = vmul.f32 %v3079, 1.442695
    %v3085 = vpow.pop %v3084
    %v3086 = vmul.f32 %v3080, 1.442695
    %v3087 = vpow.pop %v3086
    %v3088 = vmul.f32 %v3081, 1.442695
    %v3089 = vpow.pop %v3088
    %vm3090 = vcmp.ge.f32.partialorder %v3012, 0.0
    %vm3091 = vcmp.ge.f32.partialorder %v3032, 0.0
    %vm3092 = vcmp.ge.f32.partialorder %v3052, 0.0
    %vm3093 = vcmp.ge.f32.partialorder %v3072, 0.0
    %v3094 = vsel %vm3090, 1.0, %v3083
    %v3095 = vsel %vm3091, 1.0, %v3085
    %v3096 = vsel %vm3092, 1.0, %v3087
    %v3097 = vsel %vm3093, 1.0, %v3089
    %v3098 = vadd.f32 %v3083, 1.0
    %v3099 = vadd.f32 %v3085, 1.0
    %v3100 = vadd.f32 %v3087, 1.0
    %v3101 = vadd.f32 %v3089, 1.0
    %v3102 = vrcp.pop %v3098
    %v3103 = vmul.f32 %v3098, %v3102
    %v3104 = vsub.f32 1.0, %v3103
    %v3105 = vmul.f32 %v3102, %v3104
    %v3106 = vadd.f32 %v3102, %v3105
    %vm3107 = vweird.f32 %v3098
    %vm3108 = vweird.f32 %v3102
    %vm3109 = vmor %vm3107, %vm3108
    %v3110 = vsel %vm3109, %v3102, %v3106
    %v3111 = vand.u32 2147483647, %v3098
    %vm3112 = vcmp.eq.f32.partialorder %v3111, 8.507059e+37
    %v3113 = vand.u32 %v3098, 2147483648
    %v3114 = vor.u32 1.1754944e-38, %v3113
    %v3115 = vsel %vm3112, %v3114, %v3110
    %v3116 = vmul.f32 %v3094, %v3115
    %v3117 = vrcp.pop %v3099
    %v3118 = vmul.f32 %v3099, %v3117
    %v3119 = vsub.f32 1.0, %v3118
    %v3120 = vmul.f32 %v3117, %v3119
    %v3121 = vadd.f32 %v3117, %v3120
    %vm3122 = vweird.f32 %v3099
    %vm3123 = vweird.f32 %v3117
    %vm3124 = vmor %vm3122, %vm3123
    %v3125 = vsel %vm3124, %v3117, %v3121
    %v3126 = vand.u32 2147483647, %v3099
    %vm3127 = vcmp.eq.f32.partialorder %v3126, 8.507059e+37
    %v3128 = vand.u32 %v3099, 2147483648
    %v3129 = vor.u32 1.1754944e-38, %v3128
    %v3130 = vsel %vm3127, %v3129, %v3125
    %v3131 = vmul.f32 %v3095, %v3130
    %v3132 = vrcp.pop %v3100
    %v3133 = vmul.f32 %v3100, %v3132
    %v3134 = vsub.f32 1.0, %v3133
    %v3135 = vmul.f32 %v3132, %v3134
    %v3136 = vadd.f32 %v3132, %v3135
    %vm3137 = vweird.f32 %v3100
    %vm3138 = vweird.f32 %v3132
    %vm3139 = vmor %vm3137, %vm3138
    %v3140 = vsel %vm3139, %v3132, %v3136
    %v3141 = vand.u32 2147483647, %v3100
    %vm3142 = vcmp.eq.f32.partialorder %v3141, 8.507059e+37
    %v3143 = vand.u32 %v3100, 2147483648
    %v3144 = vor.u32 1.1754944e-38, %v3143
    %v3145 = vsel %vm3142, %v3144, %v3140
    %v3146 = vmul.f32 %v3096, %v3145
    %v3147 = vrcp.pop %v3101
    %v3148 = vmul.f32 %v3101, %v3147
    %v3149 = vsub.f32 1.0, %v3148
    %v3150 = vmul.f32 %v3147, %v3149
    %v3151 = vadd.f32 %v3147, %v3150
    %vm3152 = vweird.f32 %v3101
    %vm3153 = vweird.f32 %v3147
    %vm3154 = vmor %vm3152, %vm3153
    %v3155 = vsel %vm3154, %v3147, %v3151
    %v3156 = vand.u32 2147483647, %v3101
    %vm3157 = vcmp.eq.f32.partialorder %v3156, 8.507059e+37
    %v3158 = vand.u32 %v3101, 2147483648
    %v3159 = vor.u32 1.1754944e-38, %v3158
    %v3160 = vsel %vm3157, %v3159, %v3155
    %v3161 = vmul.f32 %v3097, %v3160
    %v3162 = vperm.slane %v3116, 0
    %v3163 = vperm.slane %v3131, 0
    %v3164 = vperm.slane %v3146, 0
    %v3165 = vperm.slane %v3161, 0
    %v3166 = vmul.f32 %v2742, %v3162
    %v3167 = vmul.f32 %v2762, %v3163
    %v3168 = vmul.f32 %v2782, %v3164
    %v3169 = vmul.f32 %v2802, %v3165
    %v3170 = vld [vmem:[%s2 + $0x220] sm:$0xff]
    %3171 = vset.pattern.permute.xlu0 24
    %3172 = vperm.xlu0 %3171, %v296
    %v3173 = vpop.permute.xlu0 %3172
    %v3176 = vsel %vm1156, %v3170, 0
    %3178 = vmatpush.msra.mxu0 0.0
    %3179 = vmatpush.msra.mxu0 0.0
    %3180 = vmatpush.msra.mxu0 0.0
    %3181 = vmatpush.msra.mxu0 0.0
    %3182 = vmatpush.msra.mxu0 0.0
    %3183 = vmatpush.msra.mxu0 0.0
    %3184 = vmatpush.msra.mxu0 0.0
    %3185 = vmatpush.msra.mxu0 0.0
    %3186 = vmatpush.msra.mxu0 0.0
    %3187 = vmatpush.msra.mxu0 0.0
    %3188 = vmatpush.msra.mxu0 0.0
    %3189 = vmatpush.msra.mxu0 0.0
    %3190 = vmatpush.msra.mxu0 0.0
    %3191 = vmatpush.msra.mxu0 0.0
    %3192 = vmatpush.msra.mxu0 %v3166
    %3193 = vmatpush.msra.mxu0 %v2654
    %3194 = vmatmul.f32.gmra.mxu0 %v3176
    %v3195 = vpop.f32.mrf.mxu0
    %v3196 = vadd.f32 %v3173, %v3195
    %3197 = vdwg.mxu0
    %3198 = vmatpush.msra.mxu0 0.0
    %3199 = vmatpush.msra.mxu0 0.0
    %3200 = vmatpush.msra.mxu0 0.0
    %3201 = vmatpush.msra.mxu0 0.0
    %3202 = vmatpush.msra.mxu0 0.0
    %3203 = vmatpush.msra.mxu0 0.0
    %3204 = vmatpush.msra.mxu0 0.0
    %3205 = vmatpush.msra.mxu0 0.0
    %3206 = vmatpush.msra.mxu0 0.0
    %3207 = vmatpush.msra.mxu0 0.0
    %3208 = vmatpush.msra.mxu0 0.0
    %3209 = vmatpush.msra.mxu0 0.0
    %3210 = vmatpush.msra.mxu0 0.0
    %3211 = vmatpush.msra.mxu0 0.0
    %3212 = vmatpush.msra.mxu0 %v3167
    %3213 = vmatpush.msra.mxu0 %v2674
    %3214 = vmatmul.f32.gmra.mxu0 %v3176
    %v3215 = vpop.f32.mrf.mxu0
    %v3216 = vadd.f32 %v3173, %v3215
    %3217 = vdwg.mxu0
    %3218 = vmatpush.msra.mxu0 0.0
    %3219 = vmatpush.msra.mxu0 0.0
    %3220 = vmatpush.msra.mxu0 0.0
    %3221 = vmatpush.msra.mxu0 0.0
    %3222 = vmatpush.msra.mxu0 0.0
    %3223 = vmatpush.msra.mxu0 0.0
    %3224 = vmatpush.msra.mxu0 0.0
    %3225 = vmatpush.msra.mxu0 0.0
    %3226 = vmatpush.msra.mxu0 0.0
    %3227 = vmatpush.msra.mxu0 0.0
    %3228 = vmatpush.msra.mxu0 0.0
    %3229 = vmatpush.msra.mxu0 0.0
    %3230 = vmatpush.msra.mxu0 0.0
    %3231 = vmatpush.msra.mxu0 0.0
    %3232 = vmatpush.msra.mxu0 %v3168
    %3233 = vmatpush.msra.mxu0 %v2694
    %3234 = vmatmul.f32.gmra.mxu0 %v3176
    %v3235 = vpop.f32.mrf.mxu0
    %v3236 = vadd.f32 %v3173, %v3235
    %3237 = vdwg.mxu0
    %3238 = vmatpush.msra.mxu0 0.0
    %3239 = vmatpush.msra.mxu0 0.0
    %3240 = vmatpush.msra.mxu0 0.0
    %3241 = vmatpush.msra.mxu0 0.0
    %3242 = vmatpush.msra.mxu0 0.0
    %3243 = vmatpush.msra.mxu0 0.0
    %3244 = vmatpush.msra.mxu0 0.0
    %3245 = vmatpush.msra.mxu0 0.0
    %3246 = vmatpush.msra.mxu0 0.0
    %3247 = vmatpush.msra.mxu0 0.0
    %3248 = vmatpush.msra.mxu0 0.0
    %3249 = vmatpush.msra.mxu0 0.0
    %3250 = vmatpush.msra.mxu0 0.0
    %3251 = vmatpush.msra.mxu0 0.0
    %3252 = vmatpush.msra.mxu0 %v3169
    %3253 = vmatpush.msra.mxu0 %v2714
    %3254 = vmatmul.f32.gmra.mxu0 %v3176
    %v3255 = vpop.f32.mrf.mxu0
    %v3256 = vadd.f32 %v3173, %v3255
    %3257 = vdwg.mxu0
    %v3258 = vld [vmem:[%s2 + $0x260] sm:$0xff]
    %3259 = vrot.lane.b32.xlu0 %v3196, 17
    %v3260 = vpop.permute.xlu0 %3259
    %3261 = vrot.lane.b32.xlu0 %v3216, 17
    %v3262 = vpop.permute.xlu0 %3261
    %3263 = vrot.lane.b32.xlu0 %v3236, 17
    %v3264 = vpop.permute.xlu0 %3263
    %3265 = vrot.lane.b32.xlu0 %v3256, 17
    %v3266 = vpop.permute.xlu0 %3265
    %v3267 = vsel %vm395, %v3264, %v3266
    %v3268 = vsel %vm395, %v3262, %v3264
    %v3269 = vsel %vm395, %v3260, %v3262
    %v3270 = vsel %vm395, %v3266, %v3260
    %v3271 = vsel %vm440, %v3270, 0.0
    %v3272 = vsel %vm441, %v3269, 0.0
    %v3273 = vsel %vm442, %v3268, 0.0
    %v3274 = vsel %vm443, %v3267, 0.0
    %3275 = vrot.lane.b32.xlu0 %v3196, 16
    %v3276 = vpop.permute.xlu0 %3275
    %3277 = vrot.lane.b32.xlu0 %v3216, 16
    %v3278 = vpop.permute.xlu0 %3277
    %3279 = vrot.lane.b32.xlu0 %v3236, 16
    %v3280 = vpop.permute.xlu0 %3279
    %3281 = vrot.lane.b32.xlu0 %v3256, 16
    %v3282 = vpop.permute.xlu0 %3281
    %v3283 = vsel %vm456, %v3280, %v3282
    %v3284 = vsel %vm456, %v3278, %v3280
    %v3285 = vsel %vm456, %v3276, %v3278
    %v3286 = vsel %vm456, %v3282, %v3276
    %v3287 = vsel %vm481, %v3286, 0.0
    %v3288 = vsel %vm482, %v3285, 0.0
    %v3289 = vsel %vm483, %v3284, 0.0
    %v3290 = vsel %vm484, %v3283, 0.0
    %3291 = vrot.lane.b32.xlu0 %v3196, 15
    %v3292 = vpop.permute.xlu0 %3291
    %3293 = vrot.lane.b32.xlu0 %v3216, 15
    %v3294 = vpop.permute.xlu0 %3293
    %3295 = vrot.lane.b32.xlu0 %v3236, 15
    %v3296 = vpop.permute.xlu0 %3295
    %3297 = vrot.lane.b32.xlu0 %v3256, 15
    %v3298 = vpop.permute.xlu0 %3297
    %v3299 = vsel %vm497, %v3296, %v3298
    %v3300 = vsel %vm497, %v3294, %v3296
    %v3301 = vsel %vm497, %v3292, %v3294
    %v3302 = vsel %vm497, %v3298, %v3292
    %v3303 = vsel %vm526, %v3302, 0.0
    %v3304 = vsel %vm527, %v3301, 0.0
    %v3305 = vsel %vm528, %v3300, 0.0
    %v3306 = vsel %vm529, %v3299, 0.0
    %3307 = vrot.lane.b32.xlu0 %v3196, 1
    %v3308 = vpop.permute.xlu0 %3307
    %3309 = vrot.lane.b32.xlu0 %v3216, 1
    %v3310 = vpop.permute.xlu0 %3309
    %3311 = vrot.lane.b32.xlu0 %v3236, 1
    %v3312 = vpop.permute.xlu0 %3311
    %3313 = vrot.lane.b32.xlu0 %v3256, 1
    %v3314 = vpop.permute.xlu0 %3313
    %v3315 = vsel %vm542, %v3312, %v3314
    %v3316 = vsel %vm542, %v3310, %v3312
    %v3317 = vsel %vm542, %v3308, %v3310
    %v3318 = vsel %vm542, %v3314, %v3308
    %v3319 = vsel %vm571, %v3318, 0.0
    %v3320 = vsel %vm572, %v3317, 0.0
    %v3321 = vsel %vm573, %v3316, 0.0
    %v3322 = vsel %vm574, %v3315, 0.0
    %v3323 = vsel %vm591, %v3196, 0.0
    %v3324 = vsel %vm592, %v3216, 0.0
    %v3325 = vsel %vm593, %v3236, 0.0
    %v3326 = vsel %vm594, %v3256, 0.0
    %3327 = vrot.lane.b32.xlu0 %v3196, 127
    %v3328 = vpop.permute.xlu0 %3327
    %3329 = vrot.lane.b32.xlu0 %v3216, 127
    %v3330 = vpop.permute.xlu0 %3329
    %3331 = vrot.lane.b32.xlu0 %v3236, 127
    %v3332 = vpop.permute.xlu0 %3331
    %3333 = vrot.lane.b32.xlu0 %v3256, 127
    %v3334 = vpop.permute.xlu0 %3333
    %v3335 = vsel %vm607, %v3332, %v3334
    %v3336 = vsel %vm607, %v3330, %v3332
    %v3337 = vsel %vm607, %v3328, %v3330
    %v3338 = vsel %vm607, %v3334, %v3328
    %v3339 = vsel %vm624, %v3337, 0.0
    %v3340 = vsel %vm625, %v3336, 0.0
    %v3341 = vsel %vm626, %v3335, 0.0
    %v3342 = vsel %vm627, %v3338, 0.0
    %3343 = vrot.lane.b32.xlu0 %v3196, 113
    %v3344 = vpop.permute.xlu0 %3343
    %3345 = vrot.lane.b32.xlu0 %v3216, 113
    %v3346 = vpop.permute.xlu0 %3345
    %3347 = vrot.lane.b32.xlu0 %v3236, 113
    %v3348 = vpop.permute.xlu0 %3347
    %3349 = vrot.lane.b32.xlu0 %v3256, 113
    %v3350 = vpop.permute.xlu0 %3349
    %v3351 = vsel %vm640, %v3348, %v3350
    %v3352 = vsel %vm640, %v3346, %v3348
    %v3353 = vsel %vm640, %v3344, %v3346
    %v3354 = vsel %vm640, %v3350, %v3344
    %v3355 = vsel %vm673, %v3353, 0.0
    %v3356 = vsel %vm674, %v3352, 0.0
    %v3357 = vsel %vm675, %v3351, 0.0
    %v3358 = vsel %vm676, %v3354, 0.0
    %3359 = vrot.lane.b32.xlu0 %v3196, 112
    %v3360 = vpop.permute.xlu0 %3359
    %3361 = vrot.lane.b32.xlu0 %v3216, 112
    %v3362 = vpop.permute.xlu0 %3361
    %3363 = vrot.lane.b32.xlu0 %v3236, 112
    %v3364 = vpop.permute.xlu0 %3363
    %3365 = vrot.lane.b32.xlu0 %v3256, 112
    %v3366 = vpop.permute.xlu0 %3365
    %v3367 = vsel %vm689, %v3364, %v3366
    %v3368 = vsel %vm689, %v3362, %v3364
    %v3369 = vsel %vm689, %v3360, %v3362
    %v3370 = vsel %vm689, %v3366, %v3360
    %v3371 = vsel %vm706, %v3369, 0.0
    %v3372 = vsel %vm707, %v3368, 0.0
    %v3373 = vsel %vm708, %v3367, 0.0
    %v3374 = vsel %vm709, %v3370, 0.0
    %3375 = vrot.lane.b32.xlu0 %v3196, 111
    %v3376 = vpop.permute.xlu0 %3375
    %3377 = vrot.lane.b32.xlu0 %v3216, 111
    %v3378 = vpop.permute.xlu0 %3377
    %3379 = vrot.lane.b32.xlu0 %v3236, 111
    %v3380 = vpop.permute.xlu0 %3379
    %3381 = vrot.lane.b32.xlu0 %v3256, 111
    %v3382 = vpop.permute.xlu0 %3381
    %v3383 = vsel %vm722, %v3380, %v3382
    %v3384 = vsel %vm722, %v3378, %v3380
    %v3385 = vsel %vm722, %v3376, %v3378
    %v3386 = vsel %vm722, %v3382, %v3376
    %v3387 = vsel %vm739, %v3385, 0.0
    %v3388 = vsel %vm740, %v3384, 0.0
    %v3389 = vsel %vm741, %v3383, 0.0
    %v3390 = vsel %vm742, %v3386, 0.0
    %3391 = vset.pattern.permute.xlu0 27
    %3392 = vperm.xlu0 %3391, %v296
    %v3393 = vpop.permute.xlu0 %3392
    %v3396 = vsel %vm751, %v3258, 0
    %3398 = vmatpush.msra.mxu0 0.0
    %3399 = vmatpush.msra.mxu0 0.0
    %3400 = vmatpush.msra.mxu0 0.0
    %3401 = vmatpush.msra.mxu0 0.0
    %3402 = vmatpush.msra.mxu0 0.0
    %3403 = vmatpush.msra.mxu0 0.0
    %3404 = vmatpush.msra.mxu0 0.0
    %3405 = vmatpush.msra.mxu0 %v3387
    %3406 = vmatpush.msra.mxu0 %v3371
    %3407 = vmatpush.msra.mxu0 %v3355
    %3408 = vmatpush.msra.mxu0 %v3339
    %3409 = vmatpush.msra.mxu0 %v3323
    %3410 = vmatpush.msra.mxu0 %v3319
    %3411 = vmatpush.msra.mxu0 %v3303
    %3412 = vmatpush.msra.mxu0 %v3287
    %3413 = vmatpush.msra.mxu0 %v3271
    %3414 = vmatmul.f32.gmra.mxu0 %v3396
    %v3415 = vpop.f32.mrf.mxu0
    %v3416 = vadd.f32 %v3393, %v3415
    %3417 = vdwg.mxu0
    %3418 = vmatpush.msra.mxu0 0.0
    %3419 = vmatpush.msra.mxu0 0.0
    %3420 = vmatpush.msra.mxu0 0.0
    %3421 = vmatpush.msra.mxu0 0.0
    %3422 = vmatpush.msra.mxu0 0.0
    %3423 = vmatpush.msra.mxu0 0.0
    %3424 = vmatpush.msra.mxu0 0.0
    %3425 = vmatpush.msra.mxu0 %v3388
    %3426 = vmatpush.msra.mxu0 %v3372
    %3427 = vmatpush.msra.mxu0 %v3356
    %3428 = vmatpush.msra.mxu0 %v3340
    %3429 = vmatpush.msra.mxu0 %v3324
    %3430 = vmatpush.msra.mxu0 %v3320
    %3431 = vmatpush.msra.mxu0 %v3304
    %3432 = vmatpush.msra.mxu0 %v3288
    %3433 = vmatpush.msra.mxu0 %v3272
    %3434 = vmatmul.f32.gmra.mxu0 %v3396
    %v3435 = vpop.f32.mrf.mxu0
    %v3436 = vadd.f32 %v3393, %v3435
    %3437 = vdwg.mxu0
    %3438 = vmatpush.msra.mxu0 0.0
    %3439 = vmatpush.msra.mxu0 0.0
    %3440 = vmatpush.msra.mxu0 0.0
    %3441 = vmatpush.msra.mxu0 0.0
    %3442 = vmatpush.msra.mxu0 0.0
    %3443 = vmatpush.msra.mxu0 0.0
    %3444 = vmatpush.msra.mxu0 0.0
    %3445 = vmatpush.msra.mxu0 %v3389
    %3446 = vmatpush.msra.mxu0 %v3373
    %3447 = vmatpush.msra.mxu0 %v3357
    %3448 = vmatpush.msra.mxu0 %v3341
    %3449 = vmatpush.msra.mxu0 %v3325
    %3450 = vmatpush.msra.mxu0 %v3321
    %3451 = vmatpush.msra.mxu0 %v3305
    %3452 = vmatpush.msra.mxu0 %v3289
    %3453 = vmatpush.msra.mxu0 %v3273
    %3454 = vmatmul.f32.gmra.mxu0 %v3396
    %v3455 = vpop.f32.mrf.mxu0
    %v3456 = vadd.f32 %v3393, %v3455
    %3457 = vdwg.mxu0
    %3458 = vmatpush.msra.mxu0 0.0
    %3459 = vmatpush.msra.mxu0 0.0
    %3460 = vmatpush.msra.mxu0 0.0
    %3461 = vmatpush.msra.mxu0 0.0
    %3462 = vmatpush.msra.mxu0 0.0
    %3463 = vmatpush.msra.mxu0 0.0
    %3464 = vmatpush.msra.mxu0 0.0
    %3465 = vmatpush.msra.mxu0 %v3390
    %3466 = vmatpush.msra.mxu0 %v3374
    %3467 = vmatpush.msra.mxu0 %v3358
    %3468 = vmatpush.msra.mxu0 %v3342
    %3469 = vmatpush.msra.mxu0 %v3326
    %3470 = vmatpush.msra.mxu0 %v3322
    %3471 = vmatpush.msra.mxu0 %v3306
    %3472 = vmatpush.msra.mxu0 %v3290
    %3473 = vmatpush.msra.mxu0 %v3274
    %3474 = vmatmul.f32.gmra.mxu0 %v3396
    %v3475 = vpop.f32.mrf.mxu0
    %v3476 = vadd.f32 %v3393, %v3475
    %3477 = vdwg.mxu0
    %s3478 = sld [smem:[#allocation2 + $0x7]]
    %vm3479 = vcmp.ge.f32.partialorder %v3416, 0.0
    %vm3480 = vcmp.ge.f32.partialorder %v3436, 0.0
    %vm3481 = vcmp.ge.f32.partialorder %v3456, 0.0
    %vm3482 = vcmp.ge.f32.partialorder %v3476, 0.0
    %v3483 = vstv %s3478
    %v3484 = vmul.f32 %v3483, %v3416
    %v3485 = vmul.f32 %v3483, %v3436
    %v3486 = vmul.f32 %v3483, %v3456
    %v3487 = vmul.f32 %v3483, %v3476
    %v3488 = vsel %vm3479, %v3416, %v3484
    %v3489 = vsel %vm3480, %v3436, %v3485
    %v3490 = vsel %vm3481, %v3456, %v3486
    %v3491 = vsel %vm3482, %v3476, %v3487
    %v3492 = vld [vmem:[%s2 + $0x270] sm:$0xff]
    %3493 = vrot.lane.b32.xlu0 %v3488, 17
    %v3494 = vpop.permute.xlu0 %3493
    %3495 = vrot.lane.b32.xlu0 %v3489, 17
    %v3496 = vpop.permute.xlu0 %3495
    %3497 = vrot.lane.b32.xlu0 %v3490, 17
    %v3498 = vpop.permute.xlu0 %3497
    %3499 = vrot.lane.b32.xlu0 %v3491, 17
    %v3500 = vpop.permute.xlu0 %3499
    %v3501 = vsel %vm395, %v3498, %v3500
    %v3502 = vsel %vm395, %v3496, %v3498
    %v3503 = vsel %vm395, %v3494, %v3496
    %v3504 = vsel %vm395, %v3500, %v3494
    %v3505 = vsel %vm440, %v3504, 0.0
    %v3506 = vsel %vm441, %v3503, 0.0
    %v3507 = vsel %vm442, %v3502, 0.0
    %v3508 = vsel %vm443, %v3501, 0.0
    %3509 = vrot.lane.b32.xlu0 %v3488, 16
    %v3510 = vpop.permute.xlu0 %3509
    %3511 = vrot.lane.b32.xlu0 %v3489, 16
    %v3512 = vpop.permute.xlu0 %3511
    %3513 = vrot.lane.b32.xlu0 %v3490, 16
    %v3514 = vpop.permute.xlu0 %3513
    %3515 = vrot.lane.b32.xlu0 %v3491, 16
    %v3516 = vpop.permute.xlu0 %3515
    %v3517 = vsel %vm456, %v3514, %v3516
    %v3518 = vsel %vm456, %v3512, %v3514
    %v3519 = vsel %vm456, %v3510, %v3512
    %v3520 = vsel %vm456, %v3516, %v3510
    %v3521 = vsel %vm481, %v3520, 0.0
    %v3522 = vsel %vm482, %v3519, 0.0
    %v3523 = vsel %vm483, %v3518, 0.0
    %v3524 = vsel %vm484, %v3517, 0.0
    %3525 = vrot.lane.b32.xlu0 %v3488, 15
    %v3526 = vpop.permute.xlu0 %3525
    %3527 = vrot.lane.b32.xlu0 %v3489, 15
    %v3528 = vpop.permute.xlu0 %3527
    %3529 = vrot.lane.b32.xlu0 %v3490, 15
    %v3530 = vpop.permute.xlu0 %3529
    %3531 = vrot.lane.b32.xlu0 %v3491, 15
    %v3532 = vpop.permute.xlu0 %3531
    %v3533 = vsel %vm497, %v3530, %v3532
    %v3534 = vsel %vm497, %v3528, %v3530
    %v3535 = vsel %vm497, %v3526, %v3528
    %v3536 = vsel %vm497, %v3532, %v3526
    %v3537 = vsel %vm526, %v3536, 0.0
    %v3538 = vsel %vm527, %v3535, 0.0
    %v3539 = vsel %vm528, %v3534, 0.0
    %v3540 = vsel %vm529, %v3533, 0.0
    %3541 = vrot.lane.b32.xlu0 %v3488, 1
    %v3542 = vpop.permute.xlu0 %3541
    %3543 = vrot.lane.b32.xlu0 %v3489, 1
    %v3544 = vpop.permute.xlu0 %3543
    %3545 = vrot.lane.b32.xlu0 %v3490, 1
    %v3546 = vpop.permute.xlu0 %3545
    %3547 = vrot.lane.b32.xlu0 %v3491, 1
    %v3548 = vpop.permute.xlu0 %3547
    %v3549 = vsel %vm542, %v3546, %v3548
    %v3550 = vsel %vm542, %v3544, %v3546
    %v3551 = vsel %vm542, %v3542, %v3544
    %v3552 = vsel %vm542, %v3548, %v3542
    %v3553 = vsel %vm571, %v3552, 0.0
    %v3554 = vsel %vm572, %v3551, 0.0
    %v3555 = vsel %vm573, %v3550, 0.0
    %v3556 = vsel %vm574, %v3549, 0.0
    %v3557 = vsel %vm591, %v3488, 0.0
    %v3558 = vsel %vm592, %v3489, 0.0
    %v3559 = vsel %vm593, %v3490, 0.0
    %v3560 = vsel %vm594, %v3491, 0.0
    %3561 = vrot.lane.b32.xlu0 %v3488, 127
    %v3562 = vpop.permute.xlu0 %3561
    %3563 = vrot.lane.b32.xlu0 %v3489, 127
    %v3564 = vpop.permute.xlu0 %3563
    %3565 = vrot.lane.b32.xlu0 %v3490, 127
    %v3566 = vpop.permute.xlu0 %3565
    %3567 = vrot.lane.b32.xlu0 %v3491, 127
    %v3568 = vpop.permute.xlu0 %3567
    %v3569 = vsel %vm607, %v3566, %v3568
    %v3570 = vsel %vm607, %v3564, %v3566
    %v3571 = vsel %vm607, %v3562, %v3564
    %v3572 = vsel %vm607, %v3568, %v3562
    %v3573 = vsel %vm624, %v3571, 0.0
    %v3574 = vsel %vm625, %v3570, 0.0
    %v3575 = vsel %vm626, %v3569, 0.0
    %v3576 = vsel %vm627, %v3572, 0.0
    %3577 = vrot.lane.b32.xlu0 %v3488, 113
    %v3578 = vpop.permute.xlu0 %3577
    %3579 = vrot.lane.b32.xlu0 %v3489, 113
    %v3580 = vpop.permute.xlu0 %3579
    %3581 = vrot.lane.b32.xlu0 %v3490, 113
    %v3582 = vpop.permute.xlu0 %3581
    %3583 = vrot.lane.b32.xlu0 %v3491, 113
    %v3584 = vpop.permute.xlu0 %3583
    %v3585 = vsel %vm640, %v3582, %v3584
    %v3586 = vsel %vm640, %v3580, %v3582
    %v3587 = vsel %vm640, %v3578, %v3580
    %v3588 = vsel %vm640, %v3584, %v3578
    %v3589 = vsel %vm673, %v3587, 0.0
    %v3590 = vsel %vm674, %v3586, 0.0
    %v3591 = vsel %vm675, %v3585, 0.0
    %v3592 = vsel %vm676, %v3588, 0.0
    %3593 = vrot.lane.b32.xlu0 %v3488, 112
    %v3594 = vpop.permute.xlu0 %3593
    %3595 = vrot.lane.b32.xlu0 %v3489, 112
    %v3596 = vpop.permute.xlu0 %3595
    %3597 = vrot.lane.b32.xlu0 %v3490, 112
    %v3598 = vpop.permute.xlu0 %3597
    %3599 = vrot.lane.b32.xlu0 %v3491, 112
    %v3600 = vpop.permute.xlu0 %3599
    %v3601 = vsel %vm689, %v3598, %v3600
    %v3602 = vsel %vm689, %v3596, %v3598
    %v3603 = vsel %vm689, %v3594, %v3596
    %v3604 = vsel %vm689, %v3600, %v3594
    %v3605 = vsel %vm706, %v3603, 0.0
    %v3606 = vsel %vm707, %v3602, 0.0
    %v3607 = vsel %vm708, %v3601, 0.0
    %v3608 = vsel %vm709, %v3604, 0.0
    %3609 = vrot.lane.b32.xlu0 %v3488, 111
    %v3610 = vpop.permute.xlu0 %3609
    %3611 = vrot.lane.b32.xlu0 %v3489, 111
    %v3612 = vpop.permute.xlu0 %3611
    %3613 = vrot.lane.b32.xlu0 %v3490, 111
    %v3614 = vpop.permute.xlu0 %3613
    %3615 = vrot.lane.b32.xlu0 %v3491, 111
    %v3616 = vpop.permute.xlu0 %3615
    %v3617 = vsel %vm722, %v3614, %v3616
    %v3618 = vsel %vm722, %v3612, %v3614
    %v3619 = vsel %vm722, %v3610, %v3612
    %v3620 = vsel %vm722, %v3616, %v3610
    %v3621 = vsel %vm739, %v3619, 0.0
    %v3622 = vsel %vm740, %v3618, 0.0
    %v3623 = vsel %vm741, %v3617, 0.0
    %v3624 = vsel %vm742, %v3620, 0.0
    %3625 = vset.pattern.permute.xlu0 28
    %3626 = vperm.xlu0 %3625, %v296
    %v3627 = vpop.permute.xlu0 %3626
    %v3630 = vsel %vm751, %v3492, 0
    %3632 = vmatpush.msra.mxu0 0.0
    %3633 = vmatpush.msra.mxu0 0.0
    %3634 = vmatpush.msra.mxu0 0.0
    %3635 = vmatpush.msra.mxu0 0.0
    %3636 = vmatpush.msra.mxu0 0.0
    %3637 = vmatpush.msra.mxu0 0.0
    %3638 = vmatpush.msra.mxu0 0.0
    %3639 = vmatpush.msra.mxu0 %v3621
    %3640 = vmatpush.msra.mxu0 %v3605
    %3641 = vmatpush.msra.mxu0 %v3589
    %3642 = vmatpush.msra.mxu0 %v3573
    %3643 = vmatpush.msra.mxu0 %v3557
    %3644 = vmatpush.msra.mxu0 %v3553
    %3645 = vmatpush.msra.mxu0 %v3537
    %3646 = vmatpush.msra.mxu0 %v3521
    %3647 = vmatpush.msra.mxu0 %v3505
    %3648 = vmatmul.f32.gmra.mxu0 %v3630
    %v3649 = vpop.f32.mrf.mxu0
    %v3650 = vadd.f32 %v3627, %v3649
    %3651 = vdwg.mxu0
    %3652 = vmatpush.msra.mxu0 0.0
    %3653 = vmatpush.msra.mxu0 0.0
    %3654 = vmatpush.msra.mxu0 0.0
    %3655 = vmatpush.msra.mxu0 0.0
    %3656 = vmatpush.msra.mxu0 0.0
    %3657 = vmatpush.msra.mxu0 0.0
    %3658 = vmatpush.msra.mxu0 0.0
    %3659 = vmatpush.msra.mxu0 %v3622
    %3660 = vmatpush.msra.mxu0 %v3606
    %3661 = vmatpush.msra.mxu0 %v3590
    %3662 = vmatpush.msra.mxu0 %v3574
    %3663 = vmatpush.msra.mxu0 %v3558
    %3664 = vmatpush.msra.mxu0 %v3554
    %3665 = vmatpush.msra.mxu0 %v3538
    %3666 = vmatpush.msra.mxu0 %v3522
    %3667 = vmatpush.msra.mxu0 %v3506
    %3668 = vmatmul.f32.gmra.mxu0 %v3630
    %v3669 = vpop.f32.mrf.mxu0
    %v3670 = vadd.f32 %v3627, %v3669
    %3671 = vdwg.mxu0
    %3672 = vmatpush.msra.mxu0 0.0
    %3673 = vmatpush.msra.mxu0 0.0
    %3674 = vmatpush.msra.mxu0 0.0
    %3675 = vmatpush.msra.mxu0 0.0
    %3676 = vmatpush.msra.mxu0 0.0
    %3677 = vmatpush.msra.mxu0 0.0
    %3678 = vmatpush.msra.mxu0 0.0
    %3679 = vmatpush.msra.mxu0 %v3623
    %3680 = vmatpush.msra.mxu0 %v3607
    %3681 = vmatpush.msra.mxu0 %v3591
    %3682 = vmatpush.msra.mxu0 %v3575
    %3683 = vmatpush.msra.mxu0 %v3559
    %3684 = vmatpush.msra.mxu0 %v3555
    %3685 = vmatpush.msra.mxu0 %v3539
    %3686 = vmatpush.msra.mxu0 %v3523
    %3687 = vmatpush.msra.mxu0 %v3507
    %3688 = vmatmul.f32.gmra.mxu0 %v3630
    %v3689 = vpop.f32.mrf.mxu0
    %v3690 = vadd.f32 %v3627, %v3689
    %3691 = vdwg.mxu0
    %3692 = vmatpush.msra.mxu0 0.0
    %3693 = vmatpush.msra.mxu0 0.0
    %3694 = vmatpush.msra.mxu0 0.0
    %3695 = vmatpush.msra.mxu0 0.0
    %3696 = vmatpush.msra.mxu0 0.0
    %3697 = vmatpush.msra.mxu0 0.0
    %3698 = vmatpush.msra.mxu0 0.0
    %3699 = vmatpush.msra.mxu0 %v3624
    %3700 = vmatpush.msra.mxu0 %v3608
    %3701 = vmatpush.msra.mxu0 %v3592
    %3702 = vmatpush.msra.mxu0 %v3576
    %3703 = vmatpush.msra.mxu0 %v3560
    %3704 = vmatpush.msra.mxu0 %v3556
    %3705 = vmatpush.msra.mxu0 %v3540
    %3706 = vmatpush.msra.mxu0 %v3524
    %3707 = vmatpush.msra.mxu0 %v3508
    %3708 = vmatmul.f32.gmra.mxu0 %v3630
    %v3709 = vpop.f32.mrf.mxu0
    %v3710 = vadd.f32 %v3627, %v3709
    %3711 = vdwg.mxu0
    %s3712 = sld [smem:[#allocation2 + $0x8]]
    %vm3713 = vcmp.ge.f32.partialorder %v3650, 0.0
    %vm3714 = vcmp.ge.f32.partialorder %v3670, 0.0
    %vm3715 = vcmp.ge.f32.partialorder %v3690, 0.0
    %vm3716 = vcmp.ge.f32.partialorder %v3710, 0.0
    %v3717 = vstv %s3712
    %v3718 = vmul.f32 %v3717, %v3650
    %v3719 = vmul.f32 %v3717, %v3670
    %v3720 = vmul.f32 %v3717, %v3690
    %v3721 = vmul.f32 %v3717, %v3710
    %v3722 = vsel %vm3713, %v3650, %v3718
    %v3723 = vsel %vm3714, %v3670, %v3719
    %v3724 = vsel %vm3715, %v3690, %v3720
    %v3725 = vsel %vm3716, %v3710, %v3721
    %3726 = vset.pattern.permute.xlu0 29
    %3727 = vperm.xlu0 %3726, %v296
    %v3728 = vpop.permute.xlu0 %3727
    %v3730 = vmul.f32 %v3722, %v3728
    %v3731 = vmul.f32 %v3723, %v3728
    %v3732 = vmul.f32 %v3724, %v3728
    %v3733 = vmul.f32 %v3725, %v3728
    %3734 = vset.pattern.permute.xlu0 30
    %3735 = vperm.xlu0 %3734, %v296
    %v3736 = vpop.permute.xlu0 %3735
    %v3738 = vadd.f32 %v3730, %v3736
    %v3739 = vadd.f32 %v3731, %v3736
    %v3740 = vadd.f32 %v3732, %v3736
    %v3741 = vadd.f32 %v3733, %v3736
    %3742 = vst [vmem:[%s6] sm:$0xff] %v3738
    %3743 = vst [vmem:[%s6 + $0x8] sm:$0xff] %v3739
    %3744 = vst [vmem:[%s6 + $0x10] sm:$0xff] %v3740
    %3745 = vst [vmem:[%s6 + $0x18] sm:$0xff] %v3741
    // Predicated region
    $region30: #{randwire_forward.1} parent=1 // pred_check
      _
    $region31: #{randwire_forward.1} parent=1 // pred_check_branch
      %3747 = sbr.rel (0) target = $region33
    $region32: #{randwire_forward.1} parent=1 // pred_region
      _
    $region33: #{randwire_forward.1} parent=1 // pred_fallthru
      _
    // Predicated region
    $region34: #{randwire_forward.1} parent=1 // pred_check
      _
    $region35: #{randwire_forward.1} parent=1 // pred_check_branch
      %3749 = sbr.rel (0) target = $region37
    $region36: #{randwire_forward.1} parent=1 // pred_region
      _
    $region37: #{randwire_forward.1} parent=1 // pred_fallthru
      _
    %3750 = vsyncpa [#allocation3], 1

</llo_original>
